<compile_context>
chip_gen: v5e
topology: v5e:2x2
jax: 0.10.0
libtpu: 0.0.40
codegen_flags: <defaults>
</compile_context>

<pallas_src>
import jax
import jax.numpy as jnp
from jax.experimental import pallas as pl
from jax.experimental.pallas import tpu as pltpu

# ---- static problem sizes (small, consistent with the module) --------------
B = 2                 # batch
H = W = 16            # spatial size of the backbone feature map
N = H * W             # 256 voxels (tokens) per batch element
BN = B * N            # 512 rows processed in one lane-dense tile
POS_DIM = 2           # config.pos_dim (2-D positions)
POS_EMBED_DIM = 128   # config.trans_in_dim == pos_embed_dim; 128 -> full lane occupancy
OMEGA = 1.0           # LearnedSinuPosEmbedder omega
LN_EPS = 1e-12


# ---------------------------------------------------------------------------
# Pallas kernel: entire forward in one grid step on a (BN, 128) tile.
# ---------------------------------------------------------------------------
def encoder_kernel(pos_ref, wt_ref, b_ref, out_ref):
    pos = pos_ref[...]                                            # (BN, POS_DIM) f32

    # voxels_pos.max() over ALL elements: sublane reduce first (cheap VPU vmax tree over
    # 512 rows), then a 2-wide lane reduce — instead of 64 XLU lane reductions.
    vmax = jnp.max(jnp.max(pos, axis=0, keepdims=True), axis=1, keepdims=True)  # (1, 1)

    # Fold 1/vmax into the tiny (POS_DIM, D) weight: one 2-vreg multiply instead of a
    # divide broadcast over the whole lane-padded position slab.
    w = wt_ref[...] * (1.0 / vmax)                                # (POS_DIM, D)

    # K=2 "matmul" as two VPU FMAs (outer-product broadcasts); omega and the even/odd
    # parity phase (cos x == sin(x + pi/2)) are pre-folded into wt/b host-side, so one
    # full-lane sin pass produces the interleaved sin/cos mix directly.
    ang = (pos[:, 0:1] * w[0:1, :]
           + pos[:, 1:2] * w[1:2, :]
           + b_ref[...])                                          # (BN, D) f32
    mix = jnp.sin(ang)                                            # single full-lane EUP pass

    # LayerNorm(eps=1e-12, elementwise_affine=False) over the 128-lane feature dim,
    # via E[x] / E[x^2] (numerically safe: mix in [-1, 1], var ~ 0.5).
    mu = jnp.mean(mix, axis=-1, keepdims=True)                    # (BN, 1)
    ms = jnp.mean(mix * mix, axis=-1, keepdims=True)              # (BN, 1)
    var = ms - mu * mu
    out_ref[...] = ((mix - mu) * jax.lax.rsqrt(var + LN_EPS)).astype(out_ref.dtype)


# ---------------------------------------------------------------------------
# One-time (per-checkpoint) parameter prep — deliberately OUTSIDE the jitted
# per-call path so the wrapper does no arithmetic before the pallas_call.
# ---------------------------------------------------------------------------
def prepare_params(w, b):
    """w: (D, POS_DIM) torch-Linear weight; b: (D,). Returns (wt_eff, b_eff)."""
    D = POS_EMBED_DIM
    parity_phase = (jnp.arange(D) % 2).astype(jnp.float32) * jnp.float32(jnp.pi / 2)
    wt_eff = (jnp.float32(OMEGA) * w.T).astype(jnp.float32)            # (POS_DIM, D)
    b_eff = (jnp.float32(OMEGA) * b + parity_phase).reshape(1, D).astype(jnp.float32)
    return jax.block_until_ready(wt_eff), jax.block_until_ready(b_eff)


# ---------------------------------------------------------------------------
# Per-call wrapper: reshape (free) + one pallas_call. No parameter prep here.
# ---------------------------------------------------------------------------
@jax.jit
def segtran_input_feat_encoder(voxels_pos, wt_eff, b_eff):
    """voxels_pos: (B, N, POS_DIM) f32; wt_eff/b_eff from prepare_params()."""
    D = POS_EMBED_DIM
    pos2d = voxels_pos.reshape(BN, POS_DIM)                            # contiguous, free

    out2d = pl.pallas_call(
        encoder_kernel,
        out_shape=jax.ShapeDtypeStruct((BN, D), jnp.float32),
        grid=(1,),                                                     # single step: overhead-bound
        in_specs=[
            pl.BlockSpec((BN, POS_DIM), lambda i: (0, 0)),             # positions (full block)
            pl.BlockSpec((POS_DIM, D), lambda i: (0, 0)),              # pos_fc.weight^T (omega folded)
            pl.BlockSpec((1, D), lambda i: (0, 0)),                    # bias + parity phase
        ],
        out_specs=pl.BlockSpec((BN, D), lambda i: (0, 0)),             # lane-dense (512, 128) store
        compiler_params=pltpu.CompilerParams(dimension_semantics=("arbitrary",)),
    )(pos2d, wt_eff, b_eff)

    return out2d.reshape(B, N, D)


# ---------------------------------------------------------------------------
# Pure-JAX reference (mirrors the PyTorch forward literally) for verification.
# ---------------------------------------------------------------------------
def reference(voxels_pos, w, b):
    pos_normed = voxels_pos / jnp.max(voxels_pos)
    pe0 = pos_normed @ w.T + b                                         # (B, N, D)
    s = jnp.sin(OMEGA * pe0[:, :, 0::2])
    c = jnp.cos(OMEGA * pe0[:, :, 1::2])
    mix = jnp.stack((s, c), axis=3).reshape(pe0.shape)                 # interleave sin/cos
    mu = mix.mean(-1, keepdims=True)
    var = jnp.square(mix - mu).mean(-1, keepdims=True)
    return (mix - mu) / jnp.sqrt(var + LN_EPS)                         # LN, no affine


# ---------------------------------------------------------------------------
if __name__ == "__main__":
    key = jax.random.PRNGKey(0)
    kw, kb = jax.random.split(key, 2)

    # voxels_pos: (h, w) grid coordinates of the 16x16 feature map (what segtran feeds in).
    hh, ww = jnp.meshgrid(jnp.arange(H, dtype=jnp.float32),
                          jnp.arange(W, dtype=jnp.float32), indexing="ij")
    grid_pos = jnp.stack([hh.reshape(-1), ww.reshape(-1)], axis=-1)    # (N, 2)
    voxels_pos = jnp.broadcast_to(grid_pos[None], (B, N, POS_DIM)).astype(jnp.float32)

    # torch nn.Linear(pos_dim, pos_embed_dim) parameters (deterministic synthetic init).
    bound = 1.0 / jnp.sqrt(jnp.float32(POS_DIM))
    w = jax.random.uniform(kw, (POS_EMBED_DIM, POS_DIM), jnp.float32, -bound, bound)
    b = jax.random.uniform(kb, (POS_EMBED_DIM,), jnp.float32, -bound, bound)

    # One-time parameter prep (hoisted out of the per-call jitted path).
    wt_eff, b_eff = prepare_params(w, b)

    out = segtran_input_feat_encoder(voxels_pos, wt_eff, b_eff)
    out = jax.block_until_ready(out)

    ref = reference(voxels_pos, w, b)
    assert out.shape == (B, N, POS_EMBED_DIM)
    max_err = jnp.max(jnp.abs(out - ref))
    assert jnp.allclose(out, ref, rtol=1e-4, atol=1e-4), f"max abs diff {max_err}"

    print("KERNEL_OK")
</pallas_src>

<mosaic_0001>
module attributes {stable_mosaic.version = 11 : i64} {
  func.func @encoder_kernel(%arg0: i32, %arg1: memref<512x2xf32, #tpu.memory_space<vmem>>, %arg2: memref<2x128xf32, #tpu.memory_space<vmem>>, %arg3: memref<1x128xf32, #tpu.memory_space<vmem>>, %arg4: memref<512x128xf32, #tpu.memory_space<vmem>>) attributes {dimension_semantics = [#tpu.dimension_semantics<arbitrary>], iteration_bounds = array<i64: 1>, scalar_prefetch = 0 : i64, scratch_operands = 0 : i64, tpu.core_type = #tpu.core_type<tc>, window_params = [{pipeline_mode = #tpu.pipeline_mode<synchronous>, transform_indices = @transform_0, window_bounds = array<i64: 512, 2>}, {pipeline_mode = #tpu.pipeline_mode<synchronous>, transform_indices = @transform_1, window_bounds = array<i64: 2, 128>}, {pipeline_mode = #tpu.pipeline_mode<synchronous>, transform_indices = @transform_2, window_bounds = array<i64: 1, 128>}, {pipeline_mode = #tpu.pipeline_mode<synchronous>, transform_indices = @transform_3, window_bounds = array<i64: 512, 128>}]} {
    %c0 = arith.constant 0 : index
    %c0_0 = arith.constant 0 : index
    %0 = vector.load %arg1[%c0, %c0_0] : memref<512x2xf32, #tpu.memory_space<vmem>>, vector<512x2xf32>
    %cst = arith.constant dense<0xFF800000> : vector<2xf32>
    %1 = vector.multi_reduction <maximumf>, %0, %cst [0] : vector<512x2xf32> to vector<2xf32>
    %2 = vector.shape_cast %1 : vector<2xf32> to vector<1x2xf32>
    %cst_1 = arith.constant dense<0xFF800000> : vector<1xf32>
    %3 = vector.multi_reduction <maximumf>, %2, %cst_1 [1] : vector<1x2xf32> to vector<1xf32>
    %4 = vector.shape_cast %3 : vector<1xf32> to vector<1x1xf32>
    %c0_2 = arith.constant 0 : index
    %c0_3 = arith.constant 0 : index
    %5 = vector.load %arg2[%c0_2, %c0_3] : memref<2x128xf32, #tpu.memory_space<vmem>>, vector<2x128xf32>
    %cst_4 = arith.constant 1.000000e+00 : f32
    %6 = vector.broadcast %cst_4 : f32 to vector<1x1xf32>
    %7 = arith.divf %6, %4 : vector<1x1xf32>
    %8 = vector.broadcast %7 : vector<1x1xf32> to vector<2x128xf32>
    %9 = arith.mulf %5, %8 : vector<2x128xf32>
    %10 = vector.extract_strided_slice %0 {offsets = [0, 0], sizes = [512, 1], strides = [1, 1]} : vector<512x2xf32> to vector<512x1xf32>
    %11 = vector.extract_strided_slice %9 {offsets = [0, 0], sizes = [1, 128], strides = [1, 1]} : vector<2x128xf32> to vector<1x128xf32>
    %12 = vector.broadcast %10 : vector<512x1xf32> to vector<512x128xf32>
    %13 = vector.broadcast %11 : vector<1x128xf32> to vector<512x128xf32>
    %14 = arith.mulf %12, %13 : vector<512x128xf32>
    %15 = vector.extract_strided_slice %0 {offsets = [0, 1], sizes = [512, 1], strides = [1, 1]} : vector<512x2xf32> to vector<512x1xf32>
    %16 = vector.extract_strided_slice %9 {offsets = [1, 0], sizes = [1, 128], strides = [1, 1]} : vector<2x128xf32> to vector<1x128xf32>
    %17 = vector.broadcast %15 : vector<512x1xf32> to vector<512x128xf32>
    %18 = vector.broadcast %16 : vector<1x128xf32> to vector<512x128xf32>
    %19 = arith.mulf %17, %18 : vector<512x128xf32>
    %20 = arith.addf %14, %19 : vector<512x128xf32>
    %c0_5 = arith.constant 0 : index
    %c0_6 = arith.constant 0 : index
    %21 = vector.load %arg3[%c0_5, %c0_6] : memref<1x128xf32, #tpu.memory_space<vmem>>, vector<1x128xf32>
    %22 = vector.broadcast %21 : vector<1x128xf32> to vector<512x128xf32>
    %23 = arith.addf %20, %22 : vector<512x128xf32>
    %24 = math.sin %23 : vector<512x128xf32>
    %cst_7 = arith.constant dense<0.000000e+00> : vector<512xf32>
    %25 = vector.multi_reduction <add>, %24, %cst_7 [1] : vector<512x128xf32> to vector<512xf32>
    %26 = vector.shape_cast %25 : vector<512xf32> to vector<512x1xf32>
    %cst_8 = arith.constant 1.280000e+02 : f32
    %27 = vector.broadcast %cst_8 : f32 to vector<512x1xf32>
    %28 = arith.divf %26, %27 : vector<512x1xf32>
    %29 = arith.mulf %24, %24 : vector<512x128xf32>
    %cst_9 = arith.constant dense<0.000000e+00> : vector<512xf32>
    %30 = vector.multi_reduction <add>, %29, %cst_9 [1] : vector<512x128xf32> to vector<512xf32>
    %31 = vector.shape_cast %30 : vector<512xf32> to vector<512x1xf32>
    %cst_10 = arith.constant 1.280000e+02 : f32
    %32 = vector.broadcast %cst_10 : f32 to vector<512x1xf32>
    %33 = arith.divf %31, %32 : vector<512x1xf32>
    %34 = arith.mulf %28, %28 : vector<512x1xf32>
    %35 = arith.subf %33, %34 : vector<512x1xf32>
    %36 = vector.broadcast %28 : vector<512x1xf32> to vector<512x128xf32>
    %37 = arith.subf %24, %36 : vector<512x128xf32>
    %cst_11 = arith.constant 9.99999996E-13 : f32
    %38 = vector.broadcast %cst_11 : f32 to vector<512x1xf32>
    %39 = arith.addf %35, %38 : vector<512x1xf32>
    %40 = math.rsqrt %39 : vector<512x1xf32>
    %41 = vector.broadcast %40 : vector<512x1xf32> to vector<512x128xf32>
    %42 = arith.mulf %37, %41 : vector<512x128xf32>
    %c0_12 = arith.constant 0 : index
    %c0_13 = arith.constant 0 : index
    %43 = vector.load %arg4[%c0_12, %c0_13] : memref<512x128xf32, #tpu.memory_space<vmem>>, vector<512x128xf32>
    tpu.vector_store %arg4[%c0_12, %c0_13], %42 {strides = array<i32>} : memref<512x128xf32, #tpu.memory_space<vmem>>, vector<512x128xf32>,
    return
  }
  func.func @transform_0(%arg0: i32) -> (i32, i32) {
    %c0_i32 = arith.constant 0 : i32
    %c0_i32_0 = arith.constant 0 : i32
    %c0_i32_1 = arith.constant 0 : i32
    return %c0_i32, %c0_i32_0 : i32, i32
  }
  func.func @transform_1(%arg0: i32) -> (i32, i32) {
    %c0_i32 = arith.constant 0 : i32
    %c0_i32_0 = arith.constant 0 : i32
    %c0_i32_1 = arith.constant 0 : i32
    return %c0_i32, %c0_i32_0 : i32, i32
  }
  func.func @transform_2(%arg0: i32) -> (i32, i32) {
    %c0_i32 = arith.constant 0 : i32
    %c0_i32_0 = arith.constant 0 : i32
    %c0_i32_1 = arith.constant 0 : i32
    return %c0_i32, %c0_i32_0 : i32, i32
  }
  func.func @transform_3(%arg0: i32) -> (i32, i32) {
    %c0_i32 = arith.constant 0 : i32
    %c0_i32_0 = arith.constant 0 : i32
    %c0_i32_1 = arith.constant 0 : i32
    return %c0_i32, %c0_i32_0 : i32, i32
  }
}

</mosaic_0001>

<llo_original>
// kernel: segtran_input_feat_encoder.1
$region0: #{segtran_input_feat_encoder.1}
  #allocation0 [shape = 'u32[]', space=smem, size = 0x4, offset = 0x4, fixed_abs, tag = 'smem constant byte address 0x4 - core index']
  #allocation1 [shape = 'u32[72,128]{1,0:T(1,128)}', space=vmem, size = 0x9000, scoped, tag = 'internal scratch']
  %s0 = inlined_call_operand.vmem [shape: f32[512,2], index: 0, kind: input, shape index: {}]
  %s1 = inlined_call_operand.vmem [shape: f32[2,128], index: 1, kind: input, shape index: {}]
  %s2 = inlined_call_operand.vmem [shape: f32[1,128], index: 2, kind: input, shape index: {}]
  %s3 = inlined_call_operand.hbm [shape: f32[512,128], index: 3, kind: output, shape index: {}]
  %s4 = sld [smem:[#allocation0]]
  $region22: #{segtran_input_feat_encoder.1} parent=0
    _
  %s6 = ssub.s32 1, %s4
  %s7 = scalar_select 0, %s6, %s4
  $region1: #{segtran_input_feat_encoder.1} parent=0
    #allocation2 [shape = 'u8[262144]{0}', space=vmem, size = 0x40000, scoped, tag = 'output window, operand 0, single buffered']
    #allocation3 [shape = 's32[1]{0}', space=sflag, size = 0x4, scoped, tag = 'scoped memory for segtran_input_feat_encoder.1']
    %8 = vsyncpa [#allocation3], 0
    // Predicated region
    $region2: #{segtran_input_feat_encoder.1} parent=1 // pred_check
      _
    $region3: #{segtran_input_feat_encoder.1} parent=1 // pred_check_branch
      %10 = sbr.rel (0) target = $region5
    $region4: #{segtran_input_feat_encoder.1} parent=1 // pred_region
      _
    $region5: #{segtran_input_feat_encoder.1} parent=1 // pred_fallthru
      _
    // Predicated region
    $region6: #{segtran_input_feat_encoder.1} parent=1 // pred_check
      _
    $region7: #{segtran_input_feat_encoder.1} parent=1 // pred_check_branch
      %12 = sbr.rel (0) target = $region9
    $region8: #{segtran_input_feat_encoder.1} parent=1 // pred_region
      _
    $region9: #{segtran_input_feat_encoder.1} parent=1 // pred_fallthru
      _
    // Predicated region
    $region10: #{segtran_input_feat_encoder.1} parent=1 // pred_check
      _
    $region11: #{segtran_input_feat_encoder.1} parent=1 // pred_check_branch
      %14 = sbr.rel (0) target = $region13
    $region12: #{segtran_input_feat_encoder.1} parent=1 // pred_region
      _
    $region13: #{segtran_input_feat_encoder.1} parent=1 // pred_fallthru
      _
    %v15 = vld [vmem:[%s0] sm:$0xff]
    %v16 = vld [vmem:[%s0 + $0x8] sm:$0xff]
    %v17 = vld [vmem:[%s0 + $0x10] sm:$0xff]
    %v18 = vld [vmem:[%s0 + $0x18] sm:$0xff]
    %v19 = vld [vmem:[%s0 + $0x20] sm:$0xff]
    %v20 = vld [vmem:[%s0 + $0x28] sm:$0xff]
    %v21 = vld [vmem:[%s0 + $0x30] sm:$0xff]
    %v22 = vld [vmem:[%s0 + $0x38] sm:$0xff]
    %v23 = vld [vmem:[%s0 + $0x40] sm:$0xff]
    %v24 = vld [vmem:[%s0 + $0x48] sm:$0xff]
    %v25 = vld [vmem:[%s0 + $0x50] sm:$0xff]
    %v26 = vld [vmem:[%s0 + $0x58] sm:$0xff]
    %v27 = vld [vmem:[%s0 + $0x60] sm:$0xff]
    %v28 = vld [vmem:[%s0 + $0x68] sm:$0xff]
    %v29 = vld [vmem:[%s0 + $0x70] sm:$0xff]
    %v30 = vld [vmem:[%s0 + $0x78] sm:$0xff]
    %v31 = vld [vmem:[%s0 + $0x80] sm:$0xff]
    %v32 = vld [vmem:[%s0 + $0x88] sm:$0xff]
    %v33 = vld [vmem:[%s0 + $0x90] sm:$0xff]
    %v34 = vld [vmem:[%s0 + $0x98] sm:$0xff]
    %v35 = vld [vmem:[%s0 + $0xa0] sm:$0xff]
    %v36 = vld [vmem:[%s0 + $0xa8] sm:$0xff]
    %v37 = vld [vmem:[%s0 + $0xb0] sm:$0xff]
    %v38 = vld [vmem:[%s0 + $0xb8] sm:$0xff]
    %v39 = vld [vmem:[%s0 + $0xc0] sm:$0xff]
    %v40 = vld [vmem:[%s0 + $0xc8] sm:$0xff]
    %v41 = vld [vmem:[%s0 + $0xd0] sm:$0xff]
    %v42 = vld [vmem:[%s0 + $0xd8] sm:$0xff]
    %v43 = vld [vmem:[%s0 + $0xe0] sm:$0xff]
    %v44 = vld [vmem:[%s0 + $0xe8] sm:$0xff]
    %v45 = vld [vmem:[%s0 + $0xf0] sm:$0xff]
    %v46 = vld [vmem:[%s0 + $0xf8] sm:$0xff]
    %v47 = vld [vmem:[%s0 + $0x100] sm:$0xff]
    %v48 = vld [vmem:[%s0 + $0x108] sm:$0xff]
    %v49 = vld [vmem:[%s0 + $0x110] sm:$0xff]
    %v50 = vld [vmem:[%s0 + $0x118] sm:$0xff]
    %v51 = vld [vmem:[%s0 + $0x120] sm:$0xff]
    %v52 = vld [vmem:[%s0 + $0x128] sm:$0xff]
    %v53 = vld [vmem:[%s0 + $0x130] sm:$0xff]
    %v54 = vld [vmem:[%s0 + $0x138] sm:$0xff]
    %v55 = vld [vmem:[%s0 + $0x140] sm:$0xff]
    %v56 = vld [vmem:[%s0 + $0x148] sm:$0xff]
    %v57 = vld [vmem:[%s0 + $0x150] sm:$0xff]
    %v58 = vld [vmem:[%s0 + $0x158] sm:$0xff]
    %v59 = vld [vmem:[%s0 + $0x160] sm:$0xff]
    %v60 = vld [vmem:[%s0 + $0x168] sm:$0xff]
    %v61 = vld [vmem:[%s0 + $0x170] sm:$0xff]
    %v62 = vld [vmem:[%s0 + $0x178] sm:$0xff]
    %v63 = vld [vmem:[%s0 + $0x180] sm:$0xff]
    %v64 = vld [vmem:[%s0 + $0x188] sm:$0xff]
    %v65 = vld [vmem:[%s0 + $0x190] sm:$0xff]
    %v66 = vld [vmem:[%s0 + $0x198] sm:$0xff]
    %v67 = vld [vmem:[%s0 + $0x1a0] sm:$0xff]
    %v68 = vld [vmem:[%s0 + $0x1a8] sm:$0xff]
    %v69 = vld [vmem:[%s0 + $0x1b0] sm:$0xff]
    %v70 = vld [vmem:[%s0 + $0x1b8] sm:$0xff]
    %v71 = vld [vmem:[%s0 + $0x1c0] sm:$0xff]
    %v72 = vld [vmem:[%s0 + $0x1c8] sm:$0xff]
    %v73 = vld [vmem:[%s0 + $0x1d0] sm:$0xff]
    %v74 = vld [vmem:[%s0 + $0x1d8] sm:$0xff]
    %v75 = vld [vmem:[%s0 + $0x1e0] sm:$0xff]
    %v76 = vld [vmem:[%s0 + $0x1e8] sm:$0xff]
    %v77 = vld [vmem:[%s0 + $0x1f0] sm:$0xff]
    %v78 = vld [vmem:[%s0 + $0x1f8] sm:$0xff]
    %vm79 = vcmask 15360
    %v80 = vsel %vm79, %v15, -inf
    %v81 = vsel %vm79, %v16, -inf
    %v82 = vsel %vm79, %v17, -inf
    %v83 = vsel %vm79, %v18, -inf
    %v84 = vsel %vm79, %v19, -inf
    %v85 = vmax.f32 %v80, %v84
    %v86 = vsel %vm79, %v20, -inf
    %v87 = vmax.f32 %v81, %v86
    %v88 = vsel %vm79, %v21, -inf
    %v89 = vmax.f32 %v82, %v88
    %v90 = vsel %vm79, %v22, -inf
    %v91 = vmax.f32 %v83, %v90
    %v92 = vsel %vm79, %v23, -inf
    %v93 = vmax.f32 %v85, %v92
    %v94 = vsel %vm79, %v24, -inf
    %v95 = vmax.f32 %v87, %v94
    %v96 = vsel %vm79, %v25, -inf
    %v97 = vmax.f32 %v89, %v96
    %v98 = vsel %vm79, %v26, -inf
    %v99 = vmax.f32 %v91, %v98
    %v100 = vsel %vm79, %v27, -inf
    %v101 = vmax.f32 %v93, %v100
    %v102 = vsel %vm79, %v28, -inf
    %v103 = vmax.f32 %v95, %v102
    %v104 = vsel %vm79, %v29, -inf
    %v105 = vmax.f32 %v97, %v104
    %v106 = vsel %vm79, %v30, -inf
    %v107 = vmax.f32 %v99, %v106
    %v108 = vsel %vm79, %v31, -inf
    %v109 = vmax.f32 %v101, %v108
    %v110 = vsel %vm79, %v32, -inf
    %v111 = vmax.f32 %v103, %v110
    %v112 = vsel %vm79, %v33, -inf
    %v113 = vmax.f32 %v105, %v112
    %v114 = vsel %vm79, %v34, -inf
    %v115 = vmax.f32 %v107, %v114
    %v116 = vsel %vm79, %v35, -inf
    %v117 = vmax.f32 %v109, %v116
    %v118 = vsel %vm79, %v36, -inf
    %v119 = vmax.f32 %v111, %v118
    %v120 = vsel %vm79, %v37, -inf
    %v121 = vmax.f32 %v113, %v120
    %v122 = vsel %vm79, %v38, -inf
    %v123 = vmax.f32 %v115, %v122
    %v124 = vsel %vm79, %v39, -inf
    %v125 = vmax.f32 %v117, %v124
    %v126 = vsel %vm79, %v40, -inf
    %v127 = vmax.f32 %v119, %v126
    %v128 = vsel %vm79, %v41, -inf
    %v129 = vmax.f32 %v121, %v128
    %v130 = vsel %vm79, %v42, -inf
    %v131 = vmax.f32 %v123, %v130
    %v132 = vsel %vm79, %v43, -inf
    %v133 = vmax.f32 %v125, %v132
    %v134 = vsel %vm79, %v44, -inf
    %v135 = vmax.f32 %v127, %v134
    %v136 = vsel %vm79, %v45, -inf
    %v137 = vmax.f32 %v129, %v136
    %v138 = vsel %vm79, %v46, -inf
    %v139 = vmax.f32 %v131, %v138
    %v140 = vsel %vm79, %v47, -inf
    %v141 = vmax.f32 %v133, %v140
    %v142 = vsel %vm79, %v48, -inf
    %v143 = vmax.f32 %v135, %v142
    %v144 = vsel %vm79, %v49, -inf
    %v145 = vmax.f32 %v137, %v144
    %v146 = vsel %vm79, %v50, -inf
    %v147 = vmax.f32 %v139, %v146
    %v148 = vsel %vm79, %v51, -inf
    %v149 = vmax.f32 %v141, %v148
    %v150 = vsel %vm79, %v52, -inf
    %v151 = vmax.f32 %v143, %v150
    %v152 = vsel %vm79, %v53, -inf
    %v153 = vmax.f32 %v145, %v152
    %v154 = vsel %vm79, %v54, -inf
    %v155 = vmax.f32 %v147, %v154
    %v156 = vsel %vm79, %v55, -inf
    %v157 = vmax.f32 %v149, %v156
    %v158 = vsel %vm79, %v56, -inf
    %v159 = vmax.f32 %v151, %v158
    %v160 = vsel %vm79, %v57, -inf
    %v161 = vmax.f32 %v153, %v160
    %v162 = vsel %vm79, %v58, -inf
    %v163 = vmax.f32 %v155, %v162
    %v164 = vsel %vm79, %v59, -inf
    %v165 = vmax.f32 %v157, %v164
    %v166 = vsel %vm79, %v60, -inf
    %v167 = vmax.f32 %v159, %v166
    %v168 = vsel %vm79, %v61, -inf
    %v169 = vmax.f32 %v161, %v168
    %v170 = vsel %vm79, %v62, -inf
    %v171 = vmax.f32 %v163, %v170
    %v172 = vsel %vm79, %v63, -inf
    %v173 = vmax.f32 %v165, %v172
    %v174 = vsel %vm79, %v64, -inf
    %v175 = vmax.f32 %v167, %v174
    %v176 = vsel %vm79, %v65, -inf
    %v177 = vmax.f32 %v169, %v176
    %v178 = vsel %vm79, %v66, -inf
    %v179 = vmax.f32 %v171, %v178
    %v180 = vsel %vm79, %v67, -inf
    %v181 = vmax.f32 %v173, %v180
    %v182 = vsel %vm79, %v68, -inf
    %v183 = vmax.f32 %v175, %v182
    %v184 = vsel %vm79, %v69, -inf
    %v185 = vmax.f32 %v177, %v184
    %v186 = vsel %vm79, %v70, -inf
    %v187 = vmax.f32 %v179, %v186
    %v188 = vsel %vm79, %v71, -inf
    %v189 = vmax.f32 %v181, %v188
    %v190 = vsel %vm79, %v72, -inf
    %v191 = vmax.f32 %v183, %v190
    %v192 = vsel %vm79, %v73, -inf
    %v193 = vmax.f32 %v185, %v192
    %v194 = vsel %vm79, %v74, -inf
    %v195 = vmax.f32 %v187, %v194
    %v196 = vsel %vm79, %v75, -inf
    %v197 = vmax.f32 %v189, %v196
    %v198 = vsel %vm79, %v76, -inf
    %v199 = vmax.f32 %v191, %v198
    %v200 = vsel %vm79, %v77, -inf
    %v201 = vmax.f32 %v193, %v200
    %v202 = vsel %vm79, %v78, -inf
    %v203 = vmax.f32 %v195, %v202
    %v204 = vmax.f32 %v197, %v199
    %v205 = vmax.f32 %v201, %v203
    %v206 = vmax.f32 %v204, %v205
    %v207 = vrot.slane %v206, 4
    %v208 = vmax.f32 %v206, %v207
    %v209 = vrot.slane %v208, 2
    %v210 = vmax.f32 %v208, %v209
    %v211 = vrot.slane %v210, 1
    %v212 = vmax.f32 %v210, %v211
    %v213 = vsel %vm79, %v212, -inf
    %214 = vmax.xlane.f32.xlu0 %v213
    %v215 = vpop.xlane.xlu0 %214
    %v216 = vld [vmem:[%s1] sm:$0x3]
    %v217 = vrcp.pop %v215
    %v218 = vmul.f32 %v215, %v217
    %v219 = vsub.f32 1.0, %v218
    %v220 = vmul.f32 %v217, %v219
    %v221 = vadd.f32 %v217, %v220
    %vm222 = vweird.f32 %v215
    %vm223 = vweird.f32 %v217
    %vm224 = vmor %vm222, %vm223
    %v225 = vsel %vm224, %v217, %v221
    %v226 = vand.u32 2147483647, %v215
    %vm227 = vcmp.eq.f32.partialorder %v226, 8.507059e+37
    %v228 = vand.u32 %v215, 2147483648
    %v229 = vor.u32 1.1754944e-38, %v228
    %v230 = vsel %vm227, %v229, %v225
    %v231 = vmul.f32 1.0, %v230
    %v232 = vmul.f32 %v216, %v231
    %234 = vset.pattern.permute.xlu0 0
    %235 = vperm.xlu0 %234, %v15
    %v236 = vpop.permute.xlu0 %235
    %239 = vset.pattern.permute.xlu0 0
    %240 = vperm.xlu0 %239, %v16
    %v241 = vpop.permute.xlu0 %240
    %244 = vset.pattern.permute.xlu0 0
    %245 = vperm.xlu0 %244, %v17
    %v246 = vpop.permute.xlu0 %245
    %249 = vset.pattern.permute.xlu0 0
    %250 = vperm.xlu0 %249, %v18
    %v251 = vpop.permute.xlu0 %250
    %254 = vset.pattern.permute.xlu0 0
    %255 = vperm.xlu0 %254, %v19
    %v256 = vpop.permute.xlu0 %255
    %259 = vset.pattern.permute.xlu0 0
    %260 = vperm.xlu0 %259, %v20
    %v261 = vpop.permute.xlu0 %260
    %264 = vset.pattern.permute.xlu0 0
    %265 = vperm.xlu0 %264, %v21
    %v266 = vpop.permute.xlu0 %265
    %269 = vset.pattern.permute.xlu0 0
    %270 = vperm.xlu0 %269, %v22
    %v271 = vpop.permute.xlu0 %270
    %274 = vset.pattern.permute.xlu0 0
    %275 = vperm.xlu0 %274, %v23
    %v276 = vpop.permute.xlu0 %275
    %279 = vset.pattern.permute.xlu0 0
    %280 = vperm.xlu0 %279, %v24
    %v281 = vpop.permute.xlu0 %280
    %284 = vset.pattern.permute.xlu0 0
    %285 = vperm.xlu0 %284, %v25
    %v286 = vpop.permute.xlu0 %285
    %289 = vset.pattern.permute.xlu0 0
    %290 = vperm.xlu0 %289, %v26
    %v291 = vpop.permute.xlu0 %290
    %294 = vset.pattern.permute.xlu0 0
    %295 = vperm.xlu0 %294, %v27
    %v296 = vpop.permute.xlu0 %295
    %299 = vset.pattern.permute.xlu0 0
    %300 = vperm.xlu0 %299, %v28
    %v301 = vpop.permute.xlu0 %300
    %304 = vset.pattern.permute.xlu0 0
    %305 = vperm.xlu0 %304, %v29
    %v306 = vpop.permute.xlu0 %305
    %309 = vset.pattern.permute.xlu0 0
    %310 = vperm.xlu0 %309, %v30
    %v311 = vpop.permute.xlu0 %310
    %314 = vset.pattern.permute.xlu0 0
    %315 = vperm.xlu0 %314, %v31
    %v316 = vpop.permute.xlu0 %315
    %319 = vset.pattern.permute.xlu0 0
    %320 = vperm.xlu0 %319, %v32
    %v321 = vpop.permute.xlu0 %320
    %324 = vset.pattern.permute.xlu0 0
    %325 = vperm.xlu0 %324, %v33
    %v326 = vpop.permute.xlu0 %325
    %329 = vset.pattern.permute.xlu0 0
    %330 = vperm.xlu0 %329, %v34
    %v331 = vpop.permute.xlu0 %330
    %334 = vset.pattern.permute.xlu0 0
    %335 = vperm.xlu0 %334, %v35
    %v336 = vpop.permute.xlu0 %335
    %339 = vset.pattern.permute.xlu0 0
    %340 = vperm.xlu0 %339, %v36
    %v341 = vpop.permute.xlu0 %340
    %344 = vset.pattern.permute.xlu0 0
    %345 = vperm.xlu0 %344, %v37
    %v346 = vpop.permute.xlu0 %345
    %349 = vset.pattern.permute.xlu0 0
    %350 = vperm.xlu0 %349, %v38
    %v351 = vpop.permute.xlu0 %350
    %354 = vset.pattern.permute.xlu0 0
    %355 = vperm.xlu0 %354, %v39
    %v356 = vpop.permute.xlu0 %355
    %359 = vset.pattern.permute.xlu0 0
    %360 = vperm.xlu0 %359, %v40
    %v361 = vpop.permute.xlu0 %360
    %364 = vset.pattern.permute.xlu0 0
    %365 = vperm.xlu0 %364, %v41
    %v366 = vpop.permute.xlu0 %365
    %369 = vset.pattern.permute.xlu0 0
    %370 = vperm.xlu0 %369, %v42
    %v371 = vpop.permute.xlu0 %370
    %374 = vset.pattern.permute.xlu0 0
    %375 = vperm.xlu0 %374, %v43
    %v376 = vpop.permute.xlu0 %375
    %379 = vset.pattern.permute.xlu0 0
    %380 = vperm.xlu0 %379, %v44
    %v381 = vpop.permute.xlu0 %380
    %384 = vset.pattern.permute.xlu0 0
    %385 = vperm.xlu0 %384, %v45
    %v386 = vpop.permute.xlu0 %385
    %389 = vset.pattern.permute.xlu0 0
    %390 = vperm.xlu0 %389, %v46
    %v391 = vpop.permute.xlu0 %390
    %394 = vset.pattern.permute.xlu0 0
    %395 = vperm.xlu0 %394, %v47
    %v396 = vpop.permute.xlu0 %395
    %399 = vset.pattern.permute.xlu0 0
    %400 = vperm.xlu0 %399, %v48
    %v401 = vpop.permute.xlu0 %400
    %404 = vset.pattern.permute.xlu0 0
    %405 = vperm.xlu0 %404, %v49
    %v406 = vpop.permute.xlu0 %405
    %409 = vset.pattern.permute.xlu0 0
    %410 = vperm.xlu0 %409, %v50
    %v411 = vpop.permute.xlu0 %410
    %414 = vset.pattern.permute.xlu0 0
    %415 = vperm.xlu0 %414, %v51
    %v416 = vpop.permute.xlu0 %415
    %419 = vset.pattern.permute.xlu0 0
    %420 = vperm.xlu0 %419, %v52
    %v421 = vpop.permute.xlu0 %420
    %424 = vset.pattern.permute.xlu0 0
    %425 = vperm.xlu0 %424, %v53
    %v426 = vpop.permute.xlu0 %425
    %429 = vset.pattern.permute.xlu0 0
    %430 = vperm.xlu0 %429, %v54
    %v431 = vpop.permute.xlu0 %430
    %434 = vset.pattern.permute.xlu0 0
    %435 = vperm.xlu0 %434, %v55
    %v436 = vpop.permute.xlu0 %435
    %439 = vset.pattern.permute.xlu0 0
    %440 = vperm.xlu0 %439, %v56
    %v441 = vpop.permute.xlu0 %440
    %444 = vset.pattern.permute.xlu0 0
    %445 = vperm.xlu0 %444, %v57
    %v446 = vpop.permute.xlu0 %445
    %449 = vset.pattern.permute.xlu0 0
    %450 = vperm.xlu0 %449, %v58
    %v451 = vpop.permute.xlu0 %450
    %454 = vset.pattern.permute.xlu0 0
    %455 = vperm.xlu0 %454, %v59
    %v456 = vpop.permute.xlu0 %455
    %459 = vset.pattern.permute.xlu0 0
    %460 = vperm.xlu0 %459, %v60
    %v461 = vpop.permute.xlu0 %460
    %464 = vset.pattern.permute.xlu0 0
    %465 = vperm.xlu0 %464, %v61
    %v466 = vpop.permute.xlu0 %465
    %469 = vset.pattern.permute.xlu0 0
    %470 = vperm.xlu0 %469, %v62
    %v471 = vpop.permute.xlu0 %470
    %474 = vset.pattern.permute.xlu0 0
    %475 = vperm.xlu0 %474, %v63
    %v476 = vpop.permute.xlu0 %475
    %479 = vset.pattern.permute.xlu0 0
    %480 = vperm.xlu0 %479, %v64
    %v481 = vpop.permute.xlu0 %480
    %484 = vset.pattern.permute.xlu0 0
    %485 = vperm.xlu0 %484, %v65
    %v486 = vpop.permute.xlu0 %485
    %489 = vset.pattern.permute.xlu0 0
    %490 = vperm.xlu0 %489, %v66
    %v491 = vpop.permute.xlu0 %490
    %494 = vset.pattern.permute.xlu0 0
    %495 = vperm.xlu0 %494, %v67
    %v496 = vpop.permute.xlu0 %495
    %499 = vset.pattern.permute.xlu0 0
    %500 = vperm.xlu0 %499, %v68
    %v501 = vpop.permute.xlu0 %500
    %504 = vset.pattern.permute.xlu0 0
    %505 = vperm.xlu0 %504, %v69
    %v506 = vpop.permute.xlu0 %505
    %509 = vset.pattern.permute.xlu0 0
    %510 = vperm.xlu0 %509, %v70
    %v511 = vpop.permute.xlu0 %510
    %514 = vset.pattern.permute.xlu0 0
    %515 = vperm.xlu0 %514, %v71
    %v516 = vpop.permute.xlu0 %515
    %519 = vset.pattern.permute.xlu0 0
    %520 = vperm.xlu0 %519, %v72
    %v521 = vpop.permute.xlu0 %520
    %524 = vset.pattern.permute.xlu0 0
    %525 = vperm.xlu0 %524, %v73
    %v526 = vpop.permute.xlu0 %525
    %529 = vset.pattern.permute.xlu0 0
    %530 = vperm.xlu0 %529, %v74
    %v531 = vpop.permute.xlu0 %530
    %534 = vset.pattern.permute.xlu0 0
    %535 = vperm.xlu0 %534, %v75
    %v536 = vpop.permute.xlu0 %535
    %539 = vset.pattern.permute.xlu0 0
    %540 = vperm.xlu0 %539, %v76
    %v541 = vpop.permute.xlu0 %540
    %544 = vset.pattern.permute.xlu0 0
    %545 = vperm.xlu0 %544, %v77
    %v546 = vpop.permute.xlu0 %545
    %549 = vset.pattern.permute.xlu0 0
    %550 = vperm.xlu0 %549, %v78
    %v551 = vpop.permute.xlu0 %550
    %v553 = vperm.slane %v232, 0
    %v554 = vmul.f32 %v236, %v553
    %v555 = vmul.f32 %v241, %v553
    %v556 = vmul.f32 %v246, %v553
    %v557 = vmul.f32 %v251, %v553
    %v558 = vmul.f32 %v256, %v553
    %v559 = vmul.f32 %v261, %v553
    %v560 = vmul.f32 %v266, %v553
    %v561 = vmul.f32 %v271, %v553
    %v562 = vmul.f32 %v276, %v553
    %v563 = vmul.f32 %v281, %v553
    %v564 = vmul.f32 %v286, %v553
    %v565 = vmul.f32 %v291, %v553
    %v566 = vmul.f32 %v296, %v553
    %v567 = vmul.f32 %v301, %v553
    %v568 = vmul.f32 %v306, %v553
    %v569 = vmul.f32 %v311, %v553
    %v570 = vmul.f32 %v316, %v553
    %v571 = vmul.f32 %v321, %v553
    %v572 = vmul.f32 %v326, %v553
    %v573 = vmul.f32 %v331, %v553
    %v574 = vmul.f32 %v336, %v553
    %v575 = vmul.f32 %v341, %v553
    %v576 = vmul.f32 %v346, %v553
    %v577 = vmul.f32 %v351, %v553
    %v578 = vmul.f32 %v356, %v553
    %v579 = vmul.f32 %v361, %v553
    %v580 = vmul.f32 %v366, %v553
    %v581 = vmul.f32 %v371, %v553
    %v582 = vmul.f32 %v376, %v553
    %v583 = vmul.f32 %v381, %v553
    %v584 = vmul.f32 %v386, %v553
    %v585 = vmul.f32 %v391, %v553
    %v586 = vmul.f32 %v396, %v553
    %v587 = vmul.f32 %v401, %v553
    %v588 = vmul.f32 %v406, %v553
    %v589 = vmul.f32 %v411, %v553
    %v590 = vmul.f32 %v416, %v553
    %v591 = vmul.f32 %v421, %v553
    %v592 = vmul.f32 %v426, %v553
    %v593 = vmul.f32 %v431, %v553
    %v594 = vmul.f32 %v436, %v553
    %v595 = vmul.f32 %v441, %v553
    %v596 = vmul.f32 %v446, %v553
    %v597 = vmul.f32 %v451, %v553
    %v598 = vmul.f32 %v456, %v553
    %v599 = vmul.f32 %v461, %v553
    %v600 = vmul.f32 %v466, %v553
    %v601 = vmul.f32 %v471, %v553
    %v602 = vmul.f32 %v476, %v553
    %v603 = vmul.f32 %v481, %v553
    %v604 = vmul.f32 %v486, %v553
    %v605 = vmul.f32 %v491, %v553
    %v606 = vmul.f32 %v496, %v553
    %v607 = vmul.f32 %v501, %v553
    %v608 = vmul.f32 %v506, %v553
    %v609 = vmul.f32 %v511, %v553
    %v610 = vmul.f32 %v516, %v553
    %v611 = vmul.f32 %v521, %v553
    %v612 = vmul.f32 %v526, %v553
    %v613 = vmul.f32 %v531, %v553
    %v614 = vmul.f32 %v536, %v553
    %v615 = vmul.f32 %v541, %v553
    %v616 = vmul.f32 %v546, %v553
    %v617 = vmul.f32 %v551, %v553
    %618 = vset.pattern.permute.xlu0 1
    %619 = vperm.xlu0 %618, %v15
    %v620 = vpop.permute.xlu0 %619
    %622 = vset.pattern.permute.xlu0 1
    %623 = vperm.xlu0 %622, %v16
    %v624 = vpop.permute.xlu0 %623
    %626 = vset.pattern.permute.xlu0 1
    %627 = vperm.xlu0 %626, %v17
    %v628 = vpop.permute.xlu0 %627
    %630 = vset.pattern.permute.xlu0 1
    %631 = vperm.xlu0 %630, %v18
    %v632 = vpop.permute.xlu0 %631
    %634 = vset.pattern.permute.xlu0 1
    %635 = vperm.xlu0 %634, %v19
    %v636 = vpop.permute.xlu0 %635
    %638 = vset.pattern.permute.xlu0 1
    %639 = vperm.xlu0 %638, %v20
    %v640 = vpop.permute.xlu0 %639
    %642 = vset.pattern.permute.xlu0 1
    %643 = vperm.xlu0 %642, %v21
    %v644 = vpop.permute.xlu0 %643
    %646 = vset.pattern.permute.xlu0 1
    %647 = vperm.xlu0 %646, %v22
    %v648 = vpop.permute.xlu0 %647
    %650 = vset.pattern.permute.xlu0 1
    %651 = vperm.xlu0 %650, %v23
    %v652 = vpop.permute.xlu0 %651
    %654 = vset.pattern.permute.xlu0 1
    %655 = vperm.xlu0 %654, %v24
    %v656 = vpop.permute.xlu0 %655
    %658 = vset.pattern.permute.xlu0 1
    %659 = vperm.xlu0 %658, %v25
    %v660 = vpop.permute.xlu0 %659
    %662 = vset.pattern.permute.xlu0 1
    %663 = vperm.xlu0 %662, %v26
    %v664 = vpop.permute.xlu0 %663
    %666 = vset.pattern.permute.xlu0 1
    %667 = vperm.xlu0 %666, %v27
    %v668 = vpop.permute.xlu0 %667
    %670 = vset.pattern.permute.xlu0 1
    %671 = vperm.xlu0 %670, %v28
    %v672 = vpop.permute.xlu0 %671
    %674 = vset.pattern.permute.xlu0 1
    %675 = vperm.xlu0 %674, %v29
    %v676 = vpop.permute.xlu0 %675
    %678 = vset.pattern.permute.xlu0 1
    %679 = vperm.xlu0 %678, %v30
    %v680 = vpop.permute.xlu0 %679
    %682 = vset.pattern.permute.xlu0 1
    %683 = vperm.xlu0 %682, %v31
    %v684 = vpop.permute.xlu0 %683
    %686 = vset.pattern.permute.xlu0 1
    %687 = vperm.xlu0 %686, %v32
    %v688 = vpop.permute.xlu0 %687
    %690 = vset.pattern.permute.xlu0 1
    %691 = vperm.xlu0 %690, %v33
    %v692 = vpop.permute.xlu0 %691
    %694 = vset.pattern.permute.xlu0 1
    %695 = vperm.xlu0 %694, %v34
    %v696 = vpop.permute.xlu0 %695
    %698 = vset.pattern.permute.xlu0 1
    %699 = vperm.xlu0 %698, %v35
    %v700 = vpop.permute.xlu0 %699
    %702 = vset.pattern.permute.xlu0 1
    %703 = vperm.xlu0 %702, %v36
    %v704 = vpop.permute.xlu0 %703
    %706 = vset.pattern.permute.xlu0 1
    %707 = vperm.xlu0 %706, %v37
    %v708 = vpop.permute.xlu0 %707
    %710 = vset.pattern.permute.xlu0 1
    %711 = vperm.xlu0 %710, %v38
    %v712 = vpop.permute.xlu0 %711
    %714 = vset.pattern.permute.xlu0 1
    %715 = vperm.xlu0 %714, %v39
    %v716 = vpop.permute.xlu0 %715
    %718 = vset.pattern.permute.xlu0 1
    %719 = vperm.xlu0 %718, %v40
    %v720 = vpop.permute.xlu0 %719
    %722 = vset.pattern.permute.xlu0 1
    %723 = vperm.xlu0 %722, %v41
    %v724 = vpop.permute.xlu0 %723
    %726 = vset.pattern.permute.xlu0 1
    %727 = vperm.xlu0 %726, %v42
    %v728 = vpop.permute.xlu0 %727
    %730 = vset.pattern.permute.xlu0 1
    %731 = vperm.xlu0 %730, %v43
    %v732 = vpop.permute.xlu0 %731
    %734 = vset.pattern.permute.xlu0 1
    %735 = vperm.xlu0 %734, %v44
    %v736 = vpop.permute.xlu0 %735
    %738 = vset.pattern.permute.xlu0 1
    %739 = vperm.xlu0 %738, %v45
    %v740 = vpop.permute.xlu0 %739
    %742 = vset.pattern.permute.xlu0 1
    %743 = vperm.xlu0 %742, %v46
    %v744 = vpop.permute.xlu0 %743
    %746 = vset.pattern.permute.xlu0 1
    %747 = vperm.xlu0 %746, %v47
    %v748 = vpop.permute.xlu0 %747
    %750 = vset.pattern.permute.xlu0 1
    %751 = vperm.xlu0 %750, %v48
    %v752 = vpop.permute.xlu0 %751
    %754 = vset.pattern.permute.xlu0 1
    %755 = vperm.xlu0 %754, %v49
    %v756 = vpop.permute.xlu0 %755
    %758 = vset.pattern.permute.xlu0 1
    %759 = vperm.xlu0 %758, %v50
    %v760 = vpop.permute.xlu0 %759
    %762 = vset.pattern.permute.xlu0 1
    %763 = vperm.xlu0 %762, %v51
    %v764 = vpop.permute.xlu0 %763
    %766 = vset.pattern.permute.xlu0 1
    %767 = vperm.xlu0 %766, %v52
    %v768 = vpop.permute.xlu0 %767
    %770 = vset.pattern.permute.xlu0 1
    %771 = vperm.xlu0 %770, %v53
    %v772 = vpop.permute.xlu0 %771
    %774 = vset.pattern.permute.xlu0 1
    %775 = vperm.xlu0 %774, %v54
    %v776 = vpop.permute.xlu0 %775
    %778 = vset.pattern.permute.xlu0 1
    %779 = vperm.xlu0 %778, %v55
    %v780 = vpop.permute.xlu0 %779
    %782 = vset.pattern.permute.xlu0 1
    %783 = vperm.xlu0 %782, %v56
    %v784 = vpop.permute.xlu0 %783
    %786 = vset.pattern.permute.xlu0 1
    %787 = vperm.xlu0 %786, %v57
    %v788 = vpop.permute.xlu0 %787
    %790 = vset.pattern.permute.xlu0 1
    %791 = vperm.xlu0 %790, %v58
    %v792 = vpop.permute.xlu0 %791
    %794 = vset.pattern.permute.xlu0 1
    %795 = vperm.xlu0 %794, %v59
    %v796 = vpop.permute.xlu0 %795
    %798 = vset.pattern.permute.xlu0 1
    %799 = vperm.xlu0 %798, %v60
    %v800 = vpop.permute.xlu0 %799
    %802 = vset.pattern.permute.xlu0 1
    %803 = vperm.xlu0 %802, %v61
    %v804 = vpop.permute.xlu0 %803
    %806 = vset.pattern.permute.xlu0 1
    %807 = vperm.xlu0 %806, %v62
    %v808 = vpop.permute.xlu0 %807
    %810 = vset.pattern.permute.xlu0 1
    %811 = vperm.xlu0 %810, %v63
    %v812 = vpop.permute.xlu0 %811
    %814 = vset.pattern.permute.xlu0 1
    %815 = vperm.xlu0 %814, %v64
    %v816 = vpop.permute.xlu0 %815
    %818 = vset.pattern.permute.xlu0 1
    %819 = vperm.xlu0 %818, %v65
    %v820 = vpop.permute.xlu0 %819
    %822 = vset.pattern.permute.xlu0 1
    %823 = vperm.xlu0 %822, %v66
    %v824 = vpop.permute.xlu0 %823
    %826 = vset.pattern.permute.xlu0 1
    %827 = vperm.xlu0 %826, %v67
    %v828 = vpop.permute.xlu0 %827
    %830 = vset.pattern.permute.xlu0 1
    %831 = vperm.xlu0 %830, %v68
    %v832 = vpop.permute.xlu0 %831
    %834 = vset.pattern.permute.xlu0 1
    %835 = vperm.xlu0 %834, %v69
    %v836 = vpop.permute.xlu0 %835
    %838 = vset.pattern.permute.xlu0 1
    %839 = vperm.xlu0 %838, %v70
    %v840 = vpop.permute.xlu0 %839
    %842 = vset.pattern.permute.xlu0 1
    %843 = vperm.xlu0 %842, %v71
    %v844 = vpop.permute.xlu0 %843
    %846 = vset.pattern.permute.xlu0 1
    %847 = vperm.xlu0 %846, %v72
    %v848 = vpop.permute.xlu0 %847
    %850 = vset.pattern.permute.xlu0 1
    %851 = vperm.xlu0 %850, %v73
    %v852 = vpop.permute.xlu0 %851
    %854 = vset.pattern.permute.xlu0 1
    %855 = vperm.xlu0 %854, %v74
    %v856 = vpop.permute.xlu0 %855
    %858 = vset.pattern.permute.xlu0 1
    %859 = vperm.xlu0 %858, %v75
    %v860 = vpop.permute.xlu0 %859
    %862 = vset.pattern.permute.xlu0 1
    %863 = vperm.xlu0 %862, %v76
    %v864 = vpop.permute.xlu0 %863
    %866 = vset.pattern.permute.xlu0 1
    %867 = vperm.xlu0 %866, %v77
    %v868 = vpop.permute.xlu0 %867
    %870 = vset.pattern.permute.xlu0 1
    %871 = vperm.xlu0 %870, %v78
    %v872 = vpop.permute.xlu0 %871
    %v874 = vperm.slane %v232, 1
    %v875 = vmul.f32 %v620, %v874
    %v876 = vmul.f32 %v624, %v874
    %v877 = vmul.f32 %v628, %v874
    %v878 = vmul.f32 %v632, %v874
    %v879 = vmul.f32 %v636, %v874
    %v880 = vmul.f32 %v640, %v874
    %v881 = vmul.f32 %v644, %v874
    %v882 = vmul.f32 %v648, %v874
    %v883 = vmul.f32 %v652, %v874
    %v884 = vmul.f32 %v656, %v874
    %v885 = vmul.f32 %v660, %v874
    %v886 = vmul.f32 %v664, %v874
    %v887 = vmul.f32 %v668, %v874
    %v888 = vmul.f32 %v672, %v874
    %v889 = vmul.f32 %v676, %v874
    %v890 = vmul.f32 %v680, %v874
    %v891 = vmul.f32 %v684, %v874
    %v892 = vmul.f32 %v688, %v874
    %v893 = vmul.f32 %v692, %v874
    %v894 = vmul.f32 %v696, %v874
    %v895 = vmul.f32 %v700, %v874
    %v896 = vmul.f32 %v704, %v874
    %v897 = vmul.f32 %v708, %v874
    %v898 = vmul.f32 %v712, %v874
    %v899 = vmul.f32 %v716, %v874
    %v900 = vmul.f32 %v720, %v874
    %v901 = vmul.f32 %v724, %v874
    %v902 = vmul.f32 %v728, %v874
    %v903 = vmul.f32 %v732, %v874
    %v904 = vmul.f32 %v736, %v874
    %v905 = vmul.f32 %v740, %v874
    %v906 = vmul.f32 %v744, %v874
    %v907 = vmul.f32 %v748, %v874
    %v908 = vmul.f32 %v752, %v874
    %v909 = vmul.f32 %v756, %v874
    %v910 = vmul.f32 %v760, %v874
    %v911 = vmul.f32 %v764, %v874
    %v912 = vmul.f32 %v768, %v874
    %v913 = vmul.f32 %v772, %v874
    %v914 = vmul.f32 %v776, %v874
    %v915 = vmul.f32 %v780, %v874
    %v916 = vmul.f32 %v784, %v874
    %v917 = vmul.f32 %v788, %v874
    %v918 = vmul.f32 %v792, %v874
    %v919 = vmul.f32 %v796, %v874
    %v920 = vmul.f32 %v800, %v874
    %v921 = vmul.f32 %v804, %v874
    %v922 = vmul.f32 %v808, %v874
    %v923 = vmul.f32 %v812, %v874
    %v924 = vmul.f32 %v816, %v874
    %v925 = vmul.f32 %v820, %v874
    %v926 = vmul.f32 %v824, %v874
    %v927 = vmul.f32 %v828, %v874
    %v928 = vmul.f32 %v832, %v874
    %v929 = vmul.f32 %v836, %v874
    %v930 = vmul.f32 %v840, %v874
    %v931 = vmul.f32 %v844, %v874
    %v932 = vmul.f32 %v848, %v874
    %v933 = vmul.f32 %v852, %v874
    %v934 = vmul.f32 %v856, %v874
    %v935 = vmul.f32 %v860, %v874
    %v936 = vmul.f32 %v864, %v874
    %v937 = vmul.f32 %v868, %v874
    %v938 = vmul.f32 %v872, %v874
    %v939 = vadd.f32 %v554, %v875
    %v940 = vadd.f32 %v555, %v876
    %v941 = vadd.f32 %v556, %v877
    %v942 = vadd.f32 %v557, %v878
    %v943 = vadd.f32 %v558, %v879
    %v944 = vadd.f32 %v559, %v880
    %v945 = vadd.f32 %v560, %v881
    %v946 = vadd.f32 %v561, %v882
    %v947 = vadd.f32 %v562, %v883
    %v948 = vadd.f32 %v563, %v884
    %v949 = vadd.f32 %v564, %v885
    %v950 = vadd.f32 %v565, %v886
    %v951 = vadd.f32 %v566, %v887
    %v952 = vadd.f32 %v567, %v888
    %v953 = vadd.f32 %v568, %v889
    %v954 = vadd.f32 %v569, %v890
    %v955 = vadd.f32 %v570, %v891
    %v956 = vadd.f32 %v571, %v892
    %v957 = vadd.f32 %v572, %v893
    %v958 = vadd.f32 %v573, %v894
    %v959 = vadd.f32 %v574, %v895
    %v960 = vadd.f32 %v575, %v896
    %v961 = vadd.f32 %v576, %v897
    %v962 = vadd.f32 %v577, %v898
    %v963 = vadd.f32 %v578, %v899
    %v964 = vadd.f32 %v579, %v900
    %v965 = vadd.f32 %v580, %v901
    %v966 = vadd.f32 %v581, %v902
    %v967 = vadd.f32 %v582, %v903
    %v968 = vadd.f32 %v583, %v904
    %v969 = vadd.f32 %v584, %v905
    %v970 = vadd.f32 %v585, %v906
    %v971 = vadd.f32 %v586, %v907
    %v972 = vadd.f32 %v587, %v908
    %v973 = vadd.f32 %v588, %v909
    %v974 = vadd.f32 %v589, %v910
    %v975 = vadd.f32 %v590, %v911
    %v976 = vadd.f32 %v591, %v912
    %v977 = vadd.f32 %v592, %v913
    %v978 = vadd.f32 %v593, %v914
    %v979 = vadd.f32 %v594, %v915
    %v980 = vadd.f32 %v595, %v916
    %v981 = vadd.f32 %v596, %v917
    %v982 = vadd.f32 %v597, %v918
    %v983 = vadd.f32 %v598, %v919
    %v984 = vadd.f32 %v599, %v920
    %v985 = vadd.f32 %v600, %v921
    %v986 = vadd.f32 %v601, %v922
    %v987 = vadd.f32 %v602, %v923
    %v988 = vadd.f32 %v603, %v924
    %v989 = vadd.f32 %v604, %v925
    %v990 = vadd.f32 %v605, %v926
    %v991 = vadd.f32 %v606, %v927
    %v992 = vadd.f32 %v607, %v928
    %v993 = vadd.f32 %v608, %v929
    %v994 = vadd.f32 %v609, %v930
    %v995 = vadd.f32 %v610, %v931
    %v996 = vadd.f32 %v611, %v932
    %v997 = vadd.f32 %v612, %v933
    %v998 = vadd.f32 %v613, %v934
    %v999 = vadd.f32 %v614, %v935
    %v1000 = vadd.f32 %v615, %v936
    %v1001 = vadd.f32 %v616, %v937
    %v1002 = vadd.f32 %v617, %v938
    %v1003 = vld [vmem:[%s2] sm:$0x1]
    %v1005 = vperm.slane %v1003, 0
    %v1007 = vadd.f32 %v939, %v1005
    %v1008 = vadd.f32 %v940, %v1005
    %v1009 = vadd.f32 %v941, %v1005
    %v1010 = vadd.f32 %v942, %v1005
    %v1011 = vadd.f32 %v943, %v1005
    %v1012 = vadd.f32 %v944, %v1005
    %v1013 = vadd.f32 %v945, %v1005
    %v1014 = vadd.f32 %v946, %v1005
    %v1015 = vadd.f32 %v947, %v1005
    %v1016 = vadd.f32 %v948, %v1005
    %v1017 = vadd.f32 %v949, %v1005
    %v1018 = vadd.f32 %v950, %v1005
    %v1019 = vadd.f32 %v951, %v1005
    %v1020 = vadd.f32 %v952, %v1005
    %v1021 = vadd.f32 %v953, %v1005
    %v1022 = vadd.f32 %v954, %v1005
    %v1023 = vadd.f32 %v955, %v1005
    %v1024 = vadd.f32 %v956, %v1005
    %v1025 = vadd.f32 %v957, %v1005
    %v1026 = vadd.f32 %v958, %v1005
    %v1027 = vadd.f32 %v959, %v1005
    %v1028 = vadd.f32 %v960, %v1005
    %v1029 = vadd.f32 %v961, %v1005
    %v1030 = vadd.f32 %v962, %v1005
    %v1031 = vadd.f32 %v963, %v1005
    %v1032 = vadd.f32 %v964, %v1005
    %v1033 = vadd.f32 %v965, %v1005
    %v1034 = vadd.f32 %v966, %v1005
    %v1035 = vadd.f32 %v967, %v1005
    %v1036 = vadd.f32 %v968, %v1005
    %v1037 = vadd.f32 %v969, %v1005
    %v1038 = vadd.f32 %v970, %v1005
    %v1039 = vadd.f32 %v971, %v1005
    %v1040 = vadd.f32 %v972, %v1005
    %v1041 = vadd.f32 %v973, %v1005
    %v1042 = vadd.f32 %v974, %v1005
    %v1043 = vadd.f32 %v975, %v1005
    %v1044 = vadd.f32 %v976, %v1005
    %v1045 = vadd.f32 %v977, %v1005
    %v1046 = vadd.f32 %v978, %v1005
    %v1047 = vadd.f32 %v979, %v1005
    %v1048 = vadd.f32 %v980, %v1005
    %v1049 = vadd.f32 %v981, %v1005
    %v1050 = vadd.f32 %v982, %v1005
    %v1051 = vadd.f32 %v983, %v1005
    %v1052 = vadd.f32 %v984, %v1005
    %v1053 = vadd.f32 %v985, %v1005
    %v1054 = vadd.f32 %v986, %v1005
    %v1055 = vadd.f32 %v987, %v1005
    %v1056 = vadd.f32 %v988, %v1005
    %v1057 = vadd.f32 %v989, %v1005
    %v1058 = vadd.f32 %v990, %v1005
    %v1059 = vadd.f32 %v991, %v1005
    %v1060 = vadd.f32 %v992, %v1005
    %v1061 = vadd.f32 %v993, %v1005
    %v1062 = vadd.f32 %v994, %v1005
    %v1063 = vadd.f32 %v995, %v1005
    %v1064 = vadd.f32 %v996, %v1005
    %v1065 = vadd.f32 %v997, %v1005
    %v1066 = vadd.f32 %v998, %v1005
    %v1067 = vadd.f32 %v999, %v1005
    %v1068 = vadd.f32 %v1000, %v1005
    %v1069 = vadd.f32 %v1001, %v1005
    %v1070 = vadd.f32 %v1002, %v1005
    %v1071 = vand.u32 2147483647, %v1007
    %vm1072 = vcmp.le.f32.partialorder %v1071, 0.7853982
    %vm1073 = vcmp.lt.s32.totalorder %v1007, 0
    %v1074 = vand.u32 %v1007, 2139095040
    %v1075 = vshrl.u32 %v1074, 23
    %v1076 = vsub.s32 %v1075, 127
    %v1077 = vand.u32 2147483647, %v1007
    %v1078 = vand.u32 %v1077, 8388607
    %v1079 = vor.u32 %v1078, 8388608
    %v1080 = vsub.s32 0, %v1079
    %v1081 = vadd.s32 %v1076, 1
    %vm1082 = vcmp.gt.s32.totalorder %v1081, 0
    %v1083 = vsel %vm1082, %v1081, 0
    %v1084 = vshrl.u32 %v1083, 5
    %v1085 = vand.u32 %v1083, 31
    %v1086 = vsub.s32 32, %v1085
    %v1087 = vshrl.u32 683565275, %v1086
    %v1088 = vshll.u32 683565275, %v1085
    %v1089 = vshrl.u32 2475754826, %v1086
    %v1090 = vor.u32 %v1088, %v1089
    %v1091 = vshll.u32 2475754826, %v1085
    %v1092 = vshrl.u32 2131351028, %v1086
    %v1093 = vor.u32 %v1091, %v1092
    %v1094 = vshll.u32 2131351028, %v1085
    %v1095 = vshrl.u32 2102212464, %v1086
    %v1096 = vor.u32 %v1094, %v1095
    %v1097 = vshll.u32 2102212464, %v1085
    %v1098 = vshrl.u32 920167782, %v1086
    %v1099 = vor.u32 %v1097, %v1098
    %v1100 = vshll.u32 920167782, %v1085
    %v1101 = vshrl.u32 1326507024, %v1086
    %v1102 = vor.u32 %v1100, %v1101
    %vm1103 = vcmp.lt.s32.totalorder %v1084, 1
    %vm1104 = vcmp.lt.s32.totalorder %v1084, 2
    %vm1105 = vcmp.lt.s32.totalorder %v1084, 3
    %vm1106 = vcmp.lt.s32.totalorder %v1084, 4
    %v1107 = vsel %vm1103, %v1087, %v1090
    %v1108 = vsel %vm1106, %v1096, 2102212464
    %v1109 = vsel %vm1105, %v1093, %v1108
    %v1110 = vsel %vm1104, %v1107, %v1109
    %v1111 = vsel %vm1103, %v1090, %v1093
    %v1112 = vsel %vm1106, %v1099, 920167782
    %v1113 = vsel %vm1105, %v1096, %v1112
    %v1114 = vsel %vm1104, %v1111, %v1113
    %v1115 = vsel %vm1103, %v1093, %v1096
    %v1116 = vsel %vm1106, %v1102, 1326507024
    %v1117 = vsel %vm1105, %v1099, %v1116
    %v1118 = vsel %vm1104, %v1115, %v1117
    %v1119 = vshll.u32 %v1079, 8
    %v1120 = vand.u32 %v1119, 65535
    %v1121 = vshrl.u32 %v1119, 16
    %v1122 = vand.u32 %v1118, 65535
    %v1123 = vshrl.u32 %v1118, 16
    %v1124 = vmul.u32 %v1120, %v1122
    %v1125 = vmul.u32 %v1120, %v1123
    %v1126 = vmul.u32 %v1121, %v1122
    %v1127 = vmul.u32 %v1121, %v1123
    %v1128 = vshll.u32 %v1125, 16
    %v1129 = vshrl.u32 %v1125, 16
    %v1130 = vshll.u32 %v1126, 16
    %v1131 = vshrl.u32 %v1126, 16
    %vm1132 = vc.u32 %v1124, %v1128
    %v1133 = vsel %vm1132, 1, 0
    %v1134 = vadd.s32 %v1124, %v1128
    %v1135 = vadd.s32 %v1127, %v1133
    %vm1136 = vc.u32 %v1134, %v1130
    %v1137 = vsel %vm1136, 1, 0
    %v1138 = vadd.s32 %v1134, %v1130
    %v1139 = vadd.s32 %v1135, %v1137
    %v1140 = vadd.s32 %v1139, %v1129
    %v1141 = vadd.s32 %v1140, %v1131
    %v1142 = vand.u32 %v1119, 65535
    %v1143 = vshrl.u32 %v1119, 16
    %v1144 = vand.u32 %v1114, 65535
    %v1145 = vshrl.u32 %v1114, 16
    %v1146 = vmul.u32 %v1142, %v1144
    %v1147 = vmul.u32 %v1142, %v1145
    %v1148 = vmul.u32 %v1143, %v1144
    %v1149 = vmul.u32 %v1143, %v1145
    %v1150 = vshll.u32 %v1147, 16
    %v1151 = vshrl.u32 %v1147, 16
    %v1152 = vshll.u32 %v1148, 16
    %v1153 = vshrl.u32 %v1148, 16
    %vm1154 = vc.u32 %v1146, %v1150
    %v1155 = vsel %vm1154, 1, 0
    %v1156 = vadd.s32 %v1146, %v1150
    %v1157 = vadd.s32 %v1149, %v1155
    %vm1158 = vc.u32 %v1156, %v1152
    %v1159 = vsel %vm1158, 1, 0
    %v1160 = vadd.s32 %v1156, %v1152
    %v1161 = vadd.s32 %v1157, %v1159
    %v1162 = vadd.s32 %v1161, %v1151
    %v1163 = vadd.s32 %v1162, %v1153
    %v1164 = vmul.u32 %v1119, %v1110
    %v1165 = vadd.s32 %v1141, %v1160
    %vm1166 = vc.u32 %v1141, %v1160
    %v1167 = vadd.s32 %v1163, 1
    %v1168 = vsel %vm1166, %v1167, %v1163
    %v1169 = vadd.s32 %v1164, %v1168
    %v1170 = vadd.s32 %v1169, 536870912
    %v1171 = vshrl.u32 %v1170, 30
    %v1172 = vshll.u32 %v1171, 30
    %v1173 = vsub.s32 %v1169, %v1172
    %vm1174 = vcmp.lt.s32.totalorder %v1173, 0
    %v1175 = vsub.s32 0, %v1173
    %v1176 = vsel %vm1174, %v1175, %v1173
    %v1177 = vclz %v1176
    %v1178 = vsub.s32 %v1177, 2
    %vm1179 = vcmp.gt.s32.totalorder 0, %v1178
    %v1180 = vsel %vm1179, 0, %v1178
    %v1181 = vsub.s32 32, %v1180
    %v1182 = vshll.u32 %v1173, %v1180
    %v1183 = vshrl.u32 %v1165, %v1181
    %v1184 = vor.u32 %v1182, %v1183
    %v1185 = vsub.s32 4294967266, %v1180
    %v1186 = vadd.s32 %v1185, 127
    %v1187 = vshll.u32 %v1186, 23
    %v1188 = vor.u32 4788187, %v1187
    %v1189 = vand.u32 2147483647, %v1188
    %v1191 = vcvt.s32.f32 %v1184
    %v1192 = vmul.f32 %v1191, %v1189
    %v1193 = vxor.u32 %v1192, 2147483648
    %v1194 = vsel %vm1073, %v1193, %v1192
    %v1195 = vsub.s32 4, %v1171
    %v1196 = vsel %vm1073, %v1195, %v1171
    %v1197 = vsel %vm1072, %v1007, %v1194
    %v1198 = vsel %vm1072, 0, %v1196
    %v1199 = vmul.f32 %v1197, %v1197
    %v1200 = vmul.f32 %v1199, -0.001358992
    %v1201 = vadd.f32 %v1200, 0.041655596
    %v1202 = vmul.f32 %v1199, %v1201
    %v1203 = vadd.f32 %v1202, -0.4999988
    %v1204 = vmul.f32 %v1199, %v1203
    %v1205 = vadd.f32 1.0, %v1204
    %v1206 = vmul.f32 %v1197, %v1197
    %v1207 = vmul.f32 %v1206, -0.00019511016
    %v1208 = vadd.f32 %v1207, 0.008332121
    %v1209 = vmul.f32 %v1206, %v1208
    %v1210 = vadd.f32 %v1209, -0.16666654
    %v1211 = vmul.f32 %v1206, %v1210
    %v1212 = vadd.f32 %v1211, 1.0
    %v1213 = vmul.f32 %v1212, %v1197
    %vm1214 = vweird.f32 %v1007
    %v1215 = vadd.s32 %v1198, 3
    %v1216 = vand.u32 %v1215, 3
    %vm1217 = vcmp.lt.s32.totalorder %v1216, 2
    %vm1218 = vcmp.eq.s32.totalorder %v1216, 0
    %v1219 = vxor.u32 %v1213, 2147483648
    %v1220 = vsel %vm1218, %v1205, %v1219
    %vm1221 = vcmp.eq.s32.totalorder %v1216, 2
    %v1222 = vxor.u32 %v1205, 2147483648
    %v1223 = vsel %vm1221, %v1222, %v1213
    %v1224 = vsel %vm1217, %v1220, %v1223
    %v1225 = vsel %vm1214, nan, %v1224
    %v1226 = vand.u32 2147483647, %v1008
    %vm1227 = vcmp.le.f32.partialorder %v1226, 0.7853982
    %vm1228 = vcmp.lt.s32.totalorder %v1008, 0
    %v1229 = vand.u32 %v1008, 2139095040
    %v1230 = vshrl.u32 %v1229, 23
    %v1231 = vsub.s32 %v1230, 127
    %v1232 = vand.u32 2147483647, %v1008
    %v1233 = vand.u32 %v1232, 8388607
    %v1234 = vor.u32 %v1233, 8388608
    %v1235 = vsub.s32 0, %v1234
    %v1236 = vadd.s32 %v1231, 1
    %vm1237 = vcmp.gt.s32.totalorder %v1236, 0
    %v1238 = vsel %vm1237, %v1236, 0
    %v1239 = vshrl.u32 %v1238, 5
    %v1240 = vand.u32 %v1238, 31
    %v1241 = vsub.s32 32, %v1240
    %v1242 = vshrl.u32 683565275, %v1241
    %v1243 = vshll.u32 683565275, %v1240
    %v1244 = vshrl.u32 2475754826, %v1241
    %v1245 = vor.u32 %v1243, %v1244
    %v1246 = vshll.u32 2475754826, %v1240
    %v1247 = vshrl.u32 2131351028, %v1241
    %v1248 = vor.u32 %v1246, %v1247
    %v1249 = vshll.u32 2131351028, %v1240
    %v1250 = vshrl.u32 2102212464, %v1241
    %v1251 = vor.u32 %v1249, %v1250
    %v1252 = vshll.u32 2102212464, %v1240
    %v1253 = vshrl.u32 920167782, %v1241
    %v1254 = vor.u32 %v1252, %v1253
    %v1255 = vshll.u32 920167782, %v1240
    %v1256 = vshrl.u32 1326507024, %v1241
    %v1257 = vor.u32 %v1255, %v1256
    %vm1258 = vcmp.lt.s32.totalorder %v1239, 1
    %vm1259 = vcmp.lt.s32.totalorder %v1239, 2
    %vm1260 = vcmp.lt.s32.totalorder %v1239, 3
    %vm1261 = vcmp.lt.s32.totalorder %v1239, 4
    %v1262 = vsel %vm1258, %v1242, %v1245
    %v1263 = vsel %vm1261, %v1251, 2102212464
    %v1264 = vsel %vm1260, %v1248, %v1263
    %v1265 = vsel %vm1259, %v1262, %v1264
    %v1266 = vsel %vm1258, %v1245, %v1248
    %v1267 = vsel %vm1261, %v1254, 920167782
    %v1268 = vsel %vm1260, %v1251, %v1267
    %v1269 = vsel %vm1259, %v1266, %v1268
    %v1270 = vsel %vm1258, %v1248, %v1251
    %v1271 = vsel %vm1261, %v1257, 1326507024
    %v1272 = vsel %vm1260, %v1254, %v1271
    %v1273 = vsel %vm1259, %v1270, %v1272
    %v1274 = vshll.u32 %v1234, 8
    %v1275 = vand.u32 %v1274, 65535
    %v1276 = vshrl.u32 %v1274, 16
    %v1277 = vand.u32 %v1273, 65535
    %v1278 = vshrl.u32 %v1273, 16
    %v1279 = vmul.u32 %v1275, %v1277
    %v1280 = vmul.u32 %v1275, %v1278
    %v1281 = vmul.u32 %v1276, %v1277
    %v1282 = vmul.u32 %v1276, %v1278
    %v1283 = vshll.u32 %v1280, 16
    %v1284 = vshrl.u32 %v1280, 16
    %v1285 = vshll.u32 %v1281, 16
    %v1286 = vshrl.u32 %v1281, 16
    %vm1287 = vc.u32 %v1279, %v1283
    %v1288 = vsel %vm1287, 1, 0
    %v1289 = vadd.s32 %v1279, %v1283
    %v1290 = vadd.s32 %v1282, %v1288
    %vm1291 = vc.u32 %v1289, %v1285
    %v1292 = vsel %vm1291, 1, 0
    %v1293 = vadd.s32 %v1289, %v1285
    %v1294 = vadd.s32 %v1290, %v1292
    %v1295 = vadd.s32 %v1294, %v1284
    %v1296 = vadd.s32 %v1295, %v1286
    %v1297 = vand.u32 %v1274, 65535
    %v1298 = vshrl.u32 %v1274, 16
    %v1299 = vand.u32 %v1269, 65535
    %v1300 = vshrl.u32 %v1269, 16
    %v1301 = vmul.u32 %v1297, %v1299
    %v1302 = vmul.u32 %v1297, %v1300
    %v1303 = vmul.u32 %v1298, %v1299
    %v1304 = vmul.u32 %v1298, %v1300
    %v1305 = vshll.u32 %v1302, 16
    %v1306 = vshrl.u32 %v1302, 16
    %v1307 = vshll.u32 %v1303, 16
    %v1308 = vshrl.u32 %v1303, 16
    %vm1309 = vc.u32 %v1301, %v1305
    %v1310 = vsel %vm1309, 1, 0
    %v1311 = vadd.s32 %v1301, %v1305
    %v1312 = vadd.s32 %v1304, %v1310
    %vm1313 = vc.u32 %v1311, %v1307
    %v1314 = vsel %vm1313, 1, 0
    %v1315 = vadd.s32 %v1311, %v1307
    %v1316 = vadd.s32 %v1312, %v1314
    %v1317 = vadd.s32 %v1316, %v1306
    %v1318 = vadd.s32 %v1317, %v1308
    %v1319 = vmul.u32 %v1274, %v1265
    %v1320 = vadd.s32 %v1296, %v1315
    %vm1321 = vc.u32 %v1296, %v1315
    %v1322 = vadd.s32 %v1318, 1
    %v1323 = vsel %vm1321, %v1322, %v1318
    %v1324 = vadd.s32 %v1319, %v1323
    %v1325 = vadd.s32 %v1324, 536870912
    %v1326 = vshrl.u32 %v1325, 30
    %v1327 = vshll.u32 %v1326, 30
    %v1328 = vsub.s32 %v1324, %v1327
    %vm1329 = vcmp.lt.s32.totalorder %v1328, 0
    %v1330 = vsub.s32 0, %v1328
    %v1331 = vsel %vm1329, %v1330, %v1328
    %v1332 = vclz %v1331
    %v1333 = vsub.s32 %v1332, 2
    %vm1334 = vcmp.gt.s32.totalorder 0, %v1333
    %v1335 = vsel %vm1334, 0, %v1333
    %v1336 = vsub.s32 32, %v1335
    %v1337 = vshll.u32 %v1328, %v1335
    %v1338 = vshrl.u32 %v1320, %v1336
    %v1339 = vor.u32 %v1337, %v1338
    %v1340 = vsub.s32 4294967266, %v1335
    %v1341 = vadd.s32 %v1340, 127
    %v1342 = vshll.u32 %v1341, 23
    %v1343 = vor.u32 4788187, %v1342
    %v1344 = vand.u32 2147483647, %v1343
    %v1346 = vcvt.s32.f32 %v1339
    %v1347 = vmul.f32 %v1346, %v1344
    %v1348 = vxor.u32 %v1347, 2147483648
    %v1349 = vsel %vm1228, %v1348, %v1347
    %v1350 = vsub.s32 4, %v1326
    %v1351 = vsel %vm1228, %v1350, %v1326
    %v1352 = vsel %vm1227, %v1008, %v1349
    %v1353 = vsel %vm1227, 0, %v1351
    %v1354 = vmul.f32 %v1352, %v1352
    %v1355 = vmul.f32 %v1354, -0.001358992
    %v1356 = vadd.f32 %v1355, 0.041655596
    %v1357 = vmul.f32 %v1354, %v1356
    %v1358 = vadd.f32 %v1357, -0.4999988
    %v1359 = vmul.f32 %v1354, %v1358
    %v1360 = vadd.f32 1.0, %v1359
    %v1361 = vmul.f32 %v1352, %v1352
    %v1362 = vmul.f32 %v1361, -0.00019511016
    %v1363 = vadd.f32 %v1362, 0.008332121
    %v1364 = vmul.f32 %v1361, %v1363
    %v1365 = vadd.f32 %v1364, -0.16666654
    %v1366 = vmul.f32 %v1361, %v1365
    %v1367 = vadd.f32 %v1366, 1.0
    %v1368 = vmul.f32 %v1367, %v1352
    %vm1369 = vweird.f32 %v1008
    %v1370 = vadd.s32 %v1353, 3
    %v1371 = vand.u32 %v1370, 3
    %vm1372 = vcmp.lt.s32.totalorder %v1371, 2
    %vm1373 = vcmp.eq.s32.totalorder %v1371, 0
    %v1374 = vxor.u32 %v1368, 2147483648
    %v1375 = vsel %vm1373, %v1360, %v1374
    %vm1376 = vcmp.eq.s32.totalorder %v1371, 2
    %v1377 = vxor.u32 %v1360, 2147483648
    %v1378 = vsel %vm1376, %v1377, %v1368
    %v1379 = vsel %vm1372, %v1375, %v1378
    %v1380 = vsel %vm1369, nan, %v1379
    %v1381 = vand.u32 2147483647, %v1009
    %vm1382 = vcmp.le.f32.partialorder %v1381, 0.7853982
    %vm1383 = vcmp.lt.s32.totalorder %v1009, 0
    %v1384 = vand.u32 %v1009, 2139095040
    %v1385 = vshrl.u32 %v1384, 23
    %v1386 = vsub.s32 %v1385, 127
    %v1387 = vand.u32 2147483647, %v1009
    %v1388 = vand.u32 %v1387, 8388607
    %v1389 = vor.u32 %v1388, 8388608
    %v1390 = vsub.s32 0, %v1389
    %v1391 = vadd.s32 %v1386, 1
    %vm1392 = vcmp.gt.s32.totalorder %v1391, 0
    %v1393 = vsel %vm1392, %v1391, 0
    %v1394 = vshrl.u32 %v1393, 5
    %v1395 = vand.u32 %v1393, 31
    %v1396 = vsub.s32 32, %v1395
    %v1397 = vshrl.u32 683565275, %v1396
    %v1398 = vshll.u32 683565275, %v1395
    %v1399 = vshrl.u32 2475754826, %v1396
    %v1400 = vor.u32 %v1398, %v1399
    %v1401 = vshll.u32 2475754826, %v1395
    %v1402 = vshrl.u32 2131351028, %v1396
    %v1403 = vor.u32 %v1401, %v1402
    %v1404 = vshll.u32 2131351028, %v1395
    %v1405 = vshrl.u32 2102212464, %v1396
    %v1406 = vor.u32 %v1404, %v1405
    %v1407 = vshll.u32 2102212464, %v1395
    %v1408 = vshrl.u32 920167782, %v1396
    %v1409 = vor.u32 %v1407, %v1408
    %v1410 = vshll.u32 920167782, %v1395
    %v1411 = vshrl.u32 1326507024, %v1396
    %v1412 = vor.u32 %v1410, %v1411
    %vm1413 = vcmp.lt.s32.totalorder %v1394, 1
    %vm1414 = vcmp.lt.s32.totalorder %v1394, 2
    %vm1415 = vcmp.lt.s32.totalorder %v1394, 3
    %vm1416 = vcmp.lt.s32.totalorder %v1394, 4
    %v1417 = vsel %vm1413, %v1397, %v1400
    %v1418 = vsel %vm1416, %v1406, 2102212464
    %v1419 = vsel %vm1415, %v1403, %v1418
    %v1420 = vsel %vm1414, %v1417, %v1419
    %v1421 = vsel %vm1413, %v1400, %v1403
    %v1422 = vsel %vm1416, %v1409, 920167782
    %v1423 = vsel %vm1415, %v1406, %v1422
    %v1424 = vsel %vm1414, %v1421, %v1423
    %v1425 = vsel %vm1413, %v1403, %v1406
    %v1426 = vsel %vm1416, %v1412, 1326507024
    %v1427 = vsel %vm1415, %v1409, %v1426
    %v1428 = vsel %vm1414, %v1425, %v1427
    %v1429 = vshll.u32 %v1389, 8
    %v1430 = vand.u32 %v1429, 65535
    %v1431 = vshrl.u32 %v1429, 16
    %v1432 = vand.u32 %v1428, 65535
    %v1433 = vshrl.u32 %v1428, 16
    %v1434 = vmul.u32 %v1430, %v1432
    %v1435 = vmul.u32 %v1430, %v1433
    %v1436 = vmul.u32 %v1431, %v1432
    %v1437 = vmul.u32 %v1431, %v1433
    %v1438 = vshll.u32 %v1435, 16
    %v1439 = vshrl.u32 %v1435, 16
    %v1440 = vshll.u32 %v1436, 16
    %v1441 = vshrl.u32 %v1436, 16
    %vm1442 = vc.u32 %v1434, %v1438
    %v1443 = vsel %vm1442, 1, 0
    %v1444 = vadd.s32 %v1434, %v1438
    %v1445 = vadd.s32 %v1437, %v1443
    %vm1446 = vc.u32 %v1444, %v1440
    %v1447 = vsel %vm1446, 1, 0
    %v1448 = vadd.s32 %v1444, %v1440
    %v1449 = vadd.s32 %v1445, %v1447
    %v1450 = vadd.s32 %v1449, %v1439
    %v1451 = vadd.s32 %v1450, %v1441
    %v1452 = vand.u32 %v1429, 65535
    %v1453 = vshrl.u32 %v1429, 16
    %v1454 = vand.u32 %v1424, 65535
    %v1455 = vshrl.u32 %v1424, 16
    %v1456 = vmul.u32 %v1452, %v1454
    %v1457 = vmul.u32 %v1452, %v1455
    %v1458 = vmul.u32 %v1453, %v1454
    %v1459 = vmul.u32 %v1453, %v1455
    %v1460 = vshll.u32 %v1457, 16
    %v1461 = vshrl.u32 %v1457, 16
    %v1462 = vshll.u32 %v1458, 16
    %v1463 = vshrl.u32 %v1458, 16
    %vm1464 = vc.u32 %v1456, %v1460
    %v1465 = vsel %vm1464, 1, 0
    %v1466 = vadd.s32 %v1456, %v1460
    %v1467 = vadd.s32 %v1459, %v1465
    %vm1468 = vc.u32 %v1466, %v1462
    %v1469 = vsel %vm1468, 1, 0
    %v1470 = vadd.s32 %v1466, %v1462
    %v1471 = vadd.s32 %v1467, %v1469
    %v1472 = vadd.s32 %v1471, %v1461
    %v1473 = vadd.s32 %v1472, %v1463
    %v1474 = vmul.u32 %v1429, %v1420
    %v1475 = vadd.s32 %v1451, %v1470
    %vm1476 = vc.u32 %v1451, %v1470
    %v1477 = vadd.s32 %v1473, 1
    %v1478 = vsel %vm1476, %v1477, %v1473
    %v1479 = vadd.s32 %v1474, %v1478
    %v1480 = vadd.s32 %v1479, 536870912
    %v1481 = vshrl.u32 %v1480, 30
    %v1482 = vshll.u32 %v1481, 30
    %v1483 = vsub.s32 %v1479, %v1482
    %vm1484 = vcmp.lt.s32.totalorder %v1483, 0
    %v1485 = vsub.s32 0, %v1483
    %v1486 = vsel %vm1484, %v1485, %v1483
    %v1487 = vclz %v1486
    %v1488 = vsub.s32 %v1487, 2
    %vm1489 = vcmp.gt.s32.totalorder 0, %v1488
    %v1490 = vsel %vm1489, 0, %v1488
    %v1491 = vsub.s32 32, %v1490
    %v1492 = vshll.u32 %v1483, %v1490
    %v1493 = vshrl.u32 %v1475, %v1491
    %v1494 = vor.u32 %v1492, %v1493
    %v1495 = vsub.s32 4294967266, %v1490
    %v1496 = vadd.s32 %v1495, 127
    %v1497 = vshll.u32 %v1496, 23
    %v1498 = vor.u32 4788187, %v1497
    %v1499 = vand.u32 2147483647, %v1498
    %v1501 = vcvt.s32.f32 %v1494
    %v1502 = vmul.f32 %v1501, %v1499
    %v1503 = vxor.u32 %v1502, 2147483648
    %v1504 = vsel %vm1383, %v1503, %v1502
    %v1505 = vsub.s32 4, %v1481
    %v1506 = vsel %vm1383, %v1505, %v1481
    %v1507 = vsel %vm1382, %v1009, %v1504
    %v1508 = vsel %vm1382, 0, %v1506
    %v1509 = vmul.f32 %v1507, %v1507
    %v1510 = vmul.f32 %v1509, -0.001358992
    %v1511 = vadd.f32 %v1510, 0.041655596
    %v1512 = vmul.f32 %v1509, %v1511
    %v1513 = vadd.f32 %v1512, -0.4999988
    %v1514 = vmul.f32 %v1509, %v1513
    %v1515 = vadd.f32 1.0, %v1514
    %v1516 = vmul.f32 %v1507, %v1507
    %v1517 = vmul.f32 %v1516, -0.00019511016
    %v1518 = vadd.f32 %v1517, 0.008332121
    %v1519 = vmul.f32 %v1516, %v1518
    %v1520 = vadd.f32 %v1519, -0.16666654
    %v1521 = vmul.f32 %v1516, %v1520
    %v1522 = vadd.f32 %v1521, 1.0
    %v1523 = vmul.f32 %v1522, %v1507
    %vm1524 = vweird.f32 %v1009
    %v1525 = vadd.s32 %v1508, 3
    %v1526 = vand.u32 %v1525, 3
    %vm1527 = vcmp.lt.s32.totalorder %v1526, 2
    %vm1528 = vcmp.eq.s32.totalorder %v1526, 0
    %v1529 = vxor.u32 %v1523, 2147483648
    %v1530 = vsel %vm1528, %v1515, %v1529
    %vm1531 = vcmp.eq.s32.totalorder %v1526, 2
    %v1532 = vxor.u32 %v1515, 2147483648
    %v1533 = vsel %vm1531, %v1532, %v1523
    %v1534 = vsel %vm1527, %v1530, %v1533
    %v1535 = vsel %vm1524, nan, %v1534
    %v1536 = vand.u32 2147483647, %v1010
    %vm1537 = vcmp.le.f32.partialorder %v1536, 0.7853982
    %vm1538 = vcmp.lt.s32.totalorder %v1010, 0
    %v1539 = vand.u32 %v1010, 2139095040
    %v1540 = vshrl.u32 %v1539, 23
    %v1541 = vsub.s32 %v1540, 127
    %v1542 = vand.u32 2147483647, %v1010
    %v1543 = vand.u32 %v1542, 8388607
    %v1544 = vor.u32 %v1543, 8388608
    %v1545 = vsub.s32 0, %v1544
    %v1546 = vadd.s32 %v1541, 1
    %vm1547 = vcmp.gt.s32.totalorder %v1546, 0
    %v1548 = vsel %vm1547, %v1546, 0
    %v1549 = vshrl.u32 %v1548, 5
    %v1550 = vand.u32 %v1548, 31
    %v1551 = vsub.s32 32, %v1550
    %v1552 = vshrl.u32 683565275, %v1551
    %v1553 = vshll.u32 683565275, %v1550
    %v1554 = vshrl.u32 2475754826, %v1551
    %v1555 = vor.u32 %v1553, %v1554
    %v1556 = vshll.u32 2475754826, %v1550
    %v1557 = vshrl.u32 2131351028, %v1551
    %v1558 = vor.u32 %v1556, %v1557
    %v1559 = vshll.u32 2131351028, %v1550
    %v1560 = vshrl.u32 2102212464, %v1551
    %v1561 = vor.u32 %v1559, %v1560
    %v1562 = vshll.u32 2102212464, %v1550
    %v1563 = vshrl.u32 920167782, %v1551
    %v1564 = vor.u32 %v1562, %v1563
    %v1565 = vshll.u32 920167782, %v1550
    %v1566 = vshrl.u32 1326507024, %v1551
    %v1567 = vor.u32 %v1565, %v1566
    %vm1568 = vcmp.lt.s32.totalorder %v1549, 1
    %vm1569 = vcmp.lt.s32.totalorder %v1549, 2
    %vm1570 = vcmp.lt.s32.totalorder %v1549, 3
    %vm1571 = vcmp.lt.s32.totalorder %v1549, 4
    %v1572 = vsel %vm1568, %v1552, %v1555
    %v1573 = vsel %vm1571, %v1561, 2102212464
    %v1574 = vsel %vm1570, %v1558, %v1573
    %v1575 = vsel %vm1569, %v1572, %v1574
    %v1576 = vsel %vm1568, %v1555, %v1558
    %v1577 = vsel %vm1571, %v1564, 920167782
    %v1578 = vsel %vm1570, %v1561, %v1577
    %v1579 = vsel %vm1569, %v1576, %v1578
    %v1580 = vsel %vm1568, %v1558, %v1561
    %v1581 = vsel %vm1571, %v1567, 1326507024
    %v1582 = vsel %vm1570, %v1564, %v1581
    %v1583 = vsel %vm1569, %v1580, %v1582
    %v1584 = vshll.u32 %v1544, 8
    %v1585 = vand.u32 %v1584, 65535
    %v1586 = vshrl.u32 %v1584, 16
    %v1587 = vand.u32 %v1583, 65535
    %v1588 = vshrl.u32 %v1583, 16
    %v1589 = vmul.u32 %v1585, %v1587
    %v1590 = vmul.u32 %v1585, %v1588
    %v1591 = vmul.u32 %v1586, %v1587
    %v1592 = vmul.u32 %v1586, %v1588
    %v1593 = vshll.u32 %v1590, 16
    %v1594 = vshrl.u32 %v1590, 16
    %v1595 = vshll.u32 %v1591, 16
    %v1596 = vshrl.u32 %v1591, 16
    %vm1597 = vc.u32 %v1589, %v1593
    %v1598 = vsel %vm1597, 1, 0
    %v1599 = vadd.s32 %v1589, %v1593
    %v1600 = vadd.s32 %v1592, %v1598
    %vm1601 = vc.u32 %v1599, %v1595
    %v1602 = vsel %vm1601, 1, 0
    %v1603 = vadd.s32 %v1599, %v1595
    %v1604 = vadd.s32 %v1600, %v1602
    %v1605 = vadd.s32 %v1604, %v1594
    %v1606 = vadd.s32 %v1605, %v1596
    %v1607 = vand.u32 %v1584, 65535
    %v1608 = vshrl.u32 %v1584, 16
    %v1609 = vand.u32 %v1579, 65535
    %v1610 = vshrl.u32 %v1579, 16
    %v1611 = vmul.u32 %v1607, %v1609
    %v1612 = vmul.u32 %v1607, %v1610
    %v1613 = vmul.u32 %v1608, %v1609
    %v1614 = vmul.u32 %v1608, %v1610
    %v1615 = vshll.u32 %v1612, 16
    %v1616 = vshrl.u32 %v1612, 16
    %v1617 = vshll.u32 %v1613, 16
    %v1618 = vshrl.u32 %v1613, 16
    %vm1619 = vc.u32 %v1611, %v1615
    %v1620 = vsel %vm1619, 1, 0
    %v1621 = vadd.s32 %v1611, %v1615
    %v1622 = vadd.s32 %v1614, %v1620
    %vm1623 = vc.u32 %v1621, %v1617
    %v1624 = vsel %vm1623, 1, 0
    %v1625 = vadd.s32 %v1621, %v1617
    %v1626 = vadd.s32 %v1622, %v1624
    %v1627 = vadd.s32 %v1626, %v1616
    %v1628 = vadd.s32 %v1627, %v1618
    %v1629 = vmul.u32 %v1584, %v1575
    %v1630 = vadd.s32 %v1606, %v1625
    %vm1631 = vc.u32 %v1606, %v1625
    %v1632 = vadd.s32 %v1628, 1
    %v1633 = vsel %vm1631, %v1632, %v1628
    %v1634 = vadd.s32 %v1629, %v1633
    %v1635 = vadd.s32 %v1634, 536870912
    %v1636 = vshrl.u32 %v1635, 30
    %v1637 = vshll.u32 %v1636, 30
    %v1638 = vsub.s32 %v1634, %v1637
    %vm1639 = vcmp.lt.s32.totalorder %v1638, 0
    %v1640 = vsub.s32 0, %v1638
    %v1641 = vsel %vm1639, %v1640, %v1638
    %v1642 = vclz %v1641
    %v1643 = vsub.s32 %v1642, 2
    %vm1644 = vcmp.gt.s32.totalorder 0, %v1643
    %v1645 = vsel %vm1644, 0, %v1643
    %v1646 = vsub.s32 32, %v1645
    %v1647 = vshll.u32 %v1638, %v1645
    %v1648 = vshrl.u32 %v1630, %v1646
    %v1649 = vor.u32 %v1647, %v1648
    %v1650 = vsub.s32 4294967266, %v1645
    %v1651 = vadd.s32 %v1650, 127
    %v1652 = vshll.u32 %v1651, 23
    %v1653 = vor.u32 4788187, %v1652
    %v1654 = vand.u32 2147483647, %v1653
    %v1656 = vcvt.s32.f32 %v1649
    %v1657 = vmul.f32 %v1656, %v1654
    %v1658 = vxor.u32 %v1657, 2147483648
    %v1659 = vsel %vm1538, %v1658, %v1657
    %v1660 = vsub.s32 4, %v1636
    %v1661 = vsel %vm1538, %v1660, %v1636
    %v1662 = vsel %vm1537, %v1010, %v1659
    %v1663 = vsel %vm1537, 0, %v1661
    %v1664 = vmul.f32 %v1662, %v1662
    %v1665 = vmul.f32 %v1664, -0.001358992
    %v1666 = vadd.f32 %v1665, 0.041655596
    %v1667 = vmul.f32 %v1664, %v1666
    %v1668 = vadd.f32 %v1667, -0.4999988
    %v1669 = vmul.f32 %v1664, %v1668
    %v1670 = vadd.f32 1.0, %v1669
    %v1671 = vmul.f32 %v1662, %v1662
    %v1672 = vmul.f32 %v1671, -0.00019511016
    %v1673 = vadd.f32 %v1672, 0.008332121
    %v1674 = vmul.f32 %v1671, %v1673
    %v1675 = vadd.f32 %v1674, -0.16666654
    %v1676 = vmul.f32 %v1671, %v1675
    %v1677 = vadd.f32 %v1676, 1.0
    %v1678 = vmul.f32 %v1677, %v1662
    %vm1679 = vweird.f32 %v1010
    %v1680 = vadd.s32 %v1663, 3
    %v1681 = vand.u32 %v1680, 3
    %vm1682 = vcmp.lt.s32.totalorder %v1681, 2
    %vm1683 = vcmp.eq.s32.totalorder %v1681, 0
    %v1684 = vxor.u32 %v1678, 2147483648
    %v1685 = vsel %vm1683, %v1670, %v1684
    %vm1686 = vcmp.eq.s32.totalorder %v1681, 2
    %v1687 = vxor.u32 %v1670, 2147483648
    %v1688 = vsel %vm1686, %v1687, %v1678
    %v1689 = vsel %vm1682, %v1685, %v1688
    %v1690 = vsel %vm1679, nan, %v1689
    %v1691 = vand.u32 2147483647, %v1011
    %vm1692 = vcmp.le.f32.partialorder %v1691, 0.7853982
    %vm1693 = vcmp.lt.s32.totalorder %v1011, 0
    %v1694 = vand.u32 %v1011, 2139095040
    %v1695 = vshrl.u32 %v1694, 23
    %v1696 = vsub.s32 %v1695, 127
    %v1697 = vand.u32 2147483647, %v1011
    %v1698 = vand.u32 %v1697, 8388607
    %v1699 = vor.u32 %v1698, 8388608
    %v1700 = vsub.s32 0, %v1699
    %v1701 = vadd.s32 %v1696, 1
    %vm1702 = vcmp.gt.s32.totalorder %v1701, 0
    %v1703 = vsel %vm1702, %v1701, 0
    %v1704 = vshrl.u32 %v1703, 5
    %v1705 = vand.u32 %v1703, 31
    %v1706 = vsub.s32 32, %v1705
    %v1707 = vshrl.u32 683565275, %v1706
    %v1708 = vshll.u32 683565275, %v1705
    %v1709 = vshrl.u32 2475754826, %v1706
    %v1710 = vor.u32 %v1708, %v1709
    %v1711 = vshll.u32 2475754826, %v1705
    %v1712 = vshrl.u32 2131351028, %v1706
    %v1713 = vor.u32 %v1711, %v1712
    %v1714 = vshll.u32 2131351028, %v1705
    %v1715 = vshrl.u32 2102212464, %v1706
    %v1716 = vor.u32 %v1714, %v1715
    %v1717 = vshll.u32 2102212464, %v1705
    %v1718 = vshrl.u32 920167782, %v1706
    %v1719 = vor.u32 %v1717, %v1718
    %v1720 = vshll.u32 920167782, %v1705
    %v1721 = vshrl.u32 1326507024, %v1706
    %v1722 = vor.u32 %v1720, %v1721
    %vm1723 = vcmp.lt.s32.totalorder %v1704, 1
    %vm1724 = vcmp.lt.s32.totalorder %v1704, 2
    %vm1725 = vcmp.lt.s32.totalorder %v1704, 3
    %vm1726 = vcmp.lt.s32.totalorder %v1704, 4
    %v1727 = vsel %vm1723, %v1707, %v1710
    %v1728 = vsel %vm1726, %v1716, 2102212464
    %v1729 = vsel %vm1725, %v1713, %v1728
    %v1730 = vsel %vm1724, %v1727, %v1729
    %v1731 = vsel %vm1723, %v1710, %v1713
    %v1732 = vsel %vm1726, %v1719, 920167782
    %v1733 = vsel %vm1725, %v1716, %v1732
    %v1734 = vsel %vm1724, %v1731, %v1733
    %v1735 = vsel %vm1723, %v1713, %v1716
    %v1736 = vsel %vm1726, %v1722, 1326507024
    %v1737 = vsel %vm1725, %v1719, %v1736
    %v1738 = vsel %vm1724, %v1735, %v1737
    %v1739 = vshll.u32 %v1699, 8
    %v1740 = vand.u32 %v1739, 65535
    %v1741 = vshrl.u32 %v1739, 16
    %v1742 = vand.u32 %v1738, 65535
    %v1743 = vshrl.u32 %v1738, 16
    %v1744 = vmul.u32 %v1740, %v1742
    %v1745 = vmul.u32 %v1740, %v1743
    %v1746 = vmul.u32 %v1741, %v1742
    %v1747 = vmul.u32 %v1741, %v1743
    %v1748 = vshll.u32 %v1745, 16
    %v1749 = vshrl.u32 %v1745, 16
    %v1750 = vshll.u32 %v1746, 16
    %v1751 = vshrl.u32 %v1746, 16
    %vm1752 = vc.u32 %v1744, %v1748
    %v1753 = vsel %vm1752, 1, 0
    %v1754 = vadd.s32 %v1744, %v1748
    %v1755 = vadd.s32 %v1747, %v1753
    %vm1756 = vc.u32 %v1754, %v1750
    %v1757 = vsel %vm1756, 1, 0
    %v1758 = vadd.s32 %v1754, %v1750
    %v1759 = vadd.s32 %v1755, %v1757
    %v1760 = vadd.s32 %v1759, %v1749
    %v1761 = vadd.s32 %v1760, %v1751
    %v1762 = vand.u32 %v1739, 65535
    %v1763 = vshrl.u32 %v1739, 16
    %v1764 = vand.u32 %v1734, 65535
    %v1765 = vshrl.u32 %v1734, 16
    %v1766 = vmul.u32 %v1762, %v1764
    %v1767 = vmul.u32 %v1762, %v1765
    %v1768 = vmul.u32 %v1763, %v1764
    %v1769 = vmul.u32 %v1763, %v1765
    %v1770 = vshll.u32 %v1767, 16
    %v1771 = vshrl.u32 %v1767, 16
    %v1772 = vshll.u32 %v1768, 16
    %v1773 = vshrl.u32 %v1768, 16
    %vm1774 = vc.u32 %v1766, %v1770
    %v1775 = vsel %vm1774, 1, 0
    %v1776 = vadd.s32 %v1766, %v1770
    %v1777 = vadd.s32 %v1769, %v1775
    %vm1778 = vc.u32 %v1776, %v1772
    %v1779 = vsel %vm1778, 1, 0
    %v1780 = vadd.s32 %v1776, %v1772
    %v1781 = vadd.s32 %v1777, %v1779
    %v1782 = vadd.s32 %v1781, %v1771
    %v1783 = vadd.s32 %v1782, %v1773
    %v1784 = vmul.u32 %v1739, %v1730
    %v1785 = vadd.s32 %v1761, %v1780
    %vm1786 = vc.u32 %v1761, %v1780
    %v1787 = vadd.s32 %v1783, 1
    %v1788 = vsel %vm1786, %v1787, %v1783
    %v1789 = vadd.s32 %v1784, %v1788
    %v1790 = vadd.s32 %v1789, 536870912
    %v1791 = vshrl.u32 %v1790, 30
    %v1792 = vshll.u32 %v1791, 30
    %v1793 = vsub.s32 %v1789, %v1792
    %vm1794 = vcmp.lt.s32.totalorder %v1793, 0
    %v1795 = vsub.s32 0, %v1793
    %v1796 = vsel %vm1794, %v1795, %v1793
    %v1797 = vclz %v1796
    %v1798 = vsub.s32 %v1797, 2
    %vm1799 = vcmp.gt.s32.totalorder 0, %v1798
    %v1800 = vsel %vm1799, 0, %v1798
    %v1801 = vsub.s32 32, %v1800
    %v1802 = vshll.u32 %v1793, %v1800
    %v1803 = vshrl.u32 %v1785, %v1801
    %v1804 = vor.u32 %v1802, %v1803
    %v1805 = vsub.s32 4294967266, %v1800
    %v1806 = vadd.s32 %v1805, 127
    %v1807 = vshll.u32 %v1806, 23
    %v1808 = vor.u32 4788187, %v1807
    %v1809 = vand.u32 2147483647, %v1808
    %v1811 = vcvt.s32.f32 %v1804
    %v1812 = vmul.f32 %v1811, %v1809
    %v1813 = vxor.u32 %v1812, 2147483648
    %v1814 = vsel %vm1693, %v1813, %v1812
    %v1815 = vsub.s32 4, %v1791
    %v1816 = vsel %vm1693, %v1815, %v1791
    %v1817 = vsel %vm1692, %v1011, %v1814
    %v1818 = vsel %vm1692, 0, %v1816
    %v1819 = vmul.f32 %v1817, %v1817
    %v1820 = vmul.f32 %v1819, -0.001358992
    %v1821 = vadd.f32 %v1820, 0.041655596
    %v1822 = vmul.f32 %v1819, %v1821
    %v1823 = vadd.f32 %v1822, -0.4999988
    %v1824 = vmul.f32 %v1819, %v1823
    %v1825 = vadd.f32 1.0, %v1824
    %v1826 = vmul.f32 %v1817, %v1817
    %v1827 = vmul.f32 %v1826, -0.00019511016
    %v1828 = vadd.f32 %v1827, 0.008332121
    %v1829 = vmul.f32 %v1826, %v1828
    %v1830 = vadd.f32 %v1829, -0.16666654
    %v1831 = vmul.f32 %v1826, %v1830
    %v1832 = vadd.f32 %v1831, 1.0
    %v1833 = vmul.f32 %v1832, %v1817
    %vm1834 = vweird.f32 %v1011
    %v1835 = vadd.s32 %v1818, 3
    %v1836 = vand.u32 %v1835, 3
    %vm1837 = vcmp.lt.s32.totalorder %v1836, 2
    %vm1838 = vcmp.eq.s32.totalorder %v1836, 0
    %v1839 = vxor.u32 %v1833, 2147483648
    %v1840 = vsel %vm1838, %v1825, %v1839
    %vm1841 = vcmp.eq.s32.totalorder %v1836, 2
    %v1842 = vxor.u32 %v1825, 2147483648
    %v1843 = vsel %vm1841, %v1842, %v1833
    %v1844 = vsel %vm1837, %v1840, %v1843
    %v1845 = vsel %vm1834, nan, %v1844
    %v1846 = vand.u32 2147483647, %v1012
    %vm1847 = vcmp.le.f32.partialorder %v1846, 0.7853982
    %vm1848 = vcmp.lt.s32.totalorder %v1012, 0
    %v1849 = vand.u32 %v1012, 2139095040
    %v1850 = vshrl.u32 %v1849, 23
    %v1851 = vsub.s32 %v1850, 127
    %v1852 = vand.u32 2147483647, %v1012
    %v1853 = vand.u32 %v1852, 8388607
    %v1854 = vor.u32 %v1853, 8388608
    %v1855 = vsub.s32 0, %v1854
    %v1856 = vadd.s32 %v1851, 1
    %vm1857 = vcmp.gt.s32.totalorder %v1856, 0
    %v1858 = vsel %vm1857, %v1856, 0
    %v1859 = vshrl.u32 %v1858, 5
    %v1860 = vand.u32 %v1858, 31
    %v1861 = vsub.s32 32, %v1860
    %v1862 = vshrl.u32 683565275, %v1861
    %v1863 = vshll.u32 683565275, %v1860
    %v1864 = vshrl.u32 2475754826, %v1861
    %v1865 = vor.u32 %v1863, %v1864
    %v1866 = vshll.u32 2475754826, %v1860
    %v1867 = vshrl.u32 2131351028, %v1861
    %v1868 = vor.u32 %v1866, %v1867
    %v1869 = vshll.u32 2131351028, %v1860
    %v1870 = vshrl.u32 2102212464, %v1861
    %v1871 = vor.u32 %v1869, %v1870
    %v1872 = vshll.u32 2102212464, %v1860
    %v1873 = vshrl.u32 920167782, %v1861
    %v1874 = vor.u32 %v1872, %v1873
    %v1875 = vshll.u32 920167782, %v1860
    %v1876 = vshrl.u32 1326507024, %v1861
    %v1877 = vor.u32 %v1875, %v1876
    %vm1878 = vcmp.lt.s32.totalorder %v1859, 1
    %vm1879 = vcmp.lt.s32.totalorder %v1859, 2
    %vm1880 = vcmp.lt.s32.totalorder %v1859, 3
    %vm1881 = vcmp.lt.s32.totalorder %v1859, 4
    %v1882 = vsel %vm1878, %v1862, %v1865
    %v1883 = vsel %vm1881, %v1871, 2102212464
    %v1884 = vsel %vm1880, %v1868, %v1883
    %v1885 = vsel %vm1879, %v1882, %v1884
    %v1886 = vsel %vm1878, %v1865, %v1868
    %v1887 = vsel %vm1881, %v1874, 920167782
    %v1888 = vsel %vm1880, %v1871, %v1887
    %v1889 = vsel %vm1879, %v1886, %v1888
    %v1890 = vsel %vm1878, %v1868, %v1871
    %v1891 = vsel %vm1881, %v1877, 1326507024
    %v1892 = vsel %vm1880, %v1874, %v1891
    %v1893 = vsel %vm1879, %v1890, %v1892
    %v1894 = vshll.u32 %v1854, 8
    %v1895 = vand.u32 %v1894, 65535
    %v1896 = vshrl.u32 %v1894, 16
    %v1897 = vand.u32 %v1893, 65535
    %v1898 = vshrl.u32 %v1893, 16
    %v1899 = vmul.u32 %v1895, %v1897
    %v1900 = vmul.u32 %v1895, %v1898
    %v1901 = vmul.u32 %v1896, %v1897
    %v1902 = vmul.u32 %v1896, %v1898
    %v1903 = vshll.u32 %v1900, 16
    %v1904 = vshrl.u32 %v1900, 16
    %v1905 = vshll.u32 %v1901, 16
    %v1906 = vshrl.u32 %v1901, 16
    %vm1907 = vc.u32 %v1899, %v1903
    %v1908 = vsel %vm1907, 1, 0
    %v1909 = vadd.s32 %v1899, %v1903
    %v1910 = vadd.s32 %v1902, %v1908
    %vm1911 = vc.u32 %v1909, %v1905
    %v1912 = vsel %vm1911, 1, 0
    %v1913 = vadd.s32 %v1909, %v1905
    %v1914 = vadd.s32 %v1910, %v1912
    %v1915 = vadd.s32 %v1914, %v1904
    %v1916 = vadd.s32 %v1915, %v1906
    %v1917 = vand.u32 %v1894, 65535
    %v1918 = vshrl.u32 %v1894, 16
    %v1919 = vand.u32 %v1889, 65535
    %v1920 = vshrl.u32 %v1889, 16
    %v1921 = vmul.u32 %v1917, %v1919
    %v1922 = vmul.u32 %v1917, %v1920
    %v1923 = vmul.u32 %v1918, %v1919
    %v1924 = vmul.u32 %v1918, %v1920
    %v1925 = vshll.u32 %v1922, 16
    %v1926 = vshrl.u32 %v1922, 16
    %v1927 = vshll.u32 %v1923, 16
    %v1928 = vshrl.u32 %v1923, 16
    %vm1929 = vc.u32 %v1921, %v1925
    %v1930 = vsel %vm1929, 1, 0
    %v1931 = vadd.s32 %v1921, %v1925
    %v1932 = vadd.s32 %v1924, %v1930
    %vm1933 = vc.u32 %v1931, %v1927
    %v1934 = vsel %vm1933, 1, 0
    %v1935 = vadd.s32 %v1931, %v1927
    %v1936 = vadd.s32 %v1932, %v1934
    %v1937 = vadd.s32 %v1936, %v1926
    %v1938 = vadd.s32 %v1937, %v1928
    %v1939 = vmul.u32 %v1894, %v1885
    %v1940 = vadd.s32 %v1916, %v1935
    %vm1941 = vc.u32 %v1916, %v1935
    %v1942 = vadd.s32 %v1938, 1
    %v1943 = vsel %vm1941, %v1942, %v1938
    %v1944 = vadd.s32 %v1939, %v1943
    %v1945 = vadd.s32 %v1944, 536870912
    %v1946 = vshrl.u32 %v1945, 30
    %v1947 = vshll.u32 %v1946, 30
    %v1948 = vsub.s32 %v1944, %v1947
    %vm1949 = vcmp.lt.s32.totalorder %v1948, 0
    %v1950 = vsub.s32 0, %v1948
    %v1951 = vsel %vm1949, %v1950, %v1948
    %v1952 = vclz %v1951
    %v1953 = vsub.s32 %v1952, 2
    %vm1954 = vcmp.gt.s32.totalorder 0, %v1953
    %v1955 = vsel %vm1954, 0, %v1953
    %v1956 = vsub.s32 32, %v1955
    %v1957 = vshll.u32 %v1948, %v1955
    %v1958 = vshrl.u32 %v1940, %v1956
    %v1959 = vor.u32 %v1957, %v1958
    %v1960 = vsub.s32 4294967266, %v1955
    %v1961 = vadd.s32 %v1960, 127
    %v1962 = vshll.u32 %v1961, 23
    %v1963 = vor.u32 4788187, %v1962
    %v1964 = vand.u32 2147483647, %v1963
    %v1966 = vcvt.s32.f32 %v1959
    %v1967 = vmul.f32 %v1966, %v1964
    %v1968 = vxor.u32 %v1967, 2147483648
    %v1969 = vsel %vm1848, %v1968, %v1967
    %v1970 = vsub.s32 4, %v1946
    %v1971 = vsel %vm1848, %v1970, %v1946
    %v1972 = vsel %vm1847, %v1012, %v1969
    %v1973 = vsel %vm1847, 0, %v1971
    %v1974 = vmul.f32 %v1972, %v1972
    %v1975 = vmul.f32 %v1974, -0.001358992
    %v1976 = vadd.f32 %v1975, 0.041655596
    %v1977 = vmul.f32 %v1974, %v1976
    %v1978 = vadd.f32 %v1977, -0.4999988
    %v1979 = vmul.f32 %v1974, %v1978
    %v1980 = vadd.f32 1.0, %v1979
    %v1981 = vmul.f32 %v1972, %v1972
    %v1982 = vmul.f32 %v1981, -0.00019511016
    %v1983 = vadd.f32 %v1982, 0.008332121
    %v1984 = vmul.f32 %v1981, %v1983
    %v1985 = vadd.f32 %v1984, -0.16666654
    %v1986 = vmul.f32 %v1981, %v1985
    %v1987 = vadd.f32 %v1986, 1.0
    %v1988 = vmul.f32 %v1987, %v1972
    %vm1989 = vweird.f32 %v1012
    %v1990 = vadd.s32 %v1973, 3
    %v1991 = vand.u32 %v1990, 3
    %vm1992 = vcmp.lt.s32.totalorder %v1991, 2
    %vm1993 = vcmp.eq.s32.totalorder %v1991, 0
    %v1994 = vxor.u32 %v1988, 2147483648
    %v1995 = vsel %vm1993, %v1980, %v1994
    %vm1996 = vcmp.eq.s32.totalorder %v1991, 2
    %v1997 = vxor.u32 %v1980, 2147483648
    %v1998 = vsel %vm1996, %v1997, %v1988
    %v1999 = vsel %vm1992, %v1995, %v1998
    %v2000 = vsel %vm1989, nan, %v1999
    %v2001 = vand.u32 2147483647, %v1013
    %vm2002 = vcmp.le.f32.partialorder %v2001, 0.7853982
    %vm2003 = vcmp.lt.s32.totalorder %v1013, 0
    %v2004 = vand.u32 %v1013, 2139095040
    %v2005 = vshrl.u32 %v2004, 23
    %v2006 = vsub.s32 %v2005, 127
    %v2007 = vand.u32 2147483647, %v1013
    %v2008 = vand.u32 %v2007, 8388607
    %v2009 = vor.u32 %v2008, 8388608
    %v2010 = vsub.s32 0, %v2009
    %v2011 = vadd.s32 %v2006, 1
    %vm2012 = vcmp.gt.s32.totalorder %v2011, 0
    %v2013 = vsel %vm2012, %v2011, 0
    %v2014 = vshrl.u32 %v2013, 5
    %v2015 = vand.u32 %v2013, 31
    %v2016 = vsub.s32 32, %v2015
    %v2017 = vshrl.u32 683565275, %v2016
    %v2018 = vshll.u32 683565275, %v2015
    %v2019 = vshrl.u32 2475754826, %v2016
    %v2020 = vor.u32 %v2018, %v2019
    %v2021 = vshll.u32 2475754826, %v2015
    %v2022 = vshrl.u32 2131351028, %v2016
    %v2023 = vor.u32 %v2021, %v2022
    %v2024 = vshll.u32 2131351028, %v2015
    %v2025 = vshrl.u32 2102212464, %v2016
    %v2026 = vor.u32 %v2024, %v2025
    %v2027 = vshll.u32 2102212464, %v2015
    %v2028 = vshrl.u32 920167782, %v2016
    %v2029 = vor.u32 %v2027, %v2028
    %v2030 = vshll.u32 920167782, %v2015
    %v2031 = vshrl.u32 1326507024, %v2016
    %v2032 = vor.u32 %v2030, %v2031
    %vm2033 = vcmp.lt.s32.totalorder %v2014, 1
    %vm2034 = vcmp.lt.s32.totalorder %v2014, 2
    %vm2035 = vcmp.lt.s32.totalorder %v2014, 3
    %vm2036 = vcmp.lt.s32.totalorder %v2014, 4
    %v2037 = vsel %vm2033, %v2017, %v2020
    %v2038 = vsel %vm2036, %v2026, 2102212464
    %v2039 = vsel %vm2035, %v2023, %v2038
    %v2040 = vsel %vm2034, %v2037, %v2039
    %v2041 = vsel %vm2033, %v2020, %v2023
    %v2042 = vsel %vm2036, %v2029, 920167782
    %v2043 = vsel %vm2035, %v2026, %v2042
    %v2044 = vsel %vm2034, %v2041, %v2043
    %v2045 = vsel %vm2033, %v2023, %v2026
    %v2046 = vsel %vm2036, %v2032, 1326507024
    %v2047 = vsel %vm2035, %v2029, %v2046
    %v2048 = vsel %vm2034, %v2045, %v2047
    %v2049 = vshll.u32 %v2009, 8
    %v2050 = vand.u32 %v2049, 65535
    %v2051 = vshrl.u32 %v2049, 16
    %v2052 = vand.u32 %v2048, 65535
    %v2053 = vshrl.u32 %v2048, 16
    %v2054 = vmul.u32 %v2050, %v2052
    %v2055 = vmul.u32 %v2050, %v2053
    %v2056 = vmul.u32 %v2051, %v2052
    %v2057 = vmul.u32 %v2051, %v2053
    %v2058 = vshll.u32 %v2055, 16
    %v2059 = vshrl.u32 %v2055, 16
    %v2060 = vshll.u32 %v2056, 16
    %v2061 = vshrl.u32 %v2056, 16
    %vm2062 = vc.u32 %v2054, %v2058
    %v2063 = vsel %vm2062, 1, 0
    %v2064 = vadd.s32 %v2054, %v2058
    %v2065 = vadd.s32 %v2057, %v2063
    %vm2066 = vc.u32 %v2064, %v2060
    %v2067 = vsel %vm2066, 1, 0
    %v2068 = vadd.s32 %v2064, %v2060
    %v2069 = vadd.s32 %v2065, %v2067
    %v2070 = vadd.s32 %v2069, %v2059
    %v2071 = vadd.s32 %v2070, %v2061
    %v2072 = vand.u32 %v2049, 65535
    %v2073 = vshrl.u32 %v2049, 16
    %v2074 = vand.u32 %v2044, 65535
    %v2075 = vshrl.u32 %v2044, 16
    %v2076 = vmul.u32 %v2072, %v2074
    %v2077 = vmul.u32 %v2072, %v2075
    %v2078 = vmul.u32 %v2073, %v2074
    %v2079 = vmul.u32 %v2073, %v2075
    %v2080 = vshll.u32 %v2077, 16
    %v2081 = vshrl.u32 %v2077, 16
    %v2082 = vshll.u32 %v2078, 16
    %v2083 = vshrl.u32 %v2078, 16
    %vm2084 = vc.u32 %v2076, %v2080
    %v2085 = vsel %vm2084, 1, 0
    %v2086 = vadd.s32 %v2076, %v2080
    %v2087 = vadd.s32 %v2079, %v2085
    %vm2088 = vc.u32 %v2086, %v2082
    %v2089 = vsel %vm2088, 1, 0
    %v2090 = vadd.s32 %v2086, %v2082
    %v2091 = vadd.s32 %v2087, %v2089
    %v2092 = vadd.s32 %v2091, %v2081
    %v2093 = vadd.s32 %v2092, %v2083
    %v2094 = vmul.u32 %v2049, %v2040
    %v2095 = vadd.s32 %v2071, %v2090
    %vm2096 = vc.u32 %v2071, %v2090
    %v2097 = vadd.s32 %v2093, 1
    %v2098 = vsel %vm2096, %v2097, %v2093
    %v2099 = vadd.s32 %v2094, %v2098
    %v2100 = vadd.s32 %v2099, 536870912
    %v2101 = vshrl.u32 %v2100, 30
    %v2102 = vshll.u32 %v2101, 30
    %v2103 = vsub.s32 %v2099, %v2102
    %vm2104 = vcmp.lt.s32.totalorder %v2103, 0
    %v2105 = vsub.s32 0, %v2103
    %v2106 = vsel %vm2104, %v2105, %v2103
    %v2107 = vclz %v2106
    %v2108 = vsub.s32 %v2107, 2
    %vm2109 = vcmp.gt.s32.totalorder 0, %v2108
    %v2110 = vsel %vm2109, 0, %v2108
    %v2111 = vsub.s32 32, %v2110
    %v2112 = vshll.u32 %v2103, %v2110
    %v2113 = vshrl.u32 %v2095, %v2111
    %v2114 = vor.u32 %v2112, %v2113
    %v2115 = vsub.s32 4294967266, %v2110
    %v2116 = vadd.s32 %v2115, 127
    %v2117 = vshll.u32 %v2116, 23
    %v2118 = vor.u32 4788187, %v2117
    %v2119 = vand.u32 2147483647, %v2118
    %v2121 = vcvt.s32.f32 %v2114
    %v2122 = vmul.f32 %v2121, %v2119
    %v2123 = vxor.u32 %v2122, 2147483648
    %v2124 = vsel %vm2003, %v2123, %v2122
    %v2125 = vsub.s32 4, %v2101
    %v2126 = vsel %vm2003, %v2125, %v2101
    %v2127 = vsel %vm2002, %v1013, %v2124
    %v2128 = vsel %vm2002, 0, %v2126
    %v2129 = vmul.f32 %v2127, %v2127
    %v2130 = vmul.f32 %v2129, -0.001358992
    %v2131 = vadd.f32 %v2130, 0.041655596
    %v2132 = vmul.f32 %v2129, %v2131
    %v2133 = vadd.f32 %v2132, -0.4999988
    %v2134 = vmul.f32 %v2129, %v2133
    %v2135 = vadd.f32 1.0, %v2134
    %v2136 = vmul.f32 %v2127, %v2127
    %v2137 = vmul.f32 %v2136, -0.00019511016
    %v2138 = vadd.f32 %v2137, 0.008332121
    %v2139 = vmul.f32 %v2136, %v2138
    %v2140 = vadd.f32 %v2139, -0.16666654
    %v2141 = vmul.f32 %v2136, %v2140
    %v2142 = vadd.f32 %v2141, 1.0
    %v2143 = vmul.f32 %v2142, %v2127
    %vm2144 = vweird.f32 %v1013
    %v2145 = vadd.s32 %v2128, 3
    %v2146 = vand.u32 %v2145, 3
    %vm2147 = vcmp.lt.s32.totalorder %v2146, 2
    %vm2148 = vcmp.eq.s32.totalorder %v2146, 0
    %v2149 = vxor.u32 %v2143, 2147483648
    %v2150 = vsel %vm2148, %v2135, %v2149
    %vm2151 = vcmp.eq.s32.totalorder %v2146, 2
    %v2152 = vxor.u32 %v2135, 2147483648
    %v2153 = vsel %vm2151, %v2152, %v2143
    %v2154 = vsel %vm2147, %v2150, %v2153
    %v2155 = vsel %vm2144, nan, %v2154
    %v2156 = vand.u32 2147483647, %v1014
    %vm2157 = vcmp.le.f32.partialorder %v2156, 0.7853982
    %vm2158 = vcmp.lt.s32.totalorder %v1014, 0
    %v2159 = vand.u32 %v1014, 2139095040
    %v2160 = vshrl.u32 %v2159, 23
    %v2161 = vsub.s32 %v2160, 127
    %v2162 = vand.u32 2147483647, %v1014
    %v2163 = vand.u32 %v2162, 8388607
    %v2164 = vor.u32 %v2163, 8388608
    %v2165 = vsub.s32 0, %v2164
    %v2166 = vadd.s32 %v2161, 1
    %vm2167 = vcmp.gt.s32.totalorder %v2166, 0
    %v2168 = vsel %vm2167, %v2166, 0
    %v2169 = vshrl.u32 %v2168, 5
    %v2170 = vand.u32 %v2168, 31
    %v2171 = vsub.s32 32, %v2170
    %v2172 = vshrl.u32 683565275, %v2171
    %v2173 = vshll.u32 683565275, %v2170
    %v2174 = vshrl.u32 2475754826, %v2171
    %v2175 = vor.u32 %v2173, %v2174
    %v2176 = vshll.u32 2475754826, %v2170
    %v2177 = vshrl.u32 2131351028, %v2171
    %v2178 = vor.u32 %v2176, %v2177
    %v2179 = vshll.u32 2131351028, %v2170
    %v2180 = vshrl.u32 2102212464, %v2171
    %v2181 = vor.u32 %v2179, %v2180
    %v2182 = vshll.u32 2102212464, %v2170
    %v2183 = vshrl.u32 920167782, %v2171
    %v2184 = vor.u32 %v2182, %v2183
    %v2185 = vshll.u32 920167782, %v2170
    %v2186 = vshrl.u32 1326507024, %v2171
    %v2187 = vor.u32 %v2185, %v2186
    %vm2188 = vcmp.lt.s32.totalorder %v2169, 1
    %vm2189 = vcmp.lt.s32.totalorder %v2169, 2
    %vm2190 = vcmp.lt.s32.totalorder %v2169, 3
    %vm2191 = vcmp.lt.s32.totalorder %v2169, 4
    %v2192 = vsel %vm2188, %v2172, %v2175
    %v2193 = vsel %vm2191, %v2181, 2102212464
    %v2194 = vsel %vm2190, %v2178, %v2193
    %v2195 = vsel %vm2189, %v2192, %v2194
    %v2196 = vsel %vm2188, %v2175, %v2178
    %v2197 = vsel %vm2191, %v2184, 920167782
    %v2198 = vsel %vm2190, %v2181, %v2197
    %v2199 = vsel %vm2189, %v2196, %v2198
    %v2200 = vsel %vm2188, %v2178, %v2181
    %v2201 = vsel %vm2191, %v2187, 1326507024
    %v2202 = vsel %vm2190, %v2184, %v2201
    %v2203 = vsel %vm2189, %v2200, %v2202
    %v2204 = vshll.u32 %v2164, 8
    %v2205 = vand.u32 %v2204, 65535
    %v2206 = vshrl.u32 %v2204, 16
    %v2207 = vand.u32 %v2203, 65535
    %v2208 = vshrl.u32 %v2203, 16
    %v2209 = vmul.u32 %v2205, %v2207
    %v2210 = vmul.u32 %v2205, %v2208
    %v2211 = vmul.u32 %v2206, %v2207
    %v2212 = vmul.u32 %v2206, %v2208
    %v2213 = vshll.u32 %v2210, 16
    %v2214 = vshrl.u32 %v2210, 16
    %v2215 = vshll.u32 %v2211, 16
    %v2216 = vshrl.u32 %v2211, 16
    %vm2217 = vc.u32 %v2209, %v2213
    %v2218 = vsel %vm2217, 1, 0
    %v2219 = vadd.s32 %v2209, %v2213
    %v2220 = vadd.s32 %v2212, %v2218
    %vm2221 = vc.u32 %v2219, %v2215
    %v2222 = vsel %vm2221, 1, 0
    %v2223 = vadd.s32 %v2219, %v2215
    %v2224 = vadd.s32 %v2220, %v2222
    %v2225 = vadd.s32 %v2224, %v2214
    %v2226 = vadd.s32 %v2225, %v2216
    %v2227 = vand.u32 %v2204, 65535
    %v2228 = vshrl.u32 %v2204, 16
    %v2229 = vand.u32 %v2199, 65535
    %v2230 = vshrl.u32 %v2199, 16
    %v2231 = vmul.u32 %v2227, %v2229
    %v2232 = vmul.u32 %v2227, %v2230
    %v2233 = vmul.u32 %v2228, %v2229
    %v2234 = vmul.u32 %v2228, %v2230
    %v2235 = vshll.u32 %v2232, 16
    %v2236 = vshrl.u32 %v2232, 16
    %v2237 = vshll.u32 %v2233, 16
    %v2238 = vshrl.u32 %v2233, 16
    %vm2239 = vc.u32 %v2231, %v2235
    %v2240 = vsel %vm2239, 1, 0
    %v2241 = vadd.s32 %v2231, %v2235
    %v2242 = vadd.s32 %v2234, %v2240
    %vm2243 = vc.u32 %v2241, %v2237
    %v2244 = vsel %vm2243, 1, 0
    %v2245 = vadd.s32 %v2241, %v2237
    %v2246 = vadd.s32 %v2242, %v2244
    %v2247 = vadd.s32 %v2246, %v2236
    %v2248 = vadd.s32 %v2247, %v2238
    %v2249 = vmul.u32 %v2204, %v2195
    %v2250 = vadd.s32 %v2226, %v2245
    %vm2251 = vc.u32 %v2226, %v2245
    %v2252 = vadd.s32 %v2248, 1
    %v2253 = vsel %vm2251, %v2252, %v2248
    %v2254 = vadd.s32 %v2249, %v2253
    %v2255 = vadd.s32 %v2254, 536870912
    %v2256 = vshrl.u32 %v2255, 30
    %v2257 = vshll.u32 %v2256, 30
    %v2258 = vsub.s32 %v2254, %v2257
    %vm2259 = vcmp.lt.s32.totalorder %v2258, 0
    %v2260 = vsub.s32 0, %v2258
    %v2261 = vsel %vm2259, %v2260, %v2258
    %v2262 = vclz %v2261
    %v2263 = vsub.s32 %v2262, 2
    %vm2264 = vcmp.gt.s32.totalorder 0, %v2263
    %v2265 = vsel %vm2264, 0, %v2263
    %v2266 = vsub.s32 32, %v2265
    %v2267 = vshll.u32 %v2258, %v2265
    %v2268 = vshrl.u32 %v2250, %v2266
    %v2269 = vor.u32 %v2267, %v2268
    %v2270 = vsub.s32 4294967266, %v2265
    %v2271 = vadd.s32 %v2270, 127
    %v2272 = vshll.u32 %v2271, 23
    %v2273 = vor.u32 4788187, %v2272
    %v2274 = vand.u32 2147483647, %v2273
    %v2276 = vcvt.s32.f32 %v2269
    %v2277 = vmul.f32 %v2276, %v2274
    %v2278 = vxor.u32 %v2277, 2147483648
    %v2279 = vsel %vm2158, %v2278, %v2277
    %v2280 = vsub.s32 4, %v2256
    %v2281 = vsel %vm2158, %v2280, %v2256
    %v2282 = vsel %vm2157, %v1014, %v2279
    %v2283 = vsel %vm2157, 0, %v2281
    %v2284 = vmul.f32 %v2282, %v2282
    %v2285 = vmul.f32 %v2284, -0.001358992
    %v2286 = vadd.f32 %v2285, 0.041655596
    %v2287 = vmul.f32 %v2284, %v2286
    %v2288 = vadd.f32 %v2287, -0.4999988
    %v2289 = vmul.f32 %v2284, %v2288
    %v2290 = vadd.f32 1.0, %v2289
    %v2291 = vmul.f32 %v2282, %v2282
    %v2292 = vmul.f32 %v2291, -0.00019511016
    %v2293 = vadd.f32 %v2292, 0.008332121
    %v2294 = vmul.f32 %v2291, %v2293
    %v2295 = vadd.f32 %v2294, -0.16666654
    %v2296 = vmul.f32 %v2291, %v2295
    %v2297 = vadd.f32 %v2296, 1.0
    %v2298 = vmul.f32 %v2297, %v2282
    %vm2299 = vweird.f32 %v1014
    %v2300 = vadd.s32 %v2283, 3
    %v2301 = vand.u32 %v2300, 3
    %vm2302 = vcmp.lt.s32.totalorder %v2301, 2
    %vm2303 = vcmp.eq.s32.totalorder %v2301, 0
    %v2304 = vxor.u32 %v2298, 2147483648
    %v2305 = vsel %vm2303, %v2290, %v2304
    %vm2306 = vcmp.eq.s32.totalorder %v2301, 2
    %v2307 = vxor.u32 %v2290, 2147483648
    %v2308 = vsel %vm2306, %v2307, %v2298
    %v2309 = vsel %vm2302, %v2305, %v2308
    %v2310 = vsel %vm2299, nan, %v2309
    %v2311 = vand.u32 2147483647, %v1015
    %vm2312 = vcmp.le.f32.partialorder %v2311, 0.7853982
    %vm2313 = vcmp.lt.s32.totalorder %v1015, 0
    %v2314 = vand.u32 %v1015, 2139095040
    %v2315 = vshrl.u32 %v2314, 23
    %v2316 = vsub.s32 %v2315, 127
    %v2317 = vand.u32 2147483647, %v1015
    %v2318 = vand.u32 %v2317, 8388607
    %v2319 = vor.u32 %v2318, 8388608
    %v2320 = vsub.s32 0, %v2319
    %v2321 = vadd.s32 %v2316, 1
    %vm2322 = vcmp.gt.s32.totalorder %v2321, 0
    %v2323 = vsel %vm2322, %v2321, 0
    %v2324 = vshrl.u32 %v2323, 5
    %v2325 = vand.u32 %v2323, 31
    %v2326 = vsub.s32 32, %v2325
    %v2327 = vshrl.u32 683565275, %v2326
    %v2328 = vshll.u32 683565275, %v2325
    %v2329 = vshrl.u32 2475754826, %v2326
    %v2330 = vor.u32 %v2328, %v2329
    %v2331 = vshll.u32 2475754826, %v2325
    %v2332 = vshrl.u32 2131351028, %v2326
    %v2333 = vor.u32 %v2331, %v2332
    %v2334 = vshll.u32 2131351028, %v2325
    %v2335 = vshrl.u32 2102212464, %v2326
    %v2336 = vor.u32 %v2334, %v2335
    %v2337 = vshll.u32 2102212464, %v2325
    %v2338 = vshrl.u32 920167782, %v2326
    %v2339 = vor.u32 %v2337, %v2338
    %v2340 = vshll.u32 920167782, %v2325
    %v2341 = vshrl.u32 1326507024, %v2326
    %v2342 = vor.u32 %v2340, %v2341
    %vm2343 = vcmp.lt.s32.totalorder %v2324, 1
    %vm2344 = vcmp.lt.s32.totalorder %v2324, 2
    %vm2345 = vcmp.lt.s32.totalorder %v2324, 3
    %vm2346 = vcmp.lt.s32.totalorder %v2324, 4
    %v2347 = vsel %vm2343, %v2327, %v2330
    %v2348 = vsel %vm2346, %v2336, 2102212464
    %v2349 = vsel %vm2345, %v2333, %v2348
    %v2350 = vsel %vm2344, %v2347, %v2349
    %v2351 = vsel %vm2343, %v2330, %v2333
    %v2352 = vsel %vm2346, %v2339, 920167782
    %v2353 = vsel %vm2345, %v2336, %v2352
    %v2354 = vsel %vm2344, %v2351, %v2353
    %v2355 = vsel %vm2343, %v2333, %v2336
    %v2356 = vsel %vm2346, %v2342, 1326507024
    %v2357 = vsel %vm2345, %v2339, %v2356
    %v2358 = vsel %vm2344, %v2355, %v2357
    %v2359 = vshll.u32 %v2319, 8
    %v2360 = vand.u32 %v2359, 65535
    %v2361 = vshrl.u32 %v2359, 16
    %v2362 = vand.u32 %v2358, 65535
    %v2363 = vshrl.u32 %v2358, 16
    %v2364 = vmul.u32 %v2360, %v2362
    %v2365 = vmul.u32 %v2360, %v2363
    %v2366 = vmul.u32 %v2361, %v2362
    %v2367 = vmul.u32 %v2361, %v2363
    %v2368 = vshll.u32 %v2365, 16
    %v2369 = vshrl.u32 %v2365, 16
    %v2370 = vshll.u32 %v2366, 16
    %v2371 = vshrl.u32 %v2366, 16
    %vm2372 = vc.u32 %v2364, %v2368
    %v2373 = vsel %vm2372, 1, 0
    %v2374 = vadd.s32 %v2364, %v2368
    %v2375 = vadd.s32 %v2367, %v2373
    %vm2376 = vc.u32 %v2374, %v2370
    %v2377 = vsel %vm2376, 1, 0
    %v2378 = vadd.s32 %v2374, %v2370
    %v2379 = vadd.s32 %v2375, %v2377
    %v2380 = vadd.s32 %v2379, %v2369
    %v2381 = vadd.s32 %v2380, %v2371
    %v2382 = vand.u32 %v2359, 65535
    %v2383 = vshrl.u32 %v2359, 16
    %v2384 = vand.u32 %v2354, 65535
    %v2385 = vshrl.u32 %v2354, 16
    %v2386 = vmul.u32 %v2382, %v2384
    %v2387 = vmul.u32 %v2382, %v2385
    %v2388 = vmul.u32 %v2383, %v2384
    %v2389 = vmul.u32 %v2383, %v2385
    %v2390 = vshll.u32 %v2387, 16
    %v2391 = vshrl.u32 %v2387, 16
    %v2392 = vshll.u32 %v2388, 16
    %v2393 = vshrl.u32 %v2388, 16
    %vm2394 = vc.u32 %v2386, %v2390
    %v2395 = vsel %vm2394, 1, 0
    %v2396 = vadd.s32 %v2386, %v2390
    %v2397 = vadd.s32 %v2389, %v2395
    %vm2398 = vc.u32 %v2396, %v2392
    %v2399 = vsel %vm2398, 1, 0
    %v2400 = vadd.s32 %v2396, %v2392
    %v2401 = vadd.s32 %v2397, %v2399
    %v2402 = vadd.s32 %v2401, %v2391
    %v2403 = vadd.s32 %v2402, %v2393
    %v2404 = vmul.u32 %v2359, %v2350
    %v2405 = vadd.s32 %v2381, %v2400
    %vm2406 = vc.u32 %v2381, %v2400
    %v2407 = vadd.s32 %v2403, 1
    %v2408 = vsel %vm2406, %v2407, %v2403
    %v2409 = vadd.s32 %v2404, %v2408
    %v2410 = vadd.s32 %v2409, 536870912
    %v2411 = vshrl.u32 %v2410, 30
    %v2412 = vshll.u32 %v2411, 30
    %v2413 = vsub.s32 %v2409, %v2412
    %vm2414 = vcmp.lt.s32.totalorder %v2413, 0
    %v2415 = vsub.s32 0, %v2413
    %v2416 = vsel %vm2414, %v2415, %v2413
    %v2417 = vclz %v2416
    %v2418 = vsub.s32 %v2417, 2
    %vm2419 = vcmp.gt.s32.totalorder 0, %v2418
    %v2420 = vsel %vm2419, 0, %v2418
    %v2421 = vsub.s32 32, %v2420
    %v2422 = vshll.u32 %v2413, %v2420
    %v2423 = vshrl.u32 %v2405, %v2421
    %v2424 = vor.u32 %v2422, %v2423
    %v2425 = vsub.s32 4294967266, %v2420
    %v2426 = vadd.s32 %v2425, 127
    %v2427 = vshll.u32 %v2426, 23
    %v2428 = vor.u32 4788187, %v2427
    %v2429 = vand.u32 2147483647, %v2428
    %v2431 = vcvt.s32.f32 %v2424
    %v2432 = vmul.f32 %v2431, %v2429
    %v2433 = vxor.u32 %v2432, 2147483648
    %v2434 = vsel %vm2313, %v2433, %v2432
    %v2435 = vsub.s32 4, %v2411
    %v2436 = vsel %vm2313, %v2435, %v2411
    %v2437 = vsel %vm2312, %v1015, %v2434
    %v2438 = vsel %vm2312, 0, %v2436
    %v2439 = vmul.f32 %v2437, %v2437
    %v2440 = vmul.f32 %v2439, -0.001358992
    %v2441 = vadd.f32 %v2440, 0.041655596
    %v2442 = vmul.f32 %v2439, %v2441
    %v2443 = vadd.f32 %v2442, -0.4999988
    %v2444 = vmul.f32 %v2439, %v2443
    %v2445 = vadd.f32 1.0, %v2444
    %v2446 = vmul.f32 %v2437, %v2437
    %v2447 = vmul.f32 %v2446, -0.00019511016
    %v2448 = vadd.f32 %v2447, 0.008332121
    %v2449 = vmul.f32 %v2446, %v2448
    %v2450 = vadd.f32 %v2449, -0.16666654
    %v2451 = vmul.f32 %v2446, %v2450
    %v2452 = vadd.f32 %v2451, 1.0
    %v2453 = vmul.f32 %v2452, %v2437
    %vm2454 = vweird.f32 %v1015
    %v2455 = vadd.s32 %v2438, 3
    %v2456 = vand.u32 %v2455, 3
    %vm2457 = vcmp.lt.s32.totalorder %v2456, 2
    %vm2458 = vcmp.eq.s32.totalorder %v2456, 0
    %v2459 = vxor.u32 %v2453, 2147483648
    %v2460 = vsel %vm2458, %v2445, %v2459
    %vm2461 = vcmp.eq.s32.totalorder %v2456, 2
    %v2462 = vxor.u32 %v2445, 2147483648
    %v2463 = vsel %vm2461, %v2462, %v2453
    %v2464 = vsel %vm2457, %v2460, %v2463
    %v2465 = vsel %vm2454, nan, %v2464
    %v2466 = vand.u32 2147483647, %v1016
    %vm2467 = vcmp.le.f32.partialorder %v2466, 0.7853982
    %vm2468 = vcmp.lt.s32.totalorder %v1016, 0
    %v2469 = vand.u32 %v1016, 2139095040
    %v2470 = vshrl.u32 %v2469, 23
    %v2471 = vsub.s32 %v2470, 127
    %v2472 = vand.u32 2147483647, %v1016
    %v2473 = vand.u32 %v2472, 8388607
    %v2474 = vor.u32 %v2473, 8388608
    %v2475 = vsub.s32 0, %v2474
    %v2476 = vadd.s32 %v2471, 1
    %vm2477 = vcmp.gt.s32.totalorder %v2476, 0
    %v2478 = vsel %vm2477, %v2476, 0
    %v2479 = vshrl.u32 %v2478, 5
    %v2480 = vand.u32 %v2478, 31
    %v2481 = vsub.s32 32, %v2480
    %v2482 = vshrl.u32 683565275, %v2481
    %v2483 = vshll.u32 683565275, %v2480
    %v2484 = vshrl.u32 2475754826, %v2481
    %v2485 = vor.u32 %v2483, %v2484
    %v2486 = vshll.u32 2475754826, %v2480
    %v2487 = vshrl.u32 2131351028, %v2481
    %v2488 = vor.u32 %v2486, %v2487
    %v2489 = vshll.u32 2131351028, %v2480
    %v2490 = vshrl.u32 2102212464, %v2481
    %v2491 = vor.u32 %v2489, %v2490
    %v2492 = vshll.u32 2102212464, %v2480
    %v2493 = vshrl.u32 920167782, %v2481
    %v2494 = vor.u32 %v2492, %v2493
    %v2495 = vshll.u32 920167782, %v2480
    %v2496 = vshrl.u32 1326507024, %v2481
    %v2497 = vor.u32 %v2495, %v2496
    %vm2498 = vcmp.lt.s32.totalorder %v2479, 1
    %vm2499 = vcmp.lt.s32.totalorder %v2479, 2
    %vm2500 = vcmp.lt.s32.totalorder %v2479, 3
    %vm2501 = vcmp.lt.s32.totalorder %v2479, 4
    %v2502 = vsel %vm2498, %v2482, %v2485
    %v2503 = vsel %vm2501, %v2491, 2102212464
    %v2504 = vsel %vm2500, %v2488, %v2503
    %v2505 = vsel %vm2499, %v2502, %v2504
    %v2506 = vsel %vm2498, %v2485, %v2488
    %v2507 = vsel %vm2501, %v2494, 920167782
    %v2508 = vsel %vm2500, %v2491, %v2507
    %v2509 = vsel %vm2499, %v2506, %v2508
    %v2510 = vsel %vm2498, %v2488, %v2491
    %v2511 = vsel %vm2501, %v2497, 1326507024
    %v2512 = vsel %vm2500, %v2494, %v2511
    %v2513 = vsel %vm2499, %v2510, %v2512
    %v2514 = vshll.u32 %v2474, 8
    %v2515 = vand.u32 %v2514, 65535
    %v2516 = vshrl.u32 %v2514, 16
    %v2517 = vand.u32 %v2513, 65535
    %v2518 = vshrl.u32 %v2513, 16
    %v2519 = vmul.u32 %v2515, %v2517
    %v2520 = vmul.u32 %v2515, %v2518
    %v2521 = vmul.u32 %v2516, %v2517
    %v2522 = vmul.u32 %v2516, %v2518
    %v2523 = vshll.u32 %v2520, 16
    %v2524 = vshrl.u32 %v2520, 16
    %v2525 = vshll.u32 %v2521, 16
    %v2526 = vshrl.u32 %v2521, 16
    %vm2527 = vc.u32 %v2519, %v2523
    %v2528 = vsel %vm2527, 1, 0
    %v2529 = vadd.s32 %v2519, %v2523
    %v2530 = vadd.s32 %v2522, %v2528
    %vm2531 = vc.u32 %v2529, %v2525
    %v2532 = vsel %vm2531, 1, 0
    %v2533 = vadd.s32 %v2529, %v2525
    %v2534 = vadd.s32 %v2530, %v2532
    %v2535 = vadd.s32 %v2534, %v2524
    %v2536 = vadd.s32 %v2535, %v2526
    %v2537 = vand.u32 %v2514, 65535
    %v2538 = vshrl.u32 %v2514, 16
    %v2539 = vand.u32 %v2509, 65535
    %v2540 = vshrl.u32 %v2509, 16
    %v2541 = vmul.u32 %v2537, %v2539
    %v2542 = vmul.u32 %v2537, %v2540
    %v2543 = vmul.u32 %v2538, %v2539
    %v2544 = vmul.u32 %v2538, %v2540
    %v2545 = vshll.u32 %v2542, 16
    %v2546 = vshrl.u32 %v2542, 16
    %v2547 = vshll.u32 %v2543, 16
    %v2548 = vshrl.u32 %v2543, 16
    %vm2549 = vc.u32 %v2541, %v2545
    %v2550 = vsel %vm2549, 1, 0
    %v2551 = vadd.s32 %v2541, %v2545
    %v2552 = vadd.s32 %v2544, %v2550
    %vm2553 = vc.u32 %v2551, %v2547
    %v2554 = vsel %vm2553, 1, 0
    %v2555 = vadd.s32 %v2551, %v2547
    %v2556 = vadd.s32 %v2552, %v2554
    %v2557 = vadd.s32 %v2556, %v2546
    %v2558 = vadd.s32 %v2557, %v2548
    %v2559 = vmul.u32 %v2514, %v2505
    %v2560 = vadd.s32 %v2536, %v2555
    %vm2561 = vc.u32 %v2536, %v2555
    %v2562 = vadd.s32 %v2558, 1
    %v2563 = vsel %vm2561, %v2562, %v2558
    %v2564 = vadd.s32 %v2559, %v2563
    %v2565 = vadd.s32 %v2564, 536870912
    %v2566 = vshrl.u32 %v2565, 30
    %v2567 = vshll.u32 %v2566, 30
    %v2568 = vsub.s32 %v2564, %v2567
    %vm2569 = vcmp.lt.s32.totalorder %v2568, 0
    %v2570 = vsub.s32 0, %v2568
    %v2571 = vsel %vm2569, %v2570, %v2568
    %v2572 = vclz %v2571
    %v2573 = vsub.s32 %v2572, 2
    %vm2574 = vcmp.gt.s32.totalorder 0, %v2573
    %v2575 = vsel %vm2574, 0, %v2573
    %v2576 = vsub.s32 32, %v2575
    %v2577 = vshll.u32 %v2568, %v2575
    %v2578 = vshrl.u32 %v2560, %v2576
    %v2579 = vor.u32 %v2577, %v2578
    %v2580 = vsub.s32 4294967266, %v2575
    %v2581 = vadd.s32 %v2580, 127
    %v2582 = vshll.u32 %v2581, 23
    %v2583 = vor.u32 4788187, %v2582
    %v2584 = vand.u32 2147483647, %v2583
    %v2586 = vcvt.s32.f32 %v2579
    %v2587 = vmul.f32 %v2586, %v2584
    %v2588 = vxor.u32 %v2587, 2147483648
    %v2589 = vsel %vm2468, %v2588, %v2587
    %v2590 = vsub.s32 4, %v2566
    %v2591 = vsel %vm2468, %v2590, %v2566
    %v2592 = vsel %vm2467, %v1016, %v2589
    %v2593 = vsel %vm2467, 0, %v2591
    %v2594 = vmul.f32 %v2592, %v2592
    %v2595 = vmul.f32 %v2594, -0.001358992
    %v2596 = vadd.f32 %v2595, 0.041655596
    %v2597 = vmul.f32 %v2594, %v2596
    %v2598 = vadd.f32 %v2597, -0.4999988
    %v2599 = vmul.f32 %v2594, %v2598
    %v2600 = vadd.f32 1.0, %v2599
    %v2601 = vmul.f32 %v2592, %v2592
    %v2602 = vmul.f32 %v2601, -0.00019511016
    %v2603 = vadd.f32 %v2602, 0.008332121
    %v2604 = vmul.f32 %v2601, %v2603
    %v2605 = vadd.f32 %v2604, -0.16666654
    %v2606 = vmul.f32 %v2601, %v2605
    %v2607 = vadd.f32 %v2606, 1.0
    %v2608 = vmul.f32 %v2607, %v2592
    %vm2609 = vweird.f32 %v1016
    %v2610 = vadd.s32 %v2593, 3
    %v2611 = vand.u32 %v2610, 3
    %vm2612 = vcmp.lt.s32.totalorder %v2611, 2
    %vm2613 = vcmp.eq.s32.totalorder %v2611, 0
    %v2614 = vxor.u32 %v2608, 2147483648
    %v2615 = vsel %vm2613, %v2600, %v2614
    %vm2616 = vcmp.eq.s32.totalorder %v2611, 2
    %v2617 = vxor.u32 %v2600, 2147483648
    %v2618 = vsel %vm2616, %v2617, %v2608
    %v2619 = vsel %vm2612, %v2615, %v2618
    %v2620 = vsel %vm2609, nan, %v2619
    %v2621 = vand.u32 2147483647, %v1017
    %vm2622 = vcmp.le.f32.partialorder %v2621, 0.7853982
    %vm2623 = vcmp.lt.s32.totalorder %v1017, 0
    %v2624 = vand.u32 %v1017, 2139095040
    %v2625 = vshrl.u32 %v2624, 23
    %v2626 = vsub.s32 %v2625, 127
    %v2627 = vand.u32 2147483647, %v1017
    %v2628 = vand.u32 %v2627, 8388607
    %v2629 = vor.u32 %v2628, 8388608
    %v2630 = vsub.s32 0, %v2629
    %v2631 = vadd.s32 %v2626, 1
    %vm2632 = vcmp.gt.s32.totalorder %v2631, 0
    %v2633 = vsel %vm2632, %v2631, 0
    %v2634 = vshrl.u32 %v2633, 5
    %v2635 = vand.u32 %v2633, 31
    %v2636 = vsub.s32 32, %v2635
    %v2637 = vshrl.u32 683565275, %v2636
    %v2638 = vshll.u32 683565275, %v2635
    %v2639 = vshrl.u32 2475754826, %v2636
    %v2640 = vor.u32 %v2638, %v2639
    %v2641 = vshll.u32 2475754826, %v2635
    %v2642 = vshrl.u32 2131351028, %v2636
    %v2643 = vor.u32 %v2641, %v2642
    %v2644 = vshll.u32 2131351028, %v2635
    %v2645 = vshrl.u32 2102212464, %v2636
    %v2646 = vor.u32 %v2644, %v2645
    %v2647 = vshll.u32 2102212464, %v2635
    %v2648 = vshrl.u32 920167782, %v2636
    %v2649 = vor.u32 %v2647, %v2648
    %v2650 = vshll.u32 920167782, %v2635
    %v2651 = vshrl.u32 1326507024, %v2636
    %v2652 = vor.u32 %v2650, %v2651
    %vm2653 = vcmp.lt.s32.totalorder %v2634, 1
    %vm2654 = vcmp.lt.s32.totalorder %v2634, 2
    %vm2655 = vcmp.lt.s32.totalorder %v2634, 3
    %vm2656 = vcmp.lt.s32.totalorder %v2634, 4
    %v2657 = vsel %vm2653, %v2637, %v2640
    %v2658 = vsel %vm2656, %v2646, 2102212464
    %v2659 = vsel %vm2655, %v2643, %v2658
    %v2660 = vsel %vm2654, %v2657, %v2659
    %v2661 = vsel %vm2653, %v2640, %v2643
    %v2662 = vsel %vm2656, %v2649, 920167782
    %v2663 = vsel %vm2655, %v2646, %v2662
    %v2664 = vsel %vm2654, %v2661, %v2663
    %v2665 = vsel %vm2653, %v2643, %v2646
    %v2666 = vsel %vm2656, %v2652, 1326507024
    %v2667 = vsel %vm2655, %v2649, %v2666
    %v2668 = vsel %vm2654, %v2665, %v2667
    %v2669 = vshll.u32 %v2629, 8
    %v2670 = vand.u32 %v2669, 65535
    %v2671 = vshrl.u32 %v2669, 16
    %v2672 = vand.u32 %v2668, 65535
    %v2673 = vshrl.u32 %v2668, 16
    %v2674 = vmul.u32 %v2670, %v2672
    %v2675 = vmul.u32 %v2670, %v2673
    %v2676 = vmul.u32 %v2671, %v2672
    %v2677 = vmul.u32 %v2671, %v2673
    %v2678 = vshll.u32 %v2675, 16
    %v2679 = vshrl.u32 %v2675, 16
    %v2680 = vshll.u32 %v2676, 16
    %v2681 = vshrl.u32 %v2676, 16
    %vm2682 = vc.u32 %v2674, %v2678
    %v2683 = vsel %vm2682, 1, 0
    %v2684 = vadd.s32 %v2674, %v2678
    %v2685 = vadd.s32 %v2677, %v2683
    %vm2686 = vc.u32 %v2684, %v2680
    %v2687 = vsel %vm2686, 1, 0
    %v2688 = vadd.s32 %v2684, %v2680
    %v2689 = vadd.s32 %v2685, %v2687
    %v2690 = vadd.s32 %v2689, %v2679
    %v2691 = vadd.s32 %v2690, %v2681
    %v2692 = vand.u32 %v2669, 65535
    %v2693 = vshrl.u32 %v2669, 16
    %v2694 = vand.u32 %v2664, 65535
    %v2695 = vshrl.u32 %v2664, 16
    %v2696 = vmul.u32 %v2692, %v2694
    %v2697 = vmul.u32 %v2692, %v2695
    %v2698 = vmul.u32 %v2693, %v2694
    %v2699 = vmul.u32 %v2693, %v2695
    %v2700 = vshll.u32 %v2697, 16
    %v2701 = vshrl.u32 %v2697, 16
    %v2702 = vshll.u32 %v2698, 16
    %v2703 = vshrl.u32 %v2698, 16
    %vm2704 = vc.u32 %v2696, %v2700
    %v2705 = vsel %vm2704, 1, 0
    %v2706 = vadd.s32 %v2696, %v2700
    %v2707 = vadd.s32 %v2699, %v2705
    %vm2708 = vc.u32 %v2706, %v2702
    %v2709 = vsel %vm2708, 1, 0
    %v2710 = vadd.s32 %v2706, %v2702
    %v2711 = vadd.s32 %v2707, %v2709
    %v2712 = vadd.s32 %v2711, %v2701
    %v2713 = vadd.s32 %v2712, %v2703
    %v2714 = vmul.u32 %v2669, %v2660
    %v2715 = vadd.s32 %v2691, %v2710
    %vm2716 = vc.u32 %v2691, %v2710
    %v2717 = vadd.s32 %v2713, 1
    %v2718 = vsel %vm2716, %v2717, %v2713
    %v2719 = vadd.s32 %v2714, %v2718
    %v2720 = vadd.s32 %v2719, 536870912
    %v2721 = vshrl.u32 %v2720, 30
    %v2722 = vshll.u32 %v2721, 30
    %v2723 = vsub.s32 %v2719, %v2722
    %vm2724 = vcmp.lt.s32.totalorder %v2723, 0
    %v2725 = vsub.s32 0, %v2723
    %v2726 = vsel %vm2724, %v2725, %v2723
    %v2727 = vclz %v2726
    %v2728 = vsub.s32 %v2727, 2
    %vm2729 = vcmp.gt.s32.totalorder 0, %v2728
    %v2730 = vsel %vm2729, 0, %v2728
    %v2731 = vsub.s32 32, %v2730
    %v2732 = vshll.u32 %v2723, %v2730
    %v2733 = vshrl.u32 %v2715, %v2731
    %v2734 = vor.u32 %v2732, %v2733
    %v2735 = vsub.s32 4294967266, %v2730
    %v2736 = vadd.s32 %v2735, 127
    %v2737 = vshll.u32 %v2736, 23
    %v2738 = vor.u32 4788187, %v2737
    %v2739 = vand.u32 2147483647, %v2738
    %v2741 = vcvt.s32.f32 %v2734
    %v2742 = vmul.f32 %v2741, %v2739
    %v2743 = vxor.u32 %v2742, 2147483648
    %v2744 = vsel %vm2623, %v2743, %v2742
    %v2745 = vsub.s32 4, %v2721
    %v2746 = vsel %vm2623, %v2745, %v2721
    %v2747 = vsel %vm2622, %v1017, %v2744
    %v2748 = vsel %vm2622, 0, %v2746
    %v2749 = vmul.f32 %v2747, %v2747
    %v2750 = vmul.f32 %v2749, -0.001358992
    %v2751 = vadd.f32 %v2750, 0.041655596
    %v2752 = vmul.f32 %v2749, %v2751
    %v2753 = vadd.f32 %v2752, -0.4999988
    %v2754 = vmul.f32 %v2749, %v2753
    %v2755 = vadd.f32 1.0, %v2754
    %v2756 = vmul.f32 %v2747, %v2747
    %v2757 = vmul.f32 %v2756, -0.00019511016
    %v2758 = vadd.f32 %v2757, 0.008332121
    %v2759 = vmul.f32 %v2756, %v2758
    %v2760 = vadd.f32 %v2759, -0.16666654
    %v2761 = vmul.f32 %v2756, %v2760
    %v2762 = vadd.f32 %v2761, 1.0
    %v2763 = vmul.f32 %v2762, %v2747
    %vm2764 = vweird.f32 %v1017
    %v2765 = vadd.s32 %v2748, 3
    %v2766 = vand.u32 %v2765, 3
    %vm2767 = vcmp.lt.s32.totalorder %v2766, 2
    %vm2768 = vcmp.eq.s32.totalorder %v2766, 0
    %v2769 = vxor.u32 %v2763, 2147483648
    %v2770 = vsel %vm2768, %v2755, %v2769
    %vm2771 = vcmp.eq.s32.totalorder %v2766, 2
    %v2772 = vxor.u32 %v2755, 2147483648
    %v2773 = vsel %vm2771, %v2772, %v2763
    %v2774 = vsel %vm2767, %v2770, %v2773
    %v2775 = vsel %vm2764, nan, %v2774
    %v2776 = vand.u32 2147483647, %v1018
    %vm2777 = vcmp.le.f32.partialorder %v2776, 0.7853982
    %vm2778 = vcmp.lt.s32.totalorder %v1018, 0
    %v2779 = vand.u32 %v1018, 2139095040
    %v2780 = vshrl.u32 %v2779, 23
    %v2781 = vsub.s32 %v2780, 127
    %v2782 = vand.u32 2147483647, %v1018
    %v2783 = vand.u32 %v2782, 8388607
    %v2784 = vor.u32 %v2783, 8388608
    %v2785 = vsub.s32 0, %v2784
    %v2786 = vadd.s32 %v2781, 1
    %vm2787 = vcmp.gt.s32.totalorder %v2786, 0
    %v2788 = vsel %vm2787, %v2786, 0
    %v2789 = vshrl.u32 %v2788, 5
    %v2790 = vand.u32 %v2788, 31
    %v2791 = vsub.s32 32, %v2790
    %v2792 = vshrl.u32 683565275, %v2791
    %v2793 = vshll.u32 683565275, %v2790
    %v2794 = vshrl.u32 2475754826, %v2791
    %v2795 = vor.u32 %v2793, %v2794
    %v2796 = vshll.u32 2475754826, %v2790
    %v2797 = vshrl.u32 2131351028, %v2791
    %v2798 = vor.u32 %v2796, %v2797
    %v2799 = vshll.u32 2131351028, %v2790
    %v2800 = vshrl.u32 2102212464, %v2791
    %v2801 = vor.u32 %v2799, %v2800
    %v2802 = vshll.u32 2102212464, %v2790
    %v2803 = vshrl.u32 920167782, %v2791
    %v2804 = vor.u32 %v2802, %v2803
    %v2805 = vshll.u32 920167782, %v2790
    %v2806 = vshrl.u32 1326507024, %v2791
    %v2807 = vor.u32 %v2805, %v2806
    %vm2808 = vcmp.lt.s32.totalorder %v2789, 1
    %vm2809 = vcmp.lt.s32.totalorder %v2789, 2
    %vm2810 = vcmp.lt.s32.totalorder %v2789, 3
    %vm2811 = vcmp.lt.s32.totalorder %v2789, 4
    %v2812 = vsel %vm2808, %v2792, %v2795
    %v2813 = vsel %vm2811, %v2801, 2102212464
    %v2814 = vsel %vm2810, %v2798, %v2813
    %v2815 = vsel %vm2809, %v2812, %v2814
    %v2816 = vsel %vm2808, %v2795, %v2798
    %v2817 = vsel %vm2811, %v2804, 920167782
    %v2818 = vsel %vm2810, %v2801, %v2817
    %v2819 = vsel %vm2809, %v2816, %v2818
    %v2820 = vsel %vm2808, %v2798, %v2801
    %v2821 = vsel %vm2811, %v2807, 1326507024
    %v2822 = vsel %vm2810, %v2804, %v2821
    %v2823 = vsel %vm2809, %v2820, %v2822
    %v2824 = vshll.u32 %v2784, 8
    %v2825 = vand.u32 %v2824, 65535
    %v2826 = vshrl.u32 %v2824, 16
    %v2827 = vand.u32 %v2823, 65535
    %v2828 = vshrl.u32 %v2823, 16
    %v2829 = vmul.u32 %v2825, %v2827
    %v2830 = vmul.u32 %v2825, %v2828
    %v2831 = vmul.u32 %v2826, %v2827
    %v2832 = vmul.u32 %v2826, %v2828
    %v2833 = vshll.u32 %v2830, 16
    %v2834 = vshrl.u32 %v2830, 16
    %v2835 = vshll.u32 %v2831, 16
    %v2836 = vshrl.u32 %v2831, 16
    %vm2837 = vc.u32 %v2829, %v2833
    %v2838 = vsel %vm2837, 1, 0
    %v2839 = vadd.s32 %v2829, %v2833
    %v2840 = vadd.s32 %v2832, %v2838
    %vm2841 = vc.u32 %v2839, %v2835
    %v2842 = vsel %vm2841, 1, 0
    %v2843 = vadd.s32 %v2839, %v2835
    %v2844 = vadd.s32 %v2840, %v2842
    %v2845 = vadd.s32 %v2844, %v2834
    %v2846 = vadd.s32 %v2845, %v2836
    %v2847 = vand.u32 %v2824, 65535
    %v2848 = vshrl.u32 %v2824, 16
    %v2849 = vand.u32 %v2819, 65535
    %v2850 = vshrl.u32 %v2819, 16
    %v2851 = vmul.u32 %v2847, %v2849
    %v2852 = vmul.u32 %v2847, %v2850
    %v2853 = vmul.u32 %v2848, %v2849
    %v2854 = vmul.u32 %v2848, %v2850
    %v2855 = vshll.u32 %v2852, 16
    %v2856 = vshrl.u32 %v2852, 16
    %v2857 = vshll.u32 %v2853, 16
    %v2858 = vshrl.u32 %v2853, 16
    %vm2859 = vc.u32 %v2851, %v2855
    %v2860 = vsel %vm2859, 1, 0
    %v2861 = vadd.s32 %v2851, %v2855
    %v2862 = vadd.s32 %v2854, %v2860
    %vm2863 = vc.u32 %v2861, %v2857
    %v2864 = vsel %vm2863, 1, 0
    %v2865 = vadd.s32 %v2861, %v2857
    %v2866 = vadd.s32 %v2862, %v2864
    %v2867 = vadd.s32 %v2866, %v2856
    %v2868 = vadd.s32 %v2867, %v2858
    %v2869 = vmul.u32 %v2824, %v2815
    %v2870 = vadd.s32 %v2846, %v2865
    %vm2871 = vc.u32 %v2846, %v2865
    %v2872 = vadd.s32 %v2868, 1
    %v2873 = vsel %vm2871, %v2872, %v2868
    %v2874 = vadd.s32 %v2869, %v2873
    %v2875 = vadd.s32 %v2874, 536870912
    %v2876 = vshrl.u32 %v2875, 30
    %v2877 = vshll.u32 %v2876, 30
    %v2878 = vsub.s32 %v2874, %v2877
    %vm2879 = vcmp.lt.s32.totalorder %v2878, 0
    %v2880 = vsub.s32 0, %v2878
    %v2881 = vsel %vm2879, %v2880, %v2878
    %v2882 = vclz %v2881
    %v2883 = vsub.s32 %v2882, 2
    %vm2884 = vcmp.gt.s32.totalorder 0, %v2883
    %v2885 = vsel %vm2884, 0, %v2883
    %v2886 = vsub.s32 32, %v2885
    %v2887 = vshll.u32 %v2878, %v2885
    %v2888 = vshrl.u32 %v2870, %v2886
    %v2889 = vor.u32 %v2887, %v2888
    %v2890 = vsub.s32 4294967266, %v2885
    %v2891 = vadd.s32 %v2890, 127
    %v2892 = vshll.u32 %v2891, 23
    %v2893 = vor.u32 4788187, %v2892
    %v2894 = vand.u32 2147483647, %v2893
    %v2896 = vcvt.s32.f32 %v2889
    %v2897 = vmul.f32 %v2896, %v2894
    %v2898 = vxor.u32 %v2897, 2147483648
    %v2899 = vsel %vm2778, %v2898, %v2897
    %v2900 = vsub.s32 4, %v2876
    %v2901 = vsel %vm2778, %v2900, %v2876
    %v2902 = vsel %vm2777, %v1018, %v2899
    %v2903 = vsel %vm2777, 0, %v2901
    %v2904 = vmul.f32 %v2902, %v2902
    %v2905 = vmul.f32 %v2904, -0.001358992
    %v2906 = vadd.f32 %v2905, 0.041655596
    %v2907 = vmul.f32 %v2904, %v2906
    %v2908 = vadd.f32 %v2907, -0.4999988
    %v2909 = vmul.f32 %v2904, %v2908
    %v2910 = vadd.f32 1.0, %v2909
    %v2911 = vmul.f32 %v2902, %v2902
    %v2912 = vmul.f32 %v2911, -0.00019511016
    %v2913 = vadd.f32 %v2912, 0.008332121
    %v2914 = vmul.f32 %v2911, %v2913
    %v2915 = vadd.f32 %v2914, -0.16666654
    %v2916 = vmul.f32 %v2911, %v2915
    %v2917 = vadd.f32 %v2916, 1.0
    %v2918 = vmul.f32 %v2917, %v2902
    %vm2919 = vweird.f32 %v1018
    %v2920 = vadd.s32 %v2903, 3
    %v2921 = vand.u32 %v2920, 3
    %vm2922 = vcmp.lt.s32.totalorder %v2921, 2
    %vm2923 = vcmp.eq.s32.totalorder %v2921, 0
    %v2924 = vxor.u32 %v2918, 2147483648
    %v2925 = vsel %vm2923, %v2910, %v2924
    %vm2926 = vcmp.eq.s32.totalorder %v2921, 2
    %v2927 = vxor.u32 %v2910, 2147483648
    %v2928 = vsel %vm2926, %v2927, %v2918
    %v2929 = vsel %vm2922, %v2925, %v2928
    %v2930 = vsel %vm2919, nan, %v2929
    %v2931 = vand.u32 2147483647, %v1019
    %vm2932 = vcmp.le.f32.partialorder %v2931, 0.7853982
    %vm2933 = vcmp.lt.s32.totalorder %v1019, 0
    %v2934 = vand.u32 %v1019, 2139095040
    %v2935 = vshrl.u32 %v2934, 23
    %v2936 = vsub.s32 %v2935, 127
    %v2937 = vand.u32 2147483647, %v1019
    %v2938 = vand.u32 %v2937, 8388607
    %v2939 = vor.u32 %v2938, 8388608
    %v2940 = vsub.s32 0, %v2939
    %v2941 = vadd.s32 %v2936, 1
    %vm2942 = vcmp.gt.s32.totalorder %v2941, 0
    %v2943 = vsel %vm2942, %v2941, 0
    %v2944 = vshrl.u32 %v2943, 5
    %v2945 = vand.u32 %v2943, 31
    %v2946 = vsub.s32 32, %v2945
    %v2947 = vshrl.u32 683565275, %v2946
    %v2948 = vshll.u32 683565275, %v2945
    %v2949 = vshrl.u32 2475754826, %v2946
    %v2950 = vor.u32 %v2948, %v2949
    %v2951 = vshll.u32 2475754826, %v2945
    %v2952 = vshrl.u32 2131351028, %v2946
    %v2953 = vor.u32 %v2951, %v2952
    %v2954 = vshll.u32 2131351028, %v2945
    %v2955 = vshrl.u32 2102212464, %v2946
    %v2956 = vor.u32 %v2954, %v2955
    %v2957 = vshll.u32 2102212464, %v2945
    %v2958 = vshrl.u32 920167782, %v2946
    %v2959 = vor.u32 %v2957, %v2958
    %v2960 = vshll.u32 920167782, %v2945
    %v2961 = vshrl.u32 1326507024, %v2946
    %v2962 = vor.u32 %v2960, %v2961
    %vm2963 = vcmp.lt.s32.totalorder %v2944, 1
    %vm2964 = vcmp.lt.s32.totalorder %v2944, 2
    %vm2965 = vcmp.lt.s32.totalorder %v2944, 3
    %vm2966 = vcmp.lt.s32.totalorder %v2944, 4
    %v2967 = vsel %vm2963, %v2947, %v2950
    %v2968 = vsel %vm2966, %v2956, 2102212464
    %v2969 = vsel %vm2965, %v2953, %v2968
    %v2970 = vsel %vm2964, %v2967, %v2969
    %v2971 = vsel %vm2963, %v2950, %v2953
    %v2972 = vsel %vm2966, %v2959, 920167782
    %v2973 = vsel %vm2965, %v2956, %v2972
    %v2974 = vsel %vm2964, %v2971, %v2973
    %v2975 = vsel %vm2963, %v2953, %v2956
    %v2976 = vsel %vm2966, %v2962, 1326507024
    %v2977 = vsel %vm2965, %v2959, %v2976
    %v2978 = vsel %vm2964, %v2975, %v2977
    %v2979 = vshll.u32 %v2939, 8
    %v2980 = vand.u32 %v2979, 65535
    %v2981 = vshrl.u32 %v2979, 16
    %v2982 = vand.u32 %v2978, 65535
    %v2983 = vshrl.u32 %v2978, 16
    %v2984 = vmul.u32 %v2980, %v2982
    %v2985 = vmul.u32 %v2980, %v2983
    %v2986 = vmul.u32 %v2981, %v2982
    %v2987 = vmul.u32 %v2981, %v2983
    %v2988 = vshll.u32 %v2985, 16
    %v2989 = vshrl.u32 %v2985, 16
    %v2990 = vshll.u32 %v2986, 16
    %v2991 = vshrl.u32 %v2986, 16
    %vm2992 = vc.u32 %v2984, %v2988
    %v2993 = vsel %vm2992, 1, 0
    %v2994 = vadd.s32 %v2984, %v2988
    %v2995 = vadd.s32 %v2987, %v2993
    %vm2996 = vc.u32 %v2994, %v2990
    %v2997 = vsel %vm2996, 1, 0
    %v2998 = vadd.s32 %v2994, %v2990
    %v2999 = vadd.s32 %v2995, %v2997
    %v3000 = vadd.s32 %v2999, %v2989
    %v3001 = vadd.s32 %v3000, %v2991
    %v3002 = vand.u32 %v2979, 65535
    %v3003 = vshrl.u32 %v2979, 16
    %v3004 = vand.u32 %v2974, 65535
    %v3005 = vshrl.u32 %v2974, 16
    %v3006 = vmul.u32 %v3002, %v3004
    %v3007 = vmul.u32 %v3002, %v3005
    %v3008 = vmul.u32 %v3003, %v3004
    %v3009 = vmul.u32 %v3003, %v3005
    %v3010 = vshll.u32 %v3007, 16
    %v3011 = vshrl.u32 %v3007, 16
    %v3012 = vshll.u32 %v3008, 16
    %v3013 = vshrl.u32 %v3008, 16
    %vm3014 = vc.u32 %v3006, %v3010
    %v3015 = vsel %vm3014, 1, 0
    %v3016 = vadd.s32 %v3006, %v3010
    %v3017 = vadd.s32 %v3009, %v3015
    %vm3018 = vc.u32 %v3016, %v3012
    %v3019 = vsel %vm3018, 1, 0
    %v3020 = vadd.s32 %v3016, %v3012
    %v3021 = vadd.s32 %v3017, %v3019
    %v3022 = vadd.s32 %v3021, %v3011
    %v3023 = vadd.s32 %v3022, %v3013
    %v3024 = vmul.u32 %v2979, %v2970
    %v3025 = vadd.s32 %v3001, %v3020
    %vm3026 = vc.u32 %v3001, %v3020
    %v3027 = vadd.s32 %v3023, 1
    %v3028 = vsel %vm3026, %v3027, %v3023
    %v3029 = vadd.s32 %v3024, %v3028
    %v3030 = vadd.s32 %v3029, 536870912
    %v3031 = vshrl.u32 %v3030, 30
    %v3032 = vshll.u32 %v3031, 30
    %v3033 = vsub.s32 %v3029, %v3032
    %vm3034 = vcmp.lt.s32.totalorder %v3033, 0
    %v3035 = vsub.s32 0, %v3033
    %v3036 = vsel %vm3034, %v3035, %v3033
    %v3037 = vclz %v3036
    %v3038 = vsub.s32 %v3037, 2
    %vm3039 = vcmp.gt.s32.totalorder 0, %v3038
    %v3040 = vsel %vm3039, 0, %v3038
    %v3041 = vsub.s32 32, %v3040
    %v3042 = vshll.u32 %v3033, %v3040
    %v3043 = vshrl.u32 %v3025, %v3041
    %v3044 = vor.u32 %v3042, %v3043
    %v3045 = vsub.s32 4294967266, %v3040
    %v3046 = vadd.s32 %v3045, 127
    %v3047 = vshll.u32 %v3046, 23
    %v3048 = vor.u32 4788187, %v3047
    %v3049 = vand.u32 2147483647, %v3048
    %v3051 = vcvt.s32.f32 %v3044
    %v3052 = vmul.f32 %v3051, %v3049
    %v3053 = vxor.u32 %v3052, 2147483648
    %v3054 = vsel %vm2933, %v3053, %v3052
    %v3055 = vsub.s32 4, %v3031
    %v3056 = vsel %vm2933, %v3055, %v3031
    %v3057 = vsel %vm2932, %v1019, %v3054
    %v3058 = vsel %vm2932, 0, %v3056
    %v3059 = vmul.f32 %v3057, %v3057
    %v3060 = vmul.f32 %v3059, -0.001358992
    %v3061 = vadd.f32 %v3060, 0.041655596
    %v3062 = vmul.f32 %v3059, %v3061
    %v3063 = vadd.f32 %v3062, -0.4999988
    %v3064 = vmul.f32 %v3059, %v3063
    %v3065 = vadd.f32 1.0, %v3064
    %v3066 = vmul.f32 %v3057, %v3057
    %v3067 = vmul.f32 %v3066, -0.00019511016
    %v3068 = vadd.f32 %v3067, 0.008332121
    %v3069 = vmul.f32 %v3066, %v3068
    %v3070 = vadd.f32 %v3069, -0.16666654
    %v3071 = vmul.f32 %v3066, %v3070
    %v3072 = vadd.f32 %v3071, 1.0
    %v3073 = vmul.f32 %v3072, %v3057
    %vm3074 = vweird.f32 %v1019
    %v3075 = vadd.s32 %v3058, 3
    %v3076 = vand.u32 %v3075, 3
    %vm3077 = vcmp.lt.s32.totalorder %v3076, 2
    %vm3078 = vcmp.eq.s32.totalorder %v3076, 0
    %v3079 = vxor.u32 %v3073, 2147483648
    %v3080 = vsel %vm3078, %v3065, %v3079
    %vm3081 = vcmp.eq.s32.totalorder %v3076, 2
    %v3082 = vxor.u32 %v3065, 2147483648
    %v3083 = vsel %vm3081, %v3082, %v3073
    %v3084 = vsel %vm3077, %v3080, %v3083
    %v3085 = vsel %vm3074, nan, %v3084
    %v3086 = vand.u32 2147483647, %v1020
    %vm3087 = vcmp.le.f32.partialorder %v3086, 0.7853982
    %vm3088 = vcmp.lt.s32.totalorder %v1020, 0
    %v3089 = vand.u32 %v1020, 2139095040
    %v3090 = vshrl.u32 %v3089, 23
    %v3091 = vsub.s32 %v3090, 127
    %v3092 = vand.u32 2147483647, %v1020
    %v3093 = vand.u32 %v3092, 8388607
    %v3094 = vor.u32 %v3093, 8388608
    %v3095 = vsub.s32 0, %v3094
    %v3096 = vadd.s32 %v3091, 1
    %vm3097 = vcmp.gt.s32.totalorder %v3096, 0
    %v3098 = vsel %vm3097, %v3096, 0
    %v3099 = vshrl.u32 %v3098, 5
    %v3100 = vand.u32 %v3098, 31
    %v3101 = vsub.s32 32, %v3100
    %v3102 = vshrl.u32 683565275, %v3101
    %v3103 = vshll.u32 683565275, %v3100
    %v3104 = vshrl.u32 2475754826, %v3101
    %v3105 = vor.u32 %v3103, %v3104
    %v3106 = vshll.u32 2475754826, %v3100
    %v3107 = vshrl.u32 2131351028, %v3101
    %v3108 = vor.u32 %v3106, %v3107
    %v3109 = vshll.u32 2131351028, %v3100
    %v3110 = vshrl.u32 2102212464, %v3101
    %v3111 = vor.u32 %v3109, %v3110
    %v3112 = vshll.u32 2102212464, %v3100
    %v3113 = vshrl.u32 920167782, %v3101
    %v3114 = vor.u32 %v3112, %v3113
    %v3115 = vshll.u32 920167782, %v3100
    %v3116 = vshrl.u32 1326507024, %v3101
    %v3117 = vor.u32 %v3115, %v3116
    %vm3118 = vcmp.lt.s32.totalorder %v3099, 1
    %vm3119 = vcmp.lt.s32.totalorder %v3099, 2
    %vm3120 = vcmp.lt.s32.totalorder %v3099, 3
    %vm3121 = vcmp.lt.s32.totalorder %v3099, 4
    %v3122 = vsel %vm3118, %v3102, %v3105
    %v3123 = vsel %vm3121, %v3111, 2102212464
    %v3124 = vsel %vm3120, %v3108, %v3123
    %v3125 = vsel %vm3119, %v3122, %v3124
    %v3126 = vsel %vm3118, %v3105, %v3108
    %v3127 = vsel %vm3121, %v3114, 920167782
    %v3128 = vsel %vm3120, %v3111, %v3127
    %v3129 = vsel %vm3119, %v3126, %v3128
    %v3130 = vsel %vm3118, %v3108, %v3111
    %v3131 = vsel %vm3121, %v3117, 1326507024
    %v3132 = vsel %vm3120, %v3114, %v3131
    %v3133 = vsel %vm3119, %v3130, %v3132
    %v3134 = vshll.u32 %v3094, 8
    %v3135 = vand.u32 %v3134, 65535
    %v3136 = vshrl.u32 %v3134, 16
    %v3137 = vand.u32 %v3133, 65535
    %v3138 = vshrl.u32 %v3133, 16
    %v3139 = vmul.u32 %v3135, %v3137
    %v3140 = vmul.u32 %v3135, %v3138
    %v3141 = vmul.u32 %v3136, %v3137
    %v3142 = vmul.u32 %v3136, %v3138
    %v3143 = vshll.u32 %v3140, 16
    %v3144 = vshrl.u32 %v3140, 16
    %v3145 = vshll.u32 %v3141, 16
    %v3146 = vshrl.u32 %v3141, 16
    %vm3147 = vc.u32 %v3139, %v3143
    %v3148 = vsel %vm3147, 1, 0
    %v3149 = vadd.s32 %v3139, %v3143
    %v3150 = vadd.s32 %v3142, %v3148
    %vm3151 = vc.u32 %v3149, %v3145
    %v3152 = vsel %vm3151, 1, 0
    %v3153 = vadd.s32 %v3149, %v3145
    %v3154 = vadd.s32 %v3150, %v3152
    %v3155 = vadd.s32 %v3154, %v3144
    %v3156 = vadd.s32 %v3155, %v3146
    %v3157 = vand.u32 %v3134, 65535
    %v3158 = vshrl.u32 %v3134, 16
    %v3159 = vand.u32 %v3129, 65535
    %v3160 = vshrl.u32 %v3129, 16
    %v3161 = vmul.u32 %v3157, %v3159
    %v3162 = vmul.u32 %v3157, %v3160
    %v3163 = vmul.u32 %v3158, %v3159
    %v3164 = vmul.u32 %v3158, %v3160
    %v3165 = vshll.u32 %v3162, 16
    %v3166 = vshrl.u32 %v3162, 16
    %v3167 = vshll.u32 %v3163, 16
    %v3168 = vshrl.u32 %v3163, 16
    %vm3169 = vc.u32 %v3161, %v3165
    %v3170 = vsel %vm3169, 1, 0
    %v3171 = vadd.s32 %v3161, %v3165
    %v3172 = vadd.s32 %v3164, %v3170
    %vm3173 = vc.u32 %v3171, %v3167
    %v3174 = vsel %vm3173, 1, 0
    %v3175 = vadd.s32 %v3171, %v3167
    %v3176 = vadd.s32 %v3172, %v3174
    %v3177 = vadd.s32 %v3176, %v3166
    %v3178 = vadd.s32 %v3177, %v3168
    %v3179 = vmul.u32 %v3134, %v3125
    %v3180 = vadd.s32 %v3156, %v3175
    %vm3181 = vc.u32 %v3156, %v3175
    %v3182 = vadd.s32 %v3178, 1
    %v3183 = vsel %vm3181, %v3182, %v3178
    %v3184 = vadd.s32 %v3179, %v3183
    %v3185 = vadd.s32 %v3184, 536870912
    %v3186 = vshrl.u32 %v3185, 30
    %v3187 = vshll.u32 %v3186, 30
    %v3188 = vsub.s32 %v3184, %v3187
    %vm3189 = vcmp.lt.s32.totalorder %v3188, 0
    %v3190 = vsub.s32 0, %v3188
    %v3191 = vsel %vm3189, %v3190, %v3188
    %v3192 = vclz %v3191
    %v3193 = vsub.s32 %v3192, 2
    %vm3194 = vcmp.gt.s32.totalorder 0, %v3193
    %v3195 = vsel %vm3194, 0, %v3193
    %v3196 = vsub.s32 32, %v3195
    %v3197 = vshll.u32 %v3188, %v3195
    %v3198 = vshrl.u32 %v3180, %v3196
    %v3199 = vor.u32 %v3197, %v3198
    %v3200 = vsub.s32 4294967266, %v3195
    %v3201 = vadd.s32 %v3200, 127
    %v3202 = vshll.u32 %v3201, 23
    %v3203 = vor.u32 4788187, %v3202
    %v3204 = vand.u32 2147483647, %v3203
    %v3206 = vcvt.s32.f32 %v3199
    %v3207 = vmul.f32 %v3206, %v3204
    %v3208 = vxor.u32 %v3207, 2147483648
    %v3209 = vsel %vm3088, %v3208, %v3207
    %v3210 = vsub.s32 4, %v3186
    %v3211 = vsel %vm3088, %v3210, %v3186
    %v3212 = vsel %vm3087, %v1020, %v3209
    %v3213 = vsel %vm3087, 0, %v3211
    %v3214 = vmul.f32 %v3212, %v3212
    %v3215 = vmul.f32 %v3214, -0.001358992
    %v3216 = vadd.f32 %v3215, 0.041655596
    %v3217 = vmul.f32 %v3214, %v3216
    %v3218 = vadd.f32 %v3217, -0.4999988
    %v3219 = vmul.f32 %v3214, %v3218
    %v3220 = vadd.f32 1.0, %v3219
    %v3221 = vmul.f32 %v3212, %v3212
    %v3222 = vmul.f32 %v3221, -0.00019511016
    %v3223 = vadd.f32 %v3222, 0.008332121
    %v3224 = vmul.f32 %v3221, %v3223
    %v3225 = vadd.f32 %v3224, -0.16666654
    %v3226 = vmul.f32 %v3221, %v3225
    %v3227 = vadd.f32 %v3226, 1.0
    %v3228 = vmul.f32 %v3227, %v3212
    %vm3229 = vweird.f32 %v1020
    %v3230 = vadd.s32 %v3213, 3
    %v3231 = vand.u32 %v3230, 3
    %vm3232 = vcmp.lt.s32.totalorder %v3231, 2
    %vm3233 = vcmp.eq.s32.totalorder %v3231, 0
    %v3234 = vxor.u32 %v3228, 2147483648
    %v3235 = vsel %vm3233, %v3220, %v3234
    %vm3236 = vcmp.eq.s32.totalorder %v3231, 2
    %v3237 = vxor.u32 %v3220, 2147483648
    %v3238 = vsel %vm3236, %v3237, %v3228
    %v3239 = vsel %vm3232, %v3235, %v3238
    %v3240 = vsel %vm3229, nan, %v3239
    %v3241 = vand.u32 2147483647, %v1021
    %vm3242 = vcmp.le.f32.partialorder %v3241, 0.7853982
    %vm3243 = vcmp.lt.s32.totalorder %v1021, 0
    %v3244 = vand.u32 %v1021, 2139095040
    %v3245 = vshrl.u32 %v3244, 23
    %v3246 = vsub.s32 %v3245, 127
    %v3247 = vand.u32 2147483647, %v1021
    %v3248 = vand.u32 %v3247, 8388607
    %v3249 = vor.u32 %v3248, 8388608
    %v3250 = vsub.s32 0, %v3249
    %v3251 = vadd.s32 %v3246, 1
    %vm3252 = vcmp.gt.s32.totalorder %v3251, 0
    %v3253 = vsel %vm3252, %v3251, 0
    %v3254 = vshrl.u32 %v3253, 5
    %v3255 = vand.u32 %v3253, 31
    %v3256 = vsub.s32 32, %v3255
    %v3257 = vshrl.u32 683565275, %v3256
    %v3258 = vshll.u32 683565275, %v3255
    %v3259 = vshrl.u32 2475754826, %v3256
    %v3260 = vor.u32 %v3258, %v3259
    %v3261 = vshll.u32 2475754826, %v3255
    %v3262 = vshrl.u32 2131351028, %v3256
    %v3263 = vor.u32 %v3261, %v3262
    %v3264 = vshll.u32 2131351028, %v3255
    %v3265 = vshrl.u32 2102212464, %v3256
    %v3266 = vor.u32 %v3264, %v3265
    %v3267 = vshll.u32 2102212464, %v3255
    %v3268 = vshrl.u32 920167782, %v3256
    %v3269 = vor.u32 %v3267, %v3268
    %v3270 = vshll.u32 920167782, %v3255
    %v3271 = vshrl.u32 1326507024, %v3256
    %v3272 = vor.u32 %v3270, %v3271
    %vm3273 = vcmp.lt.s32.totalorder %v3254, 1
    %vm3274 = vcmp.lt.s32.totalorder %v3254, 2
    %vm3275 = vcmp.lt.s32.totalorder %v3254, 3
    %vm3276 = vcmp.lt.s32.totalorder %v3254, 4
    %v3277 = vsel %vm3273, %v3257, %v3260
    %v3278 = vsel %vm3276, %v3266, 2102212464
    %v3279 = vsel %vm3275, %v3263, %v3278
    %v3280 = vsel %vm3274, %v3277, %v3279
    %v3281 = vsel %vm3273, %v3260, %v3263
    %v3282 = vsel %vm3276, %v3269, 920167782
    %v3283 = vsel %vm3275, %v3266, %v3282
    %v3284 = vsel %vm3274, %v3281, %v3283
    %v3285 = vsel %vm3273, %v3263, %v3266
    %v3286 = vsel %vm3276, %v3272, 1326507024
    %v3287 = vsel %vm3275, %v3269, %v3286
    %v3288 = vsel %vm3274, %v3285, %v3287
    %v3289 = vshll.u32 %v3249, 8
    %v3290 = vand.u32 %v3289, 65535
    %v3291 = vshrl.u32 %v3289, 16
    %v3292 = vand.u32 %v3288, 65535
    %v3293 = vshrl.u32 %v3288, 16
    %v3294 = vmul.u32 %v3290, %v3292
    %v3295 = vmul.u32 %v3290, %v3293
    %v3296 = vmul.u32 %v3291, %v3292
    %v3297 = vmul.u32 %v3291, %v3293
    %v3298 = vshll.u32 %v3295, 16
    %v3299 = vshrl.u32 %v3295, 16
    %v3300 = vshll.u32 %v3296, 16
    %v3301 = vshrl.u32 %v3296, 16
    %vm3302 = vc.u32 %v3294, %v3298
    %v3303 = vsel %vm3302, 1, 0
    %v3304 = vadd.s32 %v3294, %v3298
    %v3305 = vadd.s32 %v3297, %v3303
    %vm3306 = vc.u32 %v3304, %v3300
    %v3307 = vsel %vm3306, 1, 0
    %v3308 = vadd.s32 %v3304, %v3300
    %v3309 = vadd.s32 %v3305, %v3307
    %v3310 = vadd.s32 %v3309, %v3299
    %v3311 = vadd.s32 %v3310, %v3301
    %v3312 = vand.u32 %v3289, 65535
    %v3313 = vshrl.u32 %v3289, 16
    %v3314 = vand.u32 %v3284, 65535
    %v3315 = vshrl.u32 %v3284, 16
    %v3316 = vmul.u32 %v3312, %v3314
    %v3317 = vmul.u32 %v3312, %v3315
    %v3318 = vmul.u32 %v3313, %v3314
    %v3319 = vmul.u32 %v3313, %v3315
    %v3320 = vshll.u32 %v3317, 16
    %v3321 = vshrl.u32 %v3317, 16
    %v3322 = vshll.u32 %v3318, 16
    %v3323 = vshrl.u32 %v3318, 16
    %vm3324 = vc.u32 %v3316, %v3320
    %v3325 = vsel %vm3324, 1, 0
    %v3326 = vadd.s32 %v3316, %v3320
    %v3327 = vadd.s32 %v3319, %v3325
    %vm3328 = vc.u32 %v3326, %v3322
    %v3329 = vsel %vm3328, 1, 0
    %v3330 = vadd.s32 %v3326, %v3322
    %v3331 = vadd.s32 %v3327, %v3329
    %v3332 = vadd.s32 %v3331, %v3321
    %v3333 = vadd.s32 %v3332, %v3323
    %v3334 = vmul.u32 %v3289, %v3280
    %v3335 = vadd.s32 %v3311, %v3330
    %vm3336 = vc.u32 %v3311, %v3330
    %v3337 = vadd.s32 %v3333, 1
    %v3338 = vsel %vm3336, %v3337, %v3333
    %v3339 = vadd.s32 %v3334, %v3338
    %v3340 = vadd.s32 %v3339, 536870912
    %v3341 = vshrl.u32 %v3340, 30
    %v3342 = vshll.u32 %v3341, 30
    %v3343 = vsub.s32 %v3339, %v3342
    %vm3344 = vcmp.lt.s32.totalorder %v3343, 0
    %v3345 = vsub.s32 0, %v3343
    %v3346 = vsel %vm3344, %v3345, %v3343
    %v3347 = vclz %v3346
    %v3348 = vsub.s32 %v3347, 2
    %vm3349 = vcmp.gt.s32.totalorder 0, %v3348
    %v3350 = vsel %vm3349, 0, %v3348
    %v3351 = vsub.s32 32, %v3350
    %v3352 = vshll.u32 %v3343, %v3350
    %v3353 = vshrl.u32 %v3335, %v3351
    %v3354 = vor.u32 %v3352, %v3353
    %v3355 = vsub.s32 4294967266, %v3350
    %v3356 = vadd.s32 %v3355, 127
    %v3357 = vshll.u32 %v3356, 23
    %v3358 = vor.u32 4788187, %v3357
    %v3359 = vand.u32 2147483647, %v3358
    %v3361 = vcvt.s32.f32 %v3354
    %v3362 = vmul.f32 %v3361, %v3359
    %v3363 = vxor.u32 %v3362, 2147483648
    %v3364 = vsel %vm3243, %v3363, %v3362
    %v3365 = vsub.s32 4, %v3341
    %v3366 = vsel %vm3243, %v3365, %v3341
    %v3367 = vsel %vm3242, %v1021, %v3364
    %v3368 = vsel %vm3242, 0, %v3366
    %v3369 = vmul.f32 %v3367, %v3367
    %v3370 = vmul.f32 %v3369, -0.001358992
    %v3371 = vadd.f32 %v3370, 0.041655596
    %v3372 = vmul.f32 %v3369, %v3371
    %v3373 = vadd.f32 %v3372, -0.4999988
    %v3374 = vmul.f32 %v3369, %v3373
    %v3375 = vadd.f32 1.0, %v3374
    %v3376 = vmul.f32 %v3367, %v3367
    %v3377 = vmul.f32 %v3376, -0.00019511016
    %v3378 = vadd.f32 %v3377, 0.008332121
    %v3379 = vmul.f32 %v3376, %v3378
    %v3380 = vadd.f32 %v3379, -0.16666654
    %v3381 = vmul.f32 %v3376, %v3380
    %v3382 = vadd.f32 %v3381, 1.0
    %v3383 = vmul.f32 %v3382, %v3367
    %vm3384 = vweird.f32 %v1021
    %v3385 = vadd.s32 %v3368, 3
    %v3386 = vand.u32 %v3385, 3
    %vm3387 = vcmp.lt.s32.totalorder %v3386, 2
    %vm3388 = vcmp.eq.s32.totalorder %v3386, 0
    %v3389 = vxor.u32 %v3383, 2147483648
    %v3390 = vsel %vm3388, %v3375, %v3389
    %vm3391 = vcmp.eq.s32.totalorder %v3386, 2
    %v3392 = vxor.u32 %v3375, 2147483648
    %v3393 = vsel %vm3391, %v3392, %v3383
    %v3394 = vsel %vm3387, %v3390, %v3393
    %v3395 = vsel %vm3384, nan, %v3394
    %v3396 = vand.u32 2147483647, %v1022
    %vm3397 = vcmp.le.f32.partialorder %v3396, 0.7853982
    %vm3398 = vcmp.lt.s32.totalorder %v1022, 0
    %v3399 = vand.u32 %v1022, 2139095040
    %v3400 = vshrl.u32 %v3399, 23
    %v3401 = vsub.s32 %v3400, 127
    %v3402 = vand.u32 2147483647, %v1022
    %v3403 = vand.u32 %v3402, 8388607
    %v3404 = vor.u32 %v3403, 8388608
    %v3405 = vsub.s32 0, %v3404
    %v3406 = vadd.s32 %v3401, 1
    %vm3407 = vcmp.gt.s32.totalorder %v3406, 0
    %v3408 = vsel %vm3407, %v3406, 0
    %v3409 = vshrl.u32 %v3408, 5
    %v3410 = vand.u32 %v3408, 31
    %v3411 = vsub.s32 32, %v3410
    %v3412 = vshrl.u32 683565275, %v3411
    %v3413 = vshll.u32 683565275, %v3410
    %v3414 = vshrl.u32 2475754826, %v3411
    %v3415 = vor.u32 %v3413, %v3414
    %v3416 = vshll.u32 2475754826, %v3410
    %v3417 = vshrl.u32 2131351028, %v3411
    %v3418 = vor.u32 %v3416, %v3417
    %v3419 = vshll.u32 2131351028, %v3410
    %v3420 = vshrl.u32 2102212464, %v3411
    %v3421 = vor.u32 %v3419, %v3420
    %v3422 = vshll.u32 2102212464, %v3410
    %v3423 = vshrl.u32 920167782, %v3411
    %v3424 = vor.u32 %v3422, %v3423
    %v3425 = vshll.u32 920167782, %v3410
    %v3426 = vshrl.u32 1326507024, %v3411
    %v3427 = vor.u32 %v3425, %v3426
    %vm3428 = vcmp.lt.s32.totalorder %v3409, 1
    %vm3429 = vcmp.lt.s32.totalorder %v3409, 2
    %vm3430 = vcmp.lt.s32.totalorder %v3409, 3
    %vm3431 = vcmp.lt.s32.totalorder %v3409, 4
    %v3432 = vsel %vm3428, %v3412, %v3415
    %v3433 = vsel %vm3431, %v3421, 2102212464
    %v3434 = vsel %vm3430, %v3418, %v3433
    %v3435 = vsel %vm3429, %v3432, %v3434
    %v3436 = vsel %vm3428, %v3415, %v3418
    %v3437 = vsel %vm3431, %v3424, 920167782
    %v3438 = vsel %vm3430, %v3421, %v3437
    %v3439 = vsel %vm3429, %v3436, %v3438
    %v3440 = vsel %vm3428, %v3418, %v3421
    %v3441 = vsel %vm3431, %v3427, 1326507024
    %v3442 = vsel %vm3430, %v3424, %v3441
    %v3443 = vsel %vm3429, %v3440, %v3442
    %v3444 = vshll.u32 %v3404, 8
    %v3445 = vand.u32 %v3444, 65535
    %v3446 = vshrl.u32 %v3444, 16
    %v3447 = vand.u32 %v3443, 65535
    %v3448 = vshrl.u32 %v3443, 16
    %v3449 = vmul.u32 %v3445, %v3447
    %v3450 = vmul.u32 %v3445, %v3448
    %v3451 = vmul.u32 %v3446, %v3447
    %v3452 = vmul.u32 %v3446, %v3448
    %v3453 = vshll.u32 %v3450, 16
    %v3454 = vshrl.u32 %v3450, 16
    %v3455 = vshll.u32 %v3451, 16
    %v3456 = vshrl.u32 %v3451, 16
    %vm3457 = vc.u32 %v3449, %v3453
    %v3458 = vsel %vm3457, 1, 0
    %v3459 = vadd.s32 %v3449, %v3453
    %v3460 = vadd.s32 %v3452, %v3458
    %vm3461 = vc.u32 %v3459, %v3455
    %v3462 = vsel %vm3461, 1, 0
    %v3463 = vadd.s32 %v3459, %v3455
    %v3464 = vadd.s32 %v3460, %v3462
    %v3465 = vadd.s32 %v3464, %v3454
    %v3466 = vadd.s32 %v3465, %v3456
    %v3467 = vand.u32 %v3444, 65535
    %v3468 = vshrl.u32 %v3444, 16
    %v3469 = vand.u32 %v3439, 65535
    %v3470 = vshrl.u32 %v3439, 16
    %v3471 = vmul.u32 %v3467, %v3469
    %v3472 = vmul.u32 %v3467, %v3470
    %v3473 = vmul.u32 %v3468, %v3469
    %v3474 = vmul.u32 %v3468, %v3470
    %v3475 = vshll.u32 %v3472, 16
    %v3476 = vshrl.u32 %v3472, 16
    %v3477 = vshll.u32 %v3473, 16
    %v3478 = vshrl.u32 %v3473, 16
    %vm3479 = vc.u32 %v3471, %v3475
    %v3480 = vsel %vm3479, 1, 0
    %v3481 = vadd.s32 %v3471, %v3475
    %v3482 = vadd.s32 %v3474, %v3480
    %vm3483 = vc.u32 %v3481, %v3477
    %v3484 = vsel %vm3483, 1, 0
    %v3485 = vadd.s32 %v3481, %v3477
    %v3486 = vadd.s32 %v3482, %v3484
    %v3487 = vadd.s32 %v3486, %v3476
    %v3488 = vadd.s32 %v3487, %v3478
    %v3489 = vmul.u32 %v3444, %v3435
    %v3490 = vadd.s32 %v3466, %v3485
    %vm3491 = vc.u32 %v3466, %v3485
    %v3492 = vadd.s32 %v3488, 1
    %v3493 = vsel %vm3491, %v3492, %v3488
    %v3494 = vadd.s32 %v3489, %v3493
    %v3495 = vadd.s32 %v3494, 536870912
    %v3496 = vshrl.u32 %v3495, 30
    %v3497 = vshll.u32 %v3496, 30
    %v3498 = vsub.s32 %v3494, %v3497
    %vm3499 = vcmp.lt.s32.totalorder %v3498, 0
    %v3500 = vsub.s32 0, %v3498
    %v3501 = vsel %vm3499, %v3500, %v3498
    %v3502 = vclz %v3501
    %v3503 = vsub.s32 %v3502, 2
    %vm3504 = vcmp.gt.s32.totalorder 0, %v3503
    %v3505 = vsel %vm3504, 0, %v3503
    %v3506 = vsub.s32 32, %v3505
    %v3507 = vshll.u32 %v3498, %v3505
    %v3508 = vshrl.u32 %v3490, %v3506
    %v3509 = vor.u32 %v3507, %v3508
    %v3510 = vsub.s32 4294967266, %v3505
    %v3511 = vadd.s32 %v3510, 127
    %v3512 = vshll.u32 %v3511, 23
    %v3513 = vor.u32 4788187, %v3512
    %v3514 = vand.u32 2147483647, %v3513
    %v3516 = vcvt.s32.f32 %v3509
    %v3517 = vmul.f32 %v3516, %v3514
    %v3518 = vxor.u32 %v3517, 2147483648
    %v3519 = vsel %vm3398, %v3518, %v3517
    %v3520 = vsub.s32 4, %v3496
    %v3521 = vsel %vm3398, %v3520, %v3496
    %v3522 = vsel %vm3397, %v1022, %v3519
    %v3523 = vsel %vm3397, 0, %v3521
    %v3524 = vmul.f32 %v3522, %v3522
    %v3525 = vmul.f32 %v3524, -0.001358992
    %v3526 = vadd.f32 %v3525, 0.041655596
    %v3527 = vmul.f32 %v3524, %v3526
    %v3528 = vadd.f32 %v3527, -0.4999988
    %v3529 = vmul.f32 %v3524, %v3528
    %v3530 = vadd.f32 1.0, %v3529
    %v3531 = vmul.f32 %v3522, %v3522
    %v3532 = vmul.f32 %v3531, -0.00019511016
    %v3533 = vadd.f32 %v3532, 0.008332121
    %v3534 = vmul.f32 %v3531, %v3533
    %v3535 = vadd.f32 %v3534, -0.16666654
    %v3536 = vmul.f32 %v3531, %v3535
    %v3537 = vadd.f32 %v3536, 1.0
    %v3538 = vmul.f32 %v3537, %v3522
    %vm3539 = vweird.f32 %v1022
    %v3540 = vadd.s32 %v3523, 3
    %v3541 = vand.u32 %v3540, 3
    %vm3542 = vcmp.lt.s32.totalorder %v3541, 2
    %vm3543 = vcmp.eq.s32.totalorder %v3541, 0
    %v3544 = vxor.u32 %v3538, 2147483648
    %v3545 = vsel %vm3543, %v3530, %v3544
    %vm3546 = vcmp.eq.s32.totalorder %v3541, 2
    %v3547 = vxor.u32 %v3530, 2147483648
    %v3548 = vsel %vm3546, %v3547, %v3538
    %v3549 = vsel %vm3542, %v3545, %v3548
    %v3550 = vsel %vm3539, nan, %v3549
    %v3551 = vand.u32 2147483647, %v1023
    %vm3552 = vcmp.le.f32.partialorder %v3551, 0.7853982
    %vm3553 = vcmp.lt.s32.totalorder %v1023, 0
    %v3554 = vand.u32 %v1023, 2139095040
    %v3555 = vshrl.u32 %v3554, 23
    %v3556 = vsub.s32 %v3555, 127
    %v3557 = vand.u32 2147483647, %v1023
    %v3558 = vand.u32 %v3557, 8388607
    %v3559 = vor.u32 %v3558, 8388608
    %v3560 = vsub.s32 0, %v3559
    %v3561 = vadd.s32 %v3556, 1
    %vm3562 = vcmp.gt.s32.totalorder %v3561, 0
    %v3563 = vsel %vm3562, %v3561, 0
    %v3564 = vshrl.u32 %v3563, 5
    %v3565 = vand.u32 %v3563, 31
    %v3566 = vsub.s32 32, %v3565
    %v3567 = vshrl.u32 683565275, %v3566
    %v3568 = vshll.u32 683565275, %v3565
    %v3569 = vshrl.u32 2475754826, %v3566
    %v3570 = vor.u32 %v3568, %v3569
    %v3571 = vshll.u32 2475754826, %v3565
    %v3572 = vshrl.u32 2131351028, %v3566
    %v3573 = vor.u32 %v3571, %v3572
    %v3574 = vshll.u32 2131351028, %v3565
    %v3575 = vshrl.u32 2102212464, %v3566
    %v3576 = vor.u32 %v3574, %v3575
    %v3577 = vshll.u32 2102212464, %v3565
    %v3578 = vshrl.u32 920167782, %v3566
    %v3579 = vor.u32 %v3577, %v3578
    %v3580 = vshll.u32 920167782, %v3565
    %v3581 = vshrl.u32 1326507024, %v3566
    %v3582 = vor.u32 %v3580, %v3581
    %vm3583 = vcmp.lt.s32.totalorder %v3564, 1
    %vm3584 = vcmp.lt.s32.totalorder %v3564, 2
    %vm3585 = vcmp.lt.s32.totalorder %v3564, 3
    %vm3586 = vcmp.lt.s32.totalorder %v3564, 4
    %v3587 = vsel %vm3583, %v3567, %v3570
    %v3588 = vsel %vm3586, %v3576, 2102212464
    %v3589 = vsel %vm3585, %v3573, %v3588
    %v3590 = vsel %vm3584, %v3587, %v3589
    %v3591 = vsel %vm3583, %v3570, %v3573
    %v3592 = vsel %vm3586, %v3579, 920167782
    %v3593 = vsel %vm3585, %v3576, %v3592
    %v3594 = vsel %vm3584, %v3591, %v3593
    %v3595 = vsel %vm3583, %v3573, %v3576
    %v3596 = vsel %vm3586, %v3582, 1326507024
    %v3597 = vsel %vm3585, %v3579, %v3596
    %v3598 = vsel %vm3584, %v3595, %v3597
    %v3599 = vshll.u32 %v3559, 8
    %v3600 = vand.u32 %v3599, 65535
    %v3601 = vshrl.u32 %v3599, 16
    %v3602 = vand.u32 %v3598, 65535
    %v3603 = vshrl.u32 %v3598, 16
    %v3604 = vmul.u32 %v3600, %v3602
    %v3605 = vmul.u32 %v3600, %v3603
    %v3606 = vmul.u32 %v3601, %v3602
    %v3607 = vmul.u32 %v3601, %v3603
    %v3608 = vshll.u32 %v3605, 16
    %v3609 = vshrl.u32 %v3605, 16
    %v3610 = vshll.u32 %v3606, 16
    %v3611 = vshrl.u32 %v3606, 16
    %vm3612 = vc.u32 %v3604, %v3608
    %v3613 = vsel %vm3612, 1, 0
    %v3614 = vadd.s32 %v3604, %v3608
    %v3615 = vadd.s32 %v3607, %v3613
    %vm3616 = vc.u32 %v3614, %v3610
    %v3617 = vsel %vm3616, 1, 0
    %v3618 = vadd.s32 %v3614, %v3610
    %v3619 = vadd.s32 %v3615, %v3617
    %v3620 = vadd.s32 %v3619, %v3609
    %v3621 = vadd.s32 %v3620, %v3611
    %v3622 = vand.u32 %v3599, 65535
    %v3623 = vshrl.u32 %v3599, 16
    %v3624 = vand.u32 %v3594, 65535
    %v3625 = vshrl.u32 %v3594, 16
    %v3626 = vmul.u32 %v3622, %v3624
    %v3627 = vmul.u32 %v3622, %v3625
    %v3628 = vmul.u32 %v3623, %v3624
    %v3629 = vmul.u32 %v3623, %v3625
    %v3630 = vshll.u32 %v3627, 16
    %v3631 = vshrl.u32 %v3627, 16
    %v3632 = vshll.u32 %v3628, 16
    %v3633 = vshrl.u32 %v3628, 16
    %vm3634 = vc.u32 %v3626, %v3630
    %v3635 = vsel %vm3634, 1, 0
    %v3636 = vadd.s32 %v3626, %v3630
    %v3637 = vadd.s32 %v3629, %v3635
    %vm3638 = vc.u32 %v3636, %v3632
    %v3639 = vsel %vm3638, 1, 0
    %v3640 = vadd.s32 %v3636, %v3632
    %v3641 = vadd.s32 %v3637, %v3639
    %v3642 = vadd.s32 %v3641, %v3631
    %v3643 = vadd.s32 %v3642, %v3633
    %v3644 = vmul.u32 %v3599, %v3590
    %v3645 = vadd.s32 %v3621, %v3640
    %vm3646 = vc.u32 %v3621, %v3640
    %v3647 = vadd.s32 %v3643, 1
    %v3648 = vsel %vm3646, %v3647, %v3643
    %v3649 = vadd.s32 %v3644, %v3648
    %v3650 = vadd.s32 %v3649, 536870912
    %v3651 = vshrl.u32 %v3650, 30
    %v3652 = vshll.u32 %v3651, 30
    %v3653 = vsub.s32 %v3649, %v3652
    %vm3654 = vcmp.lt.s32.totalorder %v3653, 0
    %v3655 = vsub.s32 0, %v3653
    %v3656 = vsel %vm3654, %v3655, %v3653
    %v3657 = vclz %v3656
    %v3658 = vsub.s32 %v3657, 2
    %vm3659 = vcmp.gt.s32.totalorder 0, %v3658
    %v3660 = vsel %vm3659, 0, %v3658
    %v3661 = vsub.s32 32, %v3660
    %v3662 = vshll.u32 %v3653, %v3660
    %v3663 = vshrl.u32 %v3645, %v3661
    %v3664 = vor.u32 %v3662, %v3663
    %v3665 = vsub.s32 4294967266, %v3660
    %v3666 = vadd.s32 %v3665, 127
    %v3667 = vshll.u32 %v3666, 23
    %v3668 = vor.u32 4788187, %v3667
    %v3669 = vand.u32 2147483647, %v3668
    %v3671 = vcvt.s32.f32 %v3664
    %v3672 = vmul.f32 %v3671, %v3669
    %v3673 = vxor.u32 %v3672, 2147483648
    %v3674 = vsel %vm3553, %v3673, %v3672
    %v3675 = vsub.s32 4, %v3651
    %v3676 = vsel %vm3553, %v3675, %v3651
    %v3677 = vsel %vm3552, %v1023, %v3674
    %v3678 = vsel %vm3552, 0, %v3676
    %v3679 = vmul.f32 %v3677, %v3677
    %v3680 = vmul.f32 %v3679, -0.001358992
    %v3681 = vadd.f32 %v3680, 0.041655596
    %v3682 = vmul.f32 %v3679, %v3681
    %v3683 = vadd.f32 %v3682, -0.4999988
    %v3684 = vmul.f32 %v3679, %v3683
    %v3685 = vadd.f32 1.0, %v3684
    %v3686 = vmul.f32 %v3677, %v3677
    %v3687 = vmul.f32 %v3686, -0.00019511016
    %v3688 = vadd.f32 %v3687, 0.008332121
    %v3689 = vmul.f32 %v3686, %v3688
    %v3690 = vadd.f32 %v3689, -0.16666654
    %v3691 = vmul.f32 %v3686, %v3690
    %v3692 = vadd.f32 %v3691, 1.0
    %v3693 = vmul.f32 %v3692, %v3677
    %vm3694 = vweird.f32 %v1023
    %v3695 = vadd.s32 %v3678, 3
    %v3696 = vand.u32 %v3695, 3
    %vm3697 = vcmp.lt.s32.totalorder %v3696, 2
    %vm3698 = vcmp.eq.s32.totalorder %v3696, 0
    %v3699 = vxor.u32 %v3693, 2147483648
    %v3700 = vsel %vm3698, %v3685, %v3699
    %vm3701 = vcmp.eq.s32.totalorder %v3696, 2
    %v3702 = vxor.u32 %v3685, 2147483648
    %v3703 = vsel %vm3701, %v3702, %v3693
    %v3704 = vsel %vm3697, %v3700, %v3703
    %v3705 = vsel %vm3694, nan, %v3704
    %v3706 = vand.u32 2147483647, %v1024
    %vm3707 = vcmp.le.f32.partialorder %v3706, 0.7853982
    %vm3708 = vcmp.lt.s32.totalorder %v1024, 0
    %v3709 = vand.u32 %v1024, 2139095040
    %v3710 = vshrl.u32 %v3709, 23
    %v3711 = vsub.s32 %v3710, 127
    %v3712 = vand.u32 2147483647, %v1024
    %v3713 = vand.u32 %v3712, 8388607
    %v3714 = vor.u32 %v3713, 8388608
    %v3715 = vsub.s32 0, %v3714
    %v3716 = vadd.s32 %v3711, 1
    %vm3717 = vcmp.gt.s32.totalorder %v3716, 0
    %v3718 = vsel %vm3717, %v3716, 0
    %v3719 = vshrl.u32 %v3718, 5
    %v3720 = vand.u32 %v3718, 31
    %v3721 = vsub.s32 32, %v3720
    %v3722 = vshrl.u32 683565275, %v3721
    %v3723 = vshll.u32 683565275, %v3720
    %v3724 = vshrl.u32 2475754826, %v3721
    %v3725 = vor.u32 %v3723, %v3724
    %v3726 = vshll.u32 2475754826, %v3720
    %v3727 = vshrl.u32 2131351028, %v3721
    %v3728 = vor.u32 %v3726, %v3727
    %v3729 = vshll.u32 2131351028, %v3720
    %v3730 = vshrl.u32 2102212464, %v3721
    %v3731 = vor.u32 %v3729, %v3730
    %v3732 = vshll.u32 2102212464, %v3720
    %v3733 = vshrl.u32 920167782, %v3721
    %v3734 = vor.u32 %v3732, %v3733
    %v3735 = vshll.u32 920167782, %v3720
    %v3736 = vshrl.u32 1326507024, %v3721
    %v3737 = vor.u32 %v3735, %v3736
    %vm3738 = vcmp.lt.s32.totalorder %v3719, 1
    %vm3739 = vcmp.lt.s32.totalorder %v3719, 2
    %vm3740 = vcmp.lt.s32.totalorder %v3719, 3
    %vm3741 = vcmp.lt.s32.totalorder %v3719, 4
    %v3742 = vsel %vm3738, %v3722, %v3725
    %v3743 = vsel %vm3741, %v3731, 2102212464
    %v3744 = vsel %vm3740, %v3728, %v3743
    %v3745 = vsel %vm3739, %v3742, %v3744
    %v3746 = vsel %vm3738, %v3725, %v3728
    %v3747 = vsel %vm3741, %v3734, 920167782
    %v3748 = vsel %vm3740, %v3731, %v3747
    %v3749 = vsel %vm3739, %v3746, %v3748
    %v3750 = vsel %vm3738, %v3728, %v3731
    %v3751 = vsel %vm3741, %v3737, 1326507024
    %v3752 = vsel %vm3740, %v3734, %v3751
    %v3753 = vsel %vm3739, %v3750, %v3752
    %v3754 = vshll.u32 %v3714, 8
    %v3755 = vand.u32 %v3754, 65535
    %v3756 = vshrl.u32 %v3754, 16
    %v3757 = vand.u32 %v3753, 65535
    %v3758 = vshrl.u32 %v3753, 16
    %v3759 = vmul.u32 %v3755, %v3757
    %v3760 = vmul.u32 %v3755, %v3758
    %v3761 = vmul.u32 %v3756, %v3757
    %v3762 = vmul.u32 %v3756, %v3758
    %v3763 = vshll.u32 %v3760, 16
    %v3764 = vshrl.u32 %v3760, 16
    %v3765 = vshll.u32 %v3761, 16
    %v3766 = vshrl.u32 %v3761, 16
    %vm3767 = vc.u32 %v3759, %v3763
    %v3768 = vsel %vm3767, 1, 0
    %v3769 = vadd.s32 %v3759, %v3763
    %v3770 = vadd.s32 %v3762, %v3768
    %vm3771 = vc.u32 %v3769, %v3765
    %v3772 = vsel %vm3771, 1, 0
    %v3773 = vadd.s32 %v3769, %v3765
    %v3774 = vadd.s32 %v3770, %v3772
    %v3775 = vadd.s32 %v3774, %v3764
    %v3776 = vadd.s32 %v3775, %v3766
    %v3777 = vand.u32 %v3754, 65535
    %v3778 = vshrl.u32 %v3754, 16
    %v3779 = vand.u32 %v3749, 65535
    %v3780 = vshrl.u32 %v3749, 16
    %v3781 = vmul.u32 %v3777, %v3779
    %v3782 = vmul.u32 %v3777, %v3780
    %v3783 = vmul.u32 %v3778, %v3779
    %v3784 = vmul.u32 %v3778, %v3780
    %v3785 = vshll.u32 %v3782, 16
    %v3786 = vshrl.u32 %v3782, 16
    %v3787 = vshll.u32 %v3783, 16
    %v3788 = vshrl.u32 %v3783, 16
    %vm3789 = vc.u32 %v3781, %v3785
    %v3790 = vsel %vm3789, 1, 0
    %v3791 = vadd.s32 %v3781, %v3785
    %v3792 = vadd.s32 %v3784, %v3790
    %vm3793 = vc.u32 %v3791, %v3787
    %v3794 = vsel %vm3793, 1, 0
    %v3795 = vadd.s32 %v3791, %v3787
    %v3796 = vadd.s32 %v3792, %v3794
    %v3797 = vadd.s32 %v3796, %v3786
    %v3798 = vadd.s32 %v3797, %v3788
    %v3799 = vmul.u32 %v3754, %v3745
    %v3800 = vadd.s32 %v3776, %v3795
    %vm3801 = vc.u32 %v3776, %v3795
    %v3802 = vadd.s32 %v3798, 1
    %v3803 = vsel %vm3801, %v3802, %v3798
    %v3804 = vadd.s32 %v3799, %v3803
    %v3805 = vadd.s32 %v3804, 536870912
    %v3806 = vshrl.u32 %v3805, 30
    %v3807 = vshll.u32 %v3806, 30
    %v3808 = vsub.s32 %v3804, %v3807
    %vm3809 = vcmp.lt.s32.totalorder %v3808, 0
    %v3810 = vsub.s32 0, %v3808
    %v3811 = vsel %vm3809, %v3810, %v3808
    %v3812 = vclz %v3811
    %v3813 = vsub.s32 %v3812, 2
    %vm3814 = vcmp.gt.s32.totalorder 0, %v3813
    %v3815 = vsel %vm3814, 0, %v3813
    %v3816 = vsub.s32 32, %v3815
    %v3817 = vshll.u32 %v3808, %v3815
    %v3818 = vshrl.u32 %v3800, %v3816
    %v3819 = vor.u32 %v3817, %v3818
    %v3820 = vsub.s32 4294967266, %v3815
    %v3821 = vadd.s32 %v3820, 127
    %v3822 = vshll.u32 %v3821, 23
    %v3823 = vor.u32 4788187, %v3822
    %v3824 = vand.u32 2147483647, %v3823
    %v3826 = vcvt.s32.f32 %v3819
    %v3827 = vmul.f32 %v3826, %v3824
    %v3828 = vxor.u32 %v3827, 2147483648
    %v3829 = vsel %vm3708, %v3828, %v3827
    %v3830 = vsub.s32 4, %v3806
    %v3831 = vsel %vm3708, %v3830, %v3806
    %v3832 = vsel %vm3707, %v1024, %v3829
    %v3833 = vsel %vm3707, 0, %v3831
    %v3834 = vmul.f32 %v3832, %v3832
    %v3835 = vmul.f32 %v3834, -0.001358992
    %v3836 = vadd.f32 %v3835, 0.041655596
    %v3837 = vmul.f32 %v3834, %v3836
    %v3838 = vadd.f32 %v3837, -0.4999988
    %v3839 = vmul.f32 %v3834, %v3838
    %v3840 = vadd.f32 1.0, %v3839
    %v3841 = vmul.f32 %v3832, %v3832
    %v3842 = vmul.f32 %v3841, -0.00019511016
    %v3843 = vadd.f32 %v3842, 0.008332121
    %v3844 = vmul.f32 %v3841, %v3843
    %v3845 = vadd.f32 %v3844, -0.16666654
    %v3846 = vmul.f32 %v3841, %v3845
    %v3847 = vadd.f32 %v3846, 1.0
    %v3848 = vmul.f32 %v3847, %v3832
    %vm3849 = vweird.f32 %v1024
    %v3850 = vadd.s32 %v3833, 3
    %v3851 = vand.u32 %v3850, 3
    %vm3852 = vcmp.lt.s32.totalorder %v3851, 2
    %vm3853 = vcmp.eq.s32.totalorder %v3851, 0
    %v3854 = vxor.u32 %v3848, 2147483648
    %v3855 = vsel %vm3853, %v3840, %v3854
    %vm3856 = vcmp.eq.s32.totalorder %v3851, 2
    %v3857 = vxor.u32 %v3840, 2147483648
    %v3858 = vsel %vm3856, %v3857, %v3848
    %v3859 = vsel %vm3852, %v3855, %v3858
    %v3860 = vsel %vm3849, nan, %v3859
    %v3861 = vand.u32 2147483647, %v1025
    %vm3862 = vcmp.le.f32.partialorder %v3861, 0.7853982
    %vm3863 = vcmp.lt.s32.totalorder %v1025, 0
    %v3864 = vand.u32 %v1025, 2139095040
    %v3865 = vshrl.u32 %v3864, 23
    %v3866 = vsub.s32 %v3865, 127
    %v3867 = vand.u32 2147483647, %v1025
    %v3868 = vand.u32 %v3867, 8388607
    %v3869 = vor.u32 %v3868, 8388608
    %v3870 = vsub.s32 0, %v3869
    %v3871 = vadd.s32 %v3866, 1
    %vm3872 = vcmp.gt.s32.totalorder %v3871, 0
    %v3873 = vsel %vm3872, %v3871, 0
    %v3874 = vshrl.u32 %v3873, 5
    %v3875 = vand.u32 %v3873, 31
    %v3876 = vsub.s32 32, %v3875
    %v3877 = vshrl.u32 683565275, %v3876
    %v3878 = vshll.u32 683565275, %v3875
    %v3879 = vshrl.u32 2475754826, %v3876
    %v3880 = vor.u32 %v3878, %v3879
    %v3881 = vshll.u32 2475754826, %v3875
    %v3882 = vshrl.u32 2131351028, %v3876
    %v3883 = vor.u32 %v3881, %v3882
    %v3884 = vshll.u32 2131351028, %v3875
    %v3885 = vshrl.u32 2102212464, %v3876
    %v3886 = vor.u32 %v3884, %v3885
    %v3887 = vshll.u32 2102212464, %v3875
    %v3888 = vshrl.u32 920167782, %v3876
    %v3889 = vor.u32 %v3887, %v3888
    %v3890 = vshll.u32 920167782, %v3875
    %v3891 = vshrl.u32 1326507024, %v3876
    %v3892 = vor.u32 %v3890, %v3891
    %vm3893 = vcmp.lt.s32.totalorder %v3874, 1
    %vm3894 = vcmp.lt.s32.totalorder %v3874, 2
    %vm3895 = vcmp.lt.s32.totalorder %v3874, 3
    %vm3896 = vcmp.lt.s32.totalorder %v3874, 4
    %v3897 = vsel %vm3893, %v3877, %v3880
    %v3898 = vsel %vm3896, %v3886, 2102212464
    %v3899 = vsel %vm3895, %v3883, %v3898
    %v3900 = vsel %vm3894, %v3897, %v3899
    %v3901 = vsel %vm3893, %v3880, %v3883
    %v3902 = vsel %vm3896, %v3889, 920167782
    %v3903 = vsel %vm3895, %v3886, %v3902
    %v3904 = vsel %vm3894, %v3901, %v3903
    %v3905 = vsel %vm3893, %v3883, %v3886
    %v3906 = vsel %vm3896, %v3892, 1326507024
    %v3907 = vsel %vm3895, %v3889, %v3906
    %v3908 = vsel %vm3894, %v3905, %v3907
    %v3909 = vshll.u32 %v3869, 8
    %v3910 = vand.u32 %v3909, 65535
    %v3911 = vshrl.u32 %v3909, 16
    %v3912 = vand.u32 %v3908, 65535
    %v3913 = vshrl.u32 %v3908, 16
    %v3914 = vmul.u32 %v3910, %v3912
    %v3915 = vmul.u32 %v3910, %v3913
    %v3916 = vmul.u32 %v3911, %v3912
    %v3917 = vmul.u32 %v3911, %v3913
    %v3918 = vshll.u32 %v3915, 16
    %v3919 = vshrl.u32 %v3915, 16
    %v3920 = vshll.u32 %v3916, 16
    %v3921 = vshrl.u32 %v3916, 16
    %vm3922 = vc.u32 %v3914, %v3918
    %v3923 = vsel %vm3922, 1, 0
    %v3924 = vadd.s32 %v3914, %v3918
    %v3925 = vadd.s32 %v3917, %v3923
    %vm3926 = vc.u32 %v3924, %v3920
    %v3927 = vsel %vm3926, 1, 0
    %v3928 = vadd.s32 %v3924, %v3920
    %v3929 = vadd.s32 %v3925, %v3927
    %v3930 = vadd.s32 %v3929, %v3919
    %v3931 = vadd.s32 %v3930, %v3921
    %v3932 = vand.u32 %v3909, 65535
    %v3933 = vshrl.u32 %v3909, 16
    %v3934 = vand.u32 %v3904, 65535
    %v3935 = vshrl.u32 %v3904, 16
    %v3936 = vmul.u32 %v3932, %v3934
    %v3937 = vmul.u32 %v3932, %v3935
    %v3938 = vmul.u32 %v3933, %v3934
    %v3939 = vmul.u32 %v3933, %v3935
    %v3940 = vshll.u32 %v3937, 16
    %v3941 = vshrl.u32 %v3937, 16
    %v3942 = vshll.u32 %v3938, 16
    %v3943 = vshrl.u32 %v3938, 16
    %vm3944 = vc.u32 %v3936, %v3940
    %v3945 = vsel %vm3944, 1, 0
    %v3946 = vadd.s32 %v3936, %v3940
    %v3947 = vadd.s32 %v3939, %v3945
    %vm3948 = vc.u32 %v3946, %v3942
    %v3949 = vsel %vm3948, 1, 0
    %v3950 = vadd.s32 %v3946, %v3942
    %v3951 = vadd.s32 %v3947, %v3949
    %v3952 = vadd.s32 %v3951, %v3941
    %v3953 = vadd.s32 %v3952, %v3943
    %v3954 = vmul.u32 %v3909, %v3900
    %v3955 = vadd.s32 %v3931, %v3950
    %vm3956 = vc.u32 %v3931, %v3950
    %v3957 = vadd.s32 %v3953, 1
    %v3958 = vsel %vm3956, %v3957, %v3953
    %v3959 = vadd.s32 %v3954, %v3958
    %v3960 = vadd.s32 %v3959, 536870912
    %v3961 = vshrl.u32 %v3960, 30
    %v3962 = vshll.u32 %v3961, 30
    %v3963 = vsub.s32 %v3959, %v3962
    %vm3964 = vcmp.lt.s32.totalorder %v3963, 0
    %v3965 = vsub.s32 0, %v3963
    %v3966 = vsel %vm3964, %v3965, %v3963
    %v3967 = vclz %v3966
    %v3968 = vsub.s32 %v3967, 2
    %vm3969 = vcmp.gt.s32.totalorder 0, %v3968
    %v3970 = vsel %vm3969, 0, %v3968
    %v3971 = vsub.s32 32, %v3970
    %v3972 = vshll.u32 %v3963, %v3970
    %v3973 = vshrl.u32 %v3955, %v3971
    %v3974 = vor.u32 %v3972, %v3973
    %v3975 = vsub.s32 4294967266, %v3970
    %v3976 = vadd.s32 %v3975, 127
    %v3977 = vshll.u32 %v3976, 23
    %v3978 = vor.u32 4788187, %v3977
    %v3979 = vand.u32 2147483647, %v3978
    %v3981 = vcvt.s32.f32 %v3974
    %v3982 = vmul.f32 %v3981, %v3979
    %v3983 = vxor.u32 %v3982, 2147483648
    %v3984 = vsel %vm3863, %v3983, %v3982
    %v3985 = vsub.s32 4, %v3961
    %v3986 = vsel %vm3863, %v3985, %v3961
    %v3987 = vsel %vm3862, %v1025, %v3984
    %v3988 = vsel %vm3862, 0, %v3986
    %v3989 = vmul.f32 %v3987, %v3987
    %v3990 = vmul.f32 %v3989, -0.001358992
    %v3991 = vadd.f32 %v3990, 0.041655596
    %v3992 = vmul.f32 %v3989, %v3991
    %v3993 = vadd.f32 %v3992, -0.4999988
    %v3994 = vmul.f32 %v3989, %v3993
    %v3995 = vadd.f32 1.0, %v3994
    %v3996 = vmul.f32 %v3987, %v3987
    %v3997 = vmul.f32 %v3996, -0.00019511016
    %v3998 = vadd.f32 %v3997, 0.008332121
    %v3999 = vmul.f32 %v3996, %v3998
    %v4000 = vadd.f32 %v3999, -0.16666654
    %v4001 = vmul.f32 %v3996, %v4000
    %v4002 = vadd.f32 %v4001, 1.0
    %v4003 = vmul.f32 %v4002, %v3987
    %vm4004 = vweird.f32 %v1025
    %v4005 = vadd.s32 %v3988, 3
    %v4006 = vand.u32 %v4005, 3
    %vm4007 = vcmp.lt.s32.totalorder %v4006, 2
    %vm4008 = vcmp.eq.s32.totalorder %v4006, 0
    %v4009 = vxor.u32 %v4003, 2147483648
    %v4010 = vsel %vm4008, %v3995, %v4009
    %vm4011 = vcmp.eq.s32.totalorder %v4006, 2
    %v4012 = vxor.u32 %v3995, 2147483648
    %v4013 = vsel %vm4011, %v4012, %v4003
    %v4014 = vsel %vm4007, %v4010, %v4013
    %v4015 = vsel %vm4004, nan, %v4014
    %v4016 = vand.u32 2147483647, %v1026
    %vm4017 = vcmp.le.f32.partialorder %v4016, 0.7853982
    %vm4018 = vcmp.lt.s32.totalorder %v1026, 0
    %v4019 = vand.u32 %v1026, 2139095040
    %v4020 = vshrl.u32 %v4019, 23
    %v4021 = vsub.s32 %v4020, 127
    %v4022 = vand.u32 2147483647, %v1026
    %v4023 = vand.u32 %v4022, 8388607
    %v4024 = vor.u32 %v4023, 8388608
    %v4025 = vsub.s32 0, %v4024
    %v4026 = vadd.s32 %v4021, 1
    %vm4027 = vcmp.gt.s32.totalorder %v4026, 0
    %v4028 = vsel %vm4027, %v4026, 0
    %v4029 = vshrl.u32 %v4028, 5
    %v4030 = vand.u32 %v4028, 31
    %v4031 = vsub.s32 32, %v4030
    %v4032 = vshrl.u32 683565275, %v4031
    %v4033 = vshll.u32 683565275, %v4030
    %v4034 = vshrl.u32 2475754826, %v4031
    %v4035 = vor.u32 %v4033, %v4034
    %v4036 = vshll.u32 2475754826, %v4030
    %v4037 = vshrl.u32 2131351028, %v4031
    %v4038 = vor.u32 %v4036, %v4037
    %v4039 = vshll.u32 2131351028, %v4030
    %v4040 = vshrl.u32 2102212464, %v4031
    %v4041 = vor.u32 %v4039, %v4040
    %v4042 = vshll.u32 2102212464, %v4030
    %v4043 = vshrl.u32 920167782, %v4031
    %v4044 = vor.u32 %v4042, %v4043
    %v4045 = vshll.u32 920167782, %v4030
    %v4046 = vshrl.u32 1326507024, %v4031
    %v4047 = vor.u32 %v4045, %v4046
    %vm4048 = vcmp.lt.s32.totalorder %v4029, 1
    %vm4049 = vcmp.lt.s32.totalorder %v4029, 2
    %vm4050 = vcmp.lt.s32.totalorder %v4029, 3
    %vm4051 = vcmp.lt.s32.totalorder %v4029, 4
    %v4052 = vsel %vm4048, %v4032, %v4035
    %v4053 = vsel %vm4051, %v4041, 2102212464
    %v4054 = vsel %vm4050, %v4038, %v4053
    %v4055 = vsel %vm4049, %v4052, %v4054
    %v4056 = vsel %vm4048, %v4035, %v4038
    %v4057 = vsel %vm4051, %v4044, 920167782
    %v4058 = vsel %vm4050, %v4041, %v4057
    %v4059 = vsel %vm4049, %v4056, %v4058
    %v4060 = vsel %vm4048, %v4038, %v4041
    %v4061 = vsel %vm4051, %v4047, 1326507024
    %v4062 = vsel %vm4050, %v4044, %v4061
    %v4063 = vsel %vm4049, %v4060, %v4062
    %v4064 = vshll.u32 %v4024, 8
    %v4065 = vand.u32 %v4064, 65535
    %v4066 = vshrl.u32 %v4064, 16
    %v4067 = vand.u32 %v4063, 65535
    %v4068 = vshrl.u32 %v4063, 16
    %v4069 = vmul.u32 %v4065, %v4067
    %v4070 = vmul.u32 %v4065, %v4068
    %v4071 = vmul.u32 %v4066, %v4067
    %v4072 = vmul.u32 %v4066, %v4068
    %v4073 = vshll.u32 %v4070, 16
    %v4074 = vshrl.u32 %v4070, 16
    %v4075 = vshll.u32 %v4071, 16
    %v4076 = vshrl.u32 %v4071, 16
    %vm4077 = vc.u32 %v4069, %v4073
    %v4078 = vsel %vm4077, 1, 0
    %v4079 = vadd.s32 %v4069, %v4073
    %v4080 = vadd.s32 %v4072, %v4078
    %vm4081 = vc.u32 %v4079, %v4075
    %v4082 = vsel %vm4081, 1, 0
    %v4083 = vadd.s32 %v4079, %v4075
    %v4084 = vadd.s32 %v4080, %v4082
    %v4085 = vadd.s32 %v4084, %v4074
    %v4086 = vadd.s32 %v4085, %v4076
    %v4087 = vand.u32 %v4064, 65535
    %v4088 = vshrl.u32 %v4064, 16
    %v4089 = vand.u32 %v4059, 65535
    %v4090 = vshrl.u32 %v4059, 16
    %v4091 = vmul.u32 %v4087, %v4089
    %v4092 = vmul.u32 %v4087, %v4090
    %v4093 = vmul.u32 %v4088, %v4089
    %v4094 = vmul.u32 %v4088, %v4090
    %v4095 = vshll.u32 %v4092, 16
    %v4096 = vshrl.u32 %v4092, 16
    %v4097 = vshll.u32 %v4093, 16
    %v4098 = vshrl.u32 %v4093, 16
    %vm4099 = vc.u32 %v4091, %v4095
    %v4100 = vsel %vm4099, 1, 0
    %v4101 = vadd.s32 %v4091, %v4095
    %v4102 = vadd.s32 %v4094, %v4100
    %vm4103 = vc.u32 %v4101, %v4097
    %v4104 = vsel %vm4103, 1, 0
    %v4105 = vadd.s32 %v4101, %v4097
    %v4106 = vadd.s32 %v4102, %v4104
    %v4107 = vadd.s32 %v4106, %v4096
    %v4108 = vadd.s32 %v4107, %v4098
    %v4109 = vmul.u32 %v4064, %v4055
    %v4110 = vadd.s32 %v4086, %v4105
    %vm4111 = vc.u32 %v4086, %v4105
    %v4112 = vadd.s32 %v4108, 1
    %v4113 = vsel %vm4111, %v4112, %v4108
    %v4114 = vadd.s32 %v4109, %v4113
    %v4115 = vadd.s32 %v4114, 536870912
    %v4116 = vshrl.u32 %v4115, 30
    %v4117 = vshll.u32 %v4116, 30
    %v4118 = vsub.s32 %v4114, %v4117
    %vm4119 = vcmp.lt.s32.totalorder %v4118, 0
    %v4120 = vsub.s32 0, %v4118
    %v4121 = vsel %vm4119, %v4120, %v4118
    %v4122 = vclz %v4121
    %v4123 = vsub.s32 %v4122, 2
    %vm4124 = vcmp.gt.s32.totalorder 0, %v4123
    %v4125 = vsel %vm4124, 0, %v4123
    %v4126 = vsub.s32 32, %v4125
    %v4127 = vshll.u32 %v4118, %v4125
    %v4128 = vshrl.u32 %v4110, %v4126
    %v4129 = vor.u32 %v4127, %v4128
    %v4130 = vsub.s32 4294967266, %v4125
    %v4131 = vadd.s32 %v4130, 127
    %v4132 = vshll.u32 %v4131, 23
    %v4133 = vor.u32 4788187, %v4132
    %v4134 = vand.u32 2147483647, %v4133
    %v4136 = vcvt.s32.f32 %v4129
    %v4137 = vmul.f32 %v4136, %v4134
    %v4138 = vxor.u32 %v4137, 2147483648
    %v4139 = vsel %vm4018, %v4138, %v4137
    %v4140 = vsub.s32 4, %v4116
    %v4141 = vsel %vm4018, %v4140, %v4116
    %v4142 = vsel %vm4017, %v1026, %v4139
    %v4143 = vsel %vm4017, 0, %v4141
    %v4144 = vmul.f32 %v4142, %v4142
    %v4145 = vmul.f32 %v4144, -0.001358992
    %v4146 = vadd.f32 %v4145, 0.041655596
    %v4147 = vmul.f32 %v4144, %v4146
    %v4148 = vadd.f32 %v4147, -0.4999988
    %v4149 = vmul.f32 %v4144, %v4148
    %v4150 = vadd.f32 1.0, %v4149
    %v4151 = vmul.f32 %v4142, %v4142
    %v4152 = vmul.f32 %v4151, -0.00019511016
    %v4153 = vadd.f32 %v4152, 0.008332121
    %v4154 = vmul.f32 %v4151, %v4153
    %v4155 = vadd.f32 %v4154, -0.16666654
    %v4156 = vmul.f32 %v4151, %v4155
    %v4157 = vadd.f32 %v4156, 1.0
    %v4158 = vmul.f32 %v4157, %v4142
    %vm4159 = vweird.f32 %v1026
    %v4160 = vadd.s32 %v4143, 3
    %v4161 = vand.u32 %v4160, 3
    %vm4162 = vcmp.lt.s32.totalorder %v4161, 2
    %vm4163 = vcmp.eq.s32.totalorder %v4161, 0
    %v4164 = vxor.u32 %v4158, 2147483648
    %v4165 = vsel %vm4163, %v4150, %v4164
    %vm4166 = vcmp.eq.s32.totalorder %v4161, 2
    %v4167 = vxor.u32 %v4150, 2147483648
    %v4168 = vsel %vm4166, %v4167, %v4158
    %v4169 = vsel %vm4162, %v4165, %v4168
    %v4170 = vsel %vm4159, nan, %v4169
    %v4171 = vand.u32 2147483647, %v1027
    %vm4172 = vcmp.le.f32.partialorder %v4171, 0.7853982
    %vm4173 = vcmp.lt.s32.totalorder %v1027, 0
    %v4174 = vand.u32 %v1027, 2139095040
    %v4175 = vshrl.u32 %v4174, 23
    %v4176 = vsub.s32 %v4175, 127
    %v4177 = vand.u32 2147483647, %v1027
    %v4178 = vand.u32 %v4177, 8388607
    %v4179 = vor.u32 %v4178, 8388608
    %v4180 = vsub.s32 0, %v4179
    %v4181 = vadd.s32 %v4176, 1
    %vm4182 = vcmp.gt.s32.totalorder %v4181, 0
    %v4183 = vsel %vm4182, %v4181, 0
    %v4184 = vshrl.u32 %v4183, 5
    %v4185 = vand.u32 %v4183, 31
    %v4186 = vsub.s32 32, %v4185
    %v4187 = vshrl.u32 683565275, %v4186
    %v4188 = vshll.u32 683565275, %v4185
    %v4189 = vshrl.u32 2475754826, %v4186
    %v4190 = vor.u32 %v4188, %v4189
    %v4191 = vshll.u32 2475754826, %v4185
    %v4192 = vshrl.u32 2131351028, %v4186
    %v4193 = vor.u32 %v4191, %v4192
    %v4194 = vshll.u32 2131351028, %v4185
    %v4195 = vshrl.u32 2102212464, %v4186
    %v4196 = vor.u32 %v4194, %v4195
    %v4197 = vshll.u32 2102212464, %v4185
    %v4198 = vshrl.u32 920167782, %v4186
    %v4199 = vor.u32 %v4197, %v4198
    %v4200 = vshll.u32 920167782, %v4185
    %v4201 = vshrl.u32 1326507024, %v4186
    %v4202 = vor.u32 %v4200, %v4201
    %vm4203 = vcmp.lt.s32.totalorder %v4184, 1
    %vm4204 = vcmp.lt.s32.totalorder %v4184, 2
    %vm4205 = vcmp.lt.s32.totalorder %v4184, 3
    %vm4206 = vcmp.lt.s32.totalorder %v4184, 4
    %v4207 = vsel %vm4203, %v4187, %v4190
    %v4208 = vsel %vm4206, %v4196, 2102212464
    %v4209 = vsel %vm4205, %v4193, %v4208
    %v4210 = vsel %vm4204, %v4207, %v4209
    %v4211 = vsel %vm4203, %v4190, %v4193
    %v4212 = vsel %vm4206, %v4199, 920167782
    %v4213 = vsel %vm4205, %v4196, %v4212
    %v4214 = vsel %vm4204, %v4211, %v4213
    %v4215 = vsel %vm4203, %v4193, %v4196
    %v4216 = vsel %vm4206, %v4202, 1326507024
    %v4217 = vsel %vm4205, %v4199, %v4216
    %v4218 = vsel %vm4204, %v4215, %v4217
    %v4219 = vshll.u32 %v4179, 8
    %v4220 = vand.u32 %v4219, 65535
    %v4221 = vshrl.u32 %v4219, 16
    %v4222 = vand.u32 %v4218, 65535
    %v4223 = vshrl.u32 %v4218, 16
    %v4224 = vmul.u32 %v4220, %v4222
    %v4225 = vmul.u32 %v4220, %v4223
    %v4226 = vmul.u32 %v4221, %v4222
    %v4227 = vmul.u32 %v4221, %v4223
    %v4228 = vshll.u32 %v4225, 16
    %v4229 = vshrl.u32 %v4225, 16
    %v4230 = vshll.u32 %v4226, 16
    %v4231 = vshrl.u32 %v4226, 16
    %vm4232 = vc.u32 %v4224, %v4228
    %v4233 = vsel %vm4232, 1, 0
    %v4234 = vadd.s32 %v4224, %v4228
    %v4235 = vadd.s32 %v4227, %v4233
    %vm4236 = vc.u32 %v4234, %v4230
    %v4237 = vsel %vm4236, 1, 0
    %v4238 = vadd.s32 %v4234, %v4230
    %v4239 = vadd.s32 %v4235, %v4237
    %v4240 = vadd.s32 %v4239, %v4229
    %v4241 = vadd.s32 %v4240, %v4231
    %v4242 = vand.u32 %v4219, 65535
    %v4243 = vshrl.u32 %v4219, 16
    %v4244 = vand.u32 %v4214, 65535
    %v4245 = vshrl.u32 %v4214, 16
    %v4246 = vmul.u32 %v4242, %v4244
    %v4247 = vmul.u32 %v4242, %v4245
    %v4248 = vmul.u32 %v4243, %v4244
    %v4249 = vmul.u32 %v4243, %v4245
    %v4250 = vshll.u32 %v4247, 16
    %v4251 = vshrl.u32 %v4247, 16
    %v4252 = vshll.u32 %v4248, 16
    %v4253 = vshrl.u32 %v4248, 16
    %vm4254 = vc.u32 %v4246, %v4250
    %v4255 = vsel %vm4254, 1, 0
    %v4256 = vadd.s32 %v4246, %v4250
    %v4257 = vadd.s32 %v4249, %v4255
    %vm4258 = vc.u32 %v4256, %v4252
    %v4259 = vsel %vm4258, 1, 0
    %v4260 = vadd.s32 %v4256, %v4252
    %v4261 = vadd.s32 %v4257, %v4259
    %v4262 = vadd.s32 %v4261, %v4251
    %v4263 = vadd.s32 %v4262, %v4253
    %v4264 = vmul.u32 %v4219, %v4210
    %v4265 = vadd.s32 %v4241, %v4260
    %vm4266 = vc.u32 %v4241, %v4260
    %v4267 = vadd.s32 %v4263, 1
    %v4268 = vsel %vm4266, %v4267, %v4263
    %v4269 = vadd.s32 %v4264, %v4268
    %v4270 = vadd.s32 %v4269, 536870912
    %v4271 = vshrl.u32 %v4270, 30
    %v4272 = vshll.u32 %v4271, 30
    %v4273 = vsub.s32 %v4269, %v4272
    %vm4274 = vcmp.lt.s32.totalorder %v4273, 0
    %v4275 = vsub.s32 0, %v4273
    %v4276 = vsel %vm4274, %v4275, %v4273
    %v4277 = vclz %v4276
    %v4278 = vsub.s32 %v4277, 2
    %vm4279 = vcmp.gt.s32.totalorder 0, %v4278
    %v4280 = vsel %vm4279, 0, %v4278
    %v4281 = vsub.s32 32, %v4280
    %v4282 = vshll.u32 %v4273, %v4280
    %v4283 = vshrl.u32 %v4265, %v4281
    %v4284 = vor.u32 %v4282, %v4283
    %v4285 = vsub.s32 4294967266, %v4280
    %v4286 = vadd.s32 %v4285, 127
    %v4287 = vshll.u32 %v4286, 23
    %v4288 = vor.u32 4788187, %v4287
    %v4289 = vand.u32 2147483647, %v4288
    %v4291 = vcvt.s32.f32 %v4284
    %v4292 = vmul.f32 %v4291, %v4289
    %v4293 = vxor.u32 %v4292, 2147483648
    %v4294 = vsel %vm4173, %v4293, %v4292
    %v4295 = vsub.s32 4, %v4271
    %v4296 = vsel %vm4173, %v4295, %v4271
    %v4297 = vsel %vm4172, %v1027, %v4294
    %v4298 = vsel %vm4172, 0, %v4296
    %v4299 = vmul.f32 %v4297, %v4297
    %v4300 = vmul.f32 %v4299, -0.001358992
    %v4301 = vadd.f32 %v4300, 0.041655596
    %v4302 = vmul.f32 %v4299, %v4301
    %v4303 = vadd.f32 %v4302, -0.4999988
    %v4304 = vmul.f32 %v4299, %v4303
    %v4305 = vadd.f32 1.0, %v4304
    %v4306 = vmul.f32 %v4297, %v4297
    %v4307 = vmul.f32 %v4306, -0.00019511016
    %v4308 = vadd.f32 %v4307, 0.008332121
    %v4309 = vmul.f32 %v4306, %v4308
    %v4310 = vadd.f32 %v4309, -0.16666654
    %v4311 = vmul.f32 %v4306, %v4310
    %v4312 = vadd.f32 %v4311, 1.0
    %v4313 = vmul.f32 %v4312, %v4297
    %vm4314 = vweird.f32 %v1027
    %v4315 = vadd.s32 %v4298, 3
    %v4316 = vand.u32 %v4315, 3
    %vm4317 = vcmp.lt.s32.totalorder %v4316, 2
    %vm4318 = vcmp.eq.s32.totalorder %v4316, 0
    %v4319 = vxor.u32 %v4313, 2147483648
    %v4320 = vsel %vm4318, %v4305, %v4319
    %vm4321 = vcmp.eq.s32.totalorder %v4316, 2
    %v4322 = vxor.u32 %v4305, 2147483648
    %v4323 = vsel %vm4321, %v4322, %v4313
    %v4324 = vsel %vm4317, %v4320, %v4323
    %v4325 = vsel %vm4314, nan, %v4324
    %v4326 = vand.u32 2147483647, %v1028
    %vm4327 = vcmp.le.f32.partialorder %v4326, 0.7853982
    %vm4328 = vcmp.lt.s32.totalorder %v1028, 0
    %v4329 = vand.u32 %v1028, 2139095040
    %v4330 = vshrl.u32 %v4329, 23
    %v4331 = vsub.s32 %v4330, 127
    %v4332 = vand.u32 2147483647, %v1028
    %v4333 = vand.u32 %v4332, 8388607
    %v4334 = vor.u32 %v4333, 8388608
    %v4335 = vsub.s32 0, %v4334
    %v4336 = vadd.s32 %v4331, 1
    %vm4337 = vcmp.gt.s32.totalorder %v4336, 0
    %v4338 = vsel %vm4337, %v4336, 0
    %v4339 = vshrl.u32 %v4338, 5
    %v4340 = vand.u32 %v4338, 31
    %v4341 = vsub.s32 32, %v4340
    %v4342 = vshrl.u32 683565275, %v4341
    %v4343 = vshll.u32 683565275, %v4340
    %v4344 = vshrl.u32 2475754826, %v4341
    %v4345 = vor.u32 %v4343, %v4344
    %v4346 = vshll.u32 2475754826, %v4340
    %v4347 = vshrl.u32 2131351028, %v4341
    %v4348 = vor.u32 %v4346, %v4347
    %v4349 = vshll.u32 2131351028, %v4340
    %v4350 = vshrl.u32 2102212464, %v4341
    %v4351 = vor.u32 %v4349, %v4350
    %v4352 = vshll.u32 2102212464, %v4340
    %v4353 = vshrl.u32 920167782, %v4341
    %v4354 = vor.u32 %v4352, %v4353
    %v4355 = vshll.u32 920167782, %v4340
    %v4356 = vshrl.u32 1326507024, %v4341
    %v4357 = vor.u32 %v4355, %v4356
    %vm4358 = vcmp.lt.s32.totalorder %v4339, 1
    %vm4359 = vcmp.lt.s32.totalorder %v4339, 2
    %vm4360 = vcmp.lt.s32.totalorder %v4339, 3
    %vm4361 = vcmp.lt.s32.totalorder %v4339, 4
    %v4362 = vsel %vm4358, %v4342, %v4345
    %v4363 = vsel %vm4361, %v4351, 2102212464
    %v4364 = vsel %vm4360, %v4348, %v4363
    %v4365 = vsel %vm4359, %v4362, %v4364
    %v4366 = vsel %vm4358, %v4345, %v4348
    %v4367 = vsel %vm4361, %v4354, 920167782
    %v4368 = vsel %vm4360, %v4351, %v4367
    %v4369 = vsel %vm4359, %v4366, %v4368
    %v4370 = vsel %vm4358, %v4348, %v4351
    %v4371 = vsel %vm4361, %v4357, 1326507024
    %v4372 = vsel %vm4360, %v4354, %v4371
    %v4373 = vsel %vm4359, %v4370, %v4372
    %v4374 = vshll.u32 %v4334, 8
    %v4375 = vand.u32 %v4374, 65535
    %v4376 = vshrl.u32 %v4374, 16
    %v4377 = vand.u32 %v4373, 65535
    %v4378 = vshrl.u32 %v4373, 16
    %v4379 = vmul.u32 %v4375, %v4377
    %v4380 = vmul.u32 %v4375, %v4378
    %v4381 = vmul.u32 %v4376, %v4377
    %v4382 = vmul.u32 %v4376, %v4378
    %v4383 = vshll.u32 %v4380, 16
    %v4384 = vshrl.u32 %v4380, 16
    %v4385 = vshll.u32 %v4381, 16
    %v4386 = vshrl.u32 %v4381, 16
    %vm4387 = vc.u32 %v4379, %v4383
    %v4388 = vsel %vm4387, 1, 0
    %v4389 = vadd.s32 %v4379, %v4383
    %v4390 = vadd.s32 %v4382, %v4388
    %vm4391 = vc.u32 %v4389, %v4385
    %v4392 = vsel %vm4391, 1, 0
    %v4393 = vadd.s32 %v4389, %v4385
    %v4394 = vadd.s32 %v4390, %v4392
    %v4395 = vadd.s32 %v4394, %v4384
    %v4396 = vadd.s32 %v4395, %v4386
    %v4397 = vand.u32 %v4374, 65535
    %v4398 = vshrl.u32 %v4374, 16
    %v4399 = vand.u32 %v4369, 65535
    %v4400 = vshrl.u32 %v4369, 16
    %v4401 = vmul.u32 %v4397, %v4399
    %v4402 = vmul.u32 %v4397, %v4400
    %v4403 = vmul.u32 %v4398, %v4399
    %v4404 = vmul.u32 %v4398, %v4400
    %v4405 = vshll.u32 %v4402, 16
    %v4406 = vshrl.u32 %v4402, 16
    %v4407 = vshll.u32 %v4403, 16
    %v4408 = vshrl.u32 %v4403, 16
    %vm4409 = vc.u32 %v4401, %v4405
    %v4410 = vsel %vm4409, 1, 0
    %v4411 = vadd.s32 %v4401, %v4405
    %v4412 = vadd.s32 %v4404, %v4410
    %vm4413 = vc.u32 %v4411, %v4407
    %v4414 = vsel %vm4413, 1, 0
    %v4415 = vadd.s32 %v4411, %v4407
    %v4416 = vadd.s32 %v4412, %v4414
    %v4417 = vadd.s32 %v4416, %v4406
    %v4418 = vadd.s32 %v4417, %v4408
    %v4419 = vmul.u32 %v4374, %v4365
    %v4420 = vadd.s32 %v4396, %v4415
    %vm4421 = vc.u32 %v4396, %v4415
    %v4422 = vadd.s32 %v4418, 1
    %v4423 = vsel %vm4421, %v4422, %v4418
    %v4424 = vadd.s32 %v4419, %v4423
    %v4425 = vadd.s32 %v4424, 536870912
    %v4426 = vshrl.u32 %v4425, 30
    %v4427 = vshll.u32 %v4426, 30
    %v4428 = vsub.s32 %v4424, %v4427
    %vm4429 = vcmp.lt.s32.totalorder %v4428, 0
    %v4430 = vsub.s32 0, %v4428
    %v4431 = vsel %vm4429, %v4430, %v4428
    %v4432 = vclz %v4431
    %v4433 = vsub.s32 %v4432, 2
    %vm4434 = vcmp.gt.s32.totalorder 0, %v4433
    %v4435 = vsel %vm4434, 0, %v4433
    %v4436 = vsub.s32 32, %v4435
    %v4437 = vshll.u32 %v4428, %v4435
    %v4438 = vshrl.u32 %v4420, %v4436
    %v4439 = vor.u32 %v4437, %v4438
    %v4440 = vsub.s32 4294967266, %v4435
    %v4441 = vadd.s32 %v4440, 127
    %v4442 = vshll.u32 %v4441, 23
    %v4443 = vor.u32 4788187, %v4442
    %v4444 = vand.u32 2147483647, %v4443
    %v4446 = vcvt.s32.f32 %v4439
    %v4447 = vmul.f32 %v4446, %v4444
    %v4448 = vxor.u32 %v4447, 2147483648
    %v4449 = vsel %vm4328, %v4448, %v4447
    %v4450 = vsub.s32 4, %v4426
    %v4451 = vsel %vm4328, %v4450, %v4426
    %v4452 = vsel %vm4327, %v1028, %v4449
    %v4453 = vsel %vm4327, 0, %v4451
    %v4454 = vmul.f32 %v4452, %v4452
    %v4455 = vmul.f32 %v4454, -0.001358992
    %v4456 = vadd.f32 %v4455, 0.041655596
    %v4457 = vmul.f32 %v4454, %v4456
    %v4458 = vadd.f32 %v4457, -0.4999988
    %v4459 = vmul.f32 %v4454, %v4458
    %v4460 = vadd.f32 1.0, %v4459
    %v4461 = vmul.f32 %v4452, %v4452
    %v4462 = vmul.f32 %v4461, -0.00019511016
    %v4463 = vadd.f32 %v4462, 0.008332121
    %v4464 = vmul.f32 %v4461, %v4463
    %v4465 = vadd.f32 %v4464, -0.16666654
    %v4466 = vmul.f32 %v4461, %v4465
    %v4467 = vadd.f32 %v4466, 1.0
    %v4468 = vmul.f32 %v4467, %v4452
    %vm4469 = vweird.f32 %v1028
    %v4470 = vadd.s32 %v4453, 3
    %v4471 = vand.u32 %v4470, 3
    %vm4472 = vcmp.lt.s32.totalorder %v4471, 2
    %vm4473 = vcmp.eq.s32.totalorder %v4471, 0
    %v4474 = vxor.u32 %v4468, 2147483648
    %v4475 = vsel %vm4473, %v4460, %v4474
    %vm4476 = vcmp.eq.s32.totalorder %v4471, 2
    %v4477 = vxor.u32 %v4460, 2147483648
    %v4478 = vsel %vm4476, %v4477, %v4468
    %v4479 = vsel %vm4472, %v4475, %v4478
    %v4480 = vsel %vm4469, nan, %v4479
    %v4481 = vand.u32 2147483647, %v1029
    %vm4482 = vcmp.le.f32.partialorder %v4481, 0.7853982
    %vm4483 = vcmp.lt.s32.totalorder %v1029, 0
    %v4484 = vand.u32 %v1029, 2139095040
    %v4485 = vshrl.u32 %v4484, 23
    %v4486 = vsub.s32 %v4485, 127
    %v4487 = vand.u32 2147483647, %v1029
    %v4488 = vand.u32 %v4487, 8388607
    %v4489 = vor.u32 %v4488, 8388608
    %v4490 = vsub.s32 0, %v4489
    %v4491 = vadd.s32 %v4486, 1
    %vm4492 = vcmp.gt.s32.totalorder %v4491, 0
    %v4493 = vsel %vm4492, %v4491, 0
    %v4494 = vshrl.u32 %v4493, 5
    %v4495 = vand.u32 %v4493, 31
    %v4496 = vsub.s32 32, %v4495
    %v4497 = vshrl.u32 683565275, %v4496
    %v4498 = vshll.u32 683565275, %v4495
    %v4499 = vshrl.u32 2475754826, %v4496
    %v4500 = vor.u32 %v4498, %v4499
    %v4501 = vshll.u32 2475754826, %v4495
    %v4502 = vshrl.u32 2131351028, %v4496
    %v4503 = vor.u32 %v4501, %v4502
    %v4504 = vshll.u32 2131351028, %v4495
    %v4505 = vshrl.u32 2102212464, %v4496
    %v4506 = vor.u32 %v4504, %v4505
    %v4507 = vshll.u32 2102212464, %v4495
    %v4508 = vshrl.u32 920167782, %v4496
    %v4509 = vor.u32 %v4507, %v4508
    %v4510 = vshll.u32 920167782, %v4495
    %v4511 = vshrl.u32 1326507024, %v4496
    %v4512 = vor.u32 %v4510, %v4511
    %vm4513 = vcmp.lt.s32.totalorder %v4494, 1
    %vm4514 = vcmp.lt.s32.totalorder %v4494, 2
    %vm4515 = vcmp.lt.s32.totalorder %v4494, 3
    %vm4516 = vcmp.lt.s32.totalorder %v4494, 4
    %v4517 = vsel %vm4513, %v4497, %v4500
    %v4518 = vsel %vm4516, %v4506, 2102212464
    %v4519 = vsel %vm4515, %v4503, %v4518
    %v4520 = vsel %vm4514, %v4517, %v4519
    %v4521 = vsel %vm4513, %v4500, %v4503
    %v4522 = vsel %vm4516, %v4509, 920167782
    %v4523 = vsel %vm4515, %v4506, %v4522
    %v4524 = vsel %vm4514, %v4521, %v4523
    %v4525 = vsel %vm4513, %v4503, %v4506
    %v4526 = vsel %vm4516, %v4512, 1326507024
    %v4527 = vsel %vm4515, %v4509, %v4526
    %v4528 = vsel %vm4514, %v4525, %v4527
    %v4529 = vshll.u32 %v4489, 8
    %v4530 = vand.u32 %v4529, 65535
    %v4531 = vshrl.u32 %v4529, 16
    %v4532 = vand.u32 %v4528, 65535
    %v4533 = vshrl.u32 %v4528, 16
    %v4534 = vmul.u32 %v4530, %v4532
    %v4535 = vmul.u32 %v4530, %v4533
    %v4536 = vmul.u32 %v4531, %v4532
    %v4537 = vmul.u32 %v4531, %v4533
    %v4538 = vshll.u32 %v4535, 16
    %v4539 = vshrl.u32 %v4535, 16
    %v4540 = vshll.u32 %v4536, 16
    %v4541 = vshrl.u32 %v4536, 16
    %vm4542 = vc.u32 %v4534, %v4538
    %v4543 = vsel %vm4542, 1, 0
    %v4544 = vadd.s32 %v4534, %v4538
    %v4545 = vadd.s32 %v4537, %v4543
    %vm4546 = vc.u32 %v4544, %v4540
    %v4547 = vsel %vm4546, 1, 0
    %v4548 = vadd.s32 %v4544, %v4540
    %v4549 = vadd.s32 %v4545, %v4547
    %v4550 = vadd.s32 %v4549, %v4539
    %v4551 = vadd.s32 %v4550, %v4541
    %v4552 = vand.u32 %v4529, 65535
    %v4553 = vshrl.u32 %v4529, 16
    %v4554 = vand.u32 %v4524, 65535
    %v4555 = vshrl.u32 %v4524, 16
    %v4556 = vmul.u32 %v4552, %v4554
    %v4557 = vmul.u32 %v4552, %v4555
    %v4558 = vmul.u32 %v4553, %v4554
    %v4559 = vmul.u32 %v4553, %v4555
    %v4560 = vshll.u32 %v4557, 16
    %v4561 = vshrl.u32 %v4557, 16
    %v4562 = vshll.u32 %v4558, 16
    %v4563 = vshrl.u32 %v4558, 16
    %vm4564 = vc.u32 %v4556, %v4560
    %v4565 = vsel %vm4564, 1, 0
    %v4566 = vadd.s32 %v4556, %v4560
    %v4567 = vadd.s32 %v4559, %v4565
    %vm4568 = vc.u32 %v4566, %v4562
    %v4569 = vsel %vm4568, 1, 0
    %v4570 = vadd.s32 %v4566, %v4562
    %v4571 = vadd.s32 %v4567, %v4569
    %v4572 = vadd.s32 %v4571, %v4561
    %v4573 = vadd.s32 %v4572, %v4563
    %v4574 = vmul.u32 %v4529, %v4520
    %v4575 = vadd.s32 %v4551, %v4570
    %vm4576 = vc.u32 %v4551, %v4570
    %v4577 = vadd.s32 %v4573, 1
    %v4578 = vsel %vm4576, %v4577, %v4573
    %v4579 = vadd.s32 %v4574, %v4578
    %v4580 = vadd.s32 %v4579, 536870912
    %v4581 = vshrl.u32 %v4580, 30
    %v4582 = vshll.u32 %v4581, 30
    %v4583 = vsub.s32 %v4579, %v4582
    %vm4584 = vcmp.lt.s32.totalorder %v4583, 0
    %v4585 = vsub.s32 0, %v4583
    %v4586 = vsel %vm4584, %v4585, %v4583
    %v4587 = vclz %v4586
    %v4588 = vsub.s32 %v4587, 2
    %vm4589 = vcmp.gt.s32.totalorder 0, %v4588
    %v4590 = vsel %vm4589, 0, %v4588
    %v4591 = vsub.s32 32, %v4590
    %v4592 = vshll.u32 %v4583, %v4590
    %v4593 = vshrl.u32 %v4575, %v4591
    %v4594 = vor.u32 %v4592, %v4593
    %v4595 = vsub.s32 4294967266, %v4590
    %v4596 = vadd.s32 %v4595, 127
    %v4597 = vshll.u32 %v4596, 23
    %v4598 = vor.u32 4788187, %v4597
    %v4599 = vand.u32 2147483647, %v4598
    %v4601 = vcvt.s32.f32 %v4594
    %v4602 = vmul.f32 %v4601, %v4599
    %v4603 = vxor.u32 %v4602, 2147483648
    %v4604 = vsel %vm4483, %v4603, %v4602
    %v4605 = vsub.s32 4, %v4581
    %v4606 = vsel %vm4483, %v4605, %v4581
    %v4607 = vsel %vm4482, %v1029, %v4604
    %v4608 = vsel %vm4482, 0, %v4606
    %v4609 = vmul.f32 %v4607, %v4607
    %v4610 = vmul.f32 %v4609, -0.001358992
    %v4611 = vadd.f32 %v4610, 0.041655596
    %v4612 = vmul.f32 %v4609, %v4611
    %v4613 = vadd.f32 %v4612, -0.4999988
    %v4614 = vmul.f32 %v4609, %v4613
    %v4615 = vadd.f32 1.0, %v4614
    %v4616 = vmul.f32 %v4607, %v4607
    %v4617 = vmul.f32 %v4616, -0.00019511016
    %v4618 = vadd.f32 %v4617, 0.008332121
    %v4619 = vmul.f32 %v4616, %v4618
    %v4620 = vadd.f32 %v4619, -0.16666654
    %v4621 = vmul.f32 %v4616, %v4620
    %v4622 = vadd.f32 %v4621, 1.0
    %v4623 = vmul.f32 %v4622, %v4607
    %vm4624 = vweird.f32 %v1029
    %v4625 = vadd.s32 %v4608, 3
    %v4626 = vand.u32 %v4625, 3
    %vm4627 = vcmp.lt.s32.totalorder %v4626, 2
    %vm4628 = vcmp.eq.s32.totalorder %v4626, 0
    %v4629 = vxor.u32 %v4623, 2147483648
    %v4630 = vsel %vm4628, %v4615, %v4629
    %vm4631 = vcmp.eq.s32.totalorder %v4626, 2
    %v4632 = vxor.u32 %v4615, 2147483648
    %v4633 = vsel %vm4631, %v4632, %v4623
    %v4634 = vsel %vm4627, %v4630, %v4633
    %v4635 = vsel %vm4624, nan, %v4634
    %v4636 = vand.u32 2147483647, %v1030
    %vm4637 = vcmp.le.f32.partialorder %v4636, 0.7853982
    %vm4638 = vcmp.lt.s32.totalorder %v1030, 0
    %v4639 = vand.u32 %v1030, 2139095040
    %v4640 = vshrl.u32 %v4639, 23
    %v4641 = vsub.s32 %v4640, 127
    %v4642 = vand.u32 2147483647, %v1030
    %v4643 = vand.u32 %v4642, 8388607
    %v4644 = vor.u32 %v4643, 8388608
    %v4645 = vsub.s32 0, %v4644
    %v4646 = vadd.s32 %v4641, 1
    %vm4647 = vcmp.gt.s32.totalorder %v4646, 0
    %v4648 = vsel %vm4647, %v4646, 0
    %v4649 = vshrl.u32 %v4648, 5
    %v4650 = vand.u32 %v4648, 31
    %v4651 = vsub.s32 32, %v4650
    %v4652 = vshrl.u32 683565275, %v4651
    %v4653 = vshll.u32 683565275, %v4650
    %v4654 = vshrl.u32 2475754826, %v4651
    %v4655 = vor.u32 %v4653, %v4654
    %v4656 = vshll.u32 2475754826, %v4650
    %v4657 = vshrl.u32 2131351028, %v4651
    %v4658 = vor.u32 %v4656, %v4657
    %v4659 = vshll.u32 2131351028, %v4650
    %v4660 = vshrl.u32 2102212464, %v4651
    %v4661 = vor.u32 %v4659, %v4660
    %v4662 = vshll.u32 2102212464, %v4650
    %v4663 = vshrl.u32 920167782, %v4651
    %v4664 = vor.u32 %v4662, %v4663
    %v4665 = vshll.u32 920167782, %v4650
    %v4666 = vshrl.u32 1326507024, %v4651
    %v4667 = vor.u32 %v4665, %v4666
    %vm4668 = vcmp.lt.s32.totalorder %v4649, 1
    %vm4669 = vcmp.lt.s32.totalorder %v4649, 2
    %vm4670 = vcmp.lt.s32.totalorder %v4649, 3
    %vm4671 = vcmp.lt.s32.totalorder %v4649, 4
    %v4672 = vsel %vm4668, %v4652, %v4655
    %v4673 = vsel %vm4671, %v4661, 2102212464
    %v4674 = vsel %vm4670, %v4658, %v4673
    %v4675 = vsel %vm4669, %v4672, %v4674
    %v4676 = vsel %vm4668, %v4655, %v4658
    %v4677 = vsel %vm4671, %v4664, 920167782
    %v4678 = vsel %vm4670, %v4661, %v4677
    %v4679 = vsel %vm4669, %v4676, %v4678
    %v4680 = vsel %vm4668, %v4658, %v4661
    %v4681 = vsel %vm4671, %v4667, 1326507024
    %v4682 = vsel %vm4670, %v4664, %v4681
    %v4683 = vsel %vm4669, %v4680, %v4682
    %v4684 = vshll.u32 %v4644, 8
    %v4685 = vand.u32 %v4684, 65535
    %v4686 = vshrl.u32 %v4684, 16
    %v4687 = vand.u32 %v4683, 65535
    %v4688 = vshrl.u32 %v4683, 16
    %v4689 = vmul.u32 %v4685, %v4687
    %v4690 = vmul.u32 %v4685, %v4688
    %v4691 = vmul.u32 %v4686, %v4687
    %v4692 = vmul.u32 %v4686, %v4688
    %v4693 = vshll.u32 %v4690, 16
    %v4694 = vshrl.u32 %v4690, 16
    %v4695 = vshll.u32 %v4691, 16
    %v4696 = vshrl.u32 %v4691, 16
    %vm4697 = vc.u32 %v4689, %v4693
    %v4698 = vsel %vm4697, 1, 0
    %v4699 = vadd.s32 %v4689, %v4693
    %v4700 = vadd.s32 %v4692, %v4698
    %vm4701 = vc.u32 %v4699, %v4695
    %v4702 = vsel %vm4701, 1, 0
    %v4703 = vadd.s32 %v4699, %v4695
    %v4704 = vadd.s32 %v4700, %v4702
    %v4705 = vadd.s32 %v4704, %v4694
    %v4706 = vadd.s32 %v4705, %v4696
    %v4707 = vand.u32 %v4684, 65535
    %v4708 = vshrl.u32 %v4684, 16
    %v4709 = vand.u32 %v4679, 65535
    %v4710 = vshrl.u32 %v4679, 16
    %v4711 = vmul.u32 %v4707, %v4709
    %v4712 = vmul.u32 %v4707, %v4710
    %v4713 = vmul.u32 %v4708, %v4709
    %v4714 = vmul.u32 %v4708, %v4710
    %v4715 = vshll.u32 %v4712, 16
    %v4716 = vshrl.u32 %v4712, 16
    %v4717 = vshll.u32 %v4713, 16
    %v4718 = vshrl.u32 %v4713, 16
    %vm4719 = vc.u32 %v4711, %v4715
    %v4720 = vsel %vm4719, 1, 0
    %v4721 = vadd.s32 %v4711, %v4715
    %v4722 = vadd.s32 %v4714, %v4720
    %vm4723 = vc.u32 %v4721, %v4717
    %v4724 = vsel %vm4723, 1, 0
    %v4725 = vadd.s32 %v4721, %v4717
    %v4726 = vadd.s32 %v4722, %v4724
    %v4727 = vadd.s32 %v4726, %v4716
    %v4728 = vadd.s32 %v4727, %v4718
    %v4729 = vmul.u32 %v4684, %v4675
    %v4730 = vadd.s32 %v4706, %v4725
    %vm4731 = vc.u32 %v4706, %v4725
    %v4732 = vadd.s32 %v4728, 1
    %v4733 = vsel %vm4731, %v4732, %v4728
    %v4734 = vadd.s32 %v4729, %v4733
    %v4735 = vadd.s32 %v4734, 536870912
    %v4736 = vshrl.u32 %v4735, 30
    %v4737 = vshll.u32 %v4736, 30
    %v4738 = vsub.s32 %v4734, %v4737
    %vm4739 = vcmp.lt.s32.totalorder %v4738, 0
    %v4740 = vsub.s32 0, %v4738
    %v4741 = vsel %vm4739, %v4740, %v4738
    %v4742 = vclz %v4741
    %v4743 = vsub.s32 %v4742, 2
    %vm4744 = vcmp.gt.s32.totalorder 0, %v4743
    %v4745 = vsel %vm4744, 0, %v4743
    %v4746 = vsub.s32 32, %v4745
    %v4747 = vshll.u32 %v4738, %v4745
    %v4748 = vshrl.u32 %v4730, %v4746
    %v4749 = vor.u32 %v4747, %v4748
    %v4750 = vsub.s32 4294967266, %v4745
    %v4751 = vadd.s32 %v4750, 127
    %v4752 = vshll.u32 %v4751, 23
    %v4753 = vor.u32 4788187, %v4752
    %v4754 = vand.u32 2147483647, %v4753
    %v4756 = vcvt.s32.f32 %v4749
    %v4757 = vmul.f32 %v4756, %v4754
    %v4758 = vxor.u32 %v4757, 2147483648
    %v4759 = vsel %vm4638, %v4758, %v4757
    %v4760 = vsub.s32 4, %v4736
    %v4761 = vsel %vm4638, %v4760, %v4736
    %v4762 = vsel %vm4637, %v1030, %v4759
    %v4763 = vsel %vm4637, 0, %v4761
    %v4764 = vmul.f32 %v4762, %v4762
    %v4765 = vmul.f32 %v4764, -0.001358992
    %v4766 = vadd.f32 %v4765, 0.041655596
    %v4767 = vmul.f32 %v4764, %v4766
    %v4768 = vadd.f32 %v4767, -0.4999988
    %v4769 = vmul.f32 %v4764, %v4768
    %v4770 = vadd.f32 1.0, %v4769
    %v4771 = vmul.f32 %v4762, %v4762
    %v4772 = vmul.f32 %v4771, -0.00019511016
    %v4773 = vadd.f32 %v4772, 0.008332121
    %v4774 = vmul.f32 %v4771, %v4773
    %v4775 = vadd.f32 %v4774, -0.16666654
    %v4776 = vmul.f32 %v4771, %v4775
    %v4777 = vadd.f32 %v4776, 1.0
    %v4778 = vmul.f32 %v4777, %v4762
    %vm4779 = vweird.f32 %v1030
    %v4780 = vadd.s32 %v4763, 3
    %v4781 = vand.u32 %v4780, 3
    %vm4782 = vcmp.lt.s32.totalorder %v4781, 2
    %vm4783 = vcmp.eq.s32.totalorder %v4781, 0
    %v4784 = vxor.u32 %v4778, 2147483648
    %v4785 = vsel %vm4783, %v4770, %v4784
    %vm4786 = vcmp.eq.s32.totalorder %v4781, 2
    %v4787 = vxor.u32 %v4770, 2147483648
    %v4788 = vsel %vm4786, %v4787, %v4778
    %v4789 = vsel %vm4782, %v4785, %v4788
    %v4790 = vsel %vm4779, nan, %v4789
    %v4791 = vand.u32 2147483647, %v1031
    %vm4792 = vcmp.le.f32.partialorder %v4791, 0.7853982
    %vm4793 = vcmp.lt.s32.totalorder %v1031, 0
    %v4794 = vand.u32 %v1031, 2139095040
    %v4795 = vshrl.u32 %v4794, 23
    %v4796 = vsub.s32 %v4795, 127
    %v4797 = vand.u32 2147483647, %v1031
    %v4798 = vand.u32 %v4797, 8388607
    %v4799 = vor.u32 %v4798, 8388608
    %v4800 = vsub.s32 0, %v4799
    %v4801 = vadd.s32 %v4796, 1
    %vm4802 = vcmp.gt.s32.totalorder %v4801, 0
    %v4803 = vsel %vm4802, %v4801, 0
    %v4804 = vshrl.u32 %v4803, 5
    %v4805 = vand.u32 %v4803, 31
    %v4806 = vsub.s32 32, %v4805
    %v4807 = vshrl.u32 683565275, %v4806
    %v4808 = vshll.u32 683565275, %v4805
    %v4809 = vshrl.u32 2475754826, %v4806
    %v4810 = vor.u32 %v4808, %v4809
    %v4811 = vshll.u32 2475754826, %v4805
    %v4812 = vshrl.u32 2131351028, %v4806
    %v4813 = vor.u32 %v4811, %v4812
    %v4814 = vshll.u32 2131351028, %v4805
    %v4815 = vshrl.u32 2102212464, %v4806
    %v4816 = vor.u32 %v4814, %v4815
    %v4817 = vshll.u32 2102212464, %v4805
    %v4818 = vshrl.u32 920167782, %v4806
    %v4819 = vor.u32 %v4817, %v4818
    %v4820 = vshll.u32 920167782, %v4805
    %v4821 = vshrl.u32 1326507024, %v4806
    %v4822 = vor.u32 %v4820, %v4821
    %vm4823 = vcmp.lt.s32.totalorder %v4804, 1
    %vm4824 = vcmp.lt.s32.totalorder %v4804, 2
    %vm4825 = vcmp.lt.s32.totalorder %v4804, 3
    %vm4826 = vcmp.lt.s32.totalorder %v4804, 4
    %v4827 = vsel %vm4823, %v4807, %v4810
    %v4828 = vsel %vm4826, %v4816, 2102212464
    %v4829 = vsel %vm4825, %v4813, %v4828
    %v4830 = vsel %vm4824, %v4827, %v4829
    %v4831 = vsel %vm4823, %v4810, %v4813
    %v4832 = vsel %vm4826, %v4819, 920167782
    %v4833 = vsel %vm4825, %v4816, %v4832
    %v4834 = vsel %vm4824, %v4831, %v4833
    %v4835 = vsel %vm4823, %v4813, %v4816
    %v4836 = vsel %vm4826, %v4822, 1326507024
    %v4837 = vsel %vm4825, %v4819, %v4836
    %v4838 = vsel %vm4824, %v4835, %v4837
    %v4839 = vshll.u32 %v4799, 8
    %v4840 = vand.u32 %v4839, 65535
    %v4841 = vshrl.u32 %v4839, 16
    %v4842 = vand.u32 %v4838, 65535
    %v4843 = vshrl.u32 %v4838, 16
    %v4844 = vmul.u32 %v4840, %v4842
    %v4845 = vmul.u32 %v4840, %v4843
    %v4846 = vmul.u32 %v4841, %v4842
    %v4847 = vmul.u32 %v4841, %v4843
    %v4848 = vshll.u32 %v4845, 16
    %v4849 = vshrl.u32 %v4845, 16
    %v4850 = vshll.u32 %v4846, 16
    %v4851 = vshrl.u32 %v4846, 16
    %vm4852 = vc.u32 %v4844, %v4848
    %v4853 = vsel %vm4852, 1, 0
    %v4854 = vadd.s32 %v4844, %v4848
    %v4855 = vadd.s32 %v4847, %v4853
    %vm4856 = vc.u32 %v4854, %v4850
    %v4857 = vsel %vm4856, 1, 0
    %v4858 = vadd.s32 %v4854, %v4850
    %v4859 = vadd.s32 %v4855, %v4857
    %v4860 = vadd.s32 %v4859, %v4849
    %v4861 = vadd.s32 %v4860, %v4851
    %v4862 = vand.u32 %v4839, 65535
    %v4863 = vshrl.u32 %v4839, 16
    %v4864 = vand.u32 %v4834, 65535
    %v4865 = vshrl.u32 %v4834, 16
    %v4866 = vmul.u32 %v4862, %v4864
    %v4867 = vmul.u32 %v4862, %v4865
    %v4868 = vmul.u32 %v4863, %v4864
    %v4869 = vmul.u32 %v4863, %v4865
    %v4870 = vshll.u32 %v4867, 16
    %v4871 = vshrl.u32 %v4867, 16
    %v4872 = vshll.u32 %v4868, 16
    %v4873 = vshrl.u32 %v4868, 16
    %vm4874 = vc.u32 %v4866, %v4870
    %v4875 = vsel %vm4874, 1, 0
    %v4876 = vadd.s32 %v4866, %v4870
    %v4877 = vadd.s32 %v4869, %v4875
    %vm4878 = vc.u32 %v4876, %v4872
    %v4879 = vsel %vm4878, 1, 0
    %v4880 = vadd.s32 %v4876, %v4872
    %v4881 = vadd.s32 %v4877, %v4879
    %v4882 = vadd.s32 %v4881, %v4871
    %v4883 = vadd.s32 %v4882, %v4873
    %v4884 = vmul.u32 %v4839, %v4830
    %v4885 = vadd.s32 %v4861, %v4880
    %vm4886 = vc.u32 %v4861, %v4880
    %v4887 = vadd.s32 %v4883, 1
    %v4888 = vsel %vm4886, %v4887, %v4883
    %v4889 = vadd.s32 %v4884, %v4888
    %v4890 = vadd.s32 %v4889, 536870912
    %v4891 = vshrl.u32 %v4890, 30
    %v4892 = vshll.u32 %v4891, 30
    %v4893 = vsub.s32 %v4889, %v4892
    %vm4894 = vcmp.lt.s32.totalorder %v4893, 0
    %v4895 = vsub.s32 0, %v4893
    %v4896 = vsel %vm4894, %v4895, %v4893
    %v4897 = vclz %v4896
    %v4898 = vsub.s32 %v4897, 2
    %vm4899 = vcmp.gt.s32.totalorder 0, %v4898
    %v4900 = vsel %vm4899, 0, %v4898
    %v4901 = vsub.s32 32, %v4900
    %v4902 = vshll.u32 %v4893, %v4900
    %v4903 = vshrl.u32 %v4885, %v4901
    %v4904 = vor.u32 %v4902, %v4903
    %v4905 = vsub.s32 4294967266, %v4900
    %v4906 = vadd.s32 %v4905, 127
    %v4907 = vshll.u32 %v4906, 23
    %v4908 = vor.u32 4788187, %v4907
    %v4909 = vand.u32 2147483647, %v4908
    %v4911 = vcvt.s32.f32 %v4904
    %v4912 = vmul.f32 %v4911, %v4909
    %v4913 = vxor.u32 %v4912, 2147483648
    %v4914 = vsel %vm4793, %v4913, %v4912
    %v4915 = vsub.s32 4, %v4891
    %v4916 = vsel %vm4793, %v4915, %v4891
    %v4917 = vsel %vm4792, %v1031, %v4914
    %v4918 = vsel %vm4792, 0, %v4916
    %v4919 = vmul.f32 %v4917, %v4917
    %v4920 = vmul.f32 %v4919, -0.001358992
    %v4921 = vadd.f32 %v4920, 0.041655596
    %v4922 = vmul.f32 %v4919, %v4921
    %v4923 = vadd.f32 %v4922, -0.4999988
    %v4924 = vmul.f32 %v4919, %v4923
    %v4925 = vadd.f32 1.0, %v4924
    %v4926 = vmul.f32 %v4917, %v4917
    %v4927 = vmul.f32 %v4926, -0.00019511016
    %v4928 = vadd.f32 %v4927, 0.008332121
    %v4929 = vmul.f32 %v4926, %v4928
    %v4930 = vadd.f32 %v4929, -0.16666654
    %v4931 = vmul.f32 %v4926, %v4930
    %v4932 = vadd.f32 %v4931, 1.0
    %v4933 = vmul.f32 %v4932, %v4917
    %vm4934 = vweird.f32 %v1031
    %v4935 = vadd.s32 %v4918, 3
    %v4936 = vand.u32 %v4935, 3
    %vm4937 = vcmp.lt.s32.totalorder %v4936, 2
    %vm4938 = vcmp.eq.s32.totalorder %v4936, 0
    %v4939 = vxor.u32 %v4933, 2147483648
    %v4940 = vsel %vm4938, %v4925, %v4939
    %vm4941 = vcmp.eq.s32.totalorder %v4936, 2
    %v4942 = vxor.u32 %v4925, 2147483648
    %v4943 = vsel %vm4941, %v4942, %v4933
    %v4944 = vsel %vm4937, %v4940, %v4943
    %v4945 = vsel %vm4934, nan, %v4944
    %v4946 = vand.u32 2147483647, %v1032
    %vm4947 = vcmp.le.f32.partialorder %v4946, 0.7853982
    %vm4948 = vcmp.lt.s32.totalorder %v1032, 0
    %v4949 = vand.u32 %v1032, 2139095040
    %v4950 = vshrl.u32 %v4949, 23
    %v4951 = vsub.s32 %v4950, 127
    %v4952 = vand.u32 2147483647, %v1032
    %v4953 = vand.u32 %v4952, 8388607
    %v4954 = vor.u32 %v4953, 8388608
    %v4955 = vsub.s32 0, %v4954
    %v4956 = vadd.s32 %v4951, 1
    %vm4957 = vcmp.gt.s32.totalorder %v4956, 0
    %v4958 = vsel %vm4957, %v4956, 0
    %v4959 = vshrl.u32 %v4958, 5
    %v4960 = vand.u32 %v4958, 31
    %v4961 = vsub.s32 32, %v4960
    %v4962 = vshrl.u32 683565275, %v4961
    %v4963 = vshll.u32 683565275, %v4960
    %v4964 = vshrl.u32 2475754826, %v4961
    %v4965 = vor.u32 %v4963, %v4964
    %v4966 = vshll.u32 2475754826, %v4960
    %v4967 = vshrl.u32 2131351028, %v4961
    %v4968 = vor.u32 %v4966, %v4967
    %v4969 = vshll.u32 2131351028, %v4960
    %v4970 = vshrl.u32 2102212464, %v4961
    %v4971 = vor.u32 %v4969, %v4970
    %v4972 = vshll.u32 2102212464, %v4960
    %v4973 = vshrl.u32 920167782, %v4961
    %v4974 = vor.u32 %v4972, %v4973
    %v4975 = vshll.u32 920167782, %v4960
    %v4976 = vshrl.u32 1326507024, %v4961
    %v4977 = vor.u32 %v4975, %v4976
    %vm4978 = vcmp.lt.s32.totalorder %v4959, 1
    %vm4979 = vcmp.lt.s32.totalorder %v4959, 2
    %vm4980 = vcmp.lt.s32.totalorder %v4959, 3
    %vm4981 = vcmp.lt.s32.totalorder %v4959, 4
    %v4982 = vsel %vm4978, %v4962, %v4965
    %v4983 = vsel %vm4981, %v4971, 2102212464
    %v4984 = vsel %vm4980, %v4968, %v4983
    %v4985 = vsel %vm4979, %v4982, %v4984
    %v4986 = vsel %vm4978, %v4965, %v4968
    %v4987 = vsel %vm4981, %v4974, 920167782
    %v4988 = vsel %vm4980, %v4971, %v4987
    %v4989 = vsel %vm4979, %v4986, %v4988
    %v4990 = vsel %vm4978, %v4968, %v4971
    %v4991 = vsel %vm4981, %v4977, 1326507024
    %v4992 = vsel %vm4980, %v4974, %v4991
    %v4993 = vsel %vm4979, %v4990, %v4992
    %v4994 = vshll.u32 %v4954, 8
    %v4995 = vand.u32 %v4994, 65535
    %v4996 = vshrl.u32 %v4994, 16
    %v4997 = vand.u32 %v4993, 65535
    %v4998 = vshrl.u32 %v4993, 16
    %v4999 = vmul.u32 %v4995, %v4997
    %v5000 = vmul.u32 %v4995, %v4998
    %v5001 = vmul.u32 %v4996, %v4997
    %v5002 = vmul.u32 %v4996, %v4998
    %v5003 = vshll.u32 %v5000, 16
    %v5004 = vshrl.u32 %v5000, 16
    %v5005 = vshll.u32 %v5001, 16
    %v5006 = vshrl.u32 %v5001, 16
    %vm5007 = vc.u32 %v4999, %v5003
    %v5008 = vsel %vm5007, 1, 0
    %v5009 = vadd.s32 %v4999, %v5003
    %v5010 = vadd.s32 %v5002, %v5008
    %vm5011 = vc.u32 %v5009, %v5005
    %v5012 = vsel %vm5011, 1, 0
    %v5013 = vadd.s32 %v5009, %v5005
    %v5014 = vadd.s32 %v5010, %v5012
    %v5015 = vadd.s32 %v5014, %v5004
    %v5016 = vadd.s32 %v5015, %v5006
    %v5017 = vand.u32 %v4994, 65535
    %v5018 = vshrl.u32 %v4994, 16
    %v5019 = vand.u32 %v4989, 65535
    %v5020 = vshrl.u32 %v4989, 16
    %v5021 = vmul.u32 %v5017, %v5019
    %v5022 = vmul.u32 %v5017, %v5020
    %v5023 = vmul.u32 %v5018, %v5019
    %v5024 = vmul.u32 %v5018, %v5020
    %v5025 = vshll.u32 %v5022, 16
    %v5026 = vshrl.u32 %v5022, 16
    %v5027 = vshll.u32 %v5023, 16
    %v5028 = vshrl.u32 %v5023, 16
    %vm5029 = vc.u32 %v5021, %v5025
    %v5030 = vsel %vm5029, 1, 0
    %v5031 = vadd.s32 %v5021, %v5025
    %v5032 = vadd.s32 %v5024, %v5030
    %vm5033 = vc.u32 %v5031, %v5027
    %v5034 = vsel %vm5033, 1, 0
    %v5035 = vadd.s32 %v5031, %v5027
    %v5036 = vadd.s32 %v5032, %v5034
    %v5037 = vadd.s32 %v5036, %v5026
    %v5038 = vadd.s32 %v5037, %v5028
    %v5039 = vmul.u32 %v4994, %v4985
    %v5040 = vadd.s32 %v5016, %v5035
    %vm5041 = vc.u32 %v5016, %v5035
    %v5042 = vadd.s32 %v5038, 1
    %v5043 = vsel %vm5041, %v5042, %v5038
    %v5044 = vadd.s32 %v5039, %v5043
    %v5045 = vadd.s32 %v5044, 536870912
    %v5046 = vshrl.u32 %v5045, 30
    %v5047 = vshll.u32 %v5046, 30
    %v5048 = vsub.s32 %v5044, %v5047
    %vm5049 = vcmp.lt.s32.totalorder %v5048, 0
    %v5050 = vsub.s32 0, %v5048
    %v5051 = vsel %vm5049, %v5050, %v5048
    %v5052 = vclz %v5051
    %v5053 = vsub.s32 %v5052, 2
    %vm5054 = vcmp.gt.s32.totalorder 0, %v5053
    %v5055 = vsel %vm5054, 0, %v5053
    %v5056 = vsub.s32 32, %v5055
    %v5057 = vshll.u32 %v5048, %v5055
    %v5058 = vshrl.u32 %v5040, %v5056
    %v5059 = vor.u32 %v5057, %v5058
    %v5060 = vsub.s32 4294967266, %v5055
    %v5061 = vadd.s32 %v5060, 127
    %v5062 = vshll.u32 %v5061, 23
    %v5063 = vor.u32 4788187, %v5062
    %v5064 = vand.u32 2147483647, %v5063
    %v5066 = vcvt.s32.f32 %v5059
    %v5067 = vmul.f32 %v5066, %v5064
    %v5068 = vxor.u32 %v5067, 2147483648
    %v5069 = vsel %vm4948, %v5068, %v5067
    %v5070 = vsub.s32 4, %v5046
    %v5071 = vsel %vm4948, %v5070, %v5046
    %v5072 = vsel %vm4947, %v1032, %v5069
    %v5073 = vsel %vm4947, 0, %v5071
    %v5074 = vmul.f32 %v5072, %v5072
    %v5075 = vmul.f32 %v5074, -0.001358992
    %v5076 = vadd.f32 %v5075, 0.041655596
    %v5077 = vmul.f32 %v5074, %v5076
    %v5078 = vadd.f32 %v5077, -0.4999988
    %v5079 = vmul.f32 %v5074, %v5078
    %v5080 = vadd.f32 1.0, %v5079
    %v5081 = vmul.f32 %v5072, %v5072
    %v5082 = vmul.f32 %v5081, -0.00019511016
    %v5083 = vadd.f32 %v5082, 0.008332121
    %v5084 = vmul.f32 %v5081, %v5083
    %v5085 = vadd.f32 %v5084, -0.16666654
    %v5086 = vmul.f32 %v5081, %v5085
    %v5087 = vadd.f32 %v5086, 1.0
    %v5088 = vmul.f32 %v5087, %v5072
    %vm5089 = vweird.f32 %v1032
    %v5090 = vadd.s32 %v5073, 3
    %v5091 = vand.u32 %v5090, 3
    %vm5092 = vcmp.lt.s32.totalorder %v5091, 2
    %vm5093 = vcmp.eq.s32.totalorder %v5091, 0
    %v5094 = vxor.u32 %v5088, 2147483648
    %v5095 = vsel %vm5093, %v5080, %v5094
    %vm5096 = vcmp.eq.s32.totalorder %v5091, 2
    %v5097 = vxor.u32 %v5080, 2147483648
    %v5098 = vsel %vm5096, %v5097, %v5088
    %v5099 = vsel %vm5092, %v5095, %v5098
    %v5100 = vsel %vm5089, nan, %v5099
    %v5101 = vand.u32 2147483647, %v1033
    %vm5102 = vcmp.le.f32.partialorder %v5101, 0.7853982
    %vm5103 = vcmp.lt.s32.totalorder %v1033, 0
    %v5104 = vand.u32 %v1033, 2139095040
    %v5105 = vshrl.u32 %v5104, 23
    %v5106 = vsub.s32 %v5105, 127
    %v5107 = vand.u32 2147483647, %v1033
    %v5108 = vand.u32 %v5107, 8388607
    %v5109 = vor.u32 %v5108, 8388608
    %v5110 = vsub.s32 0, %v5109
    %v5111 = vadd.s32 %v5106, 1
    %vm5112 = vcmp.gt.s32.totalorder %v5111, 0
    %v5113 = vsel %vm5112, %v5111, 0
    %v5114 = vshrl.u32 %v5113, 5
    %v5115 = vand.u32 %v5113, 31
    %v5116 = vsub.s32 32, %v5115
    %v5117 = vshrl.u32 683565275, %v5116
    %v5118 = vshll.u32 683565275, %v5115
    %v5119 = vshrl.u32 2475754826, %v5116
    %v5120 = vor.u32 %v5118, %v5119
    %v5121 = vshll.u32 2475754826, %v5115
    %v5122 = vshrl.u32 2131351028, %v5116
    %v5123 = vor.u32 %v5121, %v5122
    %v5124 = vshll.u32 2131351028, %v5115
    %v5125 = vshrl.u32 2102212464, %v5116
    %v5126 = vor.u32 %v5124, %v5125
    %v5127 = vshll.u32 2102212464, %v5115
    %v5128 = vshrl.u32 920167782, %v5116
    %v5129 = vor.u32 %v5127, %v5128
    %v5130 = vshll.u32 920167782, %v5115
    %v5131 = vshrl.u32 1326507024, %v5116
    %v5132 = vor.u32 %v5130, %v5131
    %vm5133 = vcmp.lt.s32.totalorder %v5114, 1
    %vm5134 = vcmp.lt.s32.totalorder %v5114, 2
    %vm5135 = vcmp.lt.s32.totalorder %v5114, 3
    %vm5136 = vcmp.lt.s32.totalorder %v5114, 4
    %v5137 = vsel %vm5133, %v5117, %v5120
    %v5138 = vsel %vm5136, %v5126, 2102212464
    %v5139 = vsel %vm5135, %v5123, %v5138
    %v5140 = vsel %vm5134, %v5137, %v5139
    %v5141 = vsel %vm5133, %v5120, %v5123
    %v5142 = vsel %vm5136, %v5129, 920167782
    %v5143 = vsel %vm5135, %v5126, %v5142
    %v5144 = vsel %vm5134, %v5141, %v5143
    %v5145 = vsel %vm5133, %v5123, %v5126
    %v5146 = vsel %vm5136, %v5132, 1326507024
    %v5147 = vsel %vm5135, %v5129, %v5146
    %v5148 = vsel %vm5134, %v5145, %v5147
    %v5149 = vshll.u32 %v5109, 8
    %v5150 = vand.u32 %v5149, 65535
    %v5151 = vshrl.u32 %v5149, 16
    %v5152 = vand.u32 %v5148, 65535
    %v5153 = vshrl.u32 %v5148, 16
    %v5154 = vmul.u32 %v5150, %v5152
    %v5155 = vmul.u32 %v5150, %v5153
    %v5156 = vmul.u32 %v5151, %v5152
    %v5157 = vmul.u32 %v5151, %v5153
    %v5158 = vshll.u32 %v5155, 16
    %v5159 = vshrl.u32 %v5155, 16
    %v5160 = vshll.u32 %v5156, 16
    %v5161 = vshrl.u32 %v5156, 16
    %vm5162 = vc.u32 %v5154, %v5158
    %v5163 = vsel %vm5162, 1, 0
    %v5164 = vadd.s32 %v5154, %v5158
    %v5165 = vadd.s32 %v5157, %v5163
    %vm5166 = vc.u32 %v5164, %v5160
    %v5167 = vsel %vm5166, 1, 0
    %v5168 = vadd.s32 %v5164, %v5160
    %v5169 = vadd.s32 %v5165, %v5167
    %v5170 = vadd.s32 %v5169, %v5159
    %v5171 = vadd.s32 %v5170, %v5161
    %v5172 = vand.u32 %v5149, 65535
    %v5173 = vshrl.u32 %v5149, 16
    %v5174 = vand.u32 %v5144, 65535
    %v5175 = vshrl.u32 %v5144, 16
    %v5176 = vmul.u32 %v5172, %v5174
    %v5177 = vmul.u32 %v5172, %v5175
    %v5178 = vmul.u32 %v5173, %v5174
    %v5179 = vmul.u32 %v5173, %v5175
    %v5180 = vshll.u32 %v5177, 16
    %v5181 = vshrl.u32 %v5177, 16
    %v5182 = vshll.u32 %v5178, 16
    %v5183 = vshrl.u32 %v5178, 16
    %vm5184 = vc.u32 %v5176, %v5180
    %v5185 = vsel %vm5184, 1, 0
    %v5186 = vadd.s32 %v5176, %v5180
    %v5187 = vadd.s32 %v5179, %v5185
    %vm5188 = vc.u32 %v5186, %v5182
    %v5189 = vsel %vm5188, 1, 0
    %v5190 = vadd.s32 %v5186, %v5182
    %v5191 = vadd.s32 %v5187, %v5189
    %v5192 = vadd.s32 %v5191, %v5181
    %v5193 = vadd.s32 %v5192, %v5183
    %v5194 = vmul.u32 %v5149, %v5140
    %v5195 = vadd.s32 %v5171, %v5190
    %vm5196 = vc.u32 %v5171, %v5190
    %v5197 = vadd.s32 %v5193, 1
    %v5198 = vsel %vm5196, %v5197, %v5193
    %v5199 = vadd.s32 %v5194, %v5198
    %v5200 = vadd.s32 %v5199, 536870912
    %v5201 = vshrl.u32 %v5200, 30
    %v5202 = vshll.u32 %v5201, 30
    %v5203 = vsub.s32 %v5199, %v5202
    %vm5204 = vcmp.lt.s32.totalorder %v5203, 0
    %v5205 = vsub.s32 0, %v5203
    %v5206 = vsel %vm5204, %v5205, %v5203
    %v5207 = vclz %v5206
    %v5208 = vsub.s32 %v5207, 2
    %vm5209 = vcmp.gt.s32.totalorder 0, %v5208
    %v5210 = vsel %vm5209, 0, %v5208
    %v5211 = vsub.s32 32, %v5210
    %v5212 = vshll.u32 %v5203, %v5210
    %v5213 = vshrl.u32 %v5195, %v5211
    %v5214 = vor.u32 %v5212, %v5213
    %v5215 = vsub.s32 4294967266, %v5210
    %v5216 = vadd.s32 %v5215, 127
    %v5217 = vshll.u32 %v5216, 23
    %v5218 = vor.u32 4788187, %v5217
    %v5219 = vand.u32 2147483647, %v5218
    %v5221 = vcvt.s32.f32 %v5214
    %v5222 = vmul.f32 %v5221, %v5219
    %v5223 = vxor.u32 %v5222, 2147483648
    %v5224 = vsel %vm5103, %v5223, %v5222
    %v5225 = vsub.s32 4, %v5201
    %v5226 = vsel %vm5103, %v5225, %v5201
    %v5227 = vsel %vm5102, %v1033, %v5224
    %v5228 = vsel %vm5102, 0, %v5226
    %v5229 = vmul.f32 %v5227, %v5227
    %v5230 = vmul.f32 %v5229, -0.001358992
    %v5231 = vadd.f32 %v5230, 0.041655596
    %v5232 = vmul.f32 %v5229, %v5231
    %v5233 = vadd.f32 %v5232, -0.4999988
    %v5234 = vmul.f32 %v5229, %v5233
    %v5235 = vadd.f32 1.0, %v5234
    %v5236 = vmul.f32 %v5227, %v5227
    %v5237 = vmul.f32 %v5236, -0.00019511016
    %v5238 = vadd.f32 %v5237, 0.008332121
    %v5239 = vmul.f32 %v5236, %v5238
    %v5240 = vadd.f32 %v5239, -0.16666654
    %v5241 = vmul.f32 %v5236, %v5240
    %v5242 = vadd.f32 %v5241, 1.0
    %v5243 = vmul.f32 %v5242, %v5227
    %vm5244 = vweird.f32 %v1033
    %v5245 = vadd.s32 %v5228, 3
    %v5246 = vand.u32 %v5245, 3
    %vm5247 = vcmp.lt.s32.totalorder %v5246, 2
    %vm5248 = vcmp.eq.s32.totalorder %v5246, 0
    %v5249 = vxor.u32 %v5243, 2147483648
    %v5250 = vsel %vm5248, %v5235, %v5249
    %vm5251 = vcmp.eq.s32.totalorder %v5246, 2
    %v5252 = vxor.u32 %v5235, 2147483648
    %v5253 = vsel %vm5251, %v5252, %v5243
    %v5254 = vsel %vm5247, %v5250, %v5253
    %v5255 = vsel %vm5244, nan, %v5254
    %v5256 = vand.u32 2147483647, %v1034
    %vm5257 = vcmp.le.f32.partialorder %v5256, 0.7853982
    %vm5258 = vcmp.lt.s32.totalorder %v1034, 0
    %v5259 = vand.u32 %v1034, 2139095040
    %v5260 = vshrl.u32 %v5259, 23
    %v5261 = vsub.s32 %v5260, 127
    %v5262 = vand.u32 2147483647, %v1034
    %v5263 = vand.u32 %v5262, 8388607
    %v5264 = vor.u32 %v5263, 8388608
    %v5265 = vsub.s32 0, %v5264
    %v5266 = vadd.s32 %v5261, 1
    %vm5267 = vcmp.gt.s32.totalorder %v5266, 0
    %v5268 = vsel %vm5267, %v5266, 0
    %v5269 = vshrl.u32 %v5268, 5
    %v5270 = vand.u32 %v5268, 31
    %v5271 = vsub.s32 32, %v5270
    %v5272 = vshrl.u32 683565275, %v5271
    %v5273 = vshll.u32 683565275, %v5270
    %v5274 = vshrl.u32 2475754826, %v5271
    %v5275 = vor.u32 %v5273, %v5274
    %v5276 = vshll.u32 2475754826, %v5270
    %v5277 = vshrl.u32 2131351028, %v5271
    %v5278 = vor.u32 %v5276, %v5277
    %v5279 = vshll.u32 2131351028, %v5270
    %v5280 = vshrl.u32 2102212464, %v5271
    %v5281 = vor.u32 %v5279, %v5280
    %v5282 = vshll.u32 2102212464, %v5270
    %v5283 = vshrl.u32 920167782, %v5271
    %v5284 = vor.u32 %v5282, %v5283
    %v5285 = vshll.u32 920167782, %v5270
    %v5286 = vshrl.u32 1326507024, %v5271
    %v5287 = vor.u32 %v5285, %v5286
    %vm5288 = vcmp.lt.s32.totalorder %v5269, 1
    %vm5289 = vcmp.lt.s32.totalorder %v5269, 2
    %vm5290 = vcmp.lt.s32.totalorder %v5269, 3
    %vm5291 = vcmp.lt.s32.totalorder %v5269, 4
    %v5292 = vsel %vm5288, %v5272, %v5275
    %v5293 = vsel %vm5291, %v5281, 2102212464
    %v5294 = vsel %vm5290, %v5278, %v5293
    %v5295 = vsel %vm5289, %v5292, %v5294
    %v5296 = vsel %vm5288, %v5275, %v5278
    %v5297 = vsel %vm5291, %v5284, 920167782
    %v5298 = vsel %vm5290, %v5281, %v5297
    %v5299 = vsel %vm5289, %v5296, %v5298
    %v5300 = vsel %vm5288, %v5278, %v5281
    %v5301 = vsel %vm5291, %v5287, 1326507024
    %v5302 = vsel %vm5290, %v5284, %v5301
    %v5303 = vsel %vm5289, %v5300, %v5302
    %v5304 = vshll.u32 %v5264, 8
    %v5305 = vand.u32 %v5304, 65535
    %v5306 = vshrl.u32 %v5304, 16
    %v5307 = vand.u32 %v5303, 65535
    %v5308 = vshrl.u32 %v5303, 16
    %v5309 = vmul.u32 %v5305, %v5307
    %v5310 = vmul.u32 %v5305, %v5308
    %v5311 = vmul.u32 %v5306, %v5307
    %v5312 = vmul.u32 %v5306, %v5308
    %v5313 = vshll.u32 %v5310, 16
    %v5314 = vshrl.u32 %v5310, 16
    %v5315 = vshll.u32 %v5311, 16
    %v5316 = vshrl.u32 %v5311, 16
    %vm5317 = vc.u32 %v5309, %v5313
    %v5318 = vsel %vm5317, 1, 0
    %v5319 = vadd.s32 %v5309, %v5313
    %v5320 = vadd.s32 %v5312, %v5318
    %vm5321 = vc.u32 %v5319, %v5315
    %v5322 = vsel %vm5321, 1, 0
    %v5323 = vadd.s32 %v5319, %v5315
    %v5324 = vadd.s32 %v5320, %v5322
    %v5325 = vadd.s32 %v5324, %v5314
    %v5326 = vadd.s32 %v5325, %v5316
    %v5327 = vand.u32 %v5304, 65535
    %v5328 = vshrl.u32 %v5304, 16
    %v5329 = vand.u32 %v5299, 65535
    %v5330 = vshrl.u32 %v5299, 16
    %v5331 = vmul.u32 %v5327, %v5329
    %v5332 = vmul.u32 %v5327, %v5330
    %v5333 = vmul.u32 %v5328, %v5329
    %v5334 = vmul.u32 %v5328, %v5330
    %v5335 = vshll.u32 %v5332, 16
    %v5336 = vshrl.u32 %v5332, 16
    %v5337 = vshll.u32 %v5333, 16
    %v5338 = vshrl.u32 %v5333, 16
    %vm5339 = vc.u32 %v5331, %v5335
    %v5340 = vsel %vm5339, 1, 0
    %v5341 = vadd.s32 %v5331, %v5335
    %v5342 = vadd.s32 %v5334, %v5340
    %vm5343 = vc.u32 %v5341, %v5337
    %v5344 = vsel %vm5343, 1, 0
    %v5345 = vadd.s32 %v5341, %v5337
    %v5346 = vadd.s32 %v5342, %v5344
    %v5347 = vadd.s32 %v5346, %v5336
    %v5348 = vadd.s32 %v5347, %v5338
    %v5349 = vmul.u32 %v5304, %v5295
    %v5350 = vadd.s32 %v5326, %v5345
    %vm5351 = vc.u32 %v5326, %v5345
    %v5352 = vadd.s32 %v5348, 1
    %v5353 = vsel %vm5351, %v5352, %v5348
    %v5354 = vadd.s32 %v5349, %v5353
    %v5355 = vadd.s32 %v5354, 536870912
    %v5356 = vshrl.u32 %v5355, 30
    %v5357 = vshll.u32 %v5356, 30
    %v5358 = vsub.s32 %v5354, %v5357
    %vm5359 = vcmp.lt.s32.totalorder %v5358, 0
    %v5360 = vsub.s32 0, %v5358
    %v5361 = vsel %vm5359, %v5360, %v5358
    %v5362 = vclz %v5361
    %v5363 = vsub.s32 %v5362, 2
    %vm5364 = vcmp.gt.s32.totalorder 0, %v5363
    %v5365 = vsel %vm5364, 0, %v5363
    %v5366 = vsub.s32 32, %v5365
    %v5367 = vshll.u32 %v5358, %v5365
    %v5368 = vshrl.u32 %v5350, %v5366
    %v5369 = vor.u32 %v5367, %v5368
    %v5370 = vsub.s32 4294967266, %v5365
    %v5371 = vadd.s32 %v5370, 127
    %v5372 = vshll.u32 %v5371, 23
    %v5373 = vor.u32 4788187, %v5372
    %v5374 = vand.u32 2147483647, %v5373
    %v5376 = vcvt.s32.f32 %v5369
    %v5377 = vmul.f32 %v5376, %v5374
    %v5378 = vxor.u32 %v5377, 2147483648
    %v5379 = vsel %vm5258, %v5378, %v5377
    %v5380 = vsub.s32 4, %v5356
    %v5381 = vsel %vm5258, %v5380, %v5356
    %v5382 = vsel %vm5257, %v1034, %v5379
    %v5383 = vsel %vm5257, 0, %v5381
    %v5384 = vmul.f32 %v5382, %v5382
    %v5385 = vmul.f32 %v5384, -0.001358992
    %v5386 = vadd.f32 %v5385, 0.041655596
    %v5387 = vmul.f32 %v5384, %v5386
    %v5388 = vadd.f32 %v5387, -0.4999988
    %v5389 = vmul.f32 %v5384, %v5388
    %v5390 = vadd.f32 1.0, %v5389
    %v5391 = vmul.f32 %v5382, %v5382
    %v5392 = vmul.f32 %v5391, -0.00019511016
    %v5393 = vadd.f32 %v5392, 0.008332121
    %v5394 = vmul.f32 %v5391, %v5393
    %v5395 = vadd.f32 %v5394, -0.16666654
    %v5396 = vmul.f32 %v5391, %v5395
    %v5397 = vadd.f32 %v5396, 1.0
    %v5398 = vmul.f32 %v5397, %v5382
    %vm5399 = vweird.f32 %v1034
    %v5400 = vadd.s32 %v5383, 3
    %v5401 = vand.u32 %v5400, 3
    %vm5402 = vcmp.lt.s32.totalorder %v5401, 2
    %vm5403 = vcmp.eq.s32.totalorder %v5401, 0
    %v5404 = vxor.u32 %v5398, 2147483648
    %v5405 = vsel %vm5403, %v5390, %v5404
    %vm5406 = vcmp.eq.s32.totalorder %v5401, 2
    %v5407 = vxor.u32 %v5390, 2147483648
    %v5408 = vsel %vm5406, %v5407, %v5398
    %v5409 = vsel %vm5402, %v5405, %v5408
    %v5410 = vsel %vm5399, nan, %v5409
    %v5411 = vand.u32 2147483647, %v1035
    %vm5412 = vcmp.le.f32.partialorder %v5411, 0.7853982
    %vm5413 = vcmp.lt.s32.totalorder %v1035, 0
    %v5414 = vand.u32 %v1035, 2139095040
    %v5415 = vshrl.u32 %v5414, 23
    %v5416 = vsub.s32 %v5415, 127
    %v5417 = vand.u32 2147483647, %v1035
    %v5418 = vand.u32 %v5417, 8388607
    %v5419 = vor.u32 %v5418, 8388608
    %v5420 = vsub.s32 0, %v5419
    %v5421 = vadd.s32 %v5416, 1
    %vm5422 = vcmp.gt.s32.totalorder %v5421, 0
    %v5423 = vsel %vm5422, %v5421, 0
    %v5424 = vshrl.u32 %v5423, 5
    %v5425 = vand.u32 %v5423, 31
    %v5426 = vsub.s32 32, %v5425
    %v5427 = vshrl.u32 683565275, %v5426
    %v5428 = vshll.u32 683565275, %v5425
    %v5429 = vshrl.u32 2475754826, %v5426
    %v5430 = vor.u32 %v5428, %v5429
    %v5431 = vshll.u32 2475754826, %v5425
    %v5432 = vshrl.u32 2131351028, %v5426
    %v5433 = vor.u32 %v5431, %v5432
    %v5434 = vshll.u32 2131351028, %v5425
    %v5435 = vshrl.u32 2102212464, %v5426
    %v5436 = vor.u32 %v5434, %v5435
    %v5437 = vshll.u32 2102212464, %v5425
    %v5438 = vshrl.u32 920167782, %v5426
    %v5439 = vor.u32 %v5437, %v5438
    %v5440 = vshll.u32 920167782, %v5425
    %v5441 = vshrl.u32 1326507024, %v5426
    %v5442 = vor.u32 %v5440, %v5441
    %vm5443 = vcmp.lt.s32.totalorder %v5424, 1
    %vm5444 = vcmp.lt.s32.totalorder %v5424, 2
    %vm5445 = vcmp.lt.s32.totalorder %v5424, 3
    %vm5446 = vcmp.lt.s32.totalorder %v5424, 4
    %v5447 = vsel %vm5443, %v5427, %v5430
    %v5448 = vsel %vm5446, %v5436, 2102212464
    %v5449 = vsel %vm5445, %v5433, %v5448
    %v5450 = vsel %vm5444, %v5447, %v5449
    %v5451 = vsel %vm5443, %v5430, %v5433
    %v5452 = vsel %vm5446, %v5439, 920167782
    %v5453 = vsel %vm5445, %v5436, %v5452
    %v5454 = vsel %vm5444, %v5451, %v5453
    %v5455 = vsel %vm5443, %v5433, %v5436
    %v5456 = vsel %vm5446, %v5442, 1326507024
    %v5457 = vsel %vm5445, %v5439, %v5456
    %v5458 = vsel %vm5444, %v5455, %v5457
    %v5459 = vshll.u32 %v5419, 8
    %v5460 = vand.u32 %v5459, 65535
    %v5461 = vshrl.u32 %v5459, 16
    %v5462 = vand.u32 %v5458, 65535
    %v5463 = vshrl.u32 %v5458, 16
    %v5464 = vmul.u32 %v5460, %v5462
    %v5465 = vmul.u32 %v5460, %v5463
    %v5466 = vmul.u32 %v5461, %v5462
    %v5467 = vmul.u32 %v5461, %v5463
    %v5468 = vshll.u32 %v5465, 16
    %v5469 = vshrl.u32 %v5465, 16
    %v5470 = vshll.u32 %v5466, 16
    %v5471 = vshrl.u32 %v5466, 16
    %vm5472 = vc.u32 %v5464, %v5468
    %v5473 = vsel %vm5472, 1, 0
    %v5474 = vadd.s32 %v5464, %v5468
    %v5475 = vadd.s32 %v5467, %v5473
    %vm5476 = vc.u32 %v5474, %v5470
    %v5477 = vsel %vm5476, 1, 0
    %v5478 = vadd.s32 %v5474, %v5470
    %v5479 = vadd.s32 %v5475, %v5477
    %v5480 = vadd.s32 %v5479, %v5469
    %v5481 = vadd.s32 %v5480, %v5471
    %v5482 = vand.u32 %v5459, 65535
    %v5483 = vshrl.u32 %v5459, 16
    %v5484 = vand.u32 %v5454, 65535
    %v5485 = vshrl.u32 %v5454, 16
    %v5486 = vmul.u32 %v5482, %v5484
    %v5487 = vmul.u32 %v5482, %v5485
    %v5488 = vmul.u32 %v5483, %v5484
    %v5489 = vmul.u32 %v5483, %v5485
    %v5490 = vshll.u32 %v5487, 16
    %v5491 = vshrl.u32 %v5487, 16
    %v5492 = vshll.u32 %v5488, 16
    %v5493 = vshrl.u32 %v5488, 16
    %vm5494 = vc.u32 %v5486, %v5490
    %v5495 = vsel %vm5494, 1, 0
    %v5496 = vadd.s32 %v5486, %v5490
    %v5497 = vadd.s32 %v5489, %v5495
    %vm5498 = vc.u32 %v5496, %v5492
    %v5499 = vsel %vm5498, 1, 0
    %v5500 = vadd.s32 %v5496, %v5492
    %v5501 = vadd.s32 %v5497, %v5499
    %v5502 = vadd.s32 %v5501, %v5491
    %v5503 = vadd.s32 %v5502, %v5493
    %v5504 = vmul.u32 %v5459, %v5450
    %v5505 = vadd.s32 %v5481, %v5500
    %vm5506 = vc.u32 %v5481, %v5500
    %v5507 = vadd.s32 %v5503, 1
    %v5508 = vsel %vm5506, %v5507, %v5503
    %v5509 = vadd.s32 %v5504, %v5508
    %v5510 = vadd.s32 %v5509, 536870912
    %v5511 = vshrl.u32 %v5510, 30
    %v5512 = vshll.u32 %v5511, 30
    %v5513 = vsub.s32 %v5509, %v5512
    %vm5514 = vcmp.lt.s32.totalorder %v5513, 0
    %v5515 = vsub.s32 0, %v5513
    %v5516 = vsel %vm5514, %v5515, %v5513
    %v5517 = vclz %v5516
    %v5518 = vsub.s32 %v5517, 2
    %vm5519 = vcmp.gt.s32.totalorder 0, %v5518
    %v5520 = vsel %vm5519, 0, %v5518
    %v5521 = vsub.s32 32, %v5520
    %v5522 = vshll.u32 %v5513, %v5520
    %v5523 = vshrl.u32 %v5505, %v5521
    %v5524 = vor.u32 %v5522, %v5523
    %v5525 = vsub.s32 4294967266, %v5520
    %v5526 = vadd.s32 %v5525, 127
    %v5527 = vshll.u32 %v5526, 23
    %v5528 = vor.u32 4788187, %v5527
    %v5529 = vand.u32 2147483647, %v5528
    %v5531 = vcvt.s32.f32 %v5524
    %v5532 = vmul.f32 %v5531, %v5529
    %v5533 = vxor.u32 %v5532, 2147483648
    %v5534 = vsel %vm5413, %v5533, %v5532
    %v5535 = vsub.s32 4, %v5511
    %v5536 = vsel %vm5413, %v5535, %v5511
    %v5537 = vsel %vm5412, %v1035, %v5534
    %v5538 = vsel %vm5412, 0, %v5536
    %v5539 = vmul.f32 %v5537, %v5537
    %v5540 = vmul.f32 %v5539, -0.001358992
    %v5541 = vadd.f32 %v5540, 0.041655596
    %v5542 = vmul.f32 %v5539, %v5541
    %v5543 = vadd.f32 %v5542, -0.4999988
    %v5544 = vmul.f32 %v5539, %v5543
    %v5545 = vadd.f32 1.0, %v5544
    %v5546 = vmul.f32 %v5537, %v5537
    %v5547 = vmul.f32 %v5546, -0.00019511016
    %v5548 = vadd.f32 %v5547, 0.008332121
    %v5549 = vmul.f32 %v5546, %v5548
    %v5550 = vadd.f32 %v5549, -0.16666654
    %v5551 = vmul.f32 %v5546, %v5550
    %v5552 = vadd.f32 %v5551, 1.0
    %v5553 = vmul.f32 %v5552, %v5537
    %vm5554 = vweird.f32 %v1035
    %v5555 = vadd.s32 %v5538, 3
    %v5556 = vand.u32 %v5555, 3
    %vm5557 = vcmp.lt.s32.totalorder %v5556, 2
    %vm5558 = vcmp.eq.s32.totalorder %v5556, 0
    %v5559 = vxor.u32 %v5553, 2147483648
    %v5560 = vsel %vm5558, %v5545, %v5559
    %vm5561 = vcmp.eq.s32.totalorder %v5556, 2
    %v5562 = vxor.u32 %v5545, 2147483648
    %v5563 = vsel %vm5561, %v5562, %v5553
    %v5564 = vsel %vm5557, %v5560, %v5563
    %v5565 = vsel %vm5554, nan, %v5564
    %v5566 = vand.u32 2147483647, %v1036
    %vm5567 = vcmp.le.f32.partialorder %v5566, 0.7853982
    %vm5568 = vcmp.lt.s32.totalorder %v1036, 0
    %v5569 = vand.u32 %v1036, 2139095040
    %v5570 = vshrl.u32 %v5569, 23
    %v5571 = vsub.s32 %v5570, 127
    %v5572 = vand.u32 2147483647, %v1036
    %v5573 = vand.u32 %v5572, 8388607
    %v5574 = vor.u32 %v5573, 8388608
    %v5575 = vsub.s32 0, %v5574
    %v5576 = vadd.s32 %v5571, 1
    %vm5577 = vcmp.gt.s32.totalorder %v5576, 0
    %v5578 = vsel %vm5577, %v5576, 0
    %v5579 = vshrl.u32 %v5578, 5
    %v5580 = vand.u32 %v5578, 31
    %v5581 = vsub.s32 32, %v5580
    %v5582 = vshrl.u32 683565275, %v5581
    %v5583 = vshll.u32 683565275, %v5580
    %v5584 = vshrl.u32 2475754826, %v5581
    %v5585 = vor.u32 %v5583, %v5584
    %v5586 = vshll.u32 2475754826, %v5580
    %v5587 = vshrl.u32 2131351028, %v5581
    %v5588 = vor.u32 %v5586, %v5587
    %v5589 = vshll.u32 2131351028, %v5580
    %v5590 = vshrl.u32 2102212464, %v5581
    %v5591 = vor.u32 %v5589, %v5590
    %v5592 = vshll.u32 2102212464, %v5580
    %v5593 = vshrl.u32 920167782, %v5581
    %v5594 = vor.u32 %v5592, %v5593
    %v5595 = vshll.u32 920167782, %v5580
    %v5596 = vshrl.u32 1326507024, %v5581
    %v5597 = vor.u32 %v5595, %v5596
    %vm5598 = vcmp.lt.s32.totalorder %v5579, 1
    %vm5599 = vcmp.lt.s32.totalorder %v5579, 2
    %vm5600 = vcmp.lt.s32.totalorder %v5579, 3
    %vm5601 = vcmp.lt.s32.totalorder %v5579, 4
    %v5602 = vsel %vm5598, %v5582, %v5585
    %v5603 = vsel %vm5601, %v5591, 2102212464
    %v5604 = vsel %vm5600, %v5588, %v5603
    %v5605 = vsel %vm5599, %v5602, %v5604
    %v5606 = vsel %vm5598, %v5585, %v5588
    %v5607 = vsel %vm5601, %v5594, 920167782
    %v5608 = vsel %vm5600, %v5591, %v5607
    %v5609 = vsel %vm5599, %v5606, %v5608
    %v5610 = vsel %vm5598, %v5588, %v5591
    %v5611 = vsel %vm5601, %v5597, 1326507024
    %v5612 = vsel %vm5600, %v5594, %v5611
    %v5613 = vsel %vm5599, %v5610, %v5612
    %v5614 = vshll.u32 %v5574, 8
    %v5615 = vand.u32 %v5614, 65535
    %v5616 = vshrl.u32 %v5614, 16
    %v5617 = vand.u32 %v5613, 65535
    %v5618 = vshrl.u32 %v5613, 16
    %v5619 = vmul.u32 %v5615, %v5617
    %v5620 = vmul.u32 %v5615, %v5618
    %v5621 = vmul.u32 %v5616, %v5617
    %v5622 = vmul.u32 %v5616, %v5618
    %v5623 = vshll.u32 %v5620, 16
    %v5624 = vshrl.u32 %v5620, 16
    %v5625 = vshll.u32 %v5621, 16
    %v5626 = vshrl.u32 %v5621, 16
    %vm5627 = vc.u32 %v5619, %v5623
    %v5628 = vsel %vm5627, 1, 0
    %v5629 = vadd.s32 %v5619, %v5623
    %v5630 = vadd.s32 %v5622, %v5628
    %vm5631 = vc.u32 %v5629, %v5625
    %v5632 = vsel %vm5631, 1, 0
    %v5633 = vadd.s32 %v5629, %v5625
    %v5634 = vadd.s32 %v5630, %v5632
    %v5635 = vadd.s32 %v5634, %v5624
    %v5636 = vadd.s32 %v5635, %v5626
    %v5637 = vand.u32 %v5614, 65535
    %v5638 = vshrl.u32 %v5614, 16
    %v5639 = vand.u32 %v5609, 65535
    %v5640 = vshrl.u32 %v5609, 16
    %v5641 = vmul.u32 %v5637, %v5639
    %v5642 = vmul.u32 %v5637, %v5640
    %v5643 = vmul.u32 %v5638, %v5639
    %v5644 = vmul.u32 %v5638, %v5640
    %v5645 = vshll.u32 %v5642, 16
    %v5646 = vshrl.u32 %v5642, 16
    %v5647 = vshll.u32 %v5643, 16
    %v5648 = vshrl.u32 %v5643, 16
    %vm5649 = vc.u32 %v5641, %v5645
    %v5650 = vsel %vm5649, 1, 0
    %v5651 = vadd.s32 %v5641, %v5645
    %v5652 = vadd.s32 %v5644, %v5650
    %vm5653 = vc.u32 %v5651, %v5647
    %v5654 = vsel %vm5653, 1, 0
    %v5655 = vadd.s32 %v5651, %v5647
    %v5656 = vadd.s32 %v5652, %v5654
    %v5657 = vadd.s32 %v5656, %v5646
    %v5658 = vadd.s32 %v5657, %v5648
    %v5659 = vmul.u32 %v5614, %v5605
    %v5660 = vadd.s32 %v5636, %v5655
    %vm5661 = vc.u32 %v5636, %v5655
    %v5662 = vadd.s32 %v5658, 1
    %v5663 = vsel %vm5661, %v5662, %v5658
    %v5664 = vadd.s32 %v5659, %v5663
    %v5665 = vadd.s32 %v5664, 536870912
    %v5666 = vshrl.u32 %v5665, 30
    %v5667 = vshll.u32 %v5666, 30
    %v5668 = vsub.s32 %v5664, %v5667
    %vm5669 = vcmp.lt.s32.totalorder %v5668, 0
    %v5670 = vsub.s32 0, %v5668
    %v5671 = vsel %vm5669, %v5670, %v5668
    %v5672 = vclz %v5671
    %v5673 = vsub.s32 %v5672, 2
    %vm5674 = vcmp.gt.s32.totalorder 0, %v5673
    %v5675 = vsel %vm5674, 0, %v5673
    %v5676 = vsub.s32 32, %v5675
    %v5677 = vshll.u32 %v5668, %v5675
    %v5678 = vshrl.u32 %v5660, %v5676
    %v5679 = vor.u32 %v5677, %v5678
    %v5680 = vsub.s32 4294967266, %v5675
    %v5681 = vadd.s32 %v5680, 127
    %v5682 = vshll.u32 %v5681, 23
    %v5683 = vor.u32 4788187, %v5682
    %v5684 = vand.u32 2147483647, %v5683
    %v5686 = vcvt.s32.f32 %v5679
    %v5687 = vmul.f32 %v5686, %v5684
    %v5688 = vxor.u32 %v5687, 2147483648
    %v5689 = vsel %vm5568, %v5688, %v5687
    %v5690 = vsub.s32 4, %v5666
    %v5691 = vsel %vm5568, %v5690, %v5666
    %v5692 = vsel %vm5567, %v1036, %v5689
    %v5693 = vsel %vm5567, 0, %v5691
    %v5694 = vmul.f32 %v5692, %v5692
    %v5695 = vmul.f32 %v5694, -0.001358992
    %v5696 = vadd.f32 %v5695, 0.041655596
    %v5697 = vmul.f32 %v5694, %v5696
    %v5698 = vadd.f32 %v5697, -0.4999988
    %v5699 = vmul.f32 %v5694, %v5698
    %v5700 = vadd.f32 1.0, %v5699
    %v5701 = vmul.f32 %v5692, %v5692
    %v5702 = vmul.f32 %v5701, -0.00019511016
    %v5703 = vadd.f32 %v5702, 0.008332121
    %v5704 = vmul.f32 %v5701, %v5703
    %v5705 = vadd.f32 %v5704, -0.16666654
    %v5706 = vmul.f32 %v5701, %v5705
    %v5707 = vadd.f32 %v5706, 1.0
    %v5708 = vmul.f32 %v5707, %v5692
    %vm5709 = vweird.f32 %v1036
    %v5710 = vadd.s32 %v5693, 3
    %v5711 = vand.u32 %v5710, 3
    %vm5712 = vcmp.lt.s32.totalorder %v5711, 2
    %vm5713 = vcmp.eq.s32.totalorder %v5711, 0
    %v5714 = vxor.u32 %v5708, 2147483648
    %v5715 = vsel %vm5713, %v5700, %v5714
    %vm5716 = vcmp.eq.s32.totalorder %v5711, 2
    %v5717 = vxor.u32 %v5700, 2147483648
    %v5718 = vsel %vm5716, %v5717, %v5708
    %v5719 = vsel %vm5712, %v5715, %v5718
    %v5720 = vsel %vm5709, nan, %v5719
    %v5721 = vand.u32 2147483647, %v1037
    %vm5722 = vcmp.le.f32.partialorder %v5721, 0.7853982
    %vm5723 = vcmp.lt.s32.totalorder %v1037, 0
    %v5724 = vand.u32 %v1037, 2139095040
    %v5725 = vshrl.u32 %v5724, 23
    %v5726 = vsub.s32 %v5725, 127
    %v5727 = vand.u32 2147483647, %v1037
    %v5728 = vand.u32 %v5727, 8388607
    %v5729 = vor.u32 %v5728, 8388608
    %v5730 = vsub.s32 0, %v5729
    %v5731 = vadd.s32 %v5726, 1
    %vm5732 = vcmp.gt.s32.totalorder %v5731, 0
    %v5733 = vsel %vm5732, %v5731, 0
    %v5734 = vshrl.u32 %v5733, 5
    %v5735 = vand.u32 %v5733, 31
    %v5736 = vsub.s32 32, %v5735
    %v5737 = vshrl.u32 683565275, %v5736
    %v5738 = vshll.u32 683565275, %v5735
    %v5739 = vshrl.u32 2475754826, %v5736
    %v5740 = vor.u32 %v5738, %v5739
    %v5741 = vshll.u32 2475754826, %v5735
    %v5742 = vshrl.u32 2131351028, %v5736
    %v5743 = vor.u32 %v5741, %v5742
    %v5744 = vshll.u32 2131351028, %v5735
    %v5745 = vshrl.u32 2102212464, %v5736
    %v5746 = vor.u32 %v5744, %v5745
    %v5747 = vshll.u32 2102212464, %v5735
    %v5748 = vshrl.u32 920167782, %v5736
    %v5749 = vor.u32 %v5747, %v5748
    %v5750 = vshll.u32 920167782, %v5735
    %v5751 = vshrl.u32 1326507024, %v5736
    %v5752 = vor.u32 %v5750, %v5751
    %vm5753 = vcmp.lt.s32.totalorder %v5734, 1
    %vm5754 = vcmp.lt.s32.totalorder %v5734, 2
    %vm5755 = vcmp.lt.s32.totalorder %v5734, 3
    %vm5756 = vcmp.lt.s32.totalorder %v5734, 4
    %v5757 = vsel %vm5753, %v5737, %v5740
    %v5758 = vsel %vm5756, %v5746, 2102212464
    %v5759 = vsel %vm5755, %v5743, %v5758
    %v5760 = vsel %vm5754, %v5757, %v5759
    %v5761 = vsel %vm5753, %v5740, %v5743
    %v5762 = vsel %vm5756, %v5749, 920167782
    %v5763 = vsel %vm5755, %v5746, %v5762
    %v5764 = vsel %vm5754, %v5761, %v5763
    %v5765 = vsel %vm5753, %v5743, %v5746
    %v5766 = vsel %vm5756, %v5752, 1326507024
    %v5767 = vsel %vm5755, %v5749, %v5766
    %v5768 = vsel %vm5754, %v5765, %v5767
    %v5769 = vshll.u32 %v5729, 8
    %v5770 = vand.u32 %v5769, 65535
    %v5771 = vshrl.u32 %v5769, 16
    %v5772 = vand.u32 %v5768, 65535
    %v5773 = vshrl.u32 %v5768, 16
    %v5774 = vmul.u32 %v5770, %v5772
    %v5775 = vmul.u32 %v5770, %v5773
    %v5776 = vmul.u32 %v5771, %v5772
    %v5777 = vmul.u32 %v5771, %v5773
    %v5778 = vshll.u32 %v5775, 16
    %v5779 = vshrl.u32 %v5775, 16
    %v5780 = vshll.u32 %v5776, 16
    %v5781 = vshrl.u32 %v5776, 16
    %vm5782 = vc.u32 %v5774, %v5778
    %v5783 = vsel %vm5782, 1, 0
    %v5784 = vadd.s32 %v5774, %v5778
    %v5785 = vadd.s32 %v5777, %v5783
    %vm5786 = vc.u32 %v5784, %v5780
    %v5787 = vsel %vm5786, 1, 0
    %v5788 = vadd.s32 %v5784, %v5780
    %v5789 = vadd.s32 %v5785, %v5787
    %v5790 = vadd.s32 %v5789, %v5779
    %v5791 = vadd.s32 %v5790, %v5781
    %v5792 = vand.u32 %v5769, 65535
    %v5793 = vshrl.u32 %v5769, 16
    %v5794 = vand.u32 %v5764, 65535
    %v5795 = vshrl.u32 %v5764, 16
    %v5796 = vmul.u32 %v5792, %v5794
    %v5797 = vmul.u32 %v5792, %v5795
    %v5798 = vmul.u32 %v5793, %v5794
    %v5799 = vmul.u32 %v5793, %v5795
    %v5800 = vshll.u32 %v5797, 16
    %v5801 = vshrl.u32 %v5797, 16
    %v5802 = vshll.u32 %v5798, 16
    %v5803 = vshrl.u32 %v5798, 16
    %vm5804 = vc.u32 %v5796, %v5800
    %v5805 = vsel %vm5804, 1, 0
    %v5806 = vadd.s32 %v5796, %v5800
    %v5807 = vadd.s32 %v5799, %v5805
    %vm5808 = vc.u32 %v5806, %v5802
    %v5809 = vsel %vm5808, 1, 0
    %v5810 = vadd.s32 %v5806, %v5802
    %v5811 = vadd.s32 %v5807, %v5809
    %v5812 = vadd.s32 %v5811, %v5801
    %v5813 = vadd.s32 %v5812, %v5803
    %v5814 = vmul.u32 %v5769, %v5760
    %v5815 = vadd.s32 %v5791, %v5810
    %vm5816 = vc.u32 %v5791, %v5810
    %v5817 = vadd.s32 %v5813, 1
    %v5818 = vsel %vm5816, %v5817, %v5813
    %v5819 = vadd.s32 %v5814, %v5818
    %v5820 = vadd.s32 %v5819, 536870912
    %v5821 = vshrl.u32 %v5820, 30
    %v5822 = vshll.u32 %v5821, 30
    %v5823 = vsub.s32 %v5819, %v5822
    %vm5824 = vcmp.lt.s32.totalorder %v5823, 0
    %v5825 = vsub.s32 0, %v5823
    %v5826 = vsel %vm5824, %v5825, %v5823
    %v5827 = vclz %v5826
    %v5828 = vsub.s32 %v5827, 2
    %vm5829 = vcmp.gt.s32.totalorder 0, %v5828
    %v5830 = vsel %vm5829, 0, %v5828
    %v5831 = vsub.s32 32, %v5830
    %v5832 = vshll.u32 %v5823, %v5830
    %v5833 = vshrl.u32 %v5815, %v5831
    %v5834 = vor.u32 %v5832, %v5833
    %v5835 = vsub.s32 4294967266, %v5830
    %v5836 = vadd.s32 %v5835, 127
    %v5837 = vshll.u32 %v5836, 23
    %v5838 = vor.u32 4788187, %v5837
    %v5839 = vand.u32 2147483647, %v5838
    %v5841 = vcvt.s32.f32 %v5834
    %v5842 = vmul.f32 %v5841, %v5839
    %v5843 = vxor.u32 %v5842, 2147483648
    %v5844 = vsel %vm5723, %v5843, %v5842
    %v5845 = vsub.s32 4, %v5821
    %v5846 = vsel %vm5723, %v5845, %v5821
    %v5847 = vsel %vm5722, %v1037, %v5844
    %v5848 = vsel %vm5722, 0, %v5846
    %v5849 = vmul.f32 %v5847, %v5847
    %v5850 = vmul.f32 %v5849, -0.001358992
    %v5851 = vadd.f32 %v5850, 0.041655596
    %v5852 = vmul.f32 %v5849, %v5851
    %v5853 = vadd.f32 %v5852, -0.4999988
    %v5854 = vmul.f32 %v5849, %v5853
    %v5855 = vadd.f32 1.0, %v5854
    %v5856 = vmul.f32 %v5847, %v5847
    %v5857 = vmul.f32 %v5856, -0.00019511016
    %v5858 = vadd.f32 %v5857, 0.008332121
    %v5859 = vmul.f32 %v5856, %v5858
    %v5860 = vadd.f32 %v5859, -0.16666654
    %v5861 = vmul.f32 %v5856, %v5860
    %v5862 = vadd.f32 %v5861, 1.0
    %v5863 = vmul.f32 %v5862, %v5847
    %vm5864 = vweird.f32 %v1037
    %v5865 = vadd.s32 %v5848, 3
    %v5866 = vand.u32 %v5865, 3
    %vm5867 = vcmp.lt.s32.totalorder %v5866, 2
    %vm5868 = vcmp.eq.s32.totalorder %v5866, 0
    %v5869 = vxor.u32 %v5863, 2147483648
    %v5870 = vsel %vm5868, %v5855, %v5869
    %vm5871 = vcmp.eq.s32.totalorder %v5866, 2
    %v5872 = vxor.u32 %v5855, 2147483648
    %v5873 = vsel %vm5871, %v5872, %v5863
    %v5874 = vsel %vm5867, %v5870, %v5873
    %v5875 = vsel %vm5864, nan, %v5874
    %v5876 = vand.u32 2147483647, %v1038
    %vm5877 = vcmp.le.f32.partialorder %v5876, 0.7853982
    %vm5878 = vcmp.lt.s32.totalorder %v1038, 0
    %v5879 = vand.u32 %v1038, 2139095040
    %v5880 = vshrl.u32 %v5879, 23
    %v5881 = vsub.s32 %v5880, 127
    %v5882 = vand.u32 2147483647, %v1038
    %v5883 = vand.u32 %v5882, 8388607
    %v5884 = vor.u32 %v5883, 8388608
    %v5885 = vsub.s32 0, %v5884
    %v5886 = vadd.s32 %v5881, 1
    %vm5887 = vcmp.gt.s32.totalorder %v5886, 0
    %v5888 = vsel %vm5887, %v5886, 0
    %v5889 = vshrl.u32 %v5888, 5
    %v5890 = vand.u32 %v5888, 31
    %v5891 = vsub.s32 32, %v5890
    %v5892 = vshrl.u32 683565275, %v5891
    %v5893 = vshll.u32 683565275, %v5890
    %v5894 = vshrl.u32 2475754826, %v5891
    %v5895 = vor.u32 %v5893, %v5894
    %v5896 = vshll.u32 2475754826, %v5890
    %v5897 = vshrl.u32 2131351028, %v5891
    %v5898 = vor.u32 %v5896, %v5897
    %v5899 = vshll.u32 2131351028, %v5890
    %v5900 = vshrl.u32 2102212464, %v5891
    %v5901 = vor.u32 %v5899, %v5900
    %v5902 = vshll.u32 2102212464, %v5890
    %v5903 = vshrl.u32 920167782, %v5891
    %v5904 = vor.u32 %v5902, %v5903
    %v5905 = vshll.u32 920167782, %v5890
    %v5906 = vshrl.u32 1326507024, %v5891
    %v5907 = vor.u32 %v5905, %v5906
    %vm5908 = vcmp.lt.s32.totalorder %v5889, 1
    %vm5909 = vcmp.lt.s32.totalorder %v5889, 2
    %vm5910 = vcmp.lt.s32.totalorder %v5889, 3
    %vm5911 = vcmp.lt.s32.totalorder %v5889, 4
    %v5912 = vsel %vm5908, %v5892, %v5895
    %v5913 = vsel %vm5911, %v5901, 2102212464
    %v5914 = vsel %vm5910, %v5898, %v5913
    %v5915 = vsel %vm5909, %v5912, %v5914
    %v5916 = vsel %vm5908, %v5895, %v5898
    %v5917 = vsel %vm5911, %v5904, 920167782
    %v5918 = vsel %vm5910, %v5901, %v5917
    %v5919 = vsel %vm5909, %v5916, %v5918
    %v5920 = vsel %vm5908, %v5898, %v5901
    %v5921 = vsel %vm5911, %v5907, 1326507024
    %v5922 = vsel %vm5910, %v5904, %v5921
    %v5923 = vsel %vm5909, %v5920, %v5922
    %v5924 = vshll.u32 %v5884, 8
    %v5925 = vand.u32 %v5924, 65535
    %v5926 = vshrl.u32 %v5924, 16
    %v5927 = vand.u32 %v5923, 65535
    %v5928 = vshrl.u32 %v5923, 16
    %v5929 = vmul.u32 %v5925, %v5927
    %v5930 = vmul.u32 %v5925, %v5928
    %v5931 = vmul.u32 %v5926, %v5927
    %v5932 = vmul.u32 %v5926, %v5928
    %v5933 = vshll.u32 %v5930, 16
    %v5934 = vshrl.u32 %v5930, 16
    %v5935 = vshll.u32 %v5931, 16
    %v5936 = vshrl.u32 %v5931, 16
    %vm5937 = vc.u32 %v5929, %v5933
    %v5938 = vsel %vm5937, 1, 0
    %v5939 = vadd.s32 %v5929, %v5933
    %v5940 = vadd.s32 %v5932, %v5938
    %vm5941 = vc.u32 %v5939, %v5935
    %v5942 = vsel %vm5941, 1, 0
    %v5943 = vadd.s32 %v5939, %v5935
    %v5944 = vadd.s32 %v5940, %v5942
    %v5945 = vadd.s32 %v5944, %v5934
    %v5946 = vadd.s32 %v5945, %v5936
    %v5947 = vand.u32 %v5924, 65535
    %v5948 = vshrl.u32 %v5924, 16
    %v5949 = vand.u32 %v5919, 65535
    %v5950 = vshrl.u32 %v5919, 16
    %v5951 = vmul.u32 %v5947, %v5949
    %v5952 = vmul.u32 %v5947, %v5950
    %v5953 = vmul.u32 %v5948, %v5949
    %v5954 = vmul.u32 %v5948, %v5950
    %v5955 = vshll.u32 %v5952, 16
    %v5956 = vshrl.u32 %v5952, 16
    %v5957 = vshll.u32 %v5953, 16
    %v5958 = vshrl.u32 %v5953, 16
    %vm5959 = vc.u32 %v5951, %v5955
    %v5960 = vsel %vm5959, 1, 0
    %v5961 = vadd.s32 %v5951, %v5955
    %v5962 = vadd.s32 %v5954, %v5960
    %vm5963 = vc.u32 %v5961, %v5957
    %v5964 = vsel %vm5963, 1, 0
    %v5965 = vadd.s32 %v5961, %v5957
    %v5966 = vadd.s32 %v5962, %v5964
    %v5967 = vadd.s32 %v5966, %v5956
    %v5968 = vadd.s32 %v5967, %v5958
    %v5969 = vmul.u32 %v5924, %v5915
    %v5970 = vadd.s32 %v5946, %v5965
    %vm5971 = vc.u32 %v5946, %v5965
    %v5972 = vadd.s32 %v5968, 1
    %v5973 = vsel %vm5971, %v5972, %v5968
    %v5974 = vadd.s32 %v5969, %v5973
    %v5975 = vadd.s32 %v5974, 536870912
    %v5976 = vshrl.u32 %v5975, 30
    %v5977 = vshll.u32 %v5976, 30
    %v5978 = vsub.s32 %v5974, %v5977
    %vm5979 = vcmp.lt.s32.totalorder %v5978, 0
    %v5980 = vsub.s32 0, %v5978
    %v5981 = vsel %vm5979, %v5980, %v5978
    %v5982 = vclz %v5981
    %v5983 = vsub.s32 %v5982, 2
    %vm5984 = vcmp.gt.s32.totalorder 0, %v5983
    %v5985 = vsel %vm5984, 0, %v5983
    %v5986 = vsub.s32 32, %v5985
    %v5987 = vshll.u32 %v5978, %v5985
    %v5988 = vshrl.u32 %v5970, %v5986
    %v5989 = vor.u32 %v5987, %v5988
    %v5990 = vsub.s32 4294967266, %v5985
    %v5991 = vadd.s32 %v5990, 127
    %v5992 = vshll.u32 %v5991, 23
    %v5993 = vor.u32 4788187, %v5992
    %v5994 = vand.u32 2147483647, %v5993
    %v5996 = vcvt.s32.f32 %v5989
    %v5997 = vmul.f32 %v5996, %v5994
    %v5998 = vxor.u32 %v5997, 2147483648
    %v5999 = vsel %vm5878, %v5998, %v5997
    %v6000 = vsub.s32 4, %v5976
    %v6001 = vsel %vm5878, %v6000, %v5976
    %v6002 = vsel %vm5877, %v1038, %v5999
    %v6003 = vsel %vm5877, 0, %v6001
    %v6004 = vmul.f32 %v6002, %v6002
    %v6005 = vmul.f32 %v6004, -0.001358992
    %v6006 = vadd.f32 %v6005, 0.041655596
    %v6007 = vmul.f32 %v6004, %v6006
    %v6008 = vadd.f32 %v6007, -0.4999988
    %v6009 = vmul.f32 %v6004, %v6008
    %v6010 = vadd.f32 1.0, %v6009
    %v6011 = vmul.f32 %v6002, %v6002
    %v6012 = vmul.f32 %v6011, -0.00019511016
    %v6013 = vadd.f32 %v6012, 0.008332121
    %v6014 = vmul.f32 %v6011, %v6013
    %v6015 = vadd.f32 %v6014, -0.16666654
    %v6016 = vmul.f32 %v6011, %v6015
    %v6017 = vadd.f32 %v6016, 1.0
    %v6018 = vmul.f32 %v6017, %v6002
    %vm6019 = vweird.f32 %v1038
    %v6020 = vadd.s32 %v6003, 3
    %v6021 = vand.u32 %v6020, 3
    %vm6022 = vcmp.lt.s32.totalorder %v6021, 2
    %vm6023 = vcmp.eq.s32.totalorder %v6021, 0
    %v6024 = vxor.u32 %v6018, 2147483648
    %v6025 = vsel %vm6023, %v6010, %v6024
    %vm6026 = vcmp.eq.s32.totalorder %v6021, 2
    %v6027 = vxor.u32 %v6010, 2147483648
    %v6028 = vsel %vm6026, %v6027, %v6018
    %v6029 = vsel %vm6022, %v6025, %v6028
    %v6030 = vsel %vm6019, nan, %v6029
    %v6031 = vand.u32 2147483647, %v1039
    %vm6032 = vcmp.le.f32.partialorder %v6031, 0.7853982
    %vm6033 = vcmp.lt.s32.totalorder %v1039, 0
    %v6034 = vand.u32 %v1039, 2139095040
    %v6035 = vshrl.u32 %v6034, 23
    %v6036 = vsub.s32 %v6035, 127
    %v6037 = vand.u32 2147483647, %v1039
    %v6038 = vand.u32 %v6037, 8388607
    %v6039 = vor.u32 %v6038, 8388608
    %v6040 = vsub.s32 0, %v6039
    %v6041 = vadd.s32 %v6036, 1
    %vm6042 = vcmp.gt.s32.totalorder %v6041, 0
    %v6043 = vsel %vm6042, %v6041, 0
    %v6044 = vshrl.u32 %v6043, 5
    %v6045 = vand.u32 %v6043, 31
    %v6046 = vsub.s32 32, %v6045
    %v6047 = vshrl.u32 683565275, %v6046
    %v6048 = vshll.u32 683565275, %v6045
    %v6049 = vshrl.u32 2475754826, %v6046
    %v6050 = vor.u32 %v6048, %v6049
    %v6051 = vshll.u32 2475754826, %v6045
    %v6052 = vshrl.u32 2131351028, %v6046
    %v6053 = vor.u32 %v6051, %v6052
    %v6054 = vshll.u32 2131351028, %v6045
    %v6055 = vshrl.u32 2102212464, %v6046
    %v6056 = vor.u32 %v6054, %v6055
    %v6057 = vshll.u32 2102212464, %v6045
    %v6058 = vshrl.u32 920167782, %v6046
    %v6059 = vor.u32 %v6057, %v6058
    %v6060 = vshll.u32 920167782, %v6045
    %v6061 = vshrl.u32 1326507024, %v6046
    %v6062 = vor.u32 %v6060, %v6061
    %vm6063 = vcmp.lt.s32.totalorder %v6044, 1
    %vm6064 = vcmp.lt.s32.totalorder %v6044, 2
    %vm6065 = vcmp.lt.s32.totalorder %v6044, 3
    %vm6066 = vcmp.lt.s32.totalorder %v6044, 4
    %v6067 = vsel %vm6063, %v6047, %v6050
    %v6068 = vsel %vm6066, %v6056, 2102212464
    %v6069 = vsel %vm6065, %v6053, %v6068
    %v6070 = vsel %vm6064, %v6067, %v6069
    %v6071 = vsel %vm6063, %v6050, %v6053
    %v6072 = vsel %vm6066, %v6059, 920167782
    %v6073 = vsel %vm6065, %v6056, %v6072
    %v6074 = vsel %vm6064, %v6071, %v6073
    %v6075 = vsel %vm6063, %v6053, %v6056
    %v6076 = vsel %vm6066, %v6062, 1326507024
    %v6077 = vsel %vm6065, %v6059, %v6076
    %v6078 = vsel %vm6064, %v6075, %v6077
    %v6079 = vshll.u32 %v6039, 8
    %v6080 = vand.u32 %v6079, 65535
    %v6081 = vshrl.u32 %v6079, 16
    %v6082 = vand.u32 %v6078, 65535
    %v6083 = vshrl.u32 %v6078, 16
    %v6084 = vmul.u32 %v6080, %v6082
    %v6085 = vmul.u32 %v6080, %v6083
    %v6086 = vmul.u32 %v6081, %v6082
    %v6087 = vmul.u32 %v6081, %v6083
    %v6088 = vshll.u32 %v6085, 16
    %v6089 = vshrl.u32 %v6085, 16
    %v6090 = vshll.u32 %v6086, 16
    %v6091 = vshrl.u32 %v6086, 16
    %vm6092 = vc.u32 %v6084, %v6088
    %v6093 = vsel %vm6092, 1, 0
    %v6094 = vadd.s32 %v6084, %v6088
    %v6095 = vadd.s32 %v6087, %v6093
    %vm6096 = vc.u32 %v6094, %v6090
    %v6097 = vsel %vm6096, 1, 0
    %v6098 = vadd.s32 %v6094, %v6090
    %v6099 = vadd.s32 %v6095, %v6097
    %v6100 = vadd.s32 %v6099, %v6089
    %v6101 = vadd.s32 %v6100, %v6091
    %v6102 = vand.u32 %v6079, 65535
    %v6103 = vshrl.u32 %v6079, 16
    %v6104 = vand.u32 %v6074, 65535
    %v6105 = vshrl.u32 %v6074, 16
    %v6106 = vmul.u32 %v6102, %v6104
    %v6107 = vmul.u32 %v6102, %v6105
    %v6108 = vmul.u32 %v6103, %v6104
    %v6109 = vmul.u32 %v6103, %v6105
    %v6110 = vshll.u32 %v6107, 16
    %v6111 = vshrl.u32 %v6107, 16
    %v6112 = vshll.u32 %v6108, 16
    %v6113 = vshrl.u32 %v6108, 16
    %vm6114 = vc.u32 %v6106, %v6110
    %v6115 = vsel %vm6114, 1, 0
    %v6116 = vadd.s32 %v6106, %v6110
    %v6117 = vadd.s32 %v6109, %v6115
    %vm6118 = vc.u32 %v6116, %v6112
    %v6119 = vsel %vm6118, 1, 0
    %v6120 = vadd.s32 %v6116, %v6112
    %v6121 = vadd.s32 %v6117, %v6119
    %v6122 = vadd.s32 %v6121, %v6111
    %v6123 = vadd.s32 %v6122, %v6113
    %v6124 = vmul.u32 %v6079, %v6070
    %v6125 = vadd.s32 %v6101, %v6120
    %vm6126 = vc.u32 %v6101, %v6120
    %v6127 = vadd.s32 %v6123, 1
    %v6128 = vsel %vm6126, %v6127, %v6123
    %v6129 = vadd.s32 %v6124, %v6128
    %v6130 = vadd.s32 %v6129, 536870912
    %v6131 = vshrl.u32 %v6130, 30
    %v6132 = vshll.u32 %v6131, 30
    %v6133 = vsub.s32 %v6129, %v6132
    %vm6134 = vcmp.lt.s32.totalorder %v6133, 0
    %v6135 = vsub.s32 0, %v6133
    %v6136 = vsel %vm6134, %v6135, %v6133
    %v6137 = vclz %v6136
    %v6138 = vsub.s32 %v6137, 2
    %vm6139 = vcmp.gt.s32.totalorder 0, %v6138
    %v6140 = vsel %vm6139, 0, %v6138
    %v6141 = vsub.s32 32, %v6140
    %v6142 = vshll.u32 %v6133, %v6140
    %v6143 = vshrl.u32 %v6125, %v6141
    %v6144 = vor.u32 %v6142, %v6143
    %v6145 = vsub.s32 4294967266, %v6140
    %v6146 = vadd.s32 %v6145, 127
    %v6147 = vshll.u32 %v6146, 23
    %v6148 = vor.u32 4788187, %v6147
    %v6149 = vand.u32 2147483647, %v6148
    %v6151 = vcvt.s32.f32 %v6144
    %v6152 = vmul.f32 %v6151, %v6149
    %v6153 = vxor.u32 %v6152, 2147483648
    %v6154 = vsel %vm6033, %v6153, %v6152
    %v6155 = vsub.s32 4, %v6131
    %v6156 = vsel %vm6033, %v6155, %v6131
    %v6157 = vsel %vm6032, %v1039, %v6154
    %v6158 = vsel %vm6032, 0, %v6156
    %v6159 = vmul.f32 %v6157, %v6157
    %v6160 = vmul.f32 %v6159, -0.001358992
    %v6161 = vadd.f32 %v6160, 0.041655596
    %v6162 = vmul.f32 %v6159, %v6161
    %v6163 = vadd.f32 %v6162, -0.4999988
    %v6164 = vmul.f32 %v6159, %v6163
    %v6165 = vadd.f32 1.0, %v6164
    %v6166 = vmul.f32 %v6157, %v6157
    %v6167 = vmul.f32 %v6166, -0.00019511016
    %v6168 = vadd.f32 %v6167, 0.008332121
    %v6169 = vmul.f32 %v6166, %v6168
    %v6170 = vadd.f32 %v6169, -0.16666654
    %v6171 = vmul.f32 %v6166, %v6170
    %v6172 = vadd.f32 %v6171, 1.0
    %v6173 = vmul.f32 %v6172, %v6157
    %vm6174 = vweird.f32 %v1039
    %v6175 = vadd.s32 %v6158, 3
    %v6176 = vand.u32 %v6175, 3
    %vm6177 = vcmp.lt.s32.totalorder %v6176, 2
    %vm6178 = vcmp.eq.s32.totalorder %v6176, 0
    %v6179 = vxor.u32 %v6173, 2147483648
    %v6180 = vsel %vm6178, %v6165, %v6179
    %vm6181 = vcmp.eq.s32.totalorder %v6176, 2
    %v6182 = vxor.u32 %v6165, 2147483648
    %v6183 = vsel %vm6181, %v6182, %v6173
    %v6184 = vsel %vm6177, %v6180, %v6183
    %v6185 = vsel %vm6174, nan, %v6184
    %v6186 = vand.u32 2147483647, %v1040
    %vm6187 = vcmp.le.f32.partialorder %v6186, 0.7853982
    %vm6188 = vcmp.lt.s32.totalorder %v1040, 0
    %v6189 = vand.u32 %v1040, 2139095040
    %v6190 = vshrl.u32 %v6189, 23
    %v6191 = vsub.s32 %v6190, 127
    %v6192 = vand.u32 2147483647, %v1040
    %v6193 = vand.u32 %v6192, 8388607
    %v6194 = vor.u32 %v6193, 8388608
    %v6195 = vsub.s32 0, %v6194
    %v6196 = vadd.s32 %v6191, 1
    %vm6197 = vcmp.gt.s32.totalorder %v6196, 0
    %v6198 = vsel %vm6197, %v6196, 0
    %v6199 = vshrl.u32 %v6198, 5
    %v6200 = vand.u32 %v6198, 31
    %v6201 = vsub.s32 32, %v6200
    %v6202 = vshrl.u32 683565275, %v6201
    %v6203 = vshll.u32 683565275, %v6200
    %v6204 = vshrl.u32 2475754826, %v6201
    %v6205 = vor.u32 %v6203, %v6204
    %v6206 = vshll.u32 2475754826, %v6200
    %v6207 = vshrl.u32 2131351028, %v6201
    %v6208 = vor.u32 %v6206, %v6207
    %v6209 = vshll.u32 2131351028, %v6200
    %v6210 = vshrl.u32 2102212464, %v6201
    %v6211 = vor.u32 %v6209, %v6210
    %v6212 = vshll.u32 2102212464, %v6200
    %v6213 = vshrl.u32 920167782, %v6201
    %v6214 = vor.u32 %v6212, %v6213
    %v6215 = vshll.u32 920167782, %v6200
    %v6216 = vshrl.u32 1326507024, %v6201
    %v6217 = vor.u32 %v6215, %v6216
    %vm6218 = vcmp.lt.s32.totalorder %v6199, 1
    %vm6219 = vcmp.lt.s32.totalorder %v6199, 2
    %vm6220 = vcmp.lt.s32.totalorder %v6199, 3
    %vm6221 = vcmp.lt.s32.totalorder %v6199, 4
    %v6222 = vsel %vm6218, %v6202, %v6205
    %v6223 = vsel %vm6221, %v6211, 2102212464
    %v6224 = vsel %vm6220, %v6208, %v6223
    %v6225 = vsel %vm6219, %v6222, %v6224
    %v6226 = vsel %vm6218, %v6205, %v6208
    %v6227 = vsel %vm6221, %v6214, 920167782
    %v6228 = vsel %vm6220, %v6211, %v6227
    %v6229 = vsel %vm6219, %v6226, %v6228
    %v6230 = vsel %vm6218, %v6208, %v6211
    %v6231 = vsel %vm6221, %v6217, 1326507024
    %v6232 = vsel %vm6220, %v6214, %v6231
    %v6233 = vsel %vm6219, %v6230, %v6232
    %v6234 = vshll.u32 %v6194, 8
    %v6235 = vand.u32 %v6234, 65535
    %v6236 = vshrl.u32 %v6234, 16
    %v6237 = vand.u32 %v6233, 65535
    %v6238 = vshrl.u32 %v6233, 16
    %v6239 = vmul.u32 %v6235, %v6237
    %v6240 = vmul.u32 %v6235, %v6238
    %v6241 = vmul.u32 %v6236, %v6237
    %v6242 = vmul.u32 %v6236, %v6238
    %v6243 = vshll.u32 %v6240, 16
    %v6244 = vshrl.u32 %v6240, 16
    %v6245 = vshll.u32 %v6241, 16
    %v6246 = vshrl.u32 %v6241, 16
    %vm6247 = vc.u32 %v6239, %v6243
    %v6248 = vsel %vm6247, 1, 0
    %v6249 = vadd.s32 %v6239, %v6243
    %v6250 = vadd.s32 %v6242, %v6248
    %vm6251 = vc.u32 %v6249, %v6245
    %v6252 = vsel %vm6251, 1, 0
    %v6253 = vadd.s32 %v6249, %v6245
    %v6254 = vadd.s32 %v6250, %v6252
    %v6255 = vadd.s32 %v6254, %v6244
    %v6256 = vadd.s32 %v6255, %v6246
    %v6257 = vand.u32 %v6234, 65535
    %v6258 = vshrl.u32 %v6234, 16
    %v6259 = vand.u32 %v6229, 65535
    %v6260 = vshrl.u32 %v6229, 16
    %v6261 = vmul.u32 %v6257, %v6259
    %v6262 = vmul.u32 %v6257, %v6260
    %v6263 = vmul.u32 %v6258, %v6259
    %v6264 = vmul.u32 %v6258, %v6260
    %v6265 = vshll.u32 %v6262, 16
    %v6266 = vshrl.u32 %v6262, 16
    %v6267 = vshll.u32 %v6263, 16
    %v6268 = vshrl.u32 %v6263, 16
    %vm6269 = vc.u32 %v6261, %v6265
    %v6270 = vsel %vm6269, 1, 0
    %v6271 = vadd.s32 %v6261, %v6265
    %v6272 = vadd.s32 %v6264, %v6270
    %vm6273 = vc.u32 %v6271, %v6267
    %v6274 = vsel %vm6273, 1, 0
    %v6275 = vadd.s32 %v6271, %v6267
    %v6276 = vadd.s32 %v6272, %v6274
    %v6277 = vadd.s32 %v6276, %v6266
    %v6278 = vadd.s32 %v6277, %v6268
    %v6279 = vmul.u32 %v6234, %v6225
    %v6280 = vadd.s32 %v6256, %v6275
    %vm6281 = vc.u32 %v6256, %v6275
    %v6282 = vadd.s32 %v6278, 1
    %v6283 = vsel %vm6281, %v6282, %v6278
    %v6284 = vadd.s32 %v6279, %v6283
    %v6285 = vadd.s32 %v6284, 536870912
    %v6286 = vshrl.u32 %v6285, 30
    %v6287 = vshll.u32 %v6286, 30
    %v6288 = vsub.s32 %v6284, %v6287
    %vm6289 = vcmp.lt.s32.totalorder %v6288, 0
    %v6290 = vsub.s32 0, %v6288
    %v6291 = vsel %vm6289, %v6290, %v6288
    %v6292 = vclz %v6291
    %v6293 = vsub.s32 %v6292, 2
    %vm6294 = vcmp.gt.s32.totalorder 0, %v6293
    %v6295 = vsel %vm6294, 0, %v6293
    %v6296 = vsub.s32 32, %v6295
    %v6297 = vshll.u32 %v6288, %v6295
    %v6298 = vshrl.u32 %v6280, %v6296
    %v6299 = vor.u32 %v6297, %v6298
    %v6300 = vsub.s32 4294967266, %v6295
    %v6301 = vadd.s32 %v6300, 127
    %v6302 = vshll.u32 %v6301, 23
    %v6303 = vor.u32 4788187, %v6302
    %v6304 = vand.u32 2147483647, %v6303
    %v6306 = vcvt.s32.f32 %v6299
    %v6307 = vmul.f32 %v6306, %v6304
    %v6308 = vxor.u32 %v6307, 2147483648
    %v6309 = vsel %vm6188, %v6308, %v6307
    %v6310 = vsub.s32 4, %v6286
    %v6311 = vsel %vm6188, %v6310, %v6286
    %v6312 = vsel %vm6187, %v1040, %v6309
    %v6313 = vsel %vm6187, 0, %v6311
    %v6314 = vmul.f32 %v6312, %v6312
    %v6315 = vmul.f32 %v6314, -0.001358992
    %v6316 = vadd.f32 %v6315, 0.041655596
    %v6317 = vmul.f32 %v6314, %v6316
    %v6318 = vadd.f32 %v6317, -0.4999988
    %v6319 = vmul.f32 %v6314, %v6318
    %v6320 = vadd.f32 1.0, %v6319
    %v6321 = vmul.f32 %v6312, %v6312
    %v6322 = vmul.f32 %v6321, -0.00019511016
    %v6323 = vadd.f32 %v6322, 0.008332121
    %v6324 = vmul.f32 %v6321, %v6323
    %v6325 = vadd.f32 %v6324, -0.16666654
    %v6326 = vmul.f32 %v6321, %v6325
    %v6327 = vadd.f32 %v6326, 1.0
    %v6328 = vmul.f32 %v6327, %v6312
    %vm6329 = vweird.f32 %v1040
    %v6330 = vadd.s32 %v6313, 3
    %v6331 = vand.u32 %v6330, 3
    %vm6332 = vcmp.lt.s32.totalorder %v6331, 2
    %vm6333 = vcmp.eq.s32.totalorder %v6331, 0
    %v6334 = vxor.u32 %v6328, 2147483648
    %v6335 = vsel %vm6333, %v6320, %v6334
    %vm6336 = vcmp.eq.s32.totalorder %v6331, 2
    %v6337 = vxor.u32 %v6320, 2147483648
    %v6338 = vsel %vm6336, %v6337, %v6328
    %v6339 = vsel %vm6332, %v6335, %v6338
    %v6340 = vsel %vm6329, nan, %v6339
    %v6341 = vand.u32 2147483647, %v1041
    %vm6342 = vcmp.le.f32.partialorder %v6341, 0.7853982
    %vm6343 = vcmp.lt.s32.totalorder %v1041, 0
    %v6344 = vand.u32 %v1041, 2139095040
    %v6345 = vshrl.u32 %v6344, 23
    %v6346 = vsub.s32 %v6345, 127
    %v6347 = vand.u32 2147483647, %v1041
    %v6348 = vand.u32 %v6347, 8388607
    %v6349 = vor.u32 %v6348, 8388608
    %v6350 = vsub.s32 0, %v6349
    %v6351 = vadd.s32 %v6346, 1
    %vm6352 = vcmp.gt.s32.totalorder %v6351, 0
    %v6353 = vsel %vm6352, %v6351, 0
    %v6354 = vshrl.u32 %v6353, 5
    %v6355 = vand.u32 %v6353, 31
    %v6356 = vsub.s32 32, %v6355
    %v6357 = vshrl.u32 683565275, %v6356
    %v6358 = vshll.u32 683565275, %v6355
    %v6359 = vshrl.u32 2475754826, %v6356
    %v6360 = vor.u32 %v6358, %v6359
    %v6361 = vshll.u32 2475754826, %v6355
    %v6362 = vshrl.u32 2131351028, %v6356
    %v6363 = vor.u32 %v6361, %v6362
    %v6364 = vshll.u32 2131351028, %v6355
    %v6365 = vshrl.u32 2102212464, %v6356
    %v6366 = vor.u32 %v6364, %v6365
    %v6367 = vshll.u32 2102212464, %v6355
    %v6368 = vshrl.u32 920167782, %v6356
    %v6369 = vor.u32 %v6367, %v6368
    %v6370 = vshll.u32 920167782, %v6355
    %v6371 = vshrl.u32 1326507024, %v6356
    %v6372 = vor.u32 %v6370, %v6371
    %vm6373 = vcmp.lt.s32.totalorder %v6354, 1
    %vm6374 = vcmp.lt.s32.totalorder %v6354, 2
    %vm6375 = vcmp.lt.s32.totalorder %v6354, 3
    %vm6376 = vcmp.lt.s32.totalorder %v6354, 4
    %v6377 = vsel %vm6373, %v6357, %v6360
    %v6378 = vsel %vm6376, %v6366, 2102212464
    %v6379 = vsel %vm6375, %v6363, %v6378
    %v6380 = vsel %vm6374, %v6377, %v6379
    %v6381 = vsel %vm6373, %v6360, %v6363
    %v6382 = vsel %vm6376, %v6369, 920167782
    %v6383 = vsel %vm6375, %v6366, %v6382
    %v6384 = vsel %vm6374, %v6381, %v6383
    %v6385 = vsel %vm6373, %v6363, %v6366
    %v6386 = vsel %vm6376, %v6372, 1326507024
    %v6387 = vsel %vm6375, %v6369, %v6386
    %v6388 = vsel %vm6374, %v6385, %v6387
    %v6389 = vshll.u32 %v6349, 8
    %v6390 = vand.u32 %v6389, 65535
    %v6391 = vshrl.u32 %v6389, 16
    %v6392 = vand.u32 %v6388, 65535
    %v6393 = vshrl.u32 %v6388, 16
    %v6394 = vmul.u32 %v6390, %v6392
    %v6395 = vmul.u32 %v6390, %v6393
    %v6396 = vmul.u32 %v6391, %v6392
    %v6397 = vmul.u32 %v6391, %v6393
    %v6398 = vshll.u32 %v6395, 16
    %v6399 = vshrl.u32 %v6395, 16
    %v6400 = vshll.u32 %v6396, 16
    %v6401 = vshrl.u32 %v6396, 16
    %vm6402 = vc.u32 %v6394, %v6398
    %v6403 = vsel %vm6402, 1, 0
    %v6404 = vadd.s32 %v6394, %v6398
    %v6405 = vadd.s32 %v6397, %v6403
    %vm6406 = vc.u32 %v6404, %v6400
    %v6407 = vsel %vm6406, 1, 0
    %v6408 = vadd.s32 %v6404, %v6400
    %v6409 = vadd.s32 %v6405, %v6407
    %v6410 = vadd.s32 %v6409, %v6399
    %v6411 = vadd.s32 %v6410, %v6401
    %v6412 = vand.u32 %v6389, 65535
    %v6413 = vshrl.u32 %v6389, 16
    %v6414 = vand.u32 %v6384, 65535
    %v6415 = vshrl.u32 %v6384, 16
    %v6416 = vmul.u32 %v6412, %v6414
    %v6417 = vmul.u32 %v6412, %v6415
    %v6418 = vmul.u32 %v6413, %v6414
    %v6419 = vmul.u32 %v6413, %v6415
    %v6420 = vshll.u32 %v6417, 16
    %v6421 = vshrl.u32 %v6417, 16
    %v6422 = vshll.u32 %v6418, 16
    %v6423 = vshrl.u32 %v6418, 16
    %vm6424 = vc.u32 %v6416, %v6420
    %v6425 = vsel %vm6424, 1, 0
    %v6426 = vadd.s32 %v6416, %v6420
    %v6427 = vadd.s32 %v6419, %v6425
    %vm6428 = vc.u32 %v6426, %v6422
    %v6429 = vsel %vm6428, 1, 0
    %v6430 = vadd.s32 %v6426, %v6422
    %v6431 = vadd.s32 %v6427, %v6429
    %v6432 = vadd.s32 %v6431, %v6421
    %v6433 = vadd.s32 %v6432, %v6423
    %v6434 = vmul.u32 %v6389, %v6380
    %v6435 = vadd.s32 %v6411, %v6430
    %vm6436 = vc.u32 %v6411, %v6430
    %v6437 = vadd.s32 %v6433, 1
    %v6438 = vsel %vm6436, %v6437, %v6433
    %v6439 = vadd.s32 %v6434, %v6438
    %v6440 = vadd.s32 %v6439, 536870912
    %v6441 = vshrl.u32 %v6440, 30
    %v6442 = vshll.u32 %v6441, 30
    %v6443 = vsub.s32 %v6439, %v6442
    %vm6444 = vcmp.lt.s32.totalorder %v6443, 0
    %v6445 = vsub.s32 0, %v6443
    %v6446 = vsel %vm6444, %v6445, %v6443
    %v6447 = vclz %v6446
    %v6448 = vsub.s32 %v6447, 2
    %vm6449 = vcmp.gt.s32.totalorder 0, %v6448
    %v6450 = vsel %vm6449, 0, %v6448
    %v6451 = vsub.s32 32, %v6450
    %v6452 = vshll.u32 %v6443, %v6450
    %v6453 = vshrl.u32 %v6435, %v6451
    %v6454 = vor.u32 %v6452, %v6453
    %v6455 = vsub.s32 4294967266, %v6450
    %v6456 = vadd.s32 %v6455, 127
    %v6457 = vshll.u32 %v6456, 23
    %v6458 = vor.u32 4788187, %v6457
    %v6459 = vand.u32 2147483647, %v6458
    %v6461 = vcvt.s32.f32 %v6454
    %v6462 = vmul.f32 %v6461, %v6459
    %v6463 = vxor.u32 %v6462, 2147483648
    %v6464 = vsel %vm6343, %v6463, %v6462
    %v6465 = vsub.s32 4, %v6441
    %v6466 = vsel %vm6343, %v6465, %v6441
    %v6467 = vsel %vm6342, %v1041, %v6464
    %v6468 = vsel %vm6342, 0, %v6466
    %v6469 = vmul.f32 %v6467, %v6467
    %v6470 = vmul.f32 %v6469, -0.001358992
    %v6471 = vadd.f32 %v6470, 0.041655596
    %v6472 = vmul.f32 %v6469, %v6471
    %v6473 = vadd.f32 %v6472, -0.4999988
    %v6474 = vmul.f32 %v6469, %v6473
    %v6475 = vadd.f32 1.0, %v6474
    %v6476 = vmul.f32 %v6467, %v6467
    %v6477 = vmul.f32 %v6476, -0.00019511016
    %v6478 = vadd.f32 %v6477, 0.008332121
    %v6479 = vmul.f32 %v6476, %v6478
    %v6480 = vadd.f32 %v6479, -0.16666654
    %v6481 = vmul.f32 %v6476, %v6480
    %v6482 = vadd.f32 %v6481, 1.0
    %v6483 = vmul.f32 %v6482, %v6467
    %vm6484 = vweird.f32 %v1041
    %v6485 = vadd.s32 %v6468, 3
    %v6486 = vand.u32 %v6485, 3
    %vm6487 = vcmp.lt.s32.totalorder %v6486, 2
    %vm6488 = vcmp.eq.s32.totalorder %v6486, 0
    %v6489 = vxor.u32 %v6483, 2147483648
    %v6490 = vsel %vm6488, %v6475, %v6489
    %vm6491 = vcmp.eq.s32.totalorder %v6486, 2
    %v6492 = vxor.u32 %v6475, 2147483648
    %v6493 = vsel %vm6491, %v6492, %v6483
    %v6494 = vsel %vm6487, %v6490, %v6493
    %v6495 = vsel %vm6484, nan, %v6494
    %v6496 = vand.u32 2147483647, %v1042
    %vm6497 = vcmp.le.f32.partialorder %v6496, 0.7853982
    %vm6498 = vcmp.lt.s32.totalorder %v1042, 0
    %v6499 = vand.u32 %v1042, 2139095040
    %v6500 = vshrl.u32 %v6499, 23
    %v6501 = vsub.s32 %v6500, 127
    %v6502 = vand.u32 2147483647, %v1042
    %v6503 = vand.u32 %v6502, 8388607
    %v6504 = vor.u32 %v6503, 8388608
    %v6505 = vsub.s32 0, %v6504
    %v6506 = vadd.s32 %v6501, 1
    %vm6507 = vcmp.gt.s32.totalorder %v6506, 0
    %v6508 = vsel %vm6507, %v6506, 0
    %v6509 = vshrl.u32 %v6508, 5
    %v6510 = vand.u32 %v6508, 31
    %v6511 = vsub.s32 32, %v6510
    %v6512 = vshrl.u32 683565275, %v6511
    %v6513 = vshll.u32 683565275, %v6510
    %v6514 = vshrl.u32 2475754826, %v6511
    %v6515 = vor.u32 %v6513, %v6514
    %v6516 = vshll.u32 2475754826, %v6510
    %v6517 = vshrl.u32 2131351028, %v6511
    %v6518 = vor.u32 %v6516, %v6517
    %v6519 = vshll.u32 2131351028, %v6510
    %v6520 = vshrl.u32 2102212464, %v6511
    %v6521 = vor.u32 %v6519, %v6520
    %v6522 = vshll.u32 2102212464, %v6510
    %v6523 = vshrl.u32 920167782, %v6511
    %v6524 = vor.u32 %v6522, %v6523
    %v6525 = vshll.u32 920167782, %v6510
    %v6526 = vshrl.u32 1326507024, %v6511
    %v6527 = vor.u32 %v6525, %v6526
    %vm6528 = vcmp.lt.s32.totalorder %v6509, 1
    %vm6529 = vcmp.lt.s32.totalorder %v6509, 2
    %vm6530 = vcmp.lt.s32.totalorder %v6509, 3
    %vm6531 = vcmp.lt.s32.totalorder %v6509, 4
    %v6532 = vsel %vm6528, %v6512, %v6515
    %v6533 = vsel %vm6531, %v6521, 2102212464
    %v6534 = vsel %vm6530, %v6518, %v6533
    %v6535 = vsel %vm6529, %v6532, %v6534
    %v6536 = vsel %vm6528, %v6515, %v6518
    %v6537 = vsel %vm6531, %v6524, 920167782
    %v6538 = vsel %vm6530, %v6521, %v6537
    %v6539 = vsel %vm6529, %v6536, %v6538
    %v6540 = vsel %vm6528, %v6518, %v6521
    %v6541 = vsel %vm6531, %v6527, 1326507024
    %v6542 = vsel %vm6530, %v6524, %v6541
    %v6543 = vsel %vm6529, %v6540, %v6542
    %v6544 = vshll.u32 %v6504, 8
    %v6545 = vand.u32 %v6544, 65535
    %v6546 = vshrl.u32 %v6544, 16
    %v6547 = vand.u32 %v6543, 65535
    %v6548 = vshrl.u32 %v6543, 16
    %v6549 = vmul.u32 %v6545, %v6547
    %v6550 = vmul.u32 %v6545, %v6548
    %v6551 = vmul.u32 %v6546, %v6547
    %v6552 = vmul.u32 %v6546, %v6548
    %v6553 = vshll.u32 %v6550, 16
    %v6554 = vshrl.u32 %v6550, 16
    %v6555 = vshll.u32 %v6551, 16
    %v6556 = vshrl.u32 %v6551, 16
    %vm6557 = vc.u32 %v6549, %v6553
    %v6558 = vsel %vm6557, 1, 0
    %v6559 = vadd.s32 %v6549, %v6553
    %v6560 = vadd.s32 %v6552, %v6558
    %vm6561 = vc.u32 %v6559, %v6555
    %v6562 = vsel %vm6561, 1, 0
    %v6563 = vadd.s32 %v6559, %v6555
    %v6564 = vadd.s32 %v6560, %v6562
    %v6565 = vadd.s32 %v6564, %v6554
    %v6566 = vadd.s32 %v6565, %v6556
    %v6567 = vand.u32 %v6544, 65535
    %v6568 = vshrl.u32 %v6544, 16
    %v6569 = vand.u32 %v6539, 65535
    %v6570 = vshrl.u32 %v6539, 16
    %v6571 = vmul.u32 %v6567, %v6569
    %v6572 = vmul.u32 %v6567, %v6570
    %v6573 = vmul.u32 %v6568, %v6569
    %v6574 = vmul.u32 %v6568, %v6570
    %v6575 = vshll.u32 %v6572, 16
    %v6576 = vshrl.u32 %v6572, 16
    %v6577 = vshll.u32 %v6573, 16
    %v6578 = vshrl.u32 %v6573, 16
    %vm6579 = vc.u32 %v6571, %v6575
    %v6580 = vsel %vm6579, 1, 0
    %v6581 = vadd.s32 %v6571, %v6575
    %v6582 = vadd.s32 %v6574, %v6580
    %vm6583 = vc.u32 %v6581, %v6577
    %v6584 = vsel %vm6583, 1, 0
    %v6585 = vadd.s32 %v6581, %v6577
    %v6586 = vadd.s32 %v6582, %v6584
    %v6587 = vadd.s32 %v6586, %v6576
    %v6588 = vadd.s32 %v6587, %v6578
    %v6589 = vmul.u32 %v6544, %v6535
    %v6590 = vadd.s32 %v6566, %v6585
    %vm6591 = vc.u32 %v6566, %v6585
    %v6592 = vadd.s32 %v6588, 1
    %v6593 = vsel %vm6591, %v6592, %v6588
    %v6594 = vadd.s32 %v6589, %v6593
    %v6595 = vadd.s32 %v6594, 536870912
    %v6596 = vshrl.u32 %v6595, 30
    %v6597 = vshll.u32 %v6596, 30
    %v6598 = vsub.s32 %v6594, %v6597
    %vm6599 = vcmp.lt.s32.totalorder %v6598, 0
    %v6600 = vsub.s32 0, %v6598
    %v6601 = vsel %vm6599, %v6600, %v6598
    %v6602 = vclz %v6601
    %v6603 = vsub.s32 %v6602, 2
    %vm6604 = vcmp.gt.s32.totalorder 0, %v6603
    %v6605 = vsel %vm6604, 0, %v6603
    %v6606 = vsub.s32 32, %v6605
    %v6607 = vshll.u32 %v6598, %v6605
    %v6608 = vshrl.u32 %v6590, %v6606
    %v6609 = vor.u32 %v6607, %v6608
    %v6610 = vsub.s32 4294967266, %v6605
    %v6611 = vadd.s32 %v6610, 127
    %v6612 = vshll.u32 %v6611, 23
    %v6613 = vor.u32 4788187, %v6612
    %v6614 = vand.u32 2147483647, %v6613
    %v6616 = vcvt.s32.f32 %v6609
    %v6617 = vmul.f32 %v6616, %v6614
    %v6618 = vxor.u32 %v6617, 2147483648
    %v6619 = vsel %vm6498, %v6618, %v6617
    %v6620 = vsub.s32 4, %v6596
    %v6621 = vsel %vm6498, %v6620, %v6596
    %v6622 = vsel %vm6497, %v1042, %v6619
    %v6623 = vsel %vm6497, 0, %v6621
    %v6624 = vmul.f32 %v6622, %v6622
    %v6625 = vmul.f32 %v6624, -0.001358992
    %v6626 = vadd.f32 %v6625, 0.041655596
    %v6627 = vmul.f32 %v6624, %v6626
    %v6628 = vadd.f32 %v6627, -0.4999988
    %v6629 = vmul.f32 %v6624, %v6628
    %v6630 = vadd.f32 1.0, %v6629
    %v6631 = vmul.f32 %v6622, %v6622
    %v6632 = vmul.f32 %v6631, -0.00019511016
    %v6633 = vadd.f32 %v6632, 0.008332121
    %v6634 = vmul.f32 %v6631, %v6633
    %v6635 = vadd.f32 %v6634, -0.16666654
    %v6636 = vmul.f32 %v6631, %v6635
    %v6637 = vadd.f32 %v6636, 1.0
    %v6638 = vmul.f32 %v6637, %v6622
    %vm6639 = vweird.f32 %v1042
    %v6640 = vadd.s32 %v6623, 3
    %v6641 = vand.u32 %v6640, 3
    %vm6642 = vcmp.lt.s32.totalorder %v6641, 2
    %vm6643 = vcmp.eq.s32.totalorder %v6641, 0
    %v6644 = vxor.u32 %v6638, 2147483648
    %v6645 = vsel %vm6643, %v6630, %v6644
    %vm6646 = vcmp.eq.s32.totalorder %v6641, 2
    %v6647 = vxor.u32 %v6630, 2147483648
    %v6648 = vsel %vm6646, %v6647, %v6638
    %v6649 = vsel %vm6642, %v6645, %v6648
    %v6650 = vsel %vm6639, nan, %v6649
    %v6651 = vand.u32 2147483647, %v1043
    %vm6652 = vcmp.le.f32.partialorder %v6651, 0.7853982
    %vm6653 = vcmp.lt.s32.totalorder %v1043, 0
    %v6654 = vand.u32 %v1043, 2139095040
    %v6655 = vshrl.u32 %v6654, 23
    %v6656 = vsub.s32 %v6655, 127
    %v6657 = vand.u32 2147483647, %v1043
    %v6658 = vand.u32 %v6657, 8388607
    %v6659 = vor.u32 %v6658, 8388608
    %v6660 = vsub.s32 0, %v6659
    %v6661 = vadd.s32 %v6656, 1
    %vm6662 = vcmp.gt.s32.totalorder %v6661, 0
    %v6663 = vsel %vm6662, %v6661, 0
    %v6664 = vshrl.u32 %v6663, 5
    %v6665 = vand.u32 %v6663, 31
    %v6666 = vsub.s32 32, %v6665
    %v6667 = vshrl.u32 683565275, %v6666
    %v6668 = vshll.u32 683565275, %v6665
    %v6669 = vshrl.u32 2475754826, %v6666
    %v6670 = vor.u32 %v6668, %v6669
    %v6671 = vshll.u32 2475754826, %v6665
    %v6672 = vshrl.u32 2131351028, %v6666
    %v6673 = vor.u32 %v6671, %v6672
    %v6674 = vshll.u32 2131351028, %v6665
    %v6675 = vshrl.u32 2102212464, %v6666
    %v6676 = vor.u32 %v6674, %v6675
    %v6677 = vshll.u32 2102212464, %v6665
    %v6678 = vshrl.u32 920167782, %v6666
    %v6679 = vor.u32 %v6677, %v6678
    %v6680 = vshll.u32 920167782, %v6665
    %v6681 = vshrl.u32 1326507024, %v6666
    %v6682 = vor.u32 %v6680, %v6681
    %vm6683 = vcmp.lt.s32.totalorder %v6664, 1
    %vm6684 = vcmp.lt.s32.totalorder %v6664, 2
    %vm6685 = vcmp.lt.s32.totalorder %v6664, 3
    %vm6686 = vcmp.lt.s32.totalorder %v6664, 4
    %v6687 = vsel %vm6683, %v6667, %v6670
    %v6688 = vsel %vm6686, %v6676, 2102212464
    %v6689 = vsel %vm6685, %v6673, %v6688
    %v6690 = vsel %vm6684, %v6687, %v6689
    %v6691 = vsel %vm6683, %v6670, %v6673
    %v6692 = vsel %vm6686, %v6679, 920167782
    %v6693 = vsel %vm6685, %v6676, %v6692
    %v6694 = vsel %vm6684, %v6691, %v6693
    %v6695 = vsel %vm6683, %v6673, %v6676
    %v6696 = vsel %vm6686, %v6682, 1326507024
    %v6697 = vsel %vm6685, %v6679, %v6696
    %v6698 = vsel %vm6684, %v6695, %v6697
    %v6699 = vshll.u32 %v6659, 8
    %v6700 = vand.u32 %v6699, 65535
    %v6701 = vshrl.u32 %v6699, 16
    %v6702 = vand.u32 %v6698, 65535
    %v6703 = vshrl.u32 %v6698, 16
    %v6704 = vmul.u32 %v6700, %v6702
    %v6705 = vmul.u32 %v6700, %v6703
    %v6706 = vmul.u32 %v6701, %v6702
    %v6707 = vmul.u32 %v6701, %v6703
    %v6708 = vshll.u32 %v6705, 16
    %v6709 = vshrl.u32 %v6705, 16
    %v6710 = vshll.u32 %v6706, 16
    %v6711 = vshrl.u32 %v6706, 16
    %vm6712 = vc.u32 %v6704, %v6708
    %v6713 = vsel %vm6712, 1, 0
    %v6714 = vadd.s32 %v6704, %v6708
    %v6715 = vadd.s32 %v6707, %v6713
    %vm6716 = vc.u32 %v6714, %v6710
    %v6717 = vsel %vm6716, 1, 0
    %v6718 = vadd.s32 %v6714, %v6710
    %v6719 = vadd.s32 %v6715, %v6717
    %v6720 = vadd.s32 %v6719, %v6709
    %v6721 = vadd.s32 %v6720, %v6711
    %v6722 = vand.u32 %v6699, 65535
    %v6723 = vshrl.u32 %v6699, 16
    %v6724 = vand.u32 %v6694, 65535
    %v6725 = vshrl.u32 %v6694, 16
    %v6726 = vmul.u32 %v6722, %v6724
    %v6727 = vmul.u32 %v6722, %v6725
    %v6728 = vmul.u32 %v6723, %v6724
    %v6729 = vmul.u32 %v6723, %v6725
    %v6730 = vshll.u32 %v6727, 16
    %v6731 = vshrl.u32 %v6727, 16
    %v6732 = vshll.u32 %v6728, 16
    %v6733 = vshrl.u32 %v6728, 16
    %vm6734 = vc.u32 %v6726, %v6730
    %v6735 = vsel %vm6734, 1, 0
    %v6736 = vadd.s32 %v6726, %v6730
    %v6737 = vadd.s32 %v6729, %v6735
    %vm6738 = vc.u32 %v6736, %v6732
    %v6739 = vsel %vm6738, 1, 0
    %v6740 = vadd.s32 %v6736, %v6732
    %v6741 = vadd.s32 %v6737, %v6739
    %v6742 = vadd.s32 %v6741, %v6731
    %v6743 = vadd.s32 %v6742, %v6733
    %v6744 = vmul.u32 %v6699, %v6690
    %v6745 = vadd.s32 %v6721, %v6740
    %vm6746 = vc.u32 %v6721, %v6740
    %v6747 = vadd.s32 %v6743, 1
    %v6748 = vsel %vm6746, %v6747, %v6743
    %v6749 = vadd.s32 %v6744, %v6748
    %v6750 = vadd.s32 %v6749, 536870912
    %v6751 = vshrl.u32 %v6750, 30
    %v6752 = vshll.u32 %v6751, 30
    %v6753 = vsub.s32 %v6749, %v6752
    %vm6754 = vcmp.lt.s32.totalorder %v6753, 0
    %v6755 = vsub.s32 0, %v6753
    %v6756 = vsel %vm6754, %v6755, %v6753
    %v6757 = vclz %v6756
    %v6758 = vsub.s32 %v6757, 2
    %vm6759 = vcmp.gt.s32.totalorder 0, %v6758
    %v6760 = vsel %vm6759, 0, %v6758
    %v6761 = vsub.s32 32, %v6760
    %v6762 = vshll.u32 %v6753, %v6760
    %v6763 = vshrl.u32 %v6745, %v6761
    %v6764 = vor.u32 %v6762, %v6763
    %v6765 = vsub.s32 4294967266, %v6760
    %v6766 = vadd.s32 %v6765, 127
    %v6767 = vshll.u32 %v6766, 23
    %v6768 = vor.u32 4788187, %v6767
    %v6769 = vand.u32 2147483647, %v6768
    %v6771 = vcvt.s32.f32 %v6764
    %v6772 = vmul.f32 %v6771, %v6769
    %v6773 = vxor.u32 %v6772, 2147483648
    %v6774 = vsel %vm6653, %v6773, %v6772
    %v6775 = vsub.s32 4, %v6751
    %v6776 = vsel %vm6653, %v6775, %v6751
    %v6777 = vsel %vm6652, %v1043, %v6774
    %v6778 = vsel %vm6652, 0, %v6776
    %v6779 = vmul.f32 %v6777, %v6777
    %v6780 = vmul.f32 %v6779, -0.001358992
    %v6781 = vadd.f32 %v6780, 0.041655596
    %v6782 = vmul.f32 %v6779, %v6781
    %v6783 = vadd.f32 %v6782, -0.4999988
    %v6784 = vmul.f32 %v6779, %v6783
    %v6785 = vadd.f32 1.0, %v6784
    %v6786 = vmul.f32 %v6777, %v6777
    %v6787 = vmul.f32 %v6786, -0.00019511016
    %v6788 = vadd.f32 %v6787, 0.008332121
    %v6789 = vmul.f32 %v6786, %v6788
    %v6790 = vadd.f32 %v6789, -0.16666654
    %v6791 = vmul.f32 %v6786, %v6790
    %v6792 = vadd.f32 %v6791, 1.0
    %v6793 = vmul.f32 %v6792, %v6777
    %vm6794 = vweird.f32 %v1043
    %v6795 = vadd.s32 %v6778, 3
    %v6796 = vand.u32 %v6795, 3
    %vm6797 = vcmp.lt.s32.totalorder %v6796, 2
    %vm6798 = vcmp.eq.s32.totalorder %v6796, 0
    %v6799 = vxor.u32 %v6793, 2147483648
    %v6800 = vsel %vm6798, %v6785, %v6799
    %vm6801 = vcmp.eq.s32.totalorder %v6796, 2
    %v6802 = vxor.u32 %v6785, 2147483648
    %v6803 = vsel %vm6801, %v6802, %v6793
    %v6804 = vsel %vm6797, %v6800, %v6803
    %v6805 = vsel %vm6794, nan, %v6804
    %v6806 = vand.u32 2147483647, %v1044
    %vm6807 = vcmp.le.f32.partialorder %v6806, 0.7853982
    %vm6808 = vcmp.lt.s32.totalorder %v1044, 0
    %v6809 = vand.u32 %v1044, 2139095040
    %v6810 = vshrl.u32 %v6809, 23
    %v6811 = vsub.s32 %v6810, 127
    %v6812 = vand.u32 2147483647, %v1044
    %v6813 = vand.u32 %v6812, 8388607
    %v6814 = vor.u32 %v6813, 8388608
    %v6815 = vsub.s32 0, %v6814
    %v6816 = vadd.s32 %v6811, 1
    %vm6817 = vcmp.gt.s32.totalorder %v6816, 0
    %v6818 = vsel %vm6817, %v6816, 0
    %v6819 = vshrl.u32 %v6818, 5
    %v6820 = vand.u32 %v6818, 31
    %v6821 = vsub.s32 32, %v6820
    %v6822 = vshrl.u32 683565275, %v6821
    %v6823 = vshll.u32 683565275, %v6820
    %v6824 = vshrl.u32 2475754826, %v6821
    %v6825 = vor.u32 %v6823, %v6824
    %v6826 = vshll.u32 2475754826, %v6820
    %v6827 = vshrl.u32 2131351028, %v6821
    %v6828 = vor.u32 %v6826, %v6827
    %v6829 = vshll.u32 2131351028, %v6820
    %v6830 = vshrl.u32 2102212464, %v6821
    %v6831 = vor.u32 %v6829, %v6830
    %v6832 = vshll.u32 2102212464, %v6820
    %v6833 = vshrl.u32 920167782, %v6821
    %v6834 = vor.u32 %v6832, %v6833
    %v6835 = vshll.u32 920167782, %v6820
    %v6836 = vshrl.u32 1326507024, %v6821
    %v6837 = vor.u32 %v6835, %v6836
    %vm6838 = vcmp.lt.s32.totalorder %v6819, 1
    %vm6839 = vcmp.lt.s32.totalorder %v6819, 2
    %vm6840 = vcmp.lt.s32.totalorder %v6819, 3
    %vm6841 = vcmp.lt.s32.totalorder %v6819, 4
    %v6842 = vsel %vm6838, %v6822, %v6825
    %v6843 = vsel %vm6841, %v6831, 2102212464
    %v6844 = vsel %vm6840, %v6828, %v6843
    %v6845 = vsel %vm6839, %v6842, %v6844
    %v6846 = vsel %vm6838, %v6825, %v6828
    %v6847 = vsel %vm6841, %v6834, 920167782
    %v6848 = vsel %vm6840, %v6831, %v6847
    %v6849 = vsel %vm6839, %v6846, %v6848
    %v6850 = vsel %vm6838, %v6828, %v6831
    %v6851 = vsel %vm6841, %v6837, 1326507024
    %v6852 = vsel %vm6840, %v6834, %v6851
    %v6853 = vsel %vm6839, %v6850, %v6852
    %v6854 = vshll.u32 %v6814, 8
    %v6855 = vand.u32 %v6854, 65535
    %v6856 = vshrl.u32 %v6854, 16
    %v6857 = vand.u32 %v6853, 65535
    %v6858 = vshrl.u32 %v6853, 16
    %v6859 = vmul.u32 %v6855, %v6857
    %v6860 = vmul.u32 %v6855, %v6858
    %v6861 = vmul.u32 %v6856, %v6857
    %v6862 = vmul.u32 %v6856, %v6858
    %v6863 = vshll.u32 %v6860, 16
    %v6864 = vshrl.u32 %v6860, 16
    %v6865 = vshll.u32 %v6861, 16
    %v6866 = vshrl.u32 %v6861, 16
    %vm6867 = vc.u32 %v6859, %v6863
    %v6868 = vsel %vm6867, 1, 0
    %v6869 = vadd.s32 %v6859, %v6863
    %v6870 = vadd.s32 %v6862, %v6868
    %vm6871 = vc.u32 %v6869, %v6865
    %v6872 = vsel %vm6871, 1, 0
    %v6873 = vadd.s32 %v6869, %v6865
    %v6874 = vadd.s32 %v6870, %v6872
    %v6875 = vadd.s32 %v6874, %v6864
    %v6876 = vadd.s32 %v6875, %v6866
    %v6877 = vand.u32 %v6854, 65535
    %v6878 = vshrl.u32 %v6854, 16
    %v6879 = vand.u32 %v6849, 65535
    %v6880 = vshrl.u32 %v6849, 16
    %v6881 = vmul.u32 %v6877, %v6879
    %v6882 = vmul.u32 %v6877, %v6880
    %v6883 = vmul.u32 %v6878, %v6879
    %v6884 = vmul.u32 %v6878, %v6880
    %v6885 = vshll.u32 %v6882, 16
    %v6886 = vshrl.u32 %v6882, 16
    %v6887 = vshll.u32 %v6883, 16
    %v6888 = vshrl.u32 %v6883, 16
    %vm6889 = vc.u32 %v6881, %v6885
    %v6890 = vsel %vm6889, 1, 0
    %v6891 = vadd.s32 %v6881, %v6885
    %v6892 = vadd.s32 %v6884, %v6890
    %vm6893 = vc.u32 %v6891, %v6887
    %v6894 = vsel %vm6893, 1, 0
    %v6895 = vadd.s32 %v6891, %v6887
    %v6896 = vadd.s32 %v6892, %v6894
    %v6897 = vadd.s32 %v6896, %v6886
    %v6898 = vadd.s32 %v6897, %v6888
    %v6899 = vmul.u32 %v6854, %v6845
    %v6900 = vadd.s32 %v6876, %v6895
    %vm6901 = vc.u32 %v6876, %v6895
    %v6902 = vadd.s32 %v6898, 1
    %v6903 = vsel %vm6901, %v6902, %v6898
    %v6904 = vadd.s32 %v6899, %v6903
    %v6905 = vadd.s32 %v6904, 536870912
    %v6906 = vshrl.u32 %v6905, 30
    %v6907 = vshll.u32 %v6906, 30
    %v6908 = vsub.s32 %v6904, %v6907
    %vm6909 = vcmp.lt.s32.totalorder %v6908, 0
    %v6910 = vsub.s32 0, %v6908
    %v6911 = vsel %vm6909, %v6910, %v6908
    %v6912 = vclz %v6911
    %v6913 = vsub.s32 %v6912, 2
    %vm6914 = vcmp.gt.s32.totalorder 0, %v6913
    %v6915 = vsel %vm6914, 0, %v6913
    %v6916 = vsub.s32 32, %v6915
    %v6917 = vshll.u32 %v6908, %v6915
    %v6918 = vshrl.u32 %v6900, %v6916
    %v6919 = vor.u32 %v6917, %v6918
    %v6920 = vsub.s32 4294967266, %v6915
    %v6921 = vadd.s32 %v6920, 127
    %v6922 = vshll.u32 %v6921, 23
    %v6923 = vor.u32 4788187, %v6922
    %v6924 = vand.u32 2147483647, %v6923
    %v6926 = vcvt.s32.f32 %v6919
    %v6927 = vmul.f32 %v6926, %v6924
    %v6928 = vxor.u32 %v6927, 2147483648
    %v6929 = vsel %vm6808, %v6928, %v6927
    %v6930 = vsub.s32 4, %v6906
    %v6931 = vsel %vm6808, %v6930, %v6906
    %v6932 = vsel %vm6807, %v1044, %v6929
    %v6933 = vsel %vm6807, 0, %v6931
    %v6934 = vmul.f32 %v6932, %v6932
    %v6935 = vmul.f32 %v6934, -0.001358992
    %v6936 = vadd.f32 %v6935, 0.041655596
    %v6937 = vmul.f32 %v6934, %v6936
    %v6938 = vadd.f32 %v6937, -0.4999988
    %v6939 = vmul.f32 %v6934, %v6938
    %v6940 = vadd.f32 1.0, %v6939
    %v6941 = vmul.f32 %v6932, %v6932
    %v6942 = vmul.f32 %v6941, -0.00019511016
    %v6943 = vadd.f32 %v6942, 0.008332121
    %v6944 = vmul.f32 %v6941, %v6943
    %v6945 = vadd.f32 %v6944, -0.16666654
    %v6946 = vmul.f32 %v6941, %v6945
    %v6947 = vadd.f32 %v6946, 1.0
    %v6948 = vmul.f32 %v6947, %v6932
    %vm6949 = vweird.f32 %v1044
    %v6950 = vadd.s32 %v6933, 3
    %v6951 = vand.u32 %v6950, 3
    %vm6952 = vcmp.lt.s32.totalorder %v6951, 2
    %vm6953 = vcmp.eq.s32.totalorder %v6951, 0
    %v6954 = vxor.u32 %v6948, 2147483648
    %v6955 = vsel %vm6953, %v6940, %v6954
    %vm6956 = vcmp.eq.s32.totalorder %v6951, 2
    %v6957 = vxor.u32 %v6940, 2147483648
    %v6958 = vsel %vm6956, %v6957, %v6948
    %v6959 = vsel %vm6952, %v6955, %v6958
    %v6960 = vsel %vm6949, nan, %v6959
    %v6961 = vand.u32 2147483647, %v1045
    %vm6962 = vcmp.le.f32.partialorder %v6961, 0.7853982
    %vm6963 = vcmp.lt.s32.totalorder %v1045, 0
    %v6964 = vand.u32 %v1045, 2139095040
    %v6965 = vshrl.u32 %v6964, 23
    %v6966 = vsub.s32 %v6965, 127
    %v6967 = vand.u32 2147483647, %v1045
    %v6968 = vand.u32 %v6967, 8388607
    %v6969 = vor.u32 %v6968, 8388608
    %v6970 = vsub.s32 0, %v6969
    %v6971 = vadd.s32 %v6966, 1
    %vm6972 = vcmp.gt.s32.totalorder %v6971, 0
    %v6973 = vsel %vm6972, %v6971, 0
    %v6974 = vshrl.u32 %v6973, 5
    %v6975 = vand.u32 %v6973, 31
    %v6976 = vsub.s32 32, %v6975
    %v6977 = vshrl.u32 683565275, %v6976
    %v6978 = vshll.u32 683565275, %v6975
    %v6979 = vshrl.u32 2475754826, %v6976
    %v6980 = vor.u32 %v6978, %v6979
    %v6981 = vshll.u32 2475754826, %v6975
    %v6982 = vshrl.u32 2131351028, %v6976
    %v6983 = vor.u32 %v6981, %v6982
    %v6984 = vshll.u32 2131351028, %v6975
    %v6985 = vshrl.u32 2102212464, %v6976
    %v6986 = vor.u32 %v6984, %v6985
    %v6987 = vshll.u32 2102212464, %v6975
    %v6988 = vshrl.u32 920167782, %v6976
    %v6989 = vor.u32 %v6987, %v6988
    %v6990 = vshll.u32 920167782, %v6975
    %v6991 = vshrl.u32 1326507024, %v6976
    %v6992 = vor.u32 %v6990, %v6991
    %vm6993 = vcmp.lt.s32.totalorder %v6974, 1
    %vm6994 = vcmp.lt.s32.totalorder %v6974, 2
    %vm6995 = vcmp.lt.s32.totalorder %v6974, 3
    %vm6996 = vcmp.lt.s32.totalorder %v6974, 4
    %v6997 = vsel %vm6993, %v6977, %v6980
    %v6998 = vsel %vm6996, %v6986, 2102212464
    %v6999 = vsel %vm6995, %v6983, %v6998
    %v7000 = vsel %vm6994, %v6997, %v6999
    %v7001 = vsel %vm6993, %v6980, %v6983
    %v7002 = vsel %vm6996, %v6989, 920167782
    %v7003 = vsel %vm6995, %v6986, %v7002
    %v7004 = vsel %vm6994, %v7001, %v7003
    %v7005 = vsel %vm6993, %v6983, %v6986
    %v7006 = vsel %vm6996, %v6992, 1326507024
    %v7007 = vsel %vm6995, %v6989, %v7006
    %v7008 = vsel %vm6994, %v7005, %v7007
    %v7009 = vshll.u32 %v6969, 8
    %v7010 = vand.u32 %v7009, 65535
    %v7011 = vshrl.u32 %v7009, 16
    %v7012 = vand.u32 %v7008, 65535
    %v7013 = vshrl.u32 %v7008, 16
    %v7014 = vmul.u32 %v7010, %v7012
    %v7015 = vmul.u32 %v7010, %v7013
    %v7016 = vmul.u32 %v7011, %v7012
    %v7017 = vmul.u32 %v7011, %v7013
    %v7018 = vshll.u32 %v7015, 16
    %v7019 = vshrl.u32 %v7015, 16
    %v7020 = vshll.u32 %v7016, 16
    %v7021 = vshrl.u32 %v7016, 16
    %vm7022 = vc.u32 %v7014, %v7018
    %v7023 = vsel %vm7022, 1, 0
    %v7024 = vadd.s32 %v7014, %v7018
    %v7025 = vadd.s32 %v7017, %v7023
    %vm7026 = vc.u32 %v7024, %v7020
    %v7027 = vsel %vm7026, 1, 0
    %v7028 = vadd.s32 %v7024, %v7020
    %v7029 = vadd.s32 %v7025, %v7027
    %v7030 = vadd.s32 %v7029, %v7019
    %v7031 = vadd.s32 %v7030, %v7021
    %v7032 = vand.u32 %v7009, 65535
    %v7033 = vshrl.u32 %v7009, 16
    %v7034 = vand.u32 %v7004, 65535
    %v7035 = vshrl.u32 %v7004, 16
    %v7036 = vmul.u32 %v7032, %v7034
    %v7037 = vmul.u32 %v7032, %v7035
    %v7038 = vmul.u32 %v7033, %v7034
    %v7039 = vmul.u32 %v7033, %v7035
    %v7040 = vshll.u32 %v7037, 16
    %v7041 = vshrl.u32 %v7037, 16
    %v7042 = vshll.u32 %v7038, 16
    %v7043 = vshrl.u32 %v7038, 16
    %vm7044 = vc.u32 %v7036, %v7040
    %v7045 = vsel %vm7044, 1, 0
    %v7046 = vadd.s32 %v7036, %v7040
    %v7047 = vadd.s32 %v7039, %v7045
    %vm7048 = vc.u32 %v7046, %v7042
    %v7049 = vsel %vm7048, 1, 0
    %v7050 = vadd.s32 %v7046, %v7042
    %v7051 = vadd.s32 %v7047, %v7049
    %v7052 = vadd.s32 %v7051, %v7041
    %v7053 = vadd.s32 %v7052, %v7043
    %v7054 = vmul.u32 %v7009, %v7000
    %v7055 = vadd.s32 %v7031, %v7050
    %vm7056 = vc.u32 %v7031, %v7050
    %v7057 = vadd.s32 %v7053, 1
    %v7058 = vsel %vm7056, %v7057, %v7053
    %v7059 = vadd.s32 %v7054, %v7058
    %v7060 = vadd.s32 %v7059, 536870912
    %v7061 = vshrl.u32 %v7060, 30
    %v7062 = vshll.u32 %v7061, 30
    %v7063 = vsub.s32 %v7059, %v7062
    %vm7064 = vcmp.lt.s32.totalorder %v7063, 0
    %v7065 = vsub.s32 0, %v7063
    %v7066 = vsel %vm7064, %v7065, %v7063
    %v7067 = vclz %v7066
    %v7068 = vsub.s32 %v7067, 2
    %vm7069 = vcmp.gt.s32.totalorder 0, %v7068
    %v7070 = vsel %vm7069, 0, %v7068
    %v7071 = vsub.s32 32, %v7070
    %v7072 = vshll.u32 %v7063, %v7070
    %v7073 = vshrl.u32 %v7055, %v7071
    %v7074 = vor.u32 %v7072, %v7073
    %v7075 = vsub.s32 4294967266, %v7070
    %v7076 = vadd.s32 %v7075, 127
    %v7077 = vshll.u32 %v7076, 23
    %v7078 = vor.u32 4788187, %v7077
    %v7079 = vand.u32 2147483647, %v7078
    %v7081 = vcvt.s32.f32 %v7074
    %v7082 = vmul.f32 %v7081, %v7079
    %v7083 = vxor.u32 %v7082, 2147483648
    %v7084 = vsel %vm6963, %v7083, %v7082
    %v7085 = vsub.s32 4, %v7061
    %v7086 = vsel %vm6963, %v7085, %v7061
    %v7087 = vsel %vm6962, %v1045, %v7084
    %v7088 = vsel %vm6962, 0, %v7086
    %v7089 = vmul.f32 %v7087, %v7087
    %v7090 = vmul.f32 %v7089, -0.001358992
    %v7091 = vadd.f32 %v7090, 0.041655596
    %v7092 = vmul.f32 %v7089, %v7091
    %v7093 = vadd.f32 %v7092, -0.4999988
    %v7094 = vmul.f32 %v7089, %v7093
    %v7095 = vadd.f32 1.0, %v7094
    %v7096 = vmul.f32 %v7087, %v7087
    %v7097 = vmul.f32 %v7096, -0.00019511016
    %v7098 = vadd.f32 %v7097, 0.008332121
    %v7099 = vmul.f32 %v7096, %v7098
    %v7100 = vadd.f32 %v7099, -0.16666654
    %v7101 = vmul.f32 %v7096, %v7100
    %v7102 = vadd.f32 %v7101, 1.0
    %v7103 = vmul.f32 %v7102, %v7087
    %vm7104 = vweird.f32 %v1045
    %v7105 = vadd.s32 %v7088, 3
    %v7106 = vand.u32 %v7105, 3
    %vm7107 = vcmp.lt.s32.totalorder %v7106, 2
    %vm7108 = vcmp.eq.s32.totalorder %v7106, 0
    %v7109 = vxor.u32 %v7103, 2147483648
    %v7110 = vsel %vm7108, %v7095, %v7109
    %vm7111 = vcmp.eq.s32.totalorder %v7106, 2
    %v7112 = vxor.u32 %v7095, 2147483648
    %v7113 = vsel %vm7111, %v7112, %v7103
    %v7114 = vsel %vm7107, %v7110, %v7113
    %v7115 = vsel %vm7104, nan, %v7114
    %v7116 = vand.u32 2147483647, %v1046
    %vm7117 = vcmp.le.f32.partialorder %v7116, 0.7853982
    %vm7118 = vcmp.lt.s32.totalorder %v1046, 0
    %v7119 = vand.u32 %v1046, 2139095040
    %v7120 = vshrl.u32 %v7119, 23
    %v7121 = vsub.s32 %v7120, 127
    %v7122 = vand.u32 2147483647, %v1046
    %v7123 = vand.u32 %v7122, 8388607
    %v7124 = vor.u32 %v7123, 8388608
    %v7125 = vsub.s32 0, %v7124
    %v7126 = vadd.s32 %v7121, 1
    %vm7127 = vcmp.gt.s32.totalorder %v7126, 0
    %v7128 = vsel %vm7127, %v7126, 0
    %v7129 = vshrl.u32 %v7128, 5
    %v7130 = vand.u32 %v7128, 31
    %v7131 = vsub.s32 32, %v7130
    %v7132 = vshrl.u32 683565275, %v7131
    %v7133 = vshll.u32 683565275, %v7130
    %v7134 = vshrl.u32 2475754826, %v7131
    %v7135 = vor.u32 %v7133, %v7134
    %v7136 = vshll.u32 2475754826, %v7130
    %v7137 = vshrl.u32 2131351028, %v7131
    %v7138 = vor.u32 %v7136, %v7137
    %v7139 = vshll.u32 2131351028, %v7130
    %v7140 = vshrl.u32 2102212464, %v7131
    %v7141 = vor.u32 %v7139, %v7140
    %v7142 = vshll.u32 2102212464, %v7130
    %v7143 = vshrl.u32 920167782, %v7131
    %v7144 = vor.u32 %v7142, %v7143
    %v7145 = vshll.u32 920167782, %v7130
    %v7146 = vshrl.u32 1326507024, %v7131
    %v7147 = vor.u32 %v7145, %v7146
    %vm7148 = vcmp.lt.s32.totalorder %v7129, 1
    %vm7149 = vcmp.lt.s32.totalorder %v7129, 2
    %vm7150 = vcmp.lt.s32.totalorder %v7129, 3
    %vm7151 = vcmp.lt.s32.totalorder %v7129, 4
    %v7152 = vsel %vm7148, %v7132, %v7135
    %v7153 = vsel %vm7151, %v7141, 2102212464
    %v7154 = vsel %vm7150, %v7138, %v7153
    %v7155 = vsel %vm7149, %v7152, %v7154
    %v7156 = vsel %vm7148, %v7135, %v7138
    %v7157 = vsel %vm7151, %v7144, 920167782
    %v7158 = vsel %vm7150, %v7141, %v7157
    %v7159 = vsel %vm7149, %v7156, %v7158
    %v7160 = vsel %vm7148, %v7138, %v7141
    %v7161 = vsel %vm7151, %v7147, 1326507024
    %v7162 = vsel %vm7150, %v7144, %v7161
    %v7163 = vsel %vm7149, %v7160, %v7162
    %v7164 = vshll.u32 %v7124, 8
    %v7165 = vand.u32 %v7164, 65535
    %v7166 = vshrl.u32 %v7164, 16
    %v7167 = vand.u32 %v7163, 65535
    %v7168 = vshrl.u32 %v7163, 16
    %v7169 = vmul.u32 %v7165, %v7167
    %v7170 = vmul.u32 %v7165, %v7168
    %v7171 = vmul.u32 %v7166, %v7167
    %v7172 = vmul.u32 %v7166, %v7168
    %v7173 = vshll.u32 %v7170, 16
    %v7174 = vshrl.u32 %v7170, 16
    %v7175 = vshll.u32 %v7171, 16
    %v7176 = vshrl.u32 %v7171, 16
    %vm7177 = vc.u32 %v7169, %v7173
    %v7178 = vsel %vm7177, 1, 0
    %v7179 = vadd.s32 %v7169, %v7173
    %v7180 = vadd.s32 %v7172, %v7178
    %vm7181 = vc.u32 %v7179, %v7175
    %v7182 = vsel %vm7181, 1, 0
    %v7183 = vadd.s32 %v7179, %v7175
    %v7184 = vadd.s32 %v7180, %v7182
    %v7185 = vadd.s32 %v7184, %v7174
    %v7186 = vadd.s32 %v7185, %v7176
    %v7187 = vand.u32 %v7164, 65535
    %v7188 = vshrl.u32 %v7164, 16
    %v7189 = vand.u32 %v7159, 65535
    %v7190 = vshrl.u32 %v7159, 16
    %v7191 = vmul.u32 %v7187, %v7189
    %v7192 = vmul.u32 %v7187, %v7190
    %v7193 = vmul.u32 %v7188, %v7189
    %v7194 = vmul.u32 %v7188, %v7190
    %v7195 = vshll.u32 %v7192, 16
    %v7196 = vshrl.u32 %v7192, 16
    %v7197 = vshll.u32 %v7193, 16
    %v7198 = vshrl.u32 %v7193, 16
    %vm7199 = vc.u32 %v7191, %v7195
    %v7200 = vsel %vm7199, 1, 0
    %v7201 = vadd.s32 %v7191, %v7195
    %v7202 = vadd.s32 %v7194, %v7200
    %vm7203 = vc.u32 %v7201, %v7197
    %v7204 = vsel %vm7203, 1, 0
    %v7205 = vadd.s32 %v7201, %v7197
    %v7206 = vadd.s32 %v7202, %v7204
    %v7207 = vadd.s32 %v7206, %v7196
    %v7208 = vadd.s32 %v7207, %v7198
    %v7209 = vmul.u32 %v7164, %v7155
    %v7210 = vadd.s32 %v7186, %v7205
    %vm7211 = vc.u32 %v7186, %v7205
    %v7212 = vadd.s32 %v7208, 1
    %v7213 = vsel %vm7211, %v7212, %v7208
    %v7214 = vadd.s32 %v7209, %v7213
    %v7215 = vadd.s32 %v7214, 536870912
    %v7216 = vshrl.u32 %v7215, 30
    %v7217 = vshll.u32 %v7216, 30
    %v7218 = vsub.s32 %v7214, %v7217
    %vm7219 = vcmp.lt.s32.totalorder %v7218, 0
    %v7220 = vsub.s32 0, %v7218
    %v7221 = vsel %vm7219, %v7220, %v7218
    %v7222 = vclz %v7221
    %v7223 = vsub.s32 %v7222, 2
    %vm7224 = vcmp.gt.s32.totalorder 0, %v7223
    %v7225 = vsel %vm7224, 0, %v7223
    %v7226 = vsub.s32 32, %v7225
    %v7227 = vshll.u32 %v7218, %v7225
    %v7228 = vshrl.u32 %v7210, %v7226
    %v7229 = vor.u32 %v7227, %v7228
    %v7230 = vsub.s32 4294967266, %v7225
    %v7231 = vadd.s32 %v7230, 127
    %v7232 = vshll.u32 %v7231, 23
    %v7233 = vor.u32 4788187, %v7232
    %v7234 = vand.u32 2147483647, %v7233
    %v7236 = vcvt.s32.f32 %v7229
    %v7237 = vmul.f32 %v7236, %v7234
    %v7238 = vxor.u32 %v7237, 2147483648
    %v7239 = vsel %vm7118, %v7238, %v7237
    %v7240 = vsub.s32 4, %v7216
    %v7241 = vsel %vm7118, %v7240, %v7216
    %v7242 = vsel %vm7117, %v1046, %v7239
    %v7243 = vsel %vm7117, 0, %v7241
    %v7244 = vmul.f32 %v7242, %v7242
    %v7245 = vmul.f32 %v7244, -0.001358992
    %v7246 = vadd.f32 %v7245, 0.041655596
    %v7247 = vmul.f32 %v7244, %v7246
    %v7248 = vadd.f32 %v7247, -0.4999988
    %v7249 = vmul.f32 %v7244, %v7248
    %v7250 = vadd.f32 1.0, %v7249
    %v7251 = vmul.f32 %v7242, %v7242
    %v7252 = vmul.f32 %v7251, -0.00019511016
    %v7253 = vadd.f32 %v7252, 0.008332121
    %v7254 = vmul.f32 %v7251, %v7253
    %v7255 = vadd.f32 %v7254, -0.16666654
    %v7256 = vmul.f32 %v7251, %v7255
    %v7257 = vadd.f32 %v7256, 1.0
    %v7258 = vmul.f32 %v7257, %v7242
    %vm7259 = vweird.f32 %v1046
    %v7260 = vadd.s32 %v7243, 3
    %v7261 = vand.u32 %v7260, 3
    %vm7262 = vcmp.lt.s32.totalorder %v7261, 2
    %vm7263 = vcmp.eq.s32.totalorder %v7261, 0
    %v7264 = vxor.u32 %v7258, 2147483648
    %v7265 = vsel %vm7263, %v7250, %v7264
    %vm7266 = vcmp.eq.s32.totalorder %v7261, 2
    %v7267 = vxor.u32 %v7250, 2147483648
    %v7268 = vsel %vm7266, %v7267, %v7258
    %v7269 = vsel %vm7262, %v7265, %v7268
    %v7270 = vsel %vm7259, nan, %v7269
    %v7271 = vand.u32 2147483647, %v1047
    %vm7272 = vcmp.le.f32.partialorder %v7271, 0.7853982
    %vm7273 = vcmp.lt.s32.totalorder %v1047, 0
    %v7274 = vand.u32 %v1047, 2139095040
    %v7275 = vshrl.u32 %v7274, 23
    %v7276 = vsub.s32 %v7275, 127
    %v7277 = vand.u32 2147483647, %v1047
    %v7278 = vand.u32 %v7277, 8388607
    %v7279 = vor.u32 %v7278, 8388608
    %v7280 = vsub.s32 0, %v7279
    %v7281 = vadd.s32 %v7276, 1
    %vm7282 = vcmp.gt.s32.totalorder %v7281, 0
    %v7283 = vsel %vm7282, %v7281, 0
    %v7284 = vshrl.u32 %v7283, 5
    %v7285 = vand.u32 %v7283, 31
    %v7286 = vsub.s32 32, %v7285
    %v7287 = vshrl.u32 683565275, %v7286
    %v7288 = vshll.u32 683565275, %v7285
    %v7289 = vshrl.u32 2475754826, %v7286
    %v7290 = vor.u32 %v7288, %v7289
    %v7291 = vshll.u32 2475754826, %v7285
    %v7292 = vshrl.u32 2131351028, %v7286
    %v7293 = vor.u32 %v7291, %v7292
    %v7294 = vshll.u32 2131351028, %v7285
    %v7295 = vshrl.u32 2102212464, %v7286
    %v7296 = vor.u32 %v7294, %v7295
    %v7297 = vshll.u32 2102212464, %v7285
    %v7298 = vshrl.u32 920167782, %v7286
    %v7299 = vor.u32 %v7297, %v7298
    %v7300 = vshll.u32 920167782, %v7285
    %v7301 = vshrl.u32 1326507024, %v7286
    %v7302 = vor.u32 %v7300, %v7301
    %vm7303 = vcmp.lt.s32.totalorder %v7284, 1
    %vm7304 = vcmp.lt.s32.totalorder %v7284, 2
    %vm7305 = vcmp.lt.s32.totalorder %v7284, 3
    %vm7306 = vcmp.lt.s32.totalorder %v7284, 4
    %v7307 = vsel %vm7303, %v7287, %v7290
    %v7308 = vsel %vm7306, %v7296, 2102212464
    %v7309 = vsel %vm7305, %v7293, %v7308
    %v7310 = vsel %vm7304, %v7307, %v7309
    %v7311 = vsel %vm7303, %v7290, %v7293
    %v7312 = vsel %vm7306, %v7299, 920167782
    %v7313 = vsel %vm7305, %v7296, %v7312
    %v7314 = vsel %vm7304, %v7311, %v7313
    %v7315 = vsel %vm7303, %v7293, %v7296
    %v7316 = vsel %vm7306, %v7302, 1326507024
    %v7317 = vsel %vm7305, %v7299, %v7316
    %v7318 = vsel %vm7304, %v7315, %v7317
    %v7319 = vshll.u32 %v7279, 8
    %v7320 = vand.u32 %v7319, 65535
    %v7321 = vshrl.u32 %v7319, 16
    %v7322 = vand.u32 %v7318, 65535
    %v7323 = vshrl.u32 %v7318, 16
    %v7324 = vmul.u32 %v7320, %v7322
    %v7325 = vmul.u32 %v7320, %v7323
    %v7326 = vmul.u32 %v7321, %v7322
    %v7327 = vmul.u32 %v7321, %v7323
    %v7328 = vshll.u32 %v7325, 16
    %v7329 = vshrl.u32 %v7325, 16
    %v7330 = vshll.u32 %v7326, 16
    %v7331 = vshrl.u32 %v7326, 16
    %vm7332 = vc.u32 %v7324, %v7328
    %v7333 = vsel %vm7332, 1, 0
    %v7334 = vadd.s32 %v7324, %v7328
    %v7335 = vadd.s32 %v7327, %v7333
    %vm7336 = vc.u32 %v7334, %v7330
    %v7337 = vsel %vm7336, 1, 0
    %v7338 = vadd.s32 %v7334, %v7330
    %v7339 = vadd.s32 %v7335, %v7337
    %v7340 = vadd.s32 %v7339, %v7329
    %v7341 = vadd.s32 %v7340, %v7331
    %v7342 = vand.u32 %v7319, 65535
    %v7343 = vshrl.u32 %v7319, 16
    %v7344 = vand.u32 %v7314, 65535
    %v7345 = vshrl.u32 %v7314, 16
    %v7346 = vmul.u32 %v7342, %v7344
    %v7347 = vmul.u32 %v7342, %v7345
    %v7348 = vmul.u32 %v7343, %v7344
    %v7349 = vmul.u32 %v7343, %v7345
    %v7350 = vshll.u32 %v7347, 16
    %v7351 = vshrl.u32 %v7347, 16
    %v7352 = vshll.u32 %v7348, 16
    %v7353 = vshrl.u32 %v7348, 16
    %vm7354 = vc.u32 %v7346, %v7350
    %v7355 = vsel %vm7354, 1, 0
    %v7356 = vadd.s32 %v7346, %v7350
    %v7357 = vadd.s32 %v7349, %v7355
    %vm7358 = vc.u32 %v7356, %v7352
    %v7359 = vsel %vm7358, 1, 0
    %v7360 = vadd.s32 %v7356, %v7352
    %v7361 = vadd.s32 %v7357, %v7359
    %v7362 = vadd.s32 %v7361, %v7351
    %v7363 = vadd.s32 %v7362, %v7353
    %v7364 = vmul.u32 %v7319, %v7310
    %v7365 = vadd.s32 %v7341, %v7360
    %vm7366 = vc.u32 %v7341, %v7360
    %v7367 = vadd.s32 %v7363, 1
    %v7368 = vsel %vm7366, %v7367, %v7363
    %v7369 = vadd.s32 %v7364, %v7368
    %v7370 = vadd.s32 %v7369, 536870912
    %v7371 = vshrl.u32 %v7370, 30
    %v7372 = vshll.u32 %v7371, 30
    %v7373 = vsub.s32 %v7369, %v7372
    %vm7374 = vcmp.lt.s32.totalorder %v7373, 0
    %v7375 = vsub.s32 0, %v7373
    %v7376 = vsel %vm7374, %v7375, %v7373
    %v7377 = vclz %v7376
    %v7378 = vsub.s32 %v7377, 2
    %vm7379 = vcmp.gt.s32.totalorder 0, %v7378
    %v7380 = vsel %vm7379, 0, %v7378
    %v7381 = vsub.s32 32, %v7380
    %v7382 = vshll.u32 %v7373, %v7380
    %v7383 = vshrl.u32 %v7365, %v7381
    %v7384 = vor.u32 %v7382, %v7383
    %v7385 = vsub.s32 4294967266, %v7380
    %v7386 = vadd.s32 %v7385, 127
    %v7387 = vshll.u32 %v7386, 23
    %v7388 = vor.u32 4788187, %v7387
    %v7389 = vand.u32 2147483647, %v7388
    %v7391 = vcvt.s32.f32 %v7384
    %v7392 = vmul.f32 %v7391, %v7389
    %v7393 = vxor.u32 %v7392, 2147483648
    %v7394 = vsel %vm7273, %v7393, %v7392
    %v7395 = vsub.s32 4, %v7371
    %v7396 = vsel %vm7273, %v7395, %v7371
    %v7397 = vsel %vm7272, %v1047, %v7394
    %v7398 = vsel %vm7272, 0, %v7396
    %v7399 = vmul.f32 %v7397, %v7397
    %v7400 = vmul.f32 %v7399, -0.001358992
    %v7401 = vadd.f32 %v7400, 0.041655596
    %v7402 = vmul.f32 %v7399, %v7401
    %v7403 = vadd.f32 %v7402, -0.4999988
    %v7404 = vmul.f32 %v7399, %v7403
    %v7405 = vadd.f32 1.0, %v7404
    %v7406 = vmul.f32 %v7397, %v7397
    %v7407 = vmul.f32 %v7406, -0.00019511016
    %v7408 = vadd.f32 %v7407, 0.008332121
    %v7409 = vmul.f32 %v7406, %v7408
    %v7410 = vadd.f32 %v7409, -0.16666654
    %v7411 = vmul.f32 %v7406, %v7410
    %v7412 = vadd.f32 %v7411, 1.0
    %v7413 = vmul.f32 %v7412, %v7397
    %vm7414 = vweird.f32 %v1047
    %v7415 = vadd.s32 %v7398, 3
    %v7416 = vand.u32 %v7415, 3
    %vm7417 = vcmp.lt.s32.totalorder %v7416, 2
    %vm7418 = vcmp.eq.s32.totalorder %v7416, 0
    %v7419 = vxor.u32 %v7413, 2147483648
    %v7420 = vsel %vm7418, %v7405, %v7419
    %vm7421 = vcmp.eq.s32.totalorder %v7416, 2
    %v7422 = vxor.u32 %v7405, 2147483648
    %v7423 = vsel %vm7421, %v7422, %v7413
    %v7424 = vsel %vm7417, %v7420, %v7423
    %v7425 = vsel %vm7414, nan, %v7424
    %v7426 = vand.u32 2147483647, %v1048
    %vm7427 = vcmp.le.f32.partialorder %v7426, 0.7853982
    %vm7428 = vcmp.lt.s32.totalorder %v1048, 0
    %v7429 = vand.u32 %v1048, 2139095040
    %v7430 = vshrl.u32 %v7429, 23
    %v7431 = vsub.s32 %v7430, 127
    %v7432 = vand.u32 2147483647, %v1048
    %v7433 = vand.u32 %v7432, 8388607
    %v7434 = vor.u32 %v7433, 8388608
    %v7435 = vsub.s32 0, %v7434
    %v7436 = vadd.s32 %v7431, 1
    %vm7437 = vcmp.gt.s32.totalorder %v7436, 0
    %v7438 = vsel %vm7437, %v7436, 0
    %v7439 = vshrl.u32 %v7438, 5
    %v7440 = vand.u32 %v7438, 31
    %v7441 = vsub.s32 32, %v7440
    %v7442 = vshrl.u32 683565275, %v7441
    %v7443 = vshll.u32 683565275, %v7440
    %v7444 = vshrl.u32 2475754826, %v7441
    %v7445 = vor.u32 %v7443, %v7444
    %v7446 = vshll.u32 2475754826, %v7440
    %v7447 = vshrl.u32 2131351028, %v7441
    %v7448 = vor.u32 %v7446, %v7447
    %v7449 = vshll.u32 2131351028, %v7440
    %v7450 = vshrl.u32 2102212464, %v7441
    %v7451 = vor.u32 %v7449, %v7450
    %v7452 = vshll.u32 2102212464, %v7440
    %v7453 = vshrl.u32 920167782, %v7441
    %v7454 = vor.u32 %v7452, %v7453
    %v7455 = vshll.u32 920167782, %v7440
    %v7456 = vshrl.u32 1326507024, %v7441
    %v7457 = vor.u32 %v7455, %v7456
    %vm7458 = vcmp.lt.s32.totalorder %v7439, 1
    %vm7459 = vcmp.lt.s32.totalorder %v7439, 2
    %vm7460 = vcmp.lt.s32.totalorder %v7439, 3
    %vm7461 = vcmp.lt.s32.totalorder %v7439, 4
    %v7462 = vsel %vm7458, %v7442, %v7445
    %v7463 = vsel %vm7461, %v7451, 2102212464
    %v7464 = vsel %vm7460, %v7448, %v7463
    %v7465 = vsel %vm7459, %v7462, %v7464
    %v7466 = vsel %vm7458, %v7445, %v7448
    %v7467 = vsel %vm7461, %v7454, 920167782
    %v7468 = vsel %vm7460, %v7451, %v7467
    %v7469 = vsel %vm7459, %v7466, %v7468
    %v7470 = vsel %vm7458, %v7448, %v7451
    %v7471 = vsel %vm7461, %v7457, 1326507024
    %v7472 = vsel %vm7460, %v7454, %v7471
    %v7473 = vsel %vm7459, %v7470, %v7472
    %v7474 = vshll.u32 %v7434, 8
    %v7475 = vand.u32 %v7474, 65535
    %v7476 = vshrl.u32 %v7474, 16
    %v7477 = vand.u32 %v7473, 65535
    %v7478 = vshrl.u32 %v7473, 16
    %v7479 = vmul.u32 %v7475, %v7477
    %v7480 = vmul.u32 %v7475, %v7478
    %v7481 = vmul.u32 %v7476, %v7477
    %v7482 = vmul.u32 %v7476, %v7478
    %v7483 = vshll.u32 %v7480, 16
    %v7484 = vshrl.u32 %v7480, 16
    %v7485 = vshll.u32 %v7481, 16
    %v7486 = vshrl.u32 %v7481, 16
    %vm7487 = vc.u32 %v7479, %v7483
    %v7488 = vsel %vm7487, 1, 0
    %v7489 = vadd.s32 %v7479, %v7483
    %v7490 = vadd.s32 %v7482, %v7488
    %vm7491 = vc.u32 %v7489, %v7485
    %v7492 = vsel %vm7491, 1, 0
    %v7493 = vadd.s32 %v7489, %v7485
    %v7494 = vadd.s32 %v7490, %v7492
    %v7495 = vadd.s32 %v7494, %v7484
    %v7496 = vadd.s32 %v7495, %v7486
    %v7497 = vand.u32 %v7474, 65535
    %v7498 = vshrl.u32 %v7474, 16
    %v7499 = vand.u32 %v7469, 65535
    %v7500 = vshrl.u32 %v7469, 16
    %v7501 = vmul.u32 %v7497, %v7499
    %v7502 = vmul.u32 %v7497, %v7500
    %v7503 = vmul.u32 %v7498, %v7499
    %v7504 = vmul.u32 %v7498, %v7500
    %v7505 = vshll.u32 %v7502, 16
    %v7506 = vshrl.u32 %v7502, 16
    %v7507 = vshll.u32 %v7503, 16
    %v7508 = vshrl.u32 %v7503, 16
    %vm7509 = vc.u32 %v7501, %v7505
    %v7510 = vsel %vm7509, 1, 0
    %v7511 = vadd.s32 %v7501, %v7505
    %v7512 = vadd.s32 %v7504, %v7510
    %vm7513 = vc.u32 %v7511, %v7507
    %v7514 = vsel %vm7513, 1, 0
    %v7515 = vadd.s32 %v7511, %v7507
    %v7516 = vadd.s32 %v7512, %v7514
    %v7517 = vadd.s32 %v7516, %v7506
    %v7518 = vadd.s32 %v7517, %v7508
    %v7519 = vmul.u32 %v7474, %v7465
    %v7520 = vadd.s32 %v7496, %v7515
    %vm7521 = vc.u32 %v7496, %v7515
    %v7522 = vadd.s32 %v7518, 1
    %v7523 = vsel %vm7521, %v7522, %v7518
    %v7524 = vadd.s32 %v7519, %v7523
    %v7525 = vadd.s32 %v7524, 536870912
    %v7526 = vshrl.u32 %v7525, 30
    %v7527 = vshll.u32 %v7526, 30
    %v7528 = vsub.s32 %v7524, %v7527
    %vm7529 = vcmp.lt.s32.totalorder %v7528, 0
    %v7530 = vsub.s32 0, %v7528
    %v7531 = vsel %vm7529, %v7530, %v7528
    %v7532 = vclz %v7531
    %v7533 = vsub.s32 %v7532, 2
    %vm7534 = vcmp.gt.s32.totalorder 0, %v7533
    %v7535 = vsel %vm7534, 0, %v7533
    %v7536 = vsub.s32 32, %v7535
    %v7537 = vshll.u32 %v7528, %v7535
    %v7538 = vshrl.u32 %v7520, %v7536
    %v7539 = vor.u32 %v7537, %v7538
    %v7540 = vsub.s32 4294967266, %v7535
    %v7541 = vadd.s32 %v7540, 127
    %v7542 = vshll.u32 %v7541, 23
    %v7543 = vor.u32 4788187, %v7542
    %v7544 = vand.u32 2147483647, %v7543
    %v7546 = vcvt.s32.f32 %v7539
    %v7547 = vmul.f32 %v7546, %v7544
    %v7548 = vxor.u32 %v7547, 2147483648
    %v7549 = vsel %vm7428, %v7548, %v7547
    %v7550 = vsub.s32 4, %v7526
    %v7551 = vsel %vm7428, %v7550, %v7526
    %v7552 = vsel %vm7427, %v1048, %v7549
    %v7553 = vsel %vm7427, 0, %v7551
    %v7554 = vmul.f32 %v7552, %v7552
    %v7555 = vmul.f32 %v7554, -0.001358992
    %v7556 = vadd.f32 %v7555, 0.041655596
    %v7557 = vmul.f32 %v7554, %v7556
    %v7558 = vadd.f32 %v7557, -0.4999988
    %v7559 = vmul.f32 %v7554, %v7558
    %v7560 = vadd.f32 1.0, %v7559
    %v7561 = vmul.f32 %v7552, %v7552
    %v7562 = vmul.f32 %v7561, -0.00019511016
    %v7563 = vadd.f32 %v7562, 0.008332121
    %v7564 = vmul.f32 %v7561, %v7563
    %v7565 = vadd.f32 %v7564, -0.16666654
    %v7566 = vmul.f32 %v7561, %v7565
    %v7567 = vadd.f32 %v7566, 1.0
    %v7568 = vmul.f32 %v7567, %v7552
    %vm7569 = vweird.f32 %v1048
    %v7570 = vadd.s32 %v7553, 3
    %v7571 = vand.u32 %v7570, 3
    %vm7572 = vcmp.lt.s32.totalorder %v7571, 2
    %vm7573 = vcmp.eq.s32.totalorder %v7571, 0
    %v7574 = vxor.u32 %v7568, 2147483648
    %v7575 = vsel %vm7573, %v7560, %v7574
    %vm7576 = vcmp.eq.s32.totalorder %v7571, 2
    %v7577 = vxor.u32 %v7560, 2147483648
    %v7578 = vsel %vm7576, %v7577, %v7568
    %v7579 = vsel %vm7572, %v7575, %v7578
    %v7580 = vsel %vm7569, nan, %v7579
    %v7581 = vand.u32 2147483647, %v1049
    %vm7582 = vcmp.le.f32.partialorder %v7581, 0.7853982
    %vm7583 = vcmp.lt.s32.totalorder %v1049, 0
    %v7584 = vand.u32 %v1049, 2139095040
    %v7585 = vshrl.u32 %v7584, 23
    %v7586 = vsub.s32 %v7585, 127
    %v7587 = vand.u32 2147483647, %v1049
    %v7588 = vand.u32 %v7587, 8388607
    %v7589 = vor.u32 %v7588, 8388608
    %v7590 = vsub.s32 0, %v7589
    %v7591 = vadd.s32 %v7586, 1
    %vm7592 = vcmp.gt.s32.totalorder %v7591, 0
    %v7593 = vsel %vm7592, %v7591, 0
    %v7594 = vshrl.u32 %v7593, 5
    %v7595 = vand.u32 %v7593, 31
    %v7596 = vsub.s32 32, %v7595
    %v7597 = vshrl.u32 683565275, %v7596
    %v7598 = vshll.u32 683565275, %v7595
    %v7599 = vshrl.u32 2475754826, %v7596
    %v7600 = vor.u32 %v7598, %v7599
    %v7601 = vshll.u32 2475754826, %v7595
    %v7602 = vshrl.u32 2131351028, %v7596
    %v7603 = vor.u32 %v7601, %v7602
    %v7604 = vshll.u32 2131351028, %v7595
    %v7605 = vshrl.u32 2102212464, %v7596
    %v7606 = vor.u32 %v7604, %v7605
    %v7607 = vshll.u32 2102212464, %v7595
    %v7608 = vshrl.u32 920167782, %v7596
    %v7609 = vor.u32 %v7607, %v7608
    %v7610 = vshll.u32 920167782, %v7595
    %v7611 = vshrl.u32 1326507024, %v7596
    %v7612 = vor.u32 %v7610, %v7611
    %vm7613 = vcmp.lt.s32.totalorder %v7594, 1
    %vm7614 = vcmp.lt.s32.totalorder %v7594, 2
    %vm7615 = vcmp.lt.s32.totalorder %v7594, 3
    %vm7616 = vcmp.lt.s32.totalorder %v7594, 4
    %v7617 = vsel %vm7613, %v7597, %v7600
    %v7618 = vsel %vm7616, %v7606, 2102212464
    %v7619 = vsel %vm7615, %v7603, %v7618
    %v7620 = vsel %vm7614, %v7617, %v7619
    %v7621 = vsel %vm7613, %v7600, %v7603
    %v7622 = vsel %vm7616, %v7609, 920167782
    %v7623 = vsel %vm7615, %v7606, %v7622
    %v7624 = vsel %vm7614, %v7621, %v7623
    %v7625 = vsel %vm7613, %v7603, %v7606
    %v7626 = vsel %vm7616, %v7612, 1326507024
    %v7627 = vsel %vm7615, %v7609, %v7626
    %v7628 = vsel %vm7614, %v7625, %v7627
    %v7629 = vshll.u32 %v7589, 8
    %v7630 = vand.u32 %v7629, 65535
    %v7631 = vshrl.u32 %v7629, 16
    %v7632 = vand.u32 %v7628, 65535
    %v7633 = vshrl.u32 %v7628, 16
    %v7634 = vmul.u32 %v7630, %v7632
    %v7635 = vmul.u32 %v7630, %v7633
    %v7636 = vmul.u32 %v7631, %v7632
    %v7637 = vmul.u32 %v7631, %v7633
    %v7638 = vshll.u32 %v7635, 16
    %v7639 = vshrl.u32 %v7635, 16
    %v7640 = vshll.u32 %v7636, 16
    %v7641 = vshrl.u32 %v7636, 16
    %vm7642 = vc.u32 %v7634, %v7638
    %v7643 = vsel %vm7642, 1, 0
    %v7644 = vadd.s32 %v7634, %v7638
    %v7645 = vadd.s32 %v7637, %v7643
    %vm7646 = vc.u32 %v7644, %v7640
    %v7647 = vsel %vm7646, 1, 0
    %v7648 = vadd.s32 %v7644, %v7640
    %v7649 = vadd.s32 %v7645, %v7647
    %v7650 = vadd.s32 %v7649, %v7639
    %v7651 = vadd.s32 %v7650, %v7641
    %v7652 = vand.u32 %v7629, 65535
    %v7653 = vshrl.u32 %v7629, 16
    %v7654 = vand.u32 %v7624, 65535
    %v7655 = vshrl.u32 %v7624, 16
    %v7656 = vmul.u32 %v7652, %v7654
    %v7657 = vmul.u32 %v7652, %v7655
    %v7658 = vmul.u32 %v7653, %v7654
    %v7659 = vmul.u32 %v7653, %v7655
    %v7660 = vshll.u32 %v7657, 16
    %v7661 = vshrl.u32 %v7657, 16
    %v7662 = vshll.u32 %v7658, 16
    %v7663 = vshrl.u32 %v7658, 16
    %vm7664 = vc.u32 %v7656, %v7660
    %v7665 = vsel %vm7664, 1, 0
    %v7666 = vadd.s32 %v7656, %v7660
    %v7667 = vadd.s32 %v7659, %v7665
    %vm7668 = vc.u32 %v7666, %v7662
    %v7669 = vsel %vm7668, 1, 0
    %v7670 = vadd.s32 %v7666, %v7662
    %v7671 = vadd.s32 %v7667, %v7669
    %v7672 = vadd.s32 %v7671, %v7661
    %v7673 = vadd.s32 %v7672, %v7663
    %v7674 = vmul.u32 %v7629, %v7620
    %v7675 = vadd.s32 %v7651, %v7670
    %vm7676 = vc.u32 %v7651, %v7670
    %v7677 = vadd.s32 %v7673, 1
    %v7678 = vsel %vm7676, %v7677, %v7673
    %v7679 = vadd.s32 %v7674, %v7678
    %v7680 = vadd.s32 %v7679, 536870912
    %v7681 = vshrl.u32 %v7680, 30
    %v7682 = vshll.u32 %v7681, 30
    %v7683 = vsub.s32 %v7679, %v7682
    %vm7684 = vcmp.lt.s32.totalorder %v7683, 0
    %v7685 = vsub.s32 0, %v7683
    %v7686 = vsel %vm7684, %v7685, %v7683
    %v7687 = vclz %v7686
    %v7688 = vsub.s32 %v7687, 2
    %vm7689 = vcmp.gt.s32.totalorder 0, %v7688
    %v7690 = vsel %vm7689, 0, %v7688
    %v7691 = vsub.s32 32, %v7690
    %v7692 = vshll.u32 %v7683, %v7690
    %v7693 = vshrl.u32 %v7675, %v7691
    %v7694 = vor.u32 %v7692, %v7693
    %v7695 = vsub.s32 4294967266, %v7690
    %v7696 = vadd.s32 %v7695, 127
    %v7697 = vshll.u32 %v7696, 23
    %v7698 = vor.u32 4788187, %v7697
    %v7699 = vand.u32 2147483647, %v7698
    %v7701 = vcvt.s32.f32 %v7694
    %v7702 = vmul.f32 %v7701, %v7699
    %v7703 = vxor.u32 %v7702, 2147483648
    %v7704 = vsel %vm7583, %v7703, %v7702
    %v7705 = vsub.s32 4, %v7681
    %v7706 = vsel %vm7583, %v7705, %v7681
    %v7707 = vsel %vm7582, %v1049, %v7704
    %v7708 = vsel %vm7582, 0, %v7706
    %v7709 = vmul.f32 %v7707, %v7707
    %v7710 = vmul.f32 %v7709, -0.001358992
    %v7711 = vadd.f32 %v7710, 0.041655596
    %v7712 = vmul.f32 %v7709, %v7711
    %v7713 = vadd.f32 %v7712, -0.4999988
    %v7714 = vmul.f32 %v7709, %v7713
    %v7715 = vadd.f32 1.0, %v7714
    %v7716 = vmul.f32 %v7707, %v7707
    %v7717 = vmul.f32 %v7716, -0.00019511016
    %v7718 = vadd.f32 %v7717, 0.008332121
    %v7719 = vmul.f32 %v7716, %v7718
    %v7720 = vadd.f32 %v7719, -0.16666654
    %v7721 = vmul.f32 %v7716, %v7720
    %v7722 = vadd.f32 %v7721, 1.0
    %v7723 = vmul.f32 %v7722, %v7707
    %vm7724 = vweird.f32 %v1049
    %v7725 = vadd.s32 %v7708, 3
    %v7726 = vand.u32 %v7725, 3
    %vm7727 = vcmp.lt.s32.totalorder %v7726, 2
    %vm7728 = vcmp.eq.s32.totalorder %v7726, 0
    %v7729 = vxor.u32 %v7723, 2147483648
    %v7730 = vsel %vm7728, %v7715, %v7729
    %vm7731 = vcmp.eq.s32.totalorder %v7726, 2
    %v7732 = vxor.u32 %v7715, 2147483648
    %v7733 = vsel %vm7731, %v7732, %v7723
    %v7734 = vsel %vm7727, %v7730, %v7733
    %v7735 = vsel %vm7724, nan, %v7734
    %v7736 = vand.u32 2147483647, %v1050
    %vm7737 = vcmp.le.f32.partialorder %v7736, 0.7853982
    %vm7738 = vcmp.lt.s32.totalorder %v1050, 0
    %v7739 = vand.u32 %v1050, 2139095040
    %v7740 = vshrl.u32 %v7739, 23
    %v7741 = vsub.s32 %v7740, 127
    %v7742 = vand.u32 2147483647, %v1050
    %v7743 = vand.u32 %v7742, 8388607
    %v7744 = vor.u32 %v7743, 8388608
    %v7745 = vsub.s32 0, %v7744
    %v7746 = vadd.s32 %v7741, 1
    %vm7747 = vcmp.gt.s32.totalorder %v7746, 0
    %v7748 = vsel %vm7747, %v7746, 0
    %v7749 = vshrl.u32 %v7748, 5
    %v7750 = vand.u32 %v7748, 31
    %v7751 = vsub.s32 32, %v7750
    %v7752 = vshrl.u32 683565275, %v7751
    %v7753 = vshll.u32 683565275, %v7750
    %v7754 = vshrl.u32 2475754826, %v7751
    %v7755 = vor.u32 %v7753, %v7754
    %v7756 = vshll.u32 2475754826, %v7750
    %v7757 = vshrl.u32 2131351028, %v7751
    %v7758 = vor.u32 %v7756, %v7757
    %v7759 = vshll.u32 2131351028, %v7750
    %v7760 = vshrl.u32 2102212464, %v7751
    %v7761 = vor.u32 %v7759, %v7760
    %v7762 = vshll.u32 2102212464, %v7750
    %v7763 = vshrl.u32 920167782, %v7751
    %v7764 = vor.u32 %v7762, %v7763
    %v7765 = vshll.u32 920167782, %v7750
    %v7766 = vshrl.u32 1326507024, %v7751
    %v7767 = vor.u32 %v7765, %v7766
    %vm7768 = vcmp.lt.s32.totalorder %v7749, 1
    %vm7769 = vcmp.lt.s32.totalorder %v7749, 2
    %vm7770 = vcmp.lt.s32.totalorder %v7749, 3
    %vm7771 = vcmp.lt.s32.totalorder %v7749, 4
    %v7772 = vsel %vm7768, %v7752, %v7755
    %v7773 = vsel %vm7771, %v7761, 2102212464
    %v7774 = vsel %vm7770, %v7758, %v7773
    %v7775 = vsel %vm7769, %v7772, %v7774
    %v7776 = vsel %vm7768, %v7755, %v7758
    %v7777 = vsel %vm7771, %v7764, 920167782
    %v7778 = vsel %vm7770, %v7761, %v7777
    %v7779 = vsel %vm7769, %v7776, %v7778
    %v7780 = vsel %vm7768, %v7758, %v7761
    %v7781 = vsel %vm7771, %v7767, 1326507024
    %v7782 = vsel %vm7770, %v7764, %v7781
    %v7783 = vsel %vm7769, %v7780, %v7782
    %v7784 = vshll.u32 %v7744, 8
    %v7785 = vand.u32 %v7784, 65535
    %v7786 = vshrl.u32 %v7784, 16
    %v7787 = vand.u32 %v7783, 65535
    %v7788 = vshrl.u32 %v7783, 16
    %v7789 = vmul.u32 %v7785, %v7787
    %v7790 = vmul.u32 %v7785, %v7788
    %v7791 = vmul.u32 %v7786, %v7787
    %v7792 = vmul.u32 %v7786, %v7788
    %v7793 = vshll.u32 %v7790, 16
    %v7794 = vshrl.u32 %v7790, 16
    %v7795 = vshll.u32 %v7791, 16
    %v7796 = vshrl.u32 %v7791, 16
    %vm7797 = vc.u32 %v7789, %v7793
    %v7798 = vsel %vm7797, 1, 0
    %v7799 = vadd.s32 %v7789, %v7793
    %v7800 = vadd.s32 %v7792, %v7798
    %vm7801 = vc.u32 %v7799, %v7795
    %v7802 = vsel %vm7801, 1, 0
    %v7803 = vadd.s32 %v7799, %v7795
    %v7804 = vadd.s32 %v7800, %v7802
    %v7805 = vadd.s32 %v7804, %v7794
    %v7806 = vadd.s32 %v7805, %v7796
    %v7807 = vand.u32 %v7784, 65535
    %v7808 = vshrl.u32 %v7784, 16
    %v7809 = vand.u32 %v7779, 65535
    %v7810 = vshrl.u32 %v7779, 16
    %v7811 = vmul.u32 %v7807, %v7809
    %v7812 = vmul.u32 %v7807, %v7810
    %v7813 = vmul.u32 %v7808, %v7809
    %v7814 = vmul.u32 %v7808, %v7810
    %v7815 = vshll.u32 %v7812, 16
    %v7816 = vshrl.u32 %v7812, 16
    %v7817 = vshll.u32 %v7813, 16
    %v7818 = vshrl.u32 %v7813, 16
    %vm7819 = vc.u32 %v7811, %v7815
    %v7820 = vsel %vm7819, 1, 0
    %v7821 = vadd.s32 %v7811, %v7815
    %v7822 = vadd.s32 %v7814, %v7820
    %vm7823 = vc.u32 %v7821, %v7817
    %v7824 = vsel %vm7823, 1, 0
    %v7825 = vadd.s32 %v7821, %v7817
    %v7826 = vadd.s32 %v7822, %v7824
    %v7827 = vadd.s32 %v7826, %v7816
    %v7828 = vadd.s32 %v7827, %v7818
    %v7829 = vmul.u32 %v7784, %v7775
    %v7830 = vadd.s32 %v7806, %v7825
    %vm7831 = vc.u32 %v7806, %v7825
    %v7832 = vadd.s32 %v7828, 1
    %v7833 = vsel %vm7831, %v7832, %v7828
    %v7834 = vadd.s32 %v7829, %v7833
    %v7835 = vadd.s32 %v7834, 536870912
    %v7836 = vshrl.u32 %v7835, 30
    %v7837 = vshll.u32 %v7836, 30
    %v7838 = vsub.s32 %v7834, %v7837
    %vm7839 = vcmp.lt.s32.totalorder %v7838, 0
    %v7840 = vsub.s32 0, %v7838
    %v7841 = vsel %vm7839, %v7840, %v7838
    %v7842 = vclz %v7841
    %v7843 = vsub.s32 %v7842, 2
    %vm7844 = vcmp.gt.s32.totalorder 0, %v7843
    %v7845 = vsel %vm7844, 0, %v7843
    %v7846 = vsub.s32 32, %v7845
    %v7847 = vshll.u32 %v7838, %v7845
    %v7848 = vshrl.u32 %v7830, %v7846
    %v7849 = vor.u32 %v7847, %v7848
    %v7850 = vsub.s32 4294967266, %v7845
    %v7851 = vadd.s32 %v7850, 127
    %v7852 = vshll.u32 %v7851, 23
    %v7853 = vor.u32 4788187, %v7852
    %v7854 = vand.u32 2147483647, %v7853
    %v7856 = vcvt.s32.f32 %v7849
    %v7857 = vmul.f32 %v7856, %v7854
    %v7858 = vxor.u32 %v7857, 2147483648
    %v7859 = vsel %vm7738, %v7858, %v7857
    %v7860 = vsub.s32 4, %v7836
    %v7861 = vsel %vm7738, %v7860, %v7836
    %v7862 = vsel %vm7737, %v1050, %v7859
    %v7863 = vsel %vm7737, 0, %v7861
    %v7864 = vmul.f32 %v7862, %v7862
    %v7865 = vmul.f32 %v7864, -0.001358992
    %v7866 = vadd.f32 %v7865, 0.041655596
    %v7867 = vmul.f32 %v7864, %v7866
    %v7868 = vadd.f32 %v7867, -0.4999988
    %v7869 = vmul.f32 %v7864, %v7868
    %v7870 = vadd.f32 1.0, %v7869
    %v7871 = vmul.f32 %v7862, %v7862
    %v7872 = vmul.f32 %v7871, -0.00019511016
    %v7873 = vadd.f32 %v7872, 0.008332121
    %v7874 = vmul.f32 %v7871, %v7873
    %v7875 = vadd.f32 %v7874, -0.16666654
    %v7876 = vmul.f32 %v7871, %v7875
    %v7877 = vadd.f32 %v7876, 1.0
    %v7878 = vmul.f32 %v7877, %v7862
    %vm7879 = vweird.f32 %v1050
    %v7880 = vadd.s32 %v7863, 3
    %v7881 = vand.u32 %v7880, 3
    %vm7882 = vcmp.lt.s32.totalorder %v7881, 2
    %vm7883 = vcmp.eq.s32.totalorder %v7881, 0
    %v7884 = vxor.u32 %v7878, 2147483648
    %v7885 = vsel %vm7883, %v7870, %v7884
    %vm7886 = vcmp.eq.s32.totalorder %v7881, 2
    %v7887 = vxor.u32 %v7870, 2147483648
    %v7888 = vsel %vm7886, %v7887, %v7878
    %v7889 = vsel %vm7882, %v7885, %v7888
    %v7890 = vsel %vm7879, nan, %v7889
    %v7891 = vand.u32 2147483647, %v1051
    %vm7892 = vcmp.le.f32.partialorder %v7891, 0.7853982
    %vm7893 = vcmp.lt.s32.totalorder %v1051, 0
    %v7894 = vand.u32 %v1051, 2139095040
    %v7895 = vshrl.u32 %v7894, 23
    %v7896 = vsub.s32 %v7895, 127
    %v7897 = vand.u32 2147483647, %v1051
    %v7898 = vand.u32 %v7897, 8388607
    %v7899 = vor.u32 %v7898, 8388608
    %v7900 = vsub.s32 0, %v7899
    %v7901 = vadd.s32 %v7896, 1
    %vm7902 = vcmp.gt.s32.totalorder %v7901, 0
    %v7903 = vsel %vm7902, %v7901, 0
    %v7904 = vshrl.u32 %v7903, 5
    %v7905 = vand.u32 %v7903, 31
    %v7906 = vsub.s32 32, %v7905
    %v7907 = vshrl.u32 683565275, %v7906
    %v7908 = vshll.u32 683565275, %v7905
    %v7909 = vshrl.u32 2475754826, %v7906
    %v7910 = vor.u32 %v7908, %v7909
    %v7911 = vshll.u32 2475754826, %v7905
    %v7912 = vshrl.u32 2131351028, %v7906
    %v7913 = vor.u32 %v7911, %v7912
    %v7914 = vshll.u32 2131351028, %v7905
    %v7915 = vshrl.u32 2102212464, %v7906
    %v7916 = vor.u32 %v7914, %v7915
    %v7917 = vshll.u32 2102212464, %v7905
    %v7918 = vshrl.u32 920167782, %v7906
    %v7919 = vor.u32 %v7917, %v7918
    %v7920 = vshll.u32 920167782, %v7905
    %v7921 = vshrl.u32 1326507024, %v7906
    %v7922 = vor.u32 %v7920, %v7921
    %vm7923 = vcmp.lt.s32.totalorder %v7904, 1
    %vm7924 = vcmp.lt.s32.totalorder %v7904, 2
    %vm7925 = vcmp.lt.s32.totalorder %v7904, 3
    %vm7926 = vcmp.lt.s32.totalorder %v7904, 4
    %v7927 = vsel %vm7923, %v7907, %v7910
    %v7928 = vsel %vm7926, %v7916, 2102212464
    %v7929 = vsel %vm7925, %v7913, %v7928
    %v7930 = vsel %vm7924, %v7927, %v7929
    %v7931 = vsel %vm7923, %v7910, %v7913
    %v7932 = vsel %vm7926, %v7919, 920167782
    %v7933 = vsel %vm7925, %v7916, %v7932
    %v7934 = vsel %vm7924, %v7931, %v7933
    %v7935 = vsel %vm7923, %v7913, %v7916
    %v7936 = vsel %vm7926, %v7922, 1326507024
    %v7937 = vsel %vm7925, %v7919, %v7936
    %v7938 = vsel %vm7924, %v7935, %v7937
    %v7939 = vshll.u32 %v7899, 8
    %v7940 = vand.u32 %v7939, 65535
    %v7941 = vshrl.u32 %v7939, 16
    %v7942 = vand.u32 %v7938, 65535
    %v7943 = vshrl.u32 %v7938, 16
    %v7944 = vmul.u32 %v7940, %v7942
    %v7945 = vmul.u32 %v7940, %v7943
    %v7946 = vmul.u32 %v7941, %v7942
    %v7947 = vmul.u32 %v7941, %v7943
    %v7948 = vshll.u32 %v7945, 16
    %v7949 = vshrl.u32 %v7945, 16
    %v7950 = vshll.u32 %v7946, 16
    %v7951 = vshrl.u32 %v7946, 16
    %vm7952 = vc.u32 %v7944, %v7948
    %v7953 = vsel %vm7952, 1, 0
    %v7954 = vadd.s32 %v7944, %v7948
    %v7955 = vadd.s32 %v7947, %v7953
    %vm7956 = vc.u32 %v7954, %v7950
    %v7957 = vsel %vm7956, 1, 0
    %v7958 = vadd.s32 %v7954, %v7950
    %v7959 = vadd.s32 %v7955, %v7957
    %v7960 = vadd.s32 %v7959, %v7949
    %v7961 = vadd.s32 %v7960, %v7951
    %v7962 = vand.u32 %v7939, 65535
    %v7963 = vshrl.u32 %v7939, 16
    %v7964 = vand.u32 %v7934, 65535
    %v7965 = vshrl.u32 %v7934, 16
    %v7966 = vmul.u32 %v7962, %v7964
    %v7967 = vmul.u32 %v7962, %v7965
    %v7968 = vmul.u32 %v7963, %v7964
    %v7969 = vmul.u32 %v7963, %v7965
    %v7970 = vshll.u32 %v7967, 16
    %v7971 = vshrl.u32 %v7967, 16
    %v7972 = vshll.u32 %v7968, 16
    %v7973 = vshrl.u32 %v7968, 16
    %vm7974 = vc.u32 %v7966, %v7970
    %v7975 = vsel %vm7974, 1, 0
    %v7976 = vadd.s32 %v7966, %v7970
    %v7977 = vadd.s32 %v7969, %v7975
    %vm7978 = vc.u32 %v7976, %v7972
    %v7979 = vsel %vm7978, 1, 0
    %v7980 = vadd.s32 %v7976, %v7972
    %v7981 = vadd.s32 %v7977, %v7979
    %v7982 = vadd.s32 %v7981, %v7971
    %v7983 = vadd.s32 %v7982, %v7973
    %v7984 = vmul.u32 %v7939, %v7930
    %v7985 = vadd.s32 %v7961, %v7980
    %vm7986 = vc.u32 %v7961, %v7980
    %v7987 = vadd.s32 %v7983, 1
    %v7988 = vsel %vm7986, %v7987, %v7983
    %v7989 = vadd.s32 %v7984, %v7988
    %v7990 = vadd.s32 %v7989, 536870912
    %v7991 = vshrl.u32 %v7990, 30
    %v7992 = vshll.u32 %v7991, 30
    %v7993 = vsub.s32 %v7989, %v7992
    %vm7994 = vcmp.lt.s32.totalorder %v7993, 0
    %v7995 = vsub.s32 0, %v7993
    %v7996 = vsel %vm7994, %v7995, %v7993
    %v7997 = vclz %v7996
    %v7998 = vsub.s32 %v7997, 2
    %vm7999 = vcmp.gt.s32.totalorder 0, %v7998
    %v8000 = vsel %vm7999, 0, %v7998
    %v8001 = vsub.s32 32, %v8000
    %v8002 = vshll.u32 %v7993, %v8000
    %v8003 = vshrl.u32 %v7985, %v8001
    %v8004 = vor.u32 %v8002, %v8003
    %v8005 = vsub.s32 4294967266, %v8000
    %v8006 = vadd.s32 %v8005, 127
    %v8007 = vshll.u32 %v8006, 23
    %v8008 = vor.u32 4788187, %v8007
    %v8009 = vand.u32 2147483647, %v8008
    %v8011 = vcvt.s32.f32 %v8004
    %v8012 = vmul.f32 %v8011, %v8009
    %v8013 = vxor.u32 %v8012, 2147483648
    %v8014 = vsel %vm7893, %v8013, %v8012
    %v8015 = vsub.s32 4, %v7991
    %v8016 = vsel %vm7893, %v8015, %v7991
    %v8017 = vsel %vm7892, %v1051, %v8014
    %v8018 = vsel %vm7892, 0, %v8016
    %v8019 = vmul.f32 %v8017, %v8017
    %v8020 = vmul.f32 %v8019, -0.001358992
    %v8021 = vadd.f32 %v8020, 0.041655596
    %v8022 = vmul.f32 %v8019, %v8021
    %v8023 = vadd.f32 %v8022, -0.4999988
    %v8024 = vmul.f32 %v8019, %v8023
    %v8025 = vadd.f32 1.0, %v8024
    %v8026 = vmul.f32 %v8017, %v8017
    %v8027 = vmul.f32 %v8026, -0.00019511016
    %v8028 = vadd.f32 %v8027, 0.008332121
    %v8029 = vmul.f32 %v8026, %v8028
    %v8030 = vadd.f32 %v8029, -0.16666654
    %v8031 = vmul.f32 %v8026, %v8030
    %v8032 = vadd.f32 %v8031, 1.0
    %v8033 = vmul.f32 %v8032, %v8017
    %vm8034 = vweird.f32 %v1051
    %v8035 = vadd.s32 %v8018, 3
    %v8036 = vand.u32 %v8035, 3
    %vm8037 = vcmp.lt.s32.totalorder %v8036, 2
    %vm8038 = vcmp.eq.s32.totalorder %v8036, 0
    %v8039 = vxor.u32 %v8033, 2147483648
    %v8040 = vsel %vm8038, %v8025, %v8039
    %vm8041 = vcmp.eq.s32.totalorder %v8036, 2
    %v8042 = vxor.u32 %v8025, 2147483648
    %v8043 = vsel %vm8041, %v8042, %v8033
    %v8044 = vsel %vm8037, %v8040, %v8043
    %v8045 = vsel %vm8034, nan, %v8044
    %v8046 = vand.u32 2147483647, %v1052
    %vm8047 = vcmp.le.f32.partialorder %v8046, 0.7853982
    %vm8048 = vcmp.lt.s32.totalorder %v1052, 0
    %v8049 = vand.u32 %v1052, 2139095040
    %v8050 = vshrl.u32 %v8049, 23
    %v8051 = vsub.s32 %v8050, 127
    %v8052 = vand.u32 2147483647, %v1052
    %v8053 = vand.u32 %v8052, 8388607
    %v8054 = vor.u32 %v8053, 8388608
    %v8055 = vsub.s32 0, %v8054
    %v8056 = vadd.s32 %v8051, 1
    %vm8057 = vcmp.gt.s32.totalorder %v8056, 0
    %v8058 = vsel %vm8057, %v8056, 0
    %v8059 = vshrl.u32 %v8058, 5
    %v8060 = vand.u32 %v8058, 31
    %v8061 = vsub.s32 32, %v8060
    %v8062 = vshrl.u32 683565275, %v8061
    %v8063 = vshll.u32 683565275, %v8060
    %v8064 = vshrl.u32 2475754826, %v8061
    %v8065 = vor.u32 %v8063, %v8064
    %v8066 = vshll.u32 2475754826, %v8060
    %v8067 = vshrl.u32 2131351028, %v8061
    %v8068 = vor.u32 %v8066, %v8067
    %v8069 = vshll.u32 2131351028, %v8060
    %v8070 = vshrl.u32 2102212464, %v8061
    %v8071 = vor.u32 %v8069, %v8070
    %v8072 = vshll.u32 2102212464, %v8060
    %v8073 = vshrl.u32 920167782, %v8061
    %v8074 = vor.u32 %v8072, %v8073
    %v8075 = vshll.u32 920167782, %v8060
    %v8076 = vshrl.u32 1326507024, %v8061
    %v8077 = vor.u32 %v8075, %v8076
    %vm8078 = vcmp.lt.s32.totalorder %v8059, 1
    %vm8079 = vcmp.lt.s32.totalorder %v8059, 2
    %vm8080 = vcmp.lt.s32.totalorder %v8059, 3
    %vm8081 = vcmp.lt.s32.totalorder %v8059, 4
    %v8082 = vsel %vm8078, %v8062, %v8065
    %v8083 = vsel %vm8081, %v8071, 2102212464
    %v8084 = vsel %vm8080, %v8068, %v8083
    %v8085 = vsel %vm8079, %v8082, %v8084
    %v8086 = vsel %vm8078, %v8065, %v8068
    %v8087 = vsel %vm8081, %v8074, 920167782
    %v8088 = vsel %vm8080, %v8071, %v8087
    %v8089 = vsel %vm8079, %v8086, %v8088
    %v8090 = vsel %vm8078, %v8068, %v8071
    %v8091 = vsel %vm8081, %v8077, 1326507024
    %v8092 = vsel %vm8080, %v8074, %v8091
    %v8093 = vsel %vm8079, %v8090, %v8092
    %v8094 = vshll.u32 %v8054, 8
    %v8095 = vand.u32 %v8094, 65535
    %v8096 = vshrl.u32 %v8094, 16
    %v8097 = vand.u32 %v8093, 65535
    %v8098 = vshrl.u32 %v8093, 16
    %v8099 = vmul.u32 %v8095, %v8097
    %v8100 = vmul.u32 %v8095, %v8098
    %v8101 = vmul.u32 %v8096, %v8097
    %v8102 = vmul.u32 %v8096, %v8098
    %v8103 = vshll.u32 %v8100, 16
    %v8104 = vshrl.u32 %v8100, 16
    %v8105 = vshll.u32 %v8101, 16
    %v8106 = vshrl.u32 %v8101, 16
    %vm8107 = vc.u32 %v8099, %v8103
    %v8108 = vsel %vm8107, 1, 0
    %v8109 = vadd.s32 %v8099, %v8103
    %v8110 = vadd.s32 %v8102, %v8108
    %vm8111 = vc.u32 %v8109, %v8105
    %v8112 = vsel %vm8111, 1, 0
    %v8113 = vadd.s32 %v8109, %v8105
    %v8114 = vadd.s32 %v8110, %v8112
    %v8115 = vadd.s32 %v8114, %v8104
    %v8116 = vadd.s32 %v8115, %v8106
    %v8117 = vand.u32 %v8094, 65535
    %v8118 = vshrl.u32 %v8094, 16
    %v8119 = vand.u32 %v8089, 65535
    %v8120 = vshrl.u32 %v8089, 16
    %v8121 = vmul.u32 %v8117, %v8119
    %v8122 = vmul.u32 %v8117, %v8120
    %v8123 = vmul.u32 %v8118, %v8119
    %v8124 = vmul.u32 %v8118, %v8120
    %v8125 = vshll.u32 %v8122, 16
    %v8126 = vshrl.u32 %v8122, 16
    %v8127 = vshll.u32 %v8123, 16
    %v8128 = vshrl.u32 %v8123, 16
    %vm8129 = vc.u32 %v8121, %v8125
    %v8130 = vsel %vm8129, 1, 0
    %v8131 = vadd.s32 %v8121, %v8125
    %v8132 = vadd.s32 %v8124, %v8130
    %vm8133 = vc.u32 %v8131, %v8127
    %v8134 = vsel %vm8133, 1, 0
    %v8135 = vadd.s32 %v8131, %v8127
    %v8136 = vadd.s32 %v8132, %v8134
    %v8137 = vadd.s32 %v8136, %v8126
    %v8138 = vadd.s32 %v8137, %v8128
    %v8139 = vmul.u32 %v8094, %v8085
    %v8140 = vadd.s32 %v8116, %v8135
    %vm8141 = vc.u32 %v8116, %v8135
    %v8142 = vadd.s32 %v8138, 1
    %v8143 = vsel %vm8141, %v8142, %v8138
    %v8144 = vadd.s32 %v8139, %v8143
    %v8145 = vadd.s32 %v8144, 536870912
    %v8146 = vshrl.u32 %v8145, 30
    %v8147 = vshll.u32 %v8146, 30
    %v8148 = vsub.s32 %v8144, %v8147
    %vm8149 = vcmp.lt.s32.totalorder %v8148, 0
    %v8150 = vsub.s32 0, %v8148
    %v8151 = vsel %vm8149, %v8150, %v8148
    %v8152 = vclz %v8151
    %v8153 = vsub.s32 %v8152, 2
    %vm8154 = vcmp.gt.s32.totalorder 0, %v8153
    %v8155 = vsel %vm8154, 0, %v8153
    %v8156 = vsub.s32 32, %v8155
    %v8157 = vshll.u32 %v8148, %v8155
    %v8158 = vshrl.u32 %v8140, %v8156
    %v8159 = vor.u32 %v8157, %v8158
    %v8160 = vsub.s32 4294967266, %v8155
    %v8161 = vadd.s32 %v8160, 127
    %v8162 = vshll.u32 %v8161, 23
    %v8163 = vor.u32 4788187, %v8162
    %v8164 = vand.u32 2147483647, %v8163
    %v8166 = vcvt.s32.f32 %v8159
    %v8167 = vmul.f32 %v8166, %v8164
    %v8168 = vxor.u32 %v8167, 2147483648
    %v8169 = vsel %vm8048, %v8168, %v8167
    %v8170 = vsub.s32 4, %v8146
    %v8171 = vsel %vm8048, %v8170, %v8146
    %v8172 = vsel %vm8047, %v1052, %v8169
    %v8173 = vsel %vm8047, 0, %v8171
    %v8174 = vmul.f32 %v8172, %v8172
    %v8175 = vmul.f32 %v8174, -0.001358992
    %v8176 = vadd.f32 %v8175, 0.041655596
    %v8177 = vmul.f32 %v8174, %v8176
    %v8178 = vadd.f32 %v8177, -0.4999988
    %v8179 = vmul.f32 %v8174, %v8178
    %v8180 = vadd.f32 1.0, %v8179
    %v8181 = vmul.f32 %v8172, %v8172
    %v8182 = vmul.f32 %v8181, -0.00019511016
    %v8183 = vadd.f32 %v8182, 0.008332121
    %v8184 = vmul.f32 %v8181, %v8183
    %v8185 = vadd.f32 %v8184, -0.16666654
    %v8186 = vmul.f32 %v8181, %v8185
    %v8187 = vadd.f32 %v8186, 1.0
    %v8188 = vmul.f32 %v8187, %v8172
    %vm8189 = vweird.f32 %v1052
    %v8190 = vadd.s32 %v8173, 3
    %v8191 = vand.u32 %v8190, 3
    %vm8192 = vcmp.lt.s32.totalorder %v8191, 2
    %vm8193 = vcmp.eq.s32.totalorder %v8191, 0
    %v8194 = vxor.u32 %v8188, 2147483648
    %v8195 = vsel %vm8193, %v8180, %v8194
    %vm8196 = vcmp.eq.s32.totalorder %v8191, 2
    %v8197 = vxor.u32 %v8180, 2147483648
    %v8198 = vsel %vm8196, %v8197, %v8188
    %v8199 = vsel %vm8192, %v8195, %v8198
    %v8200 = vsel %vm8189, nan, %v8199
    %v8201 = vand.u32 2147483647, %v1053
    %vm8202 = vcmp.le.f32.partialorder %v8201, 0.7853982
    %vm8203 = vcmp.lt.s32.totalorder %v1053, 0
    %v8204 = vand.u32 %v1053, 2139095040
    %v8205 = vshrl.u32 %v8204, 23
    %v8206 = vsub.s32 %v8205, 127
    %v8207 = vand.u32 2147483647, %v1053
    %v8208 = vand.u32 %v8207, 8388607
    %v8209 = vor.u32 %v8208, 8388608
    %v8210 = vsub.s32 0, %v8209
    %v8211 = vadd.s32 %v8206, 1
    %vm8212 = vcmp.gt.s32.totalorder %v8211, 0
    %v8213 = vsel %vm8212, %v8211, 0
    %v8214 = vshrl.u32 %v8213, 5
    %v8215 = vand.u32 %v8213, 31
    %v8216 = vsub.s32 32, %v8215
    %v8217 = vshrl.u32 683565275, %v8216
    %v8218 = vshll.u32 683565275, %v8215
    %v8219 = vshrl.u32 2475754826, %v8216
    %v8220 = vor.u32 %v8218, %v8219
    %v8221 = vshll.u32 2475754826, %v8215
    %v8222 = vshrl.u32 2131351028, %v8216
    %v8223 = vor.u32 %v8221, %v8222
    %v8224 = vshll.u32 2131351028, %v8215
    %v8225 = vshrl.u32 2102212464, %v8216
    %v8226 = vor.u32 %v8224, %v8225
    %v8227 = vshll.u32 2102212464, %v8215
    %v8228 = vshrl.u32 920167782, %v8216
    %v8229 = vor.u32 %v8227, %v8228
    %v8230 = vshll.u32 920167782, %v8215
    %v8231 = vshrl.u32 1326507024, %v8216
    %v8232 = vor.u32 %v8230, %v8231
    %vm8233 = vcmp.lt.s32.totalorder %v8214, 1
    %vm8234 = vcmp.lt.s32.totalorder %v8214, 2
    %vm8235 = vcmp.lt.s32.totalorder %v8214, 3
    %vm8236 = vcmp.lt.s32.totalorder %v8214, 4
    %v8237 = vsel %vm8233, %v8217, %v8220
    %v8238 = vsel %vm8236, %v8226, 2102212464
    %v8239 = vsel %vm8235, %v8223, %v8238
    %v8240 = vsel %vm8234, %v8237, %v8239
    %v8241 = vsel %vm8233, %v8220, %v8223
    %v8242 = vsel %vm8236, %v8229, 920167782
    %v8243 = vsel %vm8235, %v8226, %v8242
    %v8244 = vsel %vm8234, %v8241, %v8243
    %v8245 = vsel %vm8233, %v8223, %v8226
    %v8246 = vsel %vm8236, %v8232, 1326507024
    %v8247 = vsel %vm8235, %v8229, %v8246
    %v8248 = vsel %vm8234, %v8245, %v8247
    %v8249 = vshll.u32 %v8209, 8
    %v8250 = vand.u32 %v8249, 65535
    %v8251 = vshrl.u32 %v8249, 16
    %v8252 = vand.u32 %v8248, 65535
    %v8253 = vshrl.u32 %v8248, 16
    %v8254 = vmul.u32 %v8250, %v8252
    %v8255 = vmul.u32 %v8250, %v8253
    %v8256 = vmul.u32 %v8251, %v8252
    %v8257 = vmul.u32 %v8251, %v8253
    %v8258 = vshll.u32 %v8255, 16
    %v8259 = vshrl.u32 %v8255, 16
    %v8260 = vshll.u32 %v8256, 16
    %v8261 = vshrl.u32 %v8256, 16
    %vm8262 = vc.u32 %v8254, %v8258
    %v8263 = vsel %vm8262, 1, 0
    %v8264 = vadd.s32 %v8254, %v8258
    %v8265 = vadd.s32 %v8257, %v8263
    %vm8266 = vc.u32 %v8264, %v8260
    %v8267 = vsel %vm8266, 1, 0
    %v8268 = vadd.s32 %v8264, %v8260
    %v8269 = vadd.s32 %v8265, %v8267
    %v8270 = vadd.s32 %v8269, %v8259
    %v8271 = vadd.s32 %v8270, %v8261
    %v8272 = vand.u32 %v8249, 65535
    %v8273 = vshrl.u32 %v8249, 16
    %v8274 = vand.u32 %v8244, 65535
    %v8275 = vshrl.u32 %v8244, 16
    %v8276 = vmul.u32 %v8272, %v8274
    %v8277 = vmul.u32 %v8272, %v8275
    %v8278 = vmul.u32 %v8273, %v8274
    %v8279 = vmul.u32 %v8273, %v8275
    %v8280 = vshll.u32 %v8277, 16
    %v8281 = vshrl.u32 %v8277, 16
    %v8282 = vshll.u32 %v8278, 16
    %v8283 = vshrl.u32 %v8278, 16
    %vm8284 = vc.u32 %v8276, %v8280
    %v8285 = vsel %vm8284, 1, 0
    %v8286 = vadd.s32 %v8276, %v8280
    %v8287 = vadd.s32 %v8279, %v8285
    %vm8288 = vc.u32 %v8286, %v8282
    %v8289 = vsel %vm8288, 1, 0
    %v8290 = vadd.s32 %v8286, %v8282
    %v8291 = vadd.s32 %v8287, %v8289
    %v8292 = vadd.s32 %v8291, %v8281
    %v8293 = vadd.s32 %v8292, %v8283
    %v8294 = vmul.u32 %v8249, %v8240
    %v8295 = vadd.s32 %v8271, %v8290
    %vm8296 = vc.u32 %v8271, %v8290
    %v8297 = vadd.s32 %v8293, 1
    %v8298 = vsel %vm8296, %v8297, %v8293
    %v8299 = vadd.s32 %v8294, %v8298
    %v8300 = vadd.s32 %v8299, 536870912
    %v8301 = vshrl.u32 %v8300, 30
    %v8302 = vshll.u32 %v8301, 30
    %v8303 = vsub.s32 %v8299, %v8302
    %vm8304 = vcmp.lt.s32.totalorder %v8303, 0
    %v8305 = vsub.s32 0, %v8303
    %v8306 = vsel %vm8304, %v8305, %v8303
    %v8307 = vclz %v8306
    %v8308 = vsub.s32 %v8307, 2
    %vm8309 = vcmp.gt.s32.totalorder 0, %v8308
    %v8310 = vsel %vm8309, 0, %v8308
    %v8311 = vsub.s32 32, %v8310
    %v8312 = vshll.u32 %v8303, %v8310
    %v8313 = vshrl.u32 %v8295, %v8311
    %v8314 = vor.u32 %v8312, %v8313
    %v8315 = vsub.s32 4294967266, %v8310
    %v8316 = vadd.s32 %v8315, 127
    %v8317 = vshll.u32 %v8316, 23
    %v8318 = vor.u32 4788187, %v8317
    %v8319 = vand.u32 2147483647, %v8318
    %v8321 = vcvt.s32.f32 %v8314
    %v8322 = vmul.f32 %v8321, %v8319
    %v8323 = vxor.u32 %v8322, 2147483648
    %v8324 = vsel %vm8203, %v8323, %v8322
    %v8325 = vsub.s32 4, %v8301
    %v8326 = vsel %vm8203, %v8325, %v8301
    %v8327 = vsel %vm8202, %v1053, %v8324
    %v8328 = vsel %vm8202, 0, %v8326
    %v8329 = vmul.f32 %v8327, %v8327
    %v8330 = vmul.f32 %v8329, -0.001358992
    %v8331 = vadd.f32 %v8330, 0.041655596
    %v8332 = vmul.f32 %v8329, %v8331
    %v8333 = vadd.f32 %v8332, -0.4999988
    %v8334 = vmul.f32 %v8329, %v8333
    %v8335 = vadd.f32 1.0, %v8334
    %v8336 = vmul.f32 %v8327, %v8327
    %v8337 = vmul.f32 %v8336, -0.00019511016
    %v8338 = vadd.f32 %v8337, 0.008332121
    %v8339 = vmul.f32 %v8336, %v8338
    %v8340 = vadd.f32 %v8339, -0.16666654
    %v8341 = vmul.f32 %v8336, %v8340
    %v8342 = vadd.f32 %v8341, 1.0
    %v8343 = vmul.f32 %v8342, %v8327
    %vm8344 = vweird.f32 %v1053
    %v8345 = vadd.s32 %v8328, 3
    %v8346 = vand.u32 %v8345, 3
    %vm8347 = vcmp.lt.s32.totalorder %v8346, 2
    %vm8348 = vcmp.eq.s32.totalorder %v8346, 0
    %v8349 = vxor.u32 %v8343, 2147483648
    %v8350 = vsel %vm8348, %v8335, %v8349
    %vm8351 = vcmp.eq.s32.totalorder %v8346, 2
    %v8352 = vxor.u32 %v8335, 2147483648
    %v8353 = vsel %vm8351, %v8352, %v8343
    %v8354 = vsel %vm8347, %v8350, %v8353
    %v8355 = vsel %vm8344, nan, %v8354
    %v8356 = vand.u32 2147483647, %v1054
    %vm8357 = vcmp.le.f32.partialorder %v8356, 0.7853982
    %vm8358 = vcmp.lt.s32.totalorder %v1054, 0
    %v8359 = vand.u32 %v1054, 2139095040
    %v8360 = vshrl.u32 %v8359, 23
    %v8361 = vsub.s32 %v8360, 127
    %v8362 = vand.u32 2147483647, %v1054
    %v8363 = vand.u32 %v8362, 8388607
    %v8364 = vor.u32 %v8363, 8388608
    %v8365 = vsub.s32 0, %v8364
    %v8366 = vadd.s32 %v8361, 1
    %vm8367 = vcmp.gt.s32.totalorder %v8366, 0
    %v8368 = vsel %vm8367, %v8366, 0
    %v8369 = vshrl.u32 %v8368, 5
    %v8370 = vand.u32 %v8368, 31
    %v8371 = vsub.s32 32, %v8370
    %v8372 = vshrl.u32 683565275, %v8371
    %v8373 = vshll.u32 683565275, %v8370
    %v8374 = vshrl.u32 2475754826, %v8371
    %v8375 = vor.u32 %v8373, %v8374
    %v8376 = vshll.u32 2475754826, %v8370
    %v8377 = vshrl.u32 2131351028, %v8371
    %v8378 = vor.u32 %v8376, %v8377
    %v8379 = vshll.u32 2131351028, %v8370
    %v8380 = vshrl.u32 2102212464, %v8371
    %v8381 = vor.u32 %v8379, %v8380
    %v8382 = vshll.u32 2102212464, %v8370
    %v8383 = vshrl.u32 920167782, %v8371
    %v8384 = vor.u32 %v8382, %v8383
    %v8385 = vshll.u32 920167782, %v8370
    %v8386 = vshrl.u32 1326507024, %v8371
    %v8387 = vor.u32 %v8385, %v8386
    %vm8388 = vcmp.lt.s32.totalorder %v8369, 1
    %vm8389 = vcmp.lt.s32.totalorder %v8369, 2
    %vm8390 = vcmp.lt.s32.totalorder %v8369, 3
    %vm8391 = vcmp.lt.s32.totalorder %v8369, 4
    %v8392 = vsel %vm8388, %v8372, %v8375
    %v8393 = vsel %vm8391, %v8381, 2102212464
    %v8394 = vsel %vm8390, %v8378, %v8393
    %v8395 = vsel %vm8389, %v8392, %v8394
    %v8396 = vsel %vm8388, %v8375, %v8378
    %v8397 = vsel %vm8391, %v8384, 920167782
    %v8398 = vsel %vm8390, %v8381, %v8397
    %v8399 = vsel %vm8389, %v8396, %v8398
    %v8400 = vsel %vm8388, %v8378, %v8381
    %v8401 = vsel %vm8391, %v8387, 1326507024
    %v8402 = vsel %vm8390, %v8384, %v8401
    %v8403 = vsel %vm8389, %v8400, %v8402
    %v8404 = vshll.u32 %v8364, 8
    %v8405 = vand.u32 %v8404, 65535
    %v8406 = vshrl.u32 %v8404, 16
    %v8407 = vand.u32 %v8403, 65535
    %v8408 = vshrl.u32 %v8403, 16
    %v8409 = vmul.u32 %v8405, %v8407
    %v8410 = vmul.u32 %v8405, %v8408
    %v8411 = vmul.u32 %v8406, %v8407
    %v8412 = vmul.u32 %v8406, %v8408
    %v8413 = vshll.u32 %v8410, 16
    %v8414 = vshrl.u32 %v8410, 16
    %v8415 = vshll.u32 %v8411, 16
    %v8416 = vshrl.u32 %v8411, 16
    %vm8417 = vc.u32 %v8409, %v8413
    %v8418 = vsel %vm8417, 1, 0
    %v8419 = vadd.s32 %v8409, %v8413
    %v8420 = vadd.s32 %v8412, %v8418
    %vm8421 = vc.u32 %v8419, %v8415
    %v8422 = vsel %vm8421, 1, 0
    %v8423 = vadd.s32 %v8419, %v8415
    %v8424 = vadd.s32 %v8420, %v8422
    %v8425 = vadd.s32 %v8424, %v8414
    %v8426 = vadd.s32 %v8425, %v8416
    %v8427 = vand.u32 %v8404, 65535
    %v8428 = vshrl.u32 %v8404, 16
    %v8429 = vand.u32 %v8399, 65535
    %v8430 = vshrl.u32 %v8399, 16
    %v8431 = vmul.u32 %v8427, %v8429
    %v8432 = vmul.u32 %v8427, %v8430
    %v8433 = vmul.u32 %v8428, %v8429
    %v8434 = vmul.u32 %v8428, %v8430
    %v8435 = vshll.u32 %v8432, 16
    %v8436 = vshrl.u32 %v8432, 16
    %v8437 = vshll.u32 %v8433, 16
    %v8438 = vshrl.u32 %v8433, 16
    %vm8439 = vc.u32 %v8431, %v8435
    %v8440 = vsel %vm8439, 1, 0
    %v8441 = vadd.s32 %v8431, %v8435
    %v8442 = vadd.s32 %v8434, %v8440
    %vm8443 = vc.u32 %v8441, %v8437
    %v8444 = vsel %vm8443, 1, 0
    %v8445 = vadd.s32 %v8441, %v8437
    %v8446 = vadd.s32 %v8442, %v8444
    %v8447 = vadd.s32 %v8446, %v8436
    %v8448 = vadd.s32 %v8447, %v8438
    %v8449 = vmul.u32 %v8404, %v8395
    %v8450 = vadd.s32 %v8426, %v8445
    %vm8451 = vc.u32 %v8426, %v8445
    %v8452 = vadd.s32 %v8448, 1
    %v8453 = vsel %vm8451, %v8452, %v8448
    %v8454 = vadd.s32 %v8449, %v8453
    %v8455 = vadd.s32 %v8454, 536870912
    %v8456 = vshrl.u32 %v8455, 30
    %v8457 = vshll.u32 %v8456, 30
    %v8458 = vsub.s32 %v8454, %v8457
    %vm8459 = vcmp.lt.s32.totalorder %v8458, 0
    %v8460 = vsub.s32 0, %v8458
    %v8461 = vsel %vm8459, %v8460, %v8458
    %v8462 = vclz %v8461
    %v8463 = vsub.s32 %v8462, 2
    %vm8464 = vcmp.gt.s32.totalorder 0, %v8463
    %v8465 = vsel %vm8464, 0, %v8463
    %v8466 = vsub.s32 32, %v8465
    %v8467 = vshll.u32 %v8458, %v8465
    %v8468 = vshrl.u32 %v8450, %v8466
    %v8469 = vor.u32 %v8467, %v8468
    %v8470 = vsub.s32 4294967266, %v8465
    %v8471 = vadd.s32 %v8470, 127
    %v8472 = vshll.u32 %v8471, 23
    %v8473 = vor.u32 4788187, %v8472
    %v8474 = vand.u32 2147483647, %v8473
    %v8476 = vcvt.s32.f32 %v8469
    %v8477 = vmul.f32 %v8476, %v8474
    %v8478 = vxor.u32 %v8477, 2147483648
    %v8479 = vsel %vm8358, %v8478, %v8477
    %v8480 = vsub.s32 4, %v8456
    %v8481 = vsel %vm8358, %v8480, %v8456
    %v8482 = vsel %vm8357, %v1054, %v8479
    %v8483 = vsel %vm8357, 0, %v8481
    %v8484 = vmul.f32 %v8482, %v8482
    %v8485 = vmul.f32 %v8484, -0.001358992
    %v8486 = vadd.f32 %v8485, 0.041655596
    %v8487 = vmul.f32 %v8484, %v8486
    %v8488 = vadd.f32 %v8487, -0.4999988
    %v8489 = vmul.f32 %v8484, %v8488
    %v8490 = vadd.f32 1.0, %v8489
    %v8491 = vmul.f32 %v8482, %v8482
    %v8492 = vmul.f32 %v8491, -0.00019511016
    %v8493 = vadd.f32 %v8492, 0.008332121
    %v8494 = vmul.f32 %v8491, %v8493
    %v8495 = vadd.f32 %v8494, -0.16666654
    %v8496 = vmul.f32 %v8491, %v8495
    %v8497 = vadd.f32 %v8496, 1.0
    %v8498 = vmul.f32 %v8497, %v8482
    %vm8499 = vweird.f32 %v1054
    %v8500 = vadd.s32 %v8483, 3
    %v8501 = vand.u32 %v8500, 3
    %vm8502 = vcmp.lt.s32.totalorder %v8501, 2
    %vm8503 = vcmp.eq.s32.totalorder %v8501, 0
    %v8504 = vxor.u32 %v8498, 2147483648
    %v8505 = vsel %vm8503, %v8490, %v8504
    %vm8506 = vcmp.eq.s32.totalorder %v8501, 2
    %v8507 = vxor.u32 %v8490, 2147483648
    %v8508 = vsel %vm8506, %v8507, %v8498
    %v8509 = vsel %vm8502, %v8505, %v8508
    %v8510 = vsel %vm8499, nan, %v8509
    %v8511 = vand.u32 2147483647, %v1055
    %vm8512 = vcmp.le.f32.partialorder %v8511, 0.7853982
    %vm8513 = vcmp.lt.s32.totalorder %v1055, 0
    %v8514 = vand.u32 %v1055, 2139095040
    %v8515 = vshrl.u32 %v8514, 23
    %v8516 = vsub.s32 %v8515, 127
    %v8517 = vand.u32 2147483647, %v1055
    %v8518 = vand.u32 %v8517, 8388607
    %v8519 = vor.u32 %v8518, 8388608
    %v8520 = vsub.s32 0, %v8519
    %v8521 = vadd.s32 %v8516, 1
    %vm8522 = vcmp.gt.s32.totalorder %v8521, 0
    %v8523 = vsel %vm8522, %v8521, 0
    %v8524 = vshrl.u32 %v8523, 5
    %v8525 = vand.u32 %v8523, 31
    %v8526 = vsub.s32 32, %v8525
    %v8527 = vshrl.u32 683565275, %v8526
    %v8528 = vshll.u32 683565275, %v8525
    %v8529 = vshrl.u32 2475754826, %v8526
    %v8530 = vor.u32 %v8528, %v8529
    %v8531 = vshll.u32 2475754826, %v8525
    %v8532 = vshrl.u32 2131351028, %v8526
    %v8533 = vor.u32 %v8531, %v8532
    %v8534 = vshll.u32 2131351028, %v8525
    %v8535 = vshrl.u32 2102212464, %v8526
    %v8536 = vor.u32 %v8534, %v8535
    %v8537 = vshll.u32 2102212464, %v8525
    %v8538 = vshrl.u32 920167782, %v8526
    %v8539 = vor.u32 %v8537, %v8538
    %v8540 = vshll.u32 920167782, %v8525
    %v8541 = vshrl.u32 1326507024, %v8526
    %v8542 = vor.u32 %v8540, %v8541
    %vm8543 = vcmp.lt.s32.totalorder %v8524, 1
    %vm8544 = vcmp.lt.s32.totalorder %v8524, 2
    %vm8545 = vcmp.lt.s32.totalorder %v8524, 3
    %vm8546 = vcmp.lt.s32.totalorder %v8524, 4
    %v8547 = vsel %vm8543, %v8527, %v8530
    %v8548 = vsel %vm8546, %v8536, 2102212464
    %v8549 = vsel %vm8545, %v8533, %v8548
    %v8550 = vsel %vm8544, %v8547, %v8549
    %v8551 = vsel %vm8543, %v8530, %v8533
    %v8552 = vsel %vm8546, %v8539, 920167782
    %v8553 = vsel %vm8545, %v8536, %v8552
    %v8554 = vsel %vm8544, %v8551, %v8553
    %v8555 = vsel %vm8543, %v8533, %v8536
    %v8556 = vsel %vm8546, %v8542, 1326507024
    %v8557 = vsel %vm8545, %v8539, %v8556
    %v8558 = vsel %vm8544, %v8555, %v8557
    %v8559 = vshll.u32 %v8519, 8
    %v8560 = vand.u32 %v8559, 65535
    %v8561 = vshrl.u32 %v8559, 16
    %v8562 = vand.u32 %v8558, 65535
    %v8563 = vshrl.u32 %v8558, 16
    %v8564 = vmul.u32 %v8560, %v8562
    %v8565 = vmul.u32 %v8560, %v8563
    %v8566 = vmul.u32 %v8561, %v8562
    %v8567 = vmul.u32 %v8561, %v8563
    %v8568 = vshll.u32 %v8565, 16
    %v8569 = vshrl.u32 %v8565, 16
    %v8570 = vshll.u32 %v8566, 16
    %v8571 = vshrl.u32 %v8566, 16
    %vm8572 = vc.u32 %v8564, %v8568
    %v8573 = vsel %vm8572, 1, 0
    %v8574 = vadd.s32 %v8564, %v8568
    %v8575 = vadd.s32 %v8567, %v8573
    %vm8576 = vc.u32 %v8574, %v8570
    %v8577 = vsel %vm8576, 1, 0
    %v8578 = vadd.s32 %v8574, %v8570
    %v8579 = vadd.s32 %v8575, %v8577
    %v8580 = vadd.s32 %v8579, %v8569
    %v8581 = vadd.s32 %v8580, %v8571
    %v8582 = vand.u32 %v8559, 65535
    %v8583 = vshrl.u32 %v8559, 16
    %v8584 = vand.u32 %v8554, 65535
    %v8585 = vshrl.u32 %v8554, 16
    %v8586 = vmul.u32 %v8582, %v8584
    %v8587 = vmul.u32 %v8582, %v8585
    %v8588 = vmul.u32 %v8583, %v8584
    %v8589 = vmul.u32 %v8583, %v8585
    %v8590 = vshll.u32 %v8587, 16
    %v8591 = vshrl.u32 %v8587, 16
    %v8592 = vshll.u32 %v8588, 16
    %v8593 = vshrl.u32 %v8588, 16
    %vm8594 = vc.u32 %v8586, %v8590
    %v8595 = vsel %vm8594, 1, 0
    %v8596 = vadd.s32 %v8586, %v8590
    %v8597 = vadd.s32 %v8589, %v8595
    %vm8598 = vc.u32 %v8596, %v8592
    %v8599 = vsel %vm8598, 1, 0
    %v8600 = vadd.s32 %v8596, %v8592
    %v8601 = vadd.s32 %v8597, %v8599
    %v8602 = vadd.s32 %v8601, %v8591
    %v8603 = vadd.s32 %v8602, %v8593
    %v8604 = vmul.u32 %v8559, %v8550
    %v8605 = vadd.s32 %v8581, %v8600
    %vm8606 = vc.u32 %v8581, %v8600
    %v8607 = vadd.s32 %v8603, 1
    %v8608 = vsel %vm8606, %v8607, %v8603
    %v8609 = vadd.s32 %v8604, %v8608
    %v8610 = vadd.s32 %v8609, 536870912
    %v8611 = vshrl.u32 %v8610, 30
    %v8612 = vshll.u32 %v8611, 30
    %v8613 = vsub.s32 %v8609, %v8612
    %vm8614 = vcmp.lt.s32.totalorder %v8613, 0
    %v8615 = vsub.s32 0, %v8613
    %v8616 = vsel %vm8614, %v8615, %v8613
    %v8617 = vclz %v8616
    %v8618 = vsub.s32 %v8617, 2
    %vm8619 = vcmp.gt.s32.totalorder 0, %v8618
    %v8620 = vsel %vm8619, 0, %v8618
    %v8621 = vsub.s32 32, %v8620
    %v8622 = vshll.u32 %v8613, %v8620
    %v8623 = vshrl.u32 %v8605, %v8621
    %v8624 = vor.u32 %v8622, %v8623
    %v8625 = vsub.s32 4294967266, %v8620
    %v8626 = vadd.s32 %v8625, 127
    %v8627 = vshll.u32 %v8626, 23
    %v8628 = vor.u32 4788187, %v8627
    %v8629 = vand.u32 2147483647, %v8628
    %v8631 = vcvt.s32.f32 %v8624
    %v8632 = vmul.f32 %v8631, %v8629
    %v8633 = vxor.u32 %v8632, 2147483648
    %v8634 = vsel %vm8513, %v8633, %v8632
    %v8635 = vsub.s32 4, %v8611
    %v8636 = vsel %vm8513, %v8635, %v8611
    %v8637 = vsel %vm8512, %v1055, %v8634
    %v8638 = vsel %vm8512, 0, %v8636
    %v8639 = vmul.f32 %v8637, %v8637
    %v8640 = vmul.f32 %v8639, -0.001358992
    %v8641 = vadd.f32 %v8640, 0.041655596
    %v8642 = vmul.f32 %v8639, %v8641
    %v8643 = vadd.f32 %v8642, -0.4999988
    %v8644 = vmul.f32 %v8639, %v8643
    %v8645 = vadd.f32 1.0, %v8644
    %v8646 = vmul.f32 %v8637, %v8637
    %v8647 = vmul.f32 %v8646, -0.00019511016
    %v8648 = vadd.f32 %v8647, 0.008332121
    %v8649 = vmul.f32 %v8646, %v8648
    %v8650 = vadd.f32 %v8649, -0.16666654
    %v8651 = vmul.f32 %v8646, %v8650
    %v8652 = vadd.f32 %v8651, 1.0
    %v8653 = vmul.f32 %v8652, %v8637
    %vm8654 = vweird.f32 %v1055
    %v8655 = vadd.s32 %v8638, 3
    %v8656 = vand.u32 %v8655, 3
    %vm8657 = vcmp.lt.s32.totalorder %v8656, 2
    %vm8658 = vcmp.eq.s32.totalorder %v8656, 0
    %v8659 = vxor.u32 %v8653, 2147483648
    %v8660 = vsel %vm8658, %v8645, %v8659
    %vm8661 = vcmp.eq.s32.totalorder %v8656, 2
    %v8662 = vxor.u32 %v8645, 2147483648
    %v8663 = vsel %vm8661, %v8662, %v8653
    %v8664 = vsel %vm8657, %v8660, %v8663
    %v8665 = vsel %vm8654, nan, %v8664
    %v8666 = vand.u32 2147483647, %v1056
    %vm8667 = vcmp.le.f32.partialorder %v8666, 0.7853982
    %vm8668 = vcmp.lt.s32.totalorder %v1056, 0
    %v8669 = vand.u32 %v1056, 2139095040
    %v8670 = vshrl.u32 %v8669, 23
    %v8671 = vsub.s32 %v8670, 127
    %v8672 = vand.u32 2147483647, %v1056
    %v8673 = vand.u32 %v8672, 8388607
    %v8674 = vor.u32 %v8673, 8388608
    %v8675 = vsub.s32 0, %v8674
    %v8676 = vadd.s32 %v8671, 1
    %vm8677 = vcmp.gt.s32.totalorder %v8676, 0
    %v8678 = vsel %vm8677, %v8676, 0
    %v8679 = vshrl.u32 %v8678, 5
    %v8680 = vand.u32 %v8678, 31
    %v8681 = vsub.s32 32, %v8680
    %v8682 = vshrl.u32 683565275, %v8681
    %v8683 = vshll.u32 683565275, %v8680
    %v8684 = vshrl.u32 2475754826, %v8681
    %v8685 = vor.u32 %v8683, %v8684
    %v8686 = vshll.u32 2475754826, %v8680
    %v8687 = vshrl.u32 2131351028, %v8681
    %v8688 = vor.u32 %v8686, %v8687
    %v8689 = vshll.u32 2131351028, %v8680
    %v8690 = vshrl.u32 2102212464, %v8681
    %v8691 = vor.u32 %v8689, %v8690
    %v8692 = vshll.u32 2102212464, %v8680
    %v8693 = vshrl.u32 920167782, %v8681
    %v8694 = vor.u32 %v8692, %v8693
    %v8695 = vshll.u32 920167782, %v8680
    %v8696 = vshrl.u32 1326507024, %v8681
    %v8697 = vor.u32 %v8695, %v8696
    %vm8698 = vcmp.lt.s32.totalorder %v8679, 1
    %vm8699 = vcmp.lt.s32.totalorder %v8679, 2
    %vm8700 = vcmp.lt.s32.totalorder %v8679, 3
    %vm8701 = vcmp.lt.s32.totalorder %v8679, 4
    %v8702 = vsel %vm8698, %v8682, %v8685
    %v8703 = vsel %vm8701, %v8691, 2102212464
    %v8704 = vsel %vm8700, %v8688, %v8703
    %v8705 = vsel %vm8699, %v8702, %v8704
    %v8706 = vsel %vm8698, %v8685, %v8688
    %v8707 = vsel %vm8701, %v8694, 920167782
    %v8708 = vsel %vm8700, %v8691, %v8707
    %v8709 = vsel %vm8699, %v8706, %v8708
    %v8710 = vsel %vm8698, %v8688, %v8691
    %v8711 = vsel %vm8701, %v8697, 1326507024
    %v8712 = vsel %vm8700, %v8694, %v8711
    %v8713 = vsel %vm8699, %v8710, %v8712
    %v8714 = vshll.u32 %v8674, 8
    %v8715 = vand.u32 %v8714, 65535
    %v8716 = vshrl.u32 %v8714, 16
    %v8717 = vand.u32 %v8713, 65535
    %v8718 = vshrl.u32 %v8713, 16
    %v8719 = vmul.u32 %v8715, %v8717
    %v8720 = vmul.u32 %v8715, %v8718
    %v8721 = vmul.u32 %v8716, %v8717
    %v8722 = vmul.u32 %v8716, %v8718
    %v8723 = vshll.u32 %v8720, 16
    %v8724 = vshrl.u32 %v8720, 16
    %v8725 = vshll.u32 %v8721, 16
    %v8726 = vshrl.u32 %v8721, 16
    %vm8727 = vc.u32 %v8719, %v8723
    %v8728 = vsel %vm8727, 1, 0
    %v8729 = vadd.s32 %v8719, %v8723
    %v8730 = vadd.s32 %v8722, %v8728
    %vm8731 = vc.u32 %v8729, %v8725
    %v8732 = vsel %vm8731, 1, 0
    %v8733 = vadd.s32 %v8729, %v8725
    %v8734 = vadd.s32 %v8730, %v8732
    %v8735 = vadd.s32 %v8734, %v8724
    %v8736 = vadd.s32 %v8735, %v8726
    %v8737 = vand.u32 %v8714, 65535
    %v8738 = vshrl.u32 %v8714, 16
    %v8739 = vand.u32 %v8709, 65535
    %v8740 = vshrl.u32 %v8709, 16
    %v8741 = vmul.u32 %v8737, %v8739
    %v8742 = vmul.u32 %v8737, %v8740
    %v8743 = vmul.u32 %v8738, %v8739
    %v8744 = vmul.u32 %v8738, %v8740
    %v8745 = vshll.u32 %v8742, 16
    %v8746 = vshrl.u32 %v8742, 16
    %v8747 = vshll.u32 %v8743, 16
    %v8748 = vshrl.u32 %v8743, 16
    %vm8749 = vc.u32 %v8741, %v8745
    %v8750 = vsel %vm8749, 1, 0
    %v8751 = vadd.s32 %v8741, %v8745
    %v8752 = vadd.s32 %v8744, %v8750
    %vm8753 = vc.u32 %v8751, %v8747
    %v8754 = vsel %vm8753, 1, 0
    %v8755 = vadd.s32 %v8751, %v8747
    %v8756 = vadd.s32 %v8752, %v8754
    %v8757 = vadd.s32 %v8756, %v8746
    %v8758 = vadd.s32 %v8757, %v8748
    %v8759 = vmul.u32 %v8714, %v8705
    %v8760 = vadd.s32 %v8736, %v8755
    %vm8761 = vc.u32 %v8736, %v8755
    %v8762 = vadd.s32 %v8758, 1
    %v8763 = vsel %vm8761, %v8762, %v8758
    %v8764 = vadd.s32 %v8759, %v8763
    %v8765 = vadd.s32 %v8764, 536870912
    %v8766 = vshrl.u32 %v8765, 30
    %v8767 = vshll.u32 %v8766, 30
    %v8768 = vsub.s32 %v8764, %v8767
    %vm8769 = vcmp.lt.s32.totalorder %v8768, 0
    %v8770 = vsub.s32 0, %v8768
    %v8771 = vsel %vm8769, %v8770, %v8768
    %v8772 = vclz %v8771
    %v8773 = vsub.s32 %v8772, 2
    %vm8774 = vcmp.gt.s32.totalorder 0, %v8773
    %v8775 = vsel %vm8774, 0, %v8773
    %v8776 = vsub.s32 32, %v8775
    %v8777 = vshll.u32 %v8768, %v8775
    %v8778 = vshrl.u32 %v8760, %v8776
    %v8779 = vor.u32 %v8777, %v8778
    %v8780 = vsub.s32 4294967266, %v8775
    %v8781 = vadd.s32 %v8780, 127
    %v8782 = vshll.u32 %v8781, 23
    %v8783 = vor.u32 4788187, %v8782
    %v8784 = vand.u32 2147483647, %v8783
    %v8786 = vcvt.s32.f32 %v8779
    %v8787 = vmul.f32 %v8786, %v8784
    %v8788 = vxor.u32 %v8787, 2147483648
    %v8789 = vsel %vm8668, %v8788, %v8787
    %v8790 = vsub.s32 4, %v8766
    %v8791 = vsel %vm8668, %v8790, %v8766
    %v8792 = vsel %vm8667, %v1056, %v8789
    %v8793 = vsel %vm8667, 0, %v8791
    %v8794 = vmul.f32 %v8792, %v8792
    %v8795 = vmul.f32 %v8794, -0.001358992
    %v8796 = vadd.f32 %v8795, 0.041655596
    %v8797 = vmul.f32 %v8794, %v8796
    %v8798 = vadd.f32 %v8797, -0.4999988
    %v8799 = vmul.f32 %v8794, %v8798
    %v8800 = vadd.f32 1.0, %v8799
    %v8801 = vmul.f32 %v8792, %v8792
    %v8802 = vmul.f32 %v8801, -0.00019511016
    %v8803 = vadd.f32 %v8802, 0.008332121
    %v8804 = vmul.f32 %v8801, %v8803
    %v8805 = vadd.f32 %v8804, -0.16666654
    %v8806 = vmul.f32 %v8801, %v8805
    %v8807 = vadd.f32 %v8806, 1.0
    %v8808 = vmul.f32 %v8807, %v8792
    %vm8809 = vweird.f32 %v1056
    %v8810 = vadd.s32 %v8793, 3
    %v8811 = vand.u32 %v8810, 3
    %vm8812 = vcmp.lt.s32.totalorder %v8811, 2
    %vm8813 = vcmp.eq.s32.totalorder %v8811, 0
    %v8814 = vxor.u32 %v8808, 2147483648
    %v8815 = vsel %vm8813, %v8800, %v8814
    %vm8816 = vcmp.eq.s32.totalorder %v8811, 2
    %v8817 = vxor.u32 %v8800, 2147483648
    %v8818 = vsel %vm8816, %v8817, %v8808
    %v8819 = vsel %vm8812, %v8815, %v8818
    %v8820 = vsel %vm8809, nan, %v8819
    %v8821 = vand.u32 2147483647, %v1057
    %vm8822 = vcmp.le.f32.partialorder %v8821, 0.7853982
    %vm8823 = vcmp.lt.s32.totalorder %v1057, 0
    %v8824 = vand.u32 %v1057, 2139095040
    %v8825 = vshrl.u32 %v8824, 23
    %v8826 = vsub.s32 %v8825, 127
    %v8827 = vand.u32 2147483647, %v1057
    %v8828 = vand.u32 %v8827, 8388607
    %v8829 = vor.u32 %v8828, 8388608
    %v8830 = vsub.s32 0, %v8829
    %v8831 = vadd.s32 %v8826, 1
    %vm8832 = vcmp.gt.s32.totalorder %v8831, 0
    %v8833 = vsel %vm8832, %v8831, 0
    %v8834 = vshrl.u32 %v8833, 5
    %v8835 = vand.u32 %v8833, 31
    %v8836 = vsub.s32 32, %v8835
    %v8837 = vshrl.u32 683565275, %v8836
    %v8838 = vshll.u32 683565275, %v8835
    %v8839 = vshrl.u32 2475754826, %v8836
    %v8840 = vor.u32 %v8838, %v8839
    %v8841 = vshll.u32 2475754826, %v8835
    %v8842 = vshrl.u32 2131351028, %v8836
    %v8843 = vor.u32 %v8841, %v8842
    %v8844 = vshll.u32 2131351028, %v8835
    %v8845 = vshrl.u32 2102212464, %v8836
    %v8846 = vor.u32 %v8844, %v8845
    %v8847 = vshll.u32 2102212464, %v8835
    %v8848 = vshrl.u32 920167782, %v8836
    %v8849 = vor.u32 %v8847, %v8848
    %v8850 = vshll.u32 920167782, %v8835
    %v8851 = vshrl.u32 1326507024, %v8836
    %v8852 = vor.u32 %v8850, %v8851
    %vm8853 = vcmp.lt.s32.totalorder %v8834, 1
    %vm8854 = vcmp.lt.s32.totalorder %v8834, 2
    %vm8855 = vcmp.lt.s32.totalorder %v8834, 3
    %vm8856 = vcmp.lt.s32.totalorder %v8834, 4
    %v8857 = vsel %vm8853, %v8837, %v8840
    %v8858 = vsel %vm8856, %v8846, 2102212464
    %v8859 = vsel %vm8855, %v8843, %v8858
    %v8860 = vsel %vm8854, %v8857, %v8859
    %v8861 = vsel %vm8853, %v8840, %v8843
    %v8862 = vsel %vm8856, %v8849, 920167782
    %v8863 = vsel %vm8855, %v8846, %v8862
    %v8864 = vsel %vm8854, %v8861, %v8863
    %v8865 = vsel %vm8853, %v8843, %v8846
    %v8866 = vsel %vm8856, %v8852, 1326507024
    %v8867 = vsel %vm8855, %v8849, %v8866
    %v8868 = vsel %vm8854, %v8865, %v8867
    %v8869 = vshll.u32 %v8829, 8
    %v8870 = vand.u32 %v8869, 65535
    %v8871 = vshrl.u32 %v8869, 16
    %v8872 = vand.u32 %v8868, 65535
    %v8873 = vshrl.u32 %v8868, 16
    %v8874 = vmul.u32 %v8870, %v8872
    %v8875 = vmul.u32 %v8870, %v8873
    %v8876 = vmul.u32 %v8871, %v8872
    %v8877 = vmul.u32 %v8871, %v8873
    %v8878 = vshll.u32 %v8875, 16
    %v8879 = vshrl.u32 %v8875, 16
    %v8880 = vshll.u32 %v8876, 16
    %v8881 = vshrl.u32 %v8876, 16
    %vm8882 = vc.u32 %v8874, %v8878
    %v8883 = vsel %vm8882, 1, 0
    %v8884 = vadd.s32 %v8874, %v8878
    %v8885 = vadd.s32 %v8877, %v8883
    %vm8886 = vc.u32 %v8884, %v8880
    %v8887 = vsel %vm8886, 1, 0
    %v8888 = vadd.s32 %v8884, %v8880
    %v8889 = vadd.s32 %v8885, %v8887
    %v8890 = vadd.s32 %v8889, %v8879
    %v8891 = vadd.s32 %v8890, %v8881
    %v8892 = vand.u32 %v8869, 65535
    %v8893 = vshrl.u32 %v8869, 16
    %v8894 = vand.u32 %v8864, 65535
    %v8895 = vshrl.u32 %v8864, 16
    %v8896 = vmul.u32 %v8892, %v8894
    %v8897 = vmul.u32 %v8892, %v8895
    %v8898 = vmul.u32 %v8893, %v8894
    %v8899 = vmul.u32 %v8893, %v8895
    %v8900 = vshll.u32 %v8897, 16
    %v8901 = vshrl.u32 %v8897, 16
    %v8902 = vshll.u32 %v8898, 16
    %v8903 = vshrl.u32 %v8898, 16
    %vm8904 = vc.u32 %v8896, %v8900
    %v8905 = vsel %vm8904, 1, 0
    %v8906 = vadd.s32 %v8896, %v8900
    %v8907 = vadd.s32 %v8899, %v8905
    %vm8908 = vc.u32 %v8906, %v8902
    %v8909 = vsel %vm8908, 1, 0
    %v8910 = vadd.s32 %v8906, %v8902
    %v8911 = vadd.s32 %v8907, %v8909
    %v8912 = vadd.s32 %v8911, %v8901
    %v8913 = vadd.s32 %v8912, %v8903
    %v8914 = vmul.u32 %v8869, %v8860
    %v8915 = vadd.s32 %v8891, %v8910
    %vm8916 = vc.u32 %v8891, %v8910
    %v8917 = vadd.s32 %v8913, 1
    %v8918 = vsel %vm8916, %v8917, %v8913
    %v8919 = vadd.s32 %v8914, %v8918
    %v8920 = vadd.s32 %v8919, 536870912
    %v8921 = vshrl.u32 %v8920, 30
    %v8922 = vshll.u32 %v8921, 30
    %v8923 = vsub.s32 %v8919, %v8922
    %vm8924 = vcmp.lt.s32.totalorder %v8923, 0
    %v8925 = vsub.s32 0, %v8923
    %v8926 = vsel %vm8924, %v8925, %v8923
    %v8927 = vclz %v8926
    %v8928 = vsub.s32 %v8927, 2
    %vm8929 = vcmp.gt.s32.totalorder 0, %v8928
    %v8930 = vsel %vm8929, 0, %v8928
    %v8931 = vsub.s32 32, %v8930
    %v8932 = vshll.u32 %v8923, %v8930
    %v8933 = vshrl.u32 %v8915, %v8931
    %v8934 = vor.u32 %v8932, %v8933
    %v8935 = vsub.s32 4294967266, %v8930
    %v8936 = vadd.s32 %v8935, 127
    %v8937 = vshll.u32 %v8936, 23
    %v8938 = vor.u32 4788187, %v8937
    %v8939 = vand.u32 2147483647, %v8938
    %v8941 = vcvt.s32.f32 %v8934
    %v8942 = vmul.f32 %v8941, %v8939
    %v8943 = vxor.u32 %v8942, 2147483648
    %v8944 = vsel %vm8823, %v8943, %v8942
    %v8945 = vsub.s32 4, %v8921
    %v8946 = vsel %vm8823, %v8945, %v8921
    %v8947 = vsel %vm8822, %v1057, %v8944
    %v8948 = vsel %vm8822, 0, %v8946
    %v8949 = vmul.f32 %v8947, %v8947
    %v8950 = vmul.f32 %v8949, -0.001358992
    %v8951 = vadd.f32 %v8950, 0.041655596
    %v8952 = vmul.f32 %v8949, %v8951
    %v8953 = vadd.f32 %v8952, -0.4999988
    %v8954 = vmul.f32 %v8949, %v8953
    %v8955 = vadd.f32 1.0, %v8954
    %v8956 = vmul.f32 %v8947, %v8947
    %v8957 = vmul.f32 %v8956, -0.00019511016
    %v8958 = vadd.f32 %v8957, 0.008332121
    %v8959 = vmul.f32 %v8956, %v8958
    %v8960 = vadd.f32 %v8959, -0.16666654
    %v8961 = vmul.f32 %v8956, %v8960
    %v8962 = vadd.f32 %v8961, 1.0
    %v8963 = vmul.f32 %v8962, %v8947
    %vm8964 = vweird.f32 %v1057
    %v8965 = vadd.s32 %v8948, 3
    %v8966 = vand.u32 %v8965, 3
    %vm8967 = vcmp.lt.s32.totalorder %v8966, 2
    %vm8968 = vcmp.eq.s32.totalorder %v8966, 0
    %v8969 = vxor.u32 %v8963, 2147483648
    %v8970 = vsel %vm8968, %v8955, %v8969
    %vm8971 = vcmp.eq.s32.totalorder %v8966, 2
    %v8972 = vxor.u32 %v8955, 2147483648
    %v8973 = vsel %vm8971, %v8972, %v8963
    %v8974 = vsel %vm8967, %v8970, %v8973
    %v8975 = vsel %vm8964, nan, %v8974
    %v8976 = vand.u32 2147483647, %v1058
    %vm8977 = vcmp.le.f32.partialorder %v8976, 0.7853982
    %vm8978 = vcmp.lt.s32.totalorder %v1058, 0
    %v8979 = vand.u32 %v1058, 2139095040
    %v8980 = vshrl.u32 %v8979, 23
    %v8981 = vsub.s32 %v8980, 127
    %v8982 = vand.u32 2147483647, %v1058
    %v8983 = vand.u32 %v8982, 8388607
    %v8984 = vor.u32 %v8983, 8388608
    %v8985 = vsub.s32 0, %v8984
    %v8986 = vadd.s32 %v8981, 1
    %vm8987 = vcmp.gt.s32.totalorder %v8986, 0
    %v8988 = vsel %vm8987, %v8986, 0
    %v8989 = vshrl.u32 %v8988, 5
    %v8990 = vand.u32 %v8988, 31
    %v8991 = vsub.s32 32, %v8990
    %v8992 = vshrl.u32 683565275, %v8991
    %v8993 = vshll.u32 683565275, %v8990
    %v8994 = vshrl.u32 2475754826, %v8991
    %v8995 = vor.u32 %v8993, %v8994
    %v8996 = vshll.u32 2475754826, %v8990
    %v8997 = vshrl.u32 2131351028, %v8991
    %v8998 = vor.u32 %v8996, %v8997
    %v8999 = vshll.u32 2131351028, %v8990
    %v9000 = vshrl.u32 2102212464, %v8991
    %v9001 = vor.u32 %v8999, %v9000
    %v9002 = vshll.u32 2102212464, %v8990
    %v9003 = vshrl.u32 920167782, %v8991
    %v9004 = vor.u32 %v9002, %v9003
    %v9005 = vshll.u32 920167782, %v8990
    %v9006 = vshrl.u32 1326507024, %v8991
    %v9007 = vor.u32 %v9005, %v9006
    %vm9008 = vcmp.lt.s32.totalorder %v8989, 1
    %vm9009 = vcmp.lt.s32.totalorder %v8989, 2
    %vm9010 = vcmp.lt.s32.totalorder %v8989, 3
    %vm9011 = vcmp.lt.s32.totalorder %v8989, 4
    %v9012 = vsel %vm9008, %v8992, %v8995
    %v9013 = vsel %vm9011, %v9001, 2102212464
    %v9014 = vsel %vm9010, %v8998, %v9013
    %v9015 = vsel %vm9009, %v9012, %v9014
    %v9016 = vsel %vm9008, %v8995, %v8998
    %v9017 = vsel %vm9011, %v9004, 920167782
    %v9018 = vsel %vm9010, %v9001, %v9017
    %v9019 = vsel %vm9009, %v9016, %v9018
    %v9020 = vsel %vm9008, %v8998, %v9001
    %v9021 = vsel %vm9011, %v9007, 1326507024
    %v9022 = vsel %vm9010, %v9004, %v9021
    %v9023 = vsel %vm9009, %v9020, %v9022
    %v9024 = vshll.u32 %v8984, 8
    %v9025 = vand.u32 %v9024, 65535
    %v9026 = vshrl.u32 %v9024, 16
    %v9027 = vand.u32 %v9023, 65535
    %v9028 = vshrl.u32 %v9023, 16
    %v9029 = vmul.u32 %v9025, %v9027
    %v9030 = vmul.u32 %v9025, %v9028
    %v9031 = vmul.u32 %v9026, %v9027
    %v9032 = vmul.u32 %v9026, %v9028
    %v9033 = vshll.u32 %v9030, 16
    %v9034 = vshrl.u32 %v9030, 16
    %v9035 = vshll.u32 %v9031, 16
    %v9036 = vshrl.u32 %v9031, 16
    %vm9037 = vc.u32 %v9029, %v9033
    %v9038 = vsel %vm9037, 1, 0
    %v9039 = vadd.s32 %v9029, %v9033
    %v9040 = vadd.s32 %v9032, %v9038
    %vm9041 = vc.u32 %v9039, %v9035
    %v9042 = vsel %vm9041, 1, 0
    %v9043 = vadd.s32 %v9039, %v9035
    %v9044 = vadd.s32 %v9040, %v9042
    %v9045 = vadd.s32 %v9044, %v9034
    %v9046 = vadd.s32 %v9045, %v9036
    %v9047 = vand.u32 %v9024, 65535
    %v9048 = vshrl.u32 %v9024, 16
    %v9049 = vand.u32 %v9019, 65535
    %v9050 = vshrl.u32 %v9019, 16
    %v9051 = vmul.u32 %v9047, %v9049
    %v9052 = vmul.u32 %v9047, %v9050
    %v9053 = vmul.u32 %v9048, %v9049
    %v9054 = vmul.u32 %v9048, %v9050
    %v9055 = vshll.u32 %v9052, 16
    %v9056 = vshrl.u32 %v9052, 16
    %v9057 = vshll.u32 %v9053, 16
    %v9058 = vshrl.u32 %v9053, 16
    %vm9059 = vc.u32 %v9051, %v9055
    %v9060 = vsel %vm9059, 1, 0
    %v9061 = vadd.s32 %v9051, %v9055
    %v9062 = vadd.s32 %v9054, %v9060
    %vm9063 = vc.u32 %v9061, %v9057
    %v9064 = vsel %vm9063, 1, 0
    %v9065 = vadd.s32 %v9061, %v9057
    %v9066 = vadd.s32 %v9062, %v9064
    %v9067 = vadd.s32 %v9066, %v9056
    %v9068 = vadd.s32 %v9067, %v9058
    %v9069 = vmul.u32 %v9024, %v9015
    %v9070 = vadd.s32 %v9046, %v9065
    %vm9071 = vc.u32 %v9046, %v9065
    %v9072 = vadd.s32 %v9068, 1
    %v9073 = vsel %vm9071, %v9072, %v9068
    %v9074 = vadd.s32 %v9069, %v9073
    %v9075 = vadd.s32 %v9074, 536870912
    %v9076 = vshrl.u32 %v9075, 30
    %v9077 = vshll.u32 %v9076, 30
    %v9078 = vsub.s32 %v9074, %v9077
    %vm9079 = vcmp.lt.s32.totalorder %v9078, 0
    %v9080 = vsub.s32 0, %v9078
    %v9081 = vsel %vm9079, %v9080, %v9078
    %v9082 = vclz %v9081
    %v9083 = vsub.s32 %v9082, 2
    %vm9084 = vcmp.gt.s32.totalorder 0, %v9083
    %v9085 = vsel %vm9084, 0, %v9083
    %v9086 = vsub.s32 32, %v9085
    %v9087 = vshll.u32 %v9078, %v9085
    %v9088 = vshrl.u32 %v9070, %v9086
    %v9089 = vor.u32 %v9087, %v9088
    %v9090 = vsub.s32 4294967266, %v9085
    %v9091 = vadd.s32 %v9090, 127
    %v9092 = vshll.u32 %v9091, 23
    %v9093 = vor.u32 4788187, %v9092
    %v9094 = vand.u32 2147483647, %v9093
    %v9096 = vcvt.s32.f32 %v9089
    %v9097 = vmul.f32 %v9096, %v9094
    %v9098 = vxor.u32 %v9097, 2147483648
    %v9099 = vsel %vm8978, %v9098, %v9097
    %v9100 = vsub.s32 4, %v9076
    %v9101 = vsel %vm8978, %v9100, %v9076
    %v9102 = vsel %vm8977, %v1058, %v9099
    %v9103 = vsel %vm8977, 0, %v9101
    %v9104 = vmul.f32 %v9102, %v9102
    %v9105 = vmul.f32 %v9104, -0.001358992
    %v9106 = vadd.f32 %v9105, 0.041655596
    %v9107 = vmul.f32 %v9104, %v9106
    %v9108 = vadd.f32 %v9107, -0.4999988
    %v9109 = vmul.f32 %v9104, %v9108
    %v9110 = vadd.f32 1.0, %v9109
    %v9111 = vmul.f32 %v9102, %v9102
    %v9112 = vmul.f32 %v9111, -0.00019511016
    %v9113 = vadd.f32 %v9112, 0.008332121
    %v9114 = vmul.f32 %v9111, %v9113
    %v9115 = vadd.f32 %v9114, -0.16666654
    %v9116 = vmul.f32 %v9111, %v9115
    %v9117 = vadd.f32 %v9116, 1.0
    %v9118 = vmul.f32 %v9117, %v9102
    %vm9119 = vweird.f32 %v1058
    %v9120 = vadd.s32 %v9103, 3
    %v9121 = vand.u32 %v9120, 3
    %vm9122 = vcmp.lt.s32.totalorder %v9121, 2
    %vm9123 = vcmp.eq.s32.totalorder %v9121, 0
    %v9124 = vxor.u32 %v9118, 2147483648
    %v9125 = vsel %vm9123, %v9110, %v9124
    %vm9126 = vcmp.eq.s32.totalorder %v9121, 2
    %v9127 = vxor.u32 %v9110, 2147483648
    %v9128 = vsel %vm9126, %v9127, %v9118
    %v9129 = vsel %vm9122, %v9125, %v9128
    %v9130 = vsel %vm9119, nan, %v9129
    %v9131 = vand.u32 2147483647, %v1059
    %vm9132 = vcmp.le.f32.partialorder %v9131, 0.7853982
    %vm9133 = vcmp.lt.s32.totalorder %v1059, 0
    %v9134 = vand.u32 %v1059, 2139095040
    %v9135 = vshrl.u32 %v9134, 23
    %v9136 = vsub.s32 %v9135, 127
    %v9137 = vand.u32 2147483647, %v1059
    %v9138 = vand.u32 %v9137, 8388607
    %v9139 = vor.u32 %v9138, 8388608
    %v9140 = vsub.s32 0, %v9139
    %v9141 = vadd.s32 %v9136, 1
    %vm9142 = vcmp.gt.s32.totalorder %v9141, 0
    %v9143 = vsel %vm9142, %v9141, 0
    %v9144 = vshrl.u32 %v9143, 5
    %v9145 = vand.u32 %v9143, 31
    %v9146 = vsub.s32 32, %v9145
    %v9147 = vshrl.u32 683565275, %v9146
    %v9148 = vshll.u32 683565275, %v9145
    %v9149 = vshrl.u32 2475754826, %v9146
    %v9150 = vor.u32 %v9148, %v9149
    %v9151 = vshll.u32 2475754826, %v9145
    %v9152 = vshrl.u32 2131351028, %v9146
    %v9153 = vor.u32 %v9151, %v9152
    %v9154 = vshll.u32 2131351028, %v9145
    %v9155 = vshrl.u32 2102212464, %v9146
    %v9156 = vor.u32 %v9154, %v9155
    %v9157 = vshll.u32 2102212464, %v9145
    %v9158 = vshrl.u32 920167782, %v9146
    %v9159 = vor.u32 %v9157, %v9158
    %v9160 = vshll.u32 920167782, %v9145
    %v9161 = vshrl.u32 1326507024, %v9146
    %v9162 = vor.u32 %v9160, %v9161
    %vm9163 = vcmp.lt.s32.totalorder %v9144, 1
    %vm9164 = vcmp.lt.s32.totalorder %v9144, 2
    %vm9165 = vcmp.lt.s32.totalorder %v9144, 3
    %vm9166 = vcmp.lt.s32.totalorder %v9144, 4
    %v9167 = vsel %vm9163, %v9147, %v9150
    %v9168 = vsel %vm9166, %v9156, 2102212464
    %v9169 = vsel %vm9165, %v9153, %v9168
    %v9170 = vsel %vm9164, %v9167, %v9169
    %v9171 = vsel %vm9163, %v9150, %v9153
    %v9172 = vsel %vm9166, %v9159, 920167782
    %v9173 = vsel %vm9165, %v9156, %v9172
    %v9174 = vsel %vm9164, %v9171, %v9173
    %v9175 = vsel %vm9163, %v9153, %v9156
    %v9176 = vsel %vm9166, %v9162, 1326507024
    %v9177 = vsel %vm9165, %v9159, %v9176
    %v9178 = vsel %vm9164, %v9175, %v9177
    %v9179 = vshll.u32 %v9139, 8
    %v9180 = vand.u32 %v9179, 65535
    %v9181 = vshrl.u32 %v9179, 16
    %v9182 = vand.u32 %v9178, 65535
    %v9183 = vshrl.u32 %v9178, 16
    %v9184 = vmul.u32 %v9180, %v9182
    %v9185 = vmul.u32 %v9180, %v9183
    %v9186 = vmul.u32 %v9181, %v9182
    %v9187 = vmul.u32 %v9181, %v9183
    %v9188 = vshll.u32 %v9185, 16
    %v9189 = vshrl.u32 %v9185, 16
    %v9190 = vshll.u32 %v9186, 16
    %v9191 = vshrl.u32 %v9186, 16
    %vm9192 = vc.u32 %v9184, %v9188
    %v9193 = vsel %vm9192, 1, 0
    %v9194 = vadd.s32 %v9184, %v9188
    %v9195 = vadd.s32 %v9187, %v9193
    %vm9196 = vc.u32 %v9194, %v9190
    %v9197 = vsel %vm9196, 1, 0
    %v9198 = vadd.s32 %v9194, %v9190
    %v9199 = vadd.s32 %v9195, %v9197
    %v9200 = vadd.s32 %v9199, %v9189
    %v9201 = vadd.s32 %v9200, %v9191
    %v9202 = vand.u32 %v9179, 65535
    %v9203 = vshrl.u32 %v9179, 16
    %v9204 = vand.u32 %v9174, 65535
    %v9205 = vshrl.u32 %v9174, 16
    %v9206 = vmul.u32 %v9202, %v9204
    %v9207 = vmul.u32 %v9202, %v9205
    %v9208 = vmul.u32 %v9203, %v9204
    %v9209 = vmul.u32 %v9203, %v9205
    %v9210 = vshll.u32 %v9207, 16
    %v9211 = vshrl.u32 %v9207, 16
    %v9212 = vshll.u32 %v9208, 16
    %v9213 = vshrl.u32 %v9208, 16
    %vm9214 = vc.u32 %v9206, %v9210
    %v9215 = vsel %vm9214, 1, 0
    %v9216 = vadd.s32 %v9206, %v9210
    %v9217 = vadd.s32 %v9209, %v9215
    %vm9218 = vc.u32 %v9216, %v9212
    %v9219 = vsel %vm9218, 1, 0
    %v9220 = vadd.s32 %v9216, %v9212
    %v9221 = vadd.s32 %v9217, %v9219
    %v9222 = vadd.s32 %v9221, %v9211
    %v9223 = vadd.s32 %v9222, %v9213
    %v9224 = vmul.u32 %v9179, %v9170
    %v9225 = vadd.s32 %v9201, %v9220
    %vm9226 = vc.u32 %v9201, %v9220
    %v9227 = vadd.s32 %v9223, 1
    %v9228 = vsel %vm9226, %v9227, %v9223
    %v9229 = vadd.s32 %v9224, %v9228
    %v9230 = vadd.s32 %v9229, 536870912
    %v9231 = vshrl.u32 %v9230, 30
    %v9232 = vshll.u32 %v9231, 30
    %v9233 = vsub.s32 %v9229, %v9232
    %vm9234 = vcmp.lt.s32.totalorder %v9233, 0
    %v9235 = vsub.s32 0, %v9233
    %v9236 = vsel %vm9234, %v9235, %v9233
    %v9237 = vclz %v9236
    %v9238 = vsub.s32 %v9237, 2
    %vm9239 = vcmp.gt.s32.totalorder 0, %v9238
    %v9240 = vsel %vm9239, 0, %v9238
    %v9241 = vsub.s32 32, %v9240
    %v9242 = vshll.u32 %v9233, %v9240
    %v9243 = vshrl.u32 %v9225, %v9241
    %v9244 = vor.u32 %v9242, %v9243
    %v9245 = vsub.s32 4294967266, %v9240
    %v9246 = vadd.s32 %v9245, 127
    %v9247 = vshll.u32 %v9246, 23
    %v9248 = vor.u32 4788187, %v9247
    %v9249 = vand.u32 2147483647, %v9248
    %v9251 = vcvt.s32.f32 %v9244
    %v9252 = vmul.f32 %v9251, %v9249
    %v9253 = vxor.u32 %v9252, 2147483648
    %v9254 = vsel %vm9133, %v9253, %v9252
    %v9255 = vsub.s32 4, %v9231
    %v9256 = vsel %vm9133, %v9255, %v9231
    %v9257 = vsel %vm9132, %v1059, %v9254
    %v9258 = vsel %vm9132, 0, %v9256
    %v9259 = vmul.f32 %v9257, %v9257
    %v9260 = vmul.f32 %v9259, -0.001358992
    %v9261 = vadd.f32 %v9260, 0.041655596
    %v9262 = vmul.f32 %v9259, %v9261
    %v9263 = vadd.f32 %v9262, -0.4999988
    %v9264 = vmul.f32 %v9259, %v9263
    %v9265 = vadd.f32 1.0, %v9264
    %v9266 = vmul.f32 %v9257, %v9257
    %v9267 = vmul.f32 %v9266, -0.00019511016
    %v9268 = vadd.f32 %v9267, 0.008332121
    %v9269 = vmul.f32 %v9266, %v9268
    %v9270 = vadd.f32 %v9269, -0.16666654
    %v9271 = vmul.f32 %v9266, %v9270
    %v9272 = vadd.f32 %v9271, 1.0
    %v9273 = vmul.f32 %v9272, %v9257
    %vm9274 = vweird.f32 %v1059
    %v9275 = vadd.s32 %v9258, 3
    %v9276 = vand.u32 %v9275, 3
    %vm9277 = vcmp.lt.s32.totalorder %v9276, 2
    %vm9278 = vcmp.eq.s32.totalorder %v9276, 0
    %v9279 = vxor.u32 %v9273, 2147483648
    %v9280 = vsel %vm9278, %v9265, %v9279
    %vm9281 = vcmp.eq.s32.totalorder %v9276, 2
    %v9282 = vxor.u32 %v9265, 2147483648
    %v9283 = vsel %vm9281, %v9282, %v9273
    %v9284 = vsel %vm9277, %v9280, %v9283
    %v9285 = vsel %vm9274, nan, %v9284
    %v9286 = vand.u32 2147483647, %v1060
    %vm9287 = vcmp.le.f32.partialorder %v9286, 0.7853982
    %vm9288 = vcmp.lt.s32.totalorder %v1060, 0
    %v9289 = vand.u32 %v1060, 2139095040
    %v9290 = vshrl.u32 %v9289, 23
    %v9291 = vsub.s32 %v9290, 127
    %v9292 = vand.u32 2147483647, %v1060
    %v9293 = vand.u32 %v9292, 8388607
    %v9294 = vor.u32 %v9293, 8388608
    %v9295 = vsub.s32 0, %v9294
    %v9296 = vadd.s32 %v9291, 1
    %vm9297 = vcmp.gt.s32.totalorder %v9296, 0
    %v9298 = vsel %vm9297, %v9296, 0
    %v9299 = vshrl.u32 %v9298, 5
    %v9300 = vand.u32 %v9298, 31
    %v9301 = vsub.s32 32, %v9300
    %v9302 = vshrl.u32 683565275, %v9301
    %v9303 = vshll.u32 683565275, %v9300
    %v9304 = vshrl.u32 2475754826, %v9301
    %v9305 = vor.u32 %v9303, %v9304
    %v9306 = vshll.u32 2475754826, %v9300
    %v9307 = vshrl.u32 2131351028, %v9301
    %v9308 = vor.u32 %v9306, %v9307
    %v9309 = vshll.u32 2131351028, %v9300
    %v9310 = vshrl.u32 2102212464, %v9301
    %v9311 = vor.u32 %v9309, %v9310
    %v9312 = vshll.u32 2102212464, %v9300
    %v9313 = vshrl.u32 920167782, %v9301
    %v9314 = vor.u32 %v9312, %v9313
    %v9315 = vshll.u32 920167782, %v9300
    %v9316 = vshrl.u32 1326507024, %v9301
    %v9317 = vor.u32 %v9315, %v9316
    %vm9318 = vcmp.lt.s32.totalorder %v9299, 1
    %vm9319 = vcmp.lt.s32.totalorder %v9299, 2
    %vm9320 = vcmp.lt.s32.totalorder %v9299, 3
    %vm9321 = vcmp.lt.s32.totalorder %v9299, 4
    %v9322 = vsel %vm9318, %v9302, %v9305
    %v9323 = vsel %vm9321, %v9311, 2102212464
    %v9324 = vsel %vm9320, %v9308, %v9323
    %v9325 = vsel %vm9319, %v9322, %v9324
    %v9326 = vsel %vm9318, %v9305, %v9308
    %v9327 = vsel %vm9321, %v9314, 920167782
    %v9328 = vsel %vm9320, %v9311, %v9327
    %v9329 = vsel %vm9319, %v9326, %v9328
    %v9330 = vsel %vm9318, %v9308, %v9311
    %v9331 = vsel %vm9321, %v9317, 1326507024
    %v9332 = vsel %vm9320, %v9314, %v9331
    %v9333 = vsel %vm9319, %v9330, %v9332
    %v9334 = vshll.u32 %v9294, 8
    %v9335 = vand.u32 %v9334, 65535
    %v9336 = vshrl.u32 %v9334, 16
    %v9337 = vand.u32 %v9333, 65535
    %v9338 = vshrl.u32 %v9333, 16
    %v9339 = vmul.u32 %v9335, %v9337
    %v9340 = vmul.u32 %v9335, %v9338
    %v9341 = vmul.u32 %v9336, %v9337
    %v9342 = vmul.u32 %v9336, %v9338
    %v9343 = vshll.u32 %v9340, 16
    %v9344 = vshrl.u32 %v9340, 16
    %v9345 = vshll.u32 %v9341, 16
    %v9346 = vshrl.u32 %v9341, 16
    %vm9347 = vc.u32 %v9339, %v9343
    %v9348 = vsel %vm9347, 1, 0
    %v9349 = vadd.s32 %v9339, %v9343
    %v9350 = vadd.s32 %v9342, %v9348
    %vm9351 = vc.u32 %v9349, %v9345
    %v9352 = vsel %vm9351, 1, 0
    %v9353 = vadd.s32 %v9349, %v9345
    %v9354 = vadd.s32 %v9350, %v9352
    %v9355 = vadd.s32 %v9354, %v9344
    %v9356 = vadd.s32 %v9355, %v9346
    %v9357 = vand.u32 %v9334, 65535
    %v9358 = vshrl.u32 %v9334, 16
    %v9359 = vand.u32 %v9329, 65535
    %v9360 = vshrl.u32 %v9329, 16
    %v9361 = vmul.u32 %v9357, %v9359
    %v9362 = vmul.u32 %v9357, %v9360
    %v9363 = vmul.u32 %v9358, %v9359
    %v9364 = vmul.u32 %v9358, %v9360
    %v9365 = vshll.u32 %v9362, 16
    %v9366 = vshrl.u32 %v9362, 16
    %v9367 = vshll.u32 %v9363, 16
    %v9368 = vshrl.u32 %v9363, 16
    %vm9369 = vc.u32 %v9361, %v9365
    %v9370 = vsel %vm9369, 1, 0
    %v9371 = vadd.s32 %v9361, %v9365
    %v9372 = vadd.s32 %v9364, %v9370
    %vm9373 = vc.u32 %v9371, %v9367
    %v9374 = vsel %vm9373, 1, 0
    %v9375 = vadd.s32 %v9371, %v9367
    %v9376 = vadd.s32 %v9372, %v9374
    %v9377 = vadd.s32 %v9376, %v9366
    %v9378 = vadd.s32 %v9377, %v9368
    %v9379 = vmul.u32 %v9334, %v9325
    %v9380 = vadd.s32 %v9356, %v9375
    %vm9381 = vc.u32 %v9356, %v9375
    %v9382 = vadd.s32 %v9378, 1
    %v9383 = vsel %vm9381, %v9382, %v9378
    %v9384 = vadd.s32 %v9379, %v9383
    %v9385 = vadd.s32 %v9384, 536870912
    %v9386 = vshrl.u32 %v9385, 30
    %v9387 = vshll.u32 %v9386, 30
    %v9388 = vsub.s32 %v9384, %v9387
    %vm9389 = vcmp.lt.s32.totalorder %v9388, 0
    %v9390 = vsub.s32 0, %v9388
    %v9391 = vsel %vm9389, %v9390, %v9388
    %v9392 = vclz %v9391
    %v9393 = vsub.s32 %v9392, 2
    %vm9394 = vcmp.gt.s32.totalorder 0, %v9393
    %v9395 = vsel %vm9394, 0, %v9393
    %v9396 = vsub.s32 32, %v9395
    %v9397 = vshll.u32 %v9388, %v9395
    %v9398 = vshrl.u32 %v9380, %v9396
    %v9399 = vor.u32 %v9397, %v9398
    %v9400 = vsub.s32 4294967266, %v9395
    %v9401 = vadd.s32 %v9400, 127
    %v9402 = vshll.u32 %v9401, 23
    %v9403 = vor.u32 4788187, %v9402
    %v9404 = vand.u32 2147483647, %v9403
    %v9406 = vcvt.s32.f32 %v9399
    %v9407 = vmul.f32 %v9406, %v9404
    %v9408 = vxor.u32 %v9407, 2147483648
    %v9409 = vsel %vm9288, %v9408, %v9407
    %v9410 = vsub.s32 4, %v9386
    %v9411 = vsel %vm9288, %v9410, %v9386
    %v9412 = vsel %vm9287, %v1060, %v9409
    %v9413 = vsel %vm9287, 0, %v9411
    %v9414 = vmul.f32 %v9412, %v9412
    %v9415 = vmul.f32 %v9414, -0.001358992
    %v9416 = vadd.f32 %v9415, 0.041655596
    %v9417 = vmul.f32 %v9414, %v9416
    %v9418 = vadd.f32 %v9417, -0.4999988
    %v9419 = vmul.f32 %v9414, %v9418
    %v9420 = vadd.f32 1.0, %v9419
    %v9421 = vmul.f32 %v9412, %v9412
    %v9422 = vmul.f32 %v9421, -0.00019511016
    %v9423 = vadd.f32 %v9422, 0.008332121
    %v9424 = vmul.f32 %v9421, %v9423
    %v9425 = vadd.f32 %v9424, -0.16666654
    %v9426 = vmul.f32 %v9421, %v9425
    %v9427 = vadd.f32 %v9426, 1.0
    %v9428 = vmul.f32 %v9427, %v9412
    %vm9429 = vweird.f32 %v1060
    %v9430 = vadd.s32 %v9413, 3
    %v9431 = vand.u32 %v9430, 3
    %vm9432 = vcmp.lt.s32.totalorder %v9431, 2
    %vm9433 = vcmp.eq.s32.totalorder %v9431, 0
    %v9434 = vxor.u32 %v9428, 2147483648
    %v9435 = vsel %vm9433, %v9420, %v9434
    %vm9436 = vcmp.eq.s32.totalorder %v9431, 2
    %v9437 = vxor.u32 %v9420, 2147483648
    %v9438 = vsel %vm9436, %v9437, %v9428
    %v9439 = vsel %vm9432, %v9435, %v9438
    %v9440 = vsel %vm9429, nan, %v9439
    %v9441 = vand.u32 2147483647, %v1061
    %vm9442 = vcmp.le.f32.partialorder %v9441, 0.7853982
    %vm9443 = vcmp.lt.s32.totalorder %v1061, 0
    %v9444 = vand.u32 %v1061, 2139095040
    %v9445 = vshrl.u32 %v9444, 23
    %v9446 = vsub.s32 %v9445, 127
    %v9447 = vand.u32 2147483647, %v1061
    %v9448 = vand.u32 %v9447, 8388607
    %v9449 = vor.u32 %v9448, 8388608
    %v9450 = vsub.s32 0, %v9449
    %v9451 = vadd.s32 %v9446, 1
    %vm9452 = vcmp.gt.s32.totalorder %v9451, 0
    %v9453 = vsel %vm9452, %v9451, 0
    %v9454 = vshrl.u32 %v9453, 5
    %v9455 = vand.u32 %v9453, 31
    %v9456 = vsub.s32 32, %v9455
    %v9457 = vshrl.u32 683565275, %v9456
    %v9458 = vshll.u32 683565275, %v9455
    %v9459 = vshrl.u32 2475754826, %v9456
    %v9460 = vor.u32 %v9458, %v9459
    %v9461 = vshll.u32 2475754826, %v9455
    %v9462 = vshrl.u32 2131351028, %v9456
    %v9463 = vor.u32 %v9461, %v9462
    %v9464 = vshll.u32 2131351028, %v9455
    %v9465 = vshrl.u32 2102212464, %v9456
    %v9466 = vor.u32 %v9464, %v9465
    %v9467 = vshll.u32 2102212464, %v9455
    %v9468 = vshrl.u32 920167782, %v9456
    %v9469 = vor.u32 %v9467, %v9468
    %v9470 = vshll.u32 920167782, %v9455
    %v9471 = vshrl.u32 1326507024, %v9456
    %v9472 = vor.u32 %v9470, %v9471
    %vm9473 = vcmp.lt.s32.totalorder %v9454, 1
    %vm9474 = vcmp.lt.s32.totalorder %v9454, 2
    %vm9475 = vcmp.lt.s32.totalorder %v9454, 3
    %vm9476 = vcmp.lt.s32.totalorder %v9454, 4
    %v9477 = vsel %vm9473, %v9457, %v9460
    %v9478 = vsel %vm9476, %v9466, 2102212464
    %v9479 = vsel %vm9475, %v9463, %v9478
    %v9480 = vsel %vm9474, %v9477, %v9479
    %v9481 = vsel %vm9473, %v9460, %v9463
    %v9482 = vsel %vm9476, %v9469, 920167782
    %v9483 = vsel %vm9475, %v9466, %v9482
    %v9484 = vsel %vm9474, %v9481, %v9483
    %v9485 = vsel %vm9473, %v9463, %v9466
    %v9486 = vsel %vm9476, %v9472, 1326507024
    %v9487 = vsel %vm9475, %v9469, %v9486
    %v9488 = vsel %vm9474, %v9485, %v9487
    %v9489 = vshll.u32 %v9449, 8
    %v9490 = vand.u32 %v9489, 65535
    %v9491 = vshrl.u32 %v9489, 16
    %v9492 = vand.u32 %v9488, 65535
    %v9493 = vshrl.u32 %v9488, 16
    %v9494 = vmul.u32 %v9490, %v9492
    %v9495 = vmul.u32 %v9490, %v9493
    %v9496 = vmul.u32 %v9491, %v9492
    %v9497 = vmul.u32 %v9491, %v9493
    %v9498 = vshll.u32 %v9495, 16
    %v9499 = vshrl.u32 %v9495, 16
    %v9500 = vshll.u32 %v9496, 16
    %v9501 = vshrl.u32 %v9496, 16
    %vm9502 = vc.u32 %v9494, %v9498
    %v9503 = vsel %vm9502, 1, 0
    %v9504 = vadd.s32 %v9494, %v9498
    %v9505 = vadd.s32 %v9497, %v9503
    %vm9506 = vc.u32 %v9504, %v9500
    %v9507 = vsel %vm9506, 1, 0
    %v9508 = vadd.s32 %v9504, %v9500
    %v9509 = vadd.s32 %v9505, %v9507
    %v9510 = vadd.s32 %v9509, %v9499
    %v9511 = vadd.s32 %v9510, %v9501
    %v9512 = vand.u32 %v9489, 65535
    %v9513 = vshrl.u32 %v9489, 16
    %v9514 = vand.u32 %v9484, 65535
    %v9515 = vshrl.u32 %v9484, 16
    %v9516 = vmul.u32 %v9512, %v9514
    %v9517 = vmul.u32 %v9512, %v9515
    %v9518 = vmul.u32 %v9513, %v9514
    %v9519 = vmul.u32 %v9513, %v9515
    %v9520 = vshll.u32 %v9517, 16
    %v9521 = vshrl.u32 %v9517, 16
    %v9522 = vshll.u32 %v9518, 16
    %v9523 = vshrl.u32 %v9518, 16
    %vm9524 = vc.u32 %v9516, %v9520
    %v9525 = vsel %vm9524, 1, 0
    %v9526 = vadd.s32 %v9516, %v9520
    %v9527 = vadd.s32 %v9519, %v9525
    %vm9528 = vc.u32 %v9526, %v9522
    %v9529 = vsel %vm9528, 1, 0
    %v9530 = vadd.s32 %v9526, %v9522
    %v9531 = vadd.s32 %v9527, %v9529
    %v9532 = vadd.s32 %v9531, %v9521
    %v9533 = vadd.s32 %v9532, %v9523
    %v9534 = vmul.u32 %v9489, %v9480
    %v9535 = vadd.s32 %v9511, %v9530
    %vm9536 = vc.u32 %v9511, %v9530
    %v9537 = vadd.s32 %v9533, 1
    %v9538 = vsel %vm9536, %v9537, %v9533
    %v9539 = vadd.s32 %v9534, %v9538
    %v9540 = vadd.s32 %v9539, 536870912
    %v9541 = vshrl.u32 %v9540, 30
    %v9542 = vshll.u32 %v9541, 30
    %v9543 = vsub.s32 %v9539, %v9542
    %vm9544 = vcmp.lt.s32.totalorder %v9543, 0
    %v9545 = vsub.s32 0, %v9543
    %v9546 = vsel %vm9544, %v9545, %v9543
    %v9547 = vclz %v9546
    %v9548 = vsub.s32 %v9547, 2
    %vm9549 = vcmp.gt.s32.totalorder 0, %v9548
    %v9550 = vsel %vm9549, 0, %v9548
    %v9551 = vsub.s32 32, %v9550
    %v9552 = vshll.u32 %v9543, %v9550
    %v9553 = vshrl.u32 %v9535, %v9551
    %v9554 = vor.u32 %v9552, %v9553
    %v9555 = vsub.s32 4294967266, %v9550
    %v9556 = vadd.s32 %v9555, 127
    %v9557 = vshll.u32 %v9556, 23
    %v9558 = vor.u32 4788187, %v9557
    %v9559 = vand.u32 2147483647, %v9558
    %v9561 = vcvt.s32.f32 %v9554
    %v9562 = vmul.f32 %v9561, %v9559
    %v9563 = vxor.u32 %v9562, 2147483648
    %v9564 = vsel %vm9443, %v9563, %v9562
    %v9565 = vsub.s32 4, %v9541
    %v9566 = vsel %vm9443, %v9565, %v9541
    %v9567 = vsel %vm9442, %v1061, %v9564
    %v9568 = vsel %vm9442, 0, %v9566
    %v9569 = vmul.f32 %v9567, %v9567
    %v9570 = vmul.f32 %v9569, -0.001358992
    %v9571 = vadd.f32 %v9570, 0.041655596
    %v9572 = vmul.f32 %v9569, %v9571
    %v9573 = vadd.f32 %v9572, -0.4999988
    %v9574 = vmul.f32 %v9569, %v9573
    %v9575 = vadd.f32 1.0, %v9574
    %v9576 = vmul.f32 %v9567, %v9567
    %v9577 = vmul.f32 %v9576, -0.00019511016
    %v9578 = vadd.f32 %v9577, 0.008332121
    %v9579 = vmul.f32 %v9576, %v9578
    %v9580 = vadd.f32 %v9579, -0.16666654
    %v9581 = vmul.f32 %v9576, %v9580
    %v9582 = vadd.f32 %v9581, 1.0
    %v9583 = vmul.f32 %v9582, %v9567
    %vm9584 = vweird.f32 %v1061
    %v9585 = vadd.s32 %v9568, 3
    %v9586 = vand.u32 %v9585, 3
    %vm9587 = vcmp.lt.s32.totalorder %v9586, 2
    %vm9588 = vcmp.eq.s32.totalorder %v9586, 0
    %v9589 = vxor.u32 %v9583, 2147483648
    %v9590 = vsel %vm9588, %v9575, %v9589
    %vm9591 = vcmp.eq.s32.totalorder %v9586, 2
    %v9592 = vxor.u32 %v9575, 2147483648
    %v9593 = vsel %vm9591, %v9592, %v9583
    %v9594 = vsel %vm9587, %v9590, %v9593
    %v9595 = vsel %vm9584, nan, %v9594
    %v9596 = vand.u32 2147483647, %v1062
    %vm9597 = vcmp.le.f32.partialorder %v9596, 0.7853982
    %vm9598 = vcmp.lt.s32.totalorder %v1062, 0
    %v9599 = vand.u32 %v1062, 2139095040
    %v9600 = vshrl.u32 %v9599, 23
    %v9601 = vsub.s32 %v9600, 127
    %v9602 = vand.u32 2147483647, %v1062
    %v9603 = vand.u32 %v9602, 8388607
    %v9604 = vor.u32 %v9603, 8388608
    %v9605 = vsub.s32 0, %v9604
    %v9606 = vadd.s32 %v9601, 1
    %vm9607 = vcmp.gt.s32.totalorder %v9606, 0
    %v9608 = vsel %vm9607, %v9606, 0
    %v9609 = vshrl.u32 %v9608, 5
    %v9610 = vand.u32 %v9608, 31
    %v9611 = vsub.s32 32, %v9610
    %v9612 = vshrl.u32 683565275, %v9611
    %v9613 = vshll.u32 683565275, %v9610
    %v9614 = vshrl.u32 2475754826, %v9611
    %v9615 = vor.u32 %v9613, %v9614
    %v9616 = vshll.u32 2475754826, %v9610
    %v9617 = vshrl.u32 2131351028, %v9611
    %v9618 = vor.u32 %v9616, %v9617
    %v9619 = vshll.u32 2131351028, %v9610
    %v9620 = vshrl.u32 2102212464, %v9611
    %v9621 = vor.u32 %v9619, %v9620
    %v9622 = vshll.u32 2102212464, %v9610
    %v9623 = vshrl.u32 920167782, %v9611
    %v9624 = vor.u32 %v9622, %v9623
    %v9625 = vshll.u32 920167782, %v9610
    %v9626 = vshrl.u32 1326507024, %v9611
    %v9627 = vor.u32 %v9625, %v9626
    %vm9628 = vcmp.lt.s32.totalorder %v9609, 1
    %vm9629 = vcmp.lt.s32.totalorder %v9609, 2
    %vm9630 = vcmp.lt.s32.totalorder %v9609, 3
    %vm9631 = vcmp.lt.s32.totalorder %v9609, 4
    %v9632 = vsel %vm9628, %v9612, %v9615
    %v9633 = vsel %vm9631, %v9621, 2102212464
    %v9634 = vsel %vm9630, %v9618, %v9633
    %v9635 = vsel %vm9629, %v9632, %v9634
    %v9636 = vsel %vm9628, %v9615, %v9618
    %v9637 = vsel %vm9631, %v9624, 920167782
    %v9638 = vsel %vm9630, %v9621, %v9637
    %v9639 = vsel %vm9629, %v9636, %v9638
    %v9640 = vsel %vm9628, %v9618, %v9621
    %v9641 = vsel %vm9631, %v9627, 1326507024
    %v9642 = vsel %vm9630, %v9624, %v9641
    %v9643 = vsel %vm9629, %v9640, %v9642
    %v9644 = vshll.u32 %v9604, 8
    %v9645 = vand.u32 %v9644, 65535
    %v9646 = vshrl.u32 %v9644, 16
    %v9647 = vand.u32 %v9643, 65535
    %v9648 = vshrl.u32 %v9643, 16
    %v9649 = vmul.u32 %v9645, %v9647
    %v9650 = vmul.u32 %v9645, %v9648
    %v9651 = vmul.u32 %v9646, %v9647
    %v9652 = vmul.u32 %v9646, %v9648
    %v9653 = vshll.u32 %v9650, 16
    %v9654 = vshrl.u32 %v9650, 16
    %v9655 = vshll.u32 %v9651, 16
    %v9656 = vshrl.u32 %v9651, 16
    %vm9657 = vc.u32 %v9649, %v9653
    %v9658 = vsel %vm9657, 1, 0
    %v9659 = vadd.s32 %v9649, %v9653
    %v9660 = vadd.s32 %v9652, %v9658
    %vm9661 = vc.u32 %v9659, %v9655
    %v9662 = vsel %vm9661, 1, 0
    %v9663 = vadd.s32 %v9659, %v9655
    %v9664 = vadd.s32 %v9660, %v9662
    %v9665 = vadd.s32 %v9664, %v9654
    %v9666 = vadd.s32 %v9665, %v9656
    %v9667 = vand.u32 %v9644, 65535
    %v9668 = vshrl.u32 %v9644, 16
    %v9669 = vand.u32 %v9639, 65535
    %v9670 = vshrl.u32 %v9639, 16
    %v9671 = vmul.u32 %v9667, %v9669
    %v9672 = vmul.u32 %v9667, %v9670
    %v9673 = vmul.u32 %v9668, %v9669
    %v9674 = vmul.u32 %v9668, %v9670
    %v9675 = vshll.u32 %v9672, 16
    %v9676 = vshrl.u32 %v9672, 16
    %v9677 = vshll.u32 %v9673, 16
    %v9678 = vshrl.u32 %v9673, 16
    %vm9679 = vc.u32 %v9671, %v9675
    %v9680 = vsel %vm9679, 1, 0
    %v9681 = vadd.s32 %v9671, %v9675
    %v9682 = vadd.s32 %v9674, %v9680
    %vm9683 = vc.u32 %v9681, %v9677
    %v9684 = vsel %vm9683, 1, 0
    %v9685 = vadd.s32 %v9681, %v9677
    %v9686 = vadd.s32 %v9682, %v9684
    %v9687 = vadd.s32 %v9686, %v9676
    %v9688 = vadd.s32 %v9687, %v9678
    %v9689 = vmul.u32 %v9644, %v9635
    %v9690 = vadd.s32 %v9666, %v9685
    %vm9691 = vc.u32 %v9666, %v9685
    %v9692 = vadd.s32 %v9688, 1
    %v9693 = vsel %vm9691, %v9692, %v9688
    %v9694 = vadd.s32 %v9689, %v9693
    %v9695 = vadd.s32 %v9694, 536870912
    %v9696 = vshrl.u32 %v9695, 30
    %v9697 = vshll.u32 %v9696, 30
    %v9698 = vsub.s32 %v9694, %v9697
    %vm9699 = vcmp.lt.s32.totalorder %v9698, 0
    %v9700 = vsub.s32 0, %v9698
    %v9701 = vsel %vm9699, %v9700, %v9698
    %v9702 = vclz %v9701
    %v9703 = vsub.s32 %v9702, 2
    %vm9704 = vcmp.gt.s32.totalorder 0, %v9703
    %v9705 = vsel %vm9704, 0, %v9703
    %v9706 = vsub.s32 32, %v9705
    %v9707 = vshll.u32 %v9698, %v9705
    %v9708 = vshrl.u32 %v9690, %v9706
    %v9709 = vor.u32 %v9707, %v9708
    %v9710 = vsub.s32 4294967266, %v9705
    %v9711 = vadd.s32 %v9710, 127
    %v9712 = vshll.u32 %v9711, 23
    %v9713 = vor.u32 4788187, %v9712
    %v9714 = vand.u32 2147483647, %v9713
    %v9716 = vcvt.s32.f32 %v9709
    %v9717 = vmul.f32 %v9716, %v9714
    %v9718 = vxor.u32 %v9717, 2147483648
    %v9719 = vsel %vm9598, %v9718, %v9717
    %v9720 = vsub.s32 4, %v9696
    %v9721 = vsel %vm9598, %v9720, %v9696
    %v9722 = vsel %vm9597, %v1062, %v9719
    %v9723 = vsel %vm9597, 0, %v9721
    %v9724 = vmul.f32 %v9722, %v9722
    %v9725 = vmul.f32 %v9724, -0.001358992
    %v9726 = vadd.f32 %v9725, 0.041655596
    %v9727 = vmul.f32 %v9724, %v9726
    %v9728 = vadd.f32 %v9727, -0.4999988
    %v9729 = vmul.f32 %v9724, %v9728
    %v9730 = vadd.f32 1.0, %v9729
    %v9731 = vmul.f32 %v9722, %v9722
    %v9732 = vmul.f32 %v9731, -0.00019511016
    %v9733 = vadd.f32 %v9732, 0.008332121
    %v9734 = vmul.f32 %v9731, %v9733
    %v9735 = vadd.f32 %v9734, -0.16666654
    %v9736 = vmul.f32 %v9731, %v9735
    %v9737 = vadd.f32 %v9736, 1.0
    %v9738 = vmul.f32 %v9737, %v9722
    %vm9739 = vweird.f32 %v1062
    %v9740 = vadd.s32 %v9723, 3
    %v9741 = vand.u32 %v9740, 3
    %vm9742 = vcmp.lt.s32.totalorder %v9741, 2
    %vm9743 = vcmp.eq.s32.totalorder %v9741, 0
    %v9744 = vxor.u32 %v9738, 2147483648
    %v9745 = vsel %vm9743, %v9730, %v9744
    %vm9746 = vcmp.eq.s32.totalorder %v9741, 2
    %v9747 = vxor.u32 %v9730, 2147483648
    %v9748 = vsel %vm9746, %v9747, %v9738
    %v9749 = vsel %vm9742, %v9745, %v9748
    %v9750 = vsel %vm9739, nan, %v9749
    %v9751 = vand.u32 2147483647, %v1063
    %vm9752 = vcmp.le.f32.partialorder %v9751, 0.7853982
    %vm9753 = vcmp.lt.s32.totalorder %v1063, 0
    %v9754 = vand.u32 %v1063, 2139095040
    %v9755 = vshrl.u32 %v9754, 23
    %v9756 = vsub.s32 %v9755, 127
    %v9757 = vand.u32 2147483647, %v1063
    %v9758 = vand.u32 %v9757, 8388607
    %v9759 = vor.u32 %v9758, 8388608
    %v9760 = vsub.s32 0, %v9759
    %v9761 = vadd.s32 %v9756, 1
    %vm9762 = vcmp.gt.s32.totalorder %v9761, 0
    %v9763 = vsel %vm9762, %v9761, 0
    %v9764 = vshrl.u32 %v9763, 5
    %v9765 = vand.u32 %v9763, 31
    %v9766 = vsub.s32 32, %v9765
    %v9767 = vshrl.u32 683565275, %v9766
    %v9768 = vshll.u32 683565275, %v9765
    %v9769 = vshrl.u32 2475754826, %v9766
    %v9770 = vor.u32 %v9768, %v9769
    %v9771 = vshll.u32 2475754826, %v9765
    %v9772 = vshrl.u32 2131351028, %v9766
    %v9773 = vor.u32 %v9771, %v9772
    %v9774 = vshll.u32 2131351028, %v9765
    %v9775 = vshrl.u32 2102212464, %v9766
    %v9776 = vor.u32 %v9774, %v9775
    %v9777 = vshll.u32 2102212464, %v9765
    %v9778 = vshrl.u32 920167782, %v9766
    %v9779 = vor.u32 %v9777, %v9778
    %v9780 = vshll.u32 920167782, %v9765
    %v9781 = vshrl.u32 1326507024, %v9766
    %v9782 = vor.u32 %v9780, %v9781
    %vm9783 = vcmp.lt.s32.totalorder %v9764, 1
    %vm9784 = vcmp.lt.s32.totalorder %v9764, 2
    %vm9785 = vcmp.lt.s32.totalorder %v9764, 3
    %vm9786 = vcmp.lt.s32.totalorder %v9764, 4
    %v9787 = vsel %vm9783, %v9767, %v9770
    %v9788 = vsel %vm9786, %v9776, 2102212464
    %v9789 = vsel %vm9785, %v9773, %v9788
    %v9790 = vsel %vm9784, %v9787, %v9789
    %v9791 = vsel %vm9783, %v9770, %v9773
    %v9792 = vsel %vm9786, %v9779, 920167782
    %v9793 = vsel %vm9785, %v9776, %v9792
    %v9794 = vsel %vm9784, %v9791, %v9793
    %v9795 = vsel %vm9783, %v9773, %v9776
    %v9796 = vsel %vm9786, %v9782, 1326507024
    %v9797 = vsel %vm9785, %v9779, %v9796
    %v9798 = vsel %vm9784, %v9795, %v9797
    %v9799 = vshll.u32 %v9759, 8
    %v9800 = vand.u32 %v9799, 65535
    %v9801 = vshrl.u32 %v9799, 16
    %v9802 = vand.u32 %v9798, 65535
    %v9803 = vshrl.u32 %v9798, 16
    %v9804 = vmul.u32 %v9800, %v9802
    %v9805 = vmul.u32 %v9800, %v9803
    %v9806 = vmul.u32 %v9801, %v9802
    %v9807 = vmul.u32 %v9801, %v9803
    %v9808 = vshll.u32 %v9805, 16
    %v9809 = vshrl.u32 %v9805, 16
    %v9810 = vshll.u32 %v9806, 16
    %v9811 = vshrl.u32 %v9806, 16
    %vm9812 = vc.u32 %v9804, %v9808
    %v9813 = vsel %vm9812, 1, 0
    %v9814 = vadd.s32 %v9804, %v9808
    %v9815 = vadd.s32 %v9807, %v9813
    %vm9816 = vc.u32 %v9814, %v9810
    %v9817 = vsel %vm9816, 1, 0
    %v9818 = vadd.s32 %v9814, %v9810
    %v9819 = vadd.s32 %v9815, %v9817
    %v9820 = vadd.s32 %v9819, %v9809
    %v9821 = vadd.s32 %v9820, %v9811
    %v9822 = vand.u32 %v9799, 65535
    %v9823 = vshrl.u32 %v9799, 16
    %v9824 = vand.u32 %v9794, 65535
    %v9825 = vshrl.u32 %v9794, 16
    %v9826 = vmul.u32 %v9822, %v9824
    %v9827 = vmul.u32 %v9822, %v9825
    %v9828 = vmul.u32 %v9823, %v9824
    %v9829 = vmul.u32 %v9823, %v9825
    %v9830 = vshll.u32 %v9827, 16
    %v9831 = vshrl.u32 %v9827, 16
    %v9832 = vshll.u32 %v9828, 16
    %v9833 = vshrl.u32 %v9828, 16
    %vm9834 = vc.u32 %v9826, %v9830
    %v9835 = vsel %vm9834, 1, 0
    %v9836 = vadd.s32 %v9826, %v9830
    %v9837 = vadd.s32 %v9829, %v9835
    %vm9838 = vc.u32 %v9836, %v9832
    %v9839 = vsel %vm9838, 1, 0
    %v9840 = vadd.s32 %v9836, %v9832
    %v9841 = vadd.s32 %v9837, %v9839
    %v9842 = vadd.s32 %v9841, %v9831
    %v9843 = vadd.s32 %v9842, %v9833
    %v9844 = vmul.u32 %v9799, %v9790
    %v9845 = vadd.s32 %v9821, %v9840
    %vm9846 = vc.u32 %v9821, %v9840
    %v9847 = vadd.s32 %v9843, 1
    %v9848 = vsel %vm9846, %v9847, %v9843
    %v9849 = vadd.s32 %v9844, %v9848
    %v9850 = vadd.s32 %v9849, 536870912
    %v9851 = vshrl.u32 %v9850, 30
    %v9852 = vshll.u32 %v9851, 30
    %v9853 = vsub.s32 %v9849, %v9852
    %vm9854 = vcmp.lt.s32.totalorder %v9853, 0
    %v9855 = vsub.s32 0, %v9853
    %v9856 = vsel %vm9854, %v9855, %v9853
    %v9857 = vclz %v9856
    %v9858 = vsub.s32 %v9857, 2
    %vm9859 = vcmp.gt.s32.totalorder 0, %v9858
    %v9860 = vsel %vm9859, 0, %v9858
    %v9861 = vsub.s32 32, %v9860
    %v9862 = vshll.u32 %v9853, %v9860
    %v9863 = vshrl.u32 %v9845, %v9861
    %v9864 = vor.u32 %v9862, %v9863
    %v9865 = vsub.s32 4294967266, %v9860
    %v9866 = vadd.s32 %v9865, 127
    %v9867 = vshll.u32 %v9866, 23
    %v9868 = vor.u32 4788187, %v9867
    %v9869 = vand.u32 2147483647, %v9868
    %v9871 = vcvt.s32.f32 %v9864
    %v9872 = vmul.f32 %v9871, %v9869
    %v9873 = vxor.u32 %v9872, 2147483648
    %v9874 = vsel %vm9753, %v9873, %v9872
    %v9875 = vsub.s32 4, %v9851
    %v9876 = vsel %vm9753, %v9875, %v9851
    %v9877 = vsel %vm9752, %v1063, %v9874
    %v9878 = vsel %vm9752, 0, %v9876
    %v9879 = vmul.f32 %v9877, %v9877
    %v9880 = vmul.f32 %v9879, -0.001358992
    %v9881 = vadd.f32 %v9880, 0.041655596
    %v9882 = vmul.f32 %v9879, %v9881
    %v9883 = vadd.f32 %v9882, -0.4999988
    %v9884 = vmul.f32 %v9879, %v9883
    %v9885 = vadd.f32 1.0, %v9884
    %v9886 = vmul.f32 %v9877, %v9877
    %v9887 = vmul.f32 %v9886, -0.00019511016
    %v9888 = vadd.f32 %v9887, 0.008332121
    %v9889 = vmul.f32 %v9886, %v9888
    %v9890 = vadd.f32 %v9889, -0.16666654
    %v9891 = vmul.f32 %v9886, %v9890
    %v9892 = vadd.f32 %v9891, 1.0
    %v9893 = vmul.f32 %v9892, %v9877
    %vm9894 = vweird.f32 %v1063
    %v9895 = vadd.s32 %v9878, 3
    %v9896 = vand.u32 %v9895, 3
    %vm9897 = vcmp.lt.s32.totalorder %v9896, 2
    %vm9898 = vcmp.eq.s32.totalorder %v9896, 0
    %v9899 = vxor.u32 %v9893, 2147483648
    %v9900 = vsel %vm9898, %v9885, %v9899
    %vm9901 = vcmp.eq.s32.totalorder %v9896, 2
    %v9902 = vxor.u32 %v9885, 2147483648
    %v9903 = vsel %vm9901, %v9902, %v9893
    %v9904 = vsel %vm9897, %v9900, %v9903
    %v9905 = vsel %vm9894, nan, %v9904
    %v9906 = vand.u32 2147483647, %v1064
    %vm9907 = vcmp.le.f32.partialorder %v9906, 0.7853982
    %vm9908 = vcmp.lt.s32.totalorder %v1064, 0
    %v9909 = vand.u32 %v1064, 2139095040
    %v9910 = vshrl.u32 %v9909, 23
    %v9911 = vsub.s32 %v9910, 127
    %v9912 = vand.u32 2147483647, %v1064
    %v9913 = vand.u32 %v9912, 8388607
    %v9914 = vor.u32 %v9913, 8388608
    %v9915 = vsub.s32 0, %v9914
    %v9916 = vadd.s32 %v9911, 1
    %vm9917 = vcmp.gt.s32.totalorder %v9916, 0
    %v9918 = vsel %vm9917, %v9916, 0
    %v9919 = vshrl.u32 %v9918, 5
    %v9920 = vand.u32 %v9918, 31
    %v9921 = vsub.s32 32, %v9920
    %v9922 = vshrl.u32 683565275, %v9921
    %v9923 = vshll.u32 683565275, %v9920
    %v9924 = vshrl.u32 2475754826, %v9921
    %v9925 = vor.u32 %v9923, %v9924
    %v9926 = vshll.u32 2475754826, %v9920
    %v9927 = vshrl.u32 2131351028, %v9921
    %v9928 = vor.u32 %v9926, %v9927
    %v9929 = vshll.u32 2131351028, %v9920
    %v9930 = vshrl.u32 2102212464, %v9921
    %v9931 = vor.u32 %v9929, %v9930
    %v9932 = vshll.u32 2102212464, %v9920
    %v9933 = vshrl.u32 920167782, %v9921
    %v9934 = vor.u32 %v9932, %v9933
    %v9935 = vshll.u32 920167782, %v9920
    %v9936 = vshrl.u32 1326507024, %v9921
    %v9937 = vor.u32 %v9935, %v9936
    %vm9938 = vcmp.lt.s32.totalorder %v9919, 1
    %vm9939 = vcmp.lt.s32.totalorder %v9919, 2
    %vm9940 = vcmp.lt.s32.totalorder %v9919, 3
    %vm9941 = vcmp.lt.s32.totalorder %v9919, 4
    %v9942 = vsel %vm9938, %v9922, %v9925
    %v9943 = vsel %vm9941, %v9931, 2102212464
    %v9944 = vsel %vm9940, %v9928, %v9943
    %v9945 = vsel %vm9939, %v9942, %v9944
    %v9946 = vsel %vm9938, %v9925, %v9928
    %v9947 = vsel %vm9941, %v9934, 920167782
    %v9948 = vsel %vm9940, %v9931, %v9947
    %v9949 = vsel %vm9939, %v9946, %v9948
    %v9950 = vsel %vm9938, %v9928, %v9931
    %v9951 = vsel %vm9941, %v9937, 1326507024
    %v9952 = vsel %vm9940, %v9934, %v9951
    %v9953 = vsel %vm9939, %v9950, %v9952
    %v9954 = vshll.u32 %v9914, 8
    %v9955 = vand.u32 %v9954, 65535
    %v9956 = vshrl.u32 %v9954, 16
    %v9957 = vand.u32 %v9953, 65535
    %v9958 = vshrl.u32 %v9953, 16
    %v9959 = vmul.u32 %v9955, %v9957
    %v9960 = vmul.u32 %v9955, %v9958
    %v9961 = vmul.u32 %v9956, %v9957
    %v9962 = vmul.u32 %v9956, %v9958
    %v9963 = vshll.u32 %v9960, 16
    %v9964 = vshrl.u32 %v9960, 16
    %v9965 = vshll.u32 %v9961, 16
    %v9966 = vshrl.u32 %v9961, 16
    %vm9967 = vc.u32 %v9959, %v9963
    %v9968 = vsel %vm9967, 1, 0
    %v9969 = vadd.s32 %v9959, %v9963
    %v9970 = vadd.s32 %v9962, %v9968
    %vm9971 = vc.u32 %v9969, %v9965
    %v9972 = vsel %vm9971, 1, 0
    %v9973 = vadd.s32 %v9969, %v9965
    %v9974 = vadd.s32 %v9970, %v9972
    %v9975 = vadd.s32 %v9974, %v9964
    %v9976 = vadd.s32 %v9975, %v9966
    %v9977 = vand.u32 %v9954, 65535
    %v9978 = vshrl.u32 %v9954, 16
    %v9979 = vand.u32 %v9949, 65535
    %v9980 = vshrl.u32 %v9949, 16
    %v9981 = vmul.u32 %v9977, %v9979
    %v9982 = vmul.u32 %v9977, %v9980
    %v9983 = vmul.u32 %v9978, %v9979
    %v9984 = vmul.u32 %v9978, %v9980
    %v9985 = vshll.u32 %v9982, 16
    %v9986 = vshrl.u32 %v9982, 16
    %v9987 = vshll.u32 %v9983, 16
    %v9988 = vshrl.u32 %v9983, 16
    %vm9989 = vc.u32 %v9981, %v9985
    %v9990 = vsel %vm9989, 1, 0
    %v9991 = vadd.s32 %v9981, %v9985
    %v9992 = vadd.s32 %v9984, %v9990
    %vm9993 = vc.u32 %v9991, %v9987
    %v9994 = vsel %vm9993, 1, 0
    %v9995 = vadd.s32 %v9991, %v9987
    %v9996 = vadd.s32 %v9992, %v9994
    %v9997 = vadd.s32 %v9996, %v9986
    %v9998 = vadd.s32 %v9997, %v9988
    %v9999 = vmul.u32 %v9954, %v9945
    %v10000 = vadd.s32 %v9976, %v9995
    %vm10001 = vc.u32 %v9976, %v9995
    %v10002 = vadd.s32 %v9998, 1
    %v10003 = vsel %vm10001, %v10002, %v9998
    %v10004 = vadd.s32 %v9999, %v10003
    %v10005 = vadd.s32 %v10004, 536870912
    %v10006 = vshrl.u32 %v10005, 30
    %v10007 = vshll.u32 %v10006, 30
    %v10008 = vsub.s32 %v10004, %v10007
    %vm10009 = vcmp.lt.s32.totalorder %v10008, 0
    %v10010 = vsub.s32 0, %v10008
    %v10011 = vsel %vm10009, %v10010, %v10008
    %v10012 = vclz %v10011
    %v10013 = vsub.s32 %v10012, 2
    %vm10014 = vcmp.gt.s32.totalorder 0, %v10013
    %v10015 = vsel %vm10014, 0, %v10013
    %v10016 = vsub.s32 32, %v10015
    %v10017 = vshll.u32 %v10008, %v10015
    %v10018 = vshrl.u32 %v10000, %v10016
    %v10019 = vor.u32 %v10017, %v10018
    %v10020 = vsub.s32 4294967266, %v10015
    %v10021 = vadd.s32 %v10020, 127
    %v10022 = vshll.u32 %v10021, 23
    %v10023 = vor.u32 4788187, %v10022
    %v10024 = vand.u32 2147483647, %v10023
    %v10026 = vcvt.s32.f32 %v10019
    %v10027 = vmul.f32 %v10026, %v10024
    %v10028 = vxor.u32 %v10027, 2147483648
    %v10029 = vsel %vm9908, %v10028, %v10027
    %v10030 = vsub.s32 4, %v10006
    %v10031 = vsel %vm9908, %v10030, %v10006
    %v10032 = vsel %vm9907, %v1064, %v10029
    %v10033 = vsel %vm9907, 0, %v10031
    %v10034 = vmul.f32 %v10032, %v10032
    %v10035 = vmul.f32 %v10034, -0.001358992
    %v10036 = vadd.f32 %v10035, 0.041655596
    %v10037 = vmul.f32 %v10034, %v10036
    %v10038 = vadd.f32 %v10037, -0.4999988
    %v10039 = vmul.f32 %v10034, %v10038
    %v10040 = vadd.f32 1.0, %v10039
    %v10041 = vmul.f32 %v10032, %v10032
    %v10042 = vmul.f32 %v10041, -0.00019511016
    %v10043 = vadd.f32 %v10042, 0.008332121
    %v10044 = vmul.f32 %v10041, %v10043
    %v10045 = vadd.f32 %v10044, -0.16666654
    %v10046 = vmul.f32 %v10041, %v10045
    %v10047 = vadd.f32 %v10046, 1.0
    %v10048 = vmul.f32 %v10047, %v10032
    %vm10049 = vweird.f32 %v1064
    %v10050 = vadd.s32 %v10033, 3
    %v10051 = vand.u32 %v10050, 3
    %vm10052 = vcmp.lt.s32.totalorder %v10051, 2
    %vm10053 = vcmp.eq.s32.totalorder %v10051, 0
    %v10054 = vxor.u32 %v10048, 2147483648
    %v10055 = vsel %vm10053, %v10040, %v10054
    %vm10056 = vcmp.eq.s32.totalorder %v10051, 2
    %v10057 = vxor.u32 %v10040, 2147483648
    %v10058 = vsel %vm10056, %v10057, %v10048
    %v10059 = vsel %vm10052, %v10055, %v10058
    %v10060 = vsel %vm10049, nan, %v10059
    %v10061 = vand.u32 2147483647, %v1065
    %vm10062 = vcmp.le.f32.partialorder %v10061, 0.7853982
    %vm10063 = vcmp.lt.s32.totalorder %v1065, 0
    %v10064 = vand.u32 %v1065, 2139095040
    %v10065 = vshrl.u32 %v10064, 23
    %v10066 = vsub.s32 %v10065, 127
    %v10067 = vand.u32 2147483647, %v1065
    %v10068 = vand.u32 %v10067, 8388607
    %v10069 = vor.u32 %v10068, 8388608
    %v10070 = vsub.s32 0, %v10069
    %v10071 = vadd.s32 %v10066, 1
    %vm10072 = vcmp.gt.s32.totalorder %v10071, 0
    %v10073 = vsel %vm10072, %v10071, 0
    %v10074 = vshrl.u32 %v10073, 5
    %v10075 = vand.u32 %v10073, 31
    %v10076 = vsub.s32 32, %v10075
    %v10077 = vshrl.u32 683565275, %v10076
    %v10078 = vshll.u32 683565275, %v10075
    %v10079 = vshrl.u32 2475754826, %v10076
    %v10080 = vor.u32 %v10078, %v10079
    %v10081 = vshll.u32 2475754826, %v10075
    %v10082 = vshrl.u32 2131351028, %v10076
    %v10083 = vor.u32 %v10081, %v10082
    %v10084 = vshll.u32 2131351028, %v10075
    %v10085 = vshrl.u32 2102212464, %v10076
    %v10086 = vor.u32 %v10084, %v10085
    %v10087 = vshll.u32 2102212464, %v10075
    %v10088 = vshrl.u32 920167782, %v10076
    %v10089 = vor.u32 %v10087, %v10088
    %v10090 = vshll.u32 920167782, %v10075
    %v10091 = vshrl.u32 1326507024, %v10076
    %v10092 = vor.u32 %v10090, %v10091
    %vm10093 = vcmp.lt.s32.totalorder %v10074, 1
    %vm10094 = vcmp.lt.s32.totalorder %v10074, 2
    %vm10095 = vcmp.lt.s32.totalorder %v10074, 3
    %vm10096 = vcmp.lt.s32.totalorder %v10074, 4
    %v10097 = vsel %vm10093, %v10077, %v10080
    %v10098 = vsel %vm10096, %v10086, 2102212464
    %v10099 = vsel %vm10095, %v10083, %v10098
    %v10100 = vsel %vm10094, %v10097, %v10099
    %v10101 = vsel %vm10093, %v10080, %v10083
    %v10102 = vsel %vm10096, %v10089, 920167782
    %v10103 = vsel %vm10095, %v10086, %v10102
    %v10104 = vsel %vm10094, %v10101, %v10103
    %v10105 = vsel %vm10093, %v10083, %v10086
    %v10106 = vsel %vm10096, %v10092, 1326507024
    %v10107 = vsel %vm10095, %v10089, %v10106
    %v10108 = vsel %vm10094, %v10105, %v10107
    %v10109 = vshll.u32 %v10069, 8
    %v10110 = vand.u32 %v10109, 65535
    %v10111 = vshrl.u32 %v10109, 16
    %v10112 = vand.u32 %v10108, 65535
    %v10113 = vshrl.u32 %v10108, 16
    %v10114 = vmul.u32 %v10110, %v10112
    %v10115 = vmul.u32 %v10110, %v10113
    %v10116 = vmul.u32 %v10111, %v10112
    %v10117 = vmul.u32 %v10111, %v10113
    %v10118 = vshll.u32 %v10115, 16
    %v10119 = vshrl.u32 %v10115, 16
    %v10120 = vshll.u32 %v10116, 16
    %v10121 = vshrl.u32 %v10116, 16
    %vm10122 = vc.u32 %v10114, %v10118
    %v10123 = vsel %vm10122, 1, 0
    %v10124 = vadd.s32 %v10114, %v10118
    %v10125 = vadd.s32 %v10117, %v10123
    %vm10126 = vc.u32 %v10124, %v10120
    %v10127 = vsel %vm10126, 1, 0
    %v10128 = vadd.s32 %v10124, %v10120
    %v10129 = vadd.s32 %v10125, %v10127
    %v10130 = vadd.s32 %v10129, %v10119
    %v10131 = vadd.s32 %v10130, %v10121
    %v10132 = vand.u32 %v10109, 65535
    %v10133 = vshrl.u32 %v10109, 16
    %v10134 = vand.u32 %v10104, 65535
    %v10135 = vshrl.u32 %v10104, 16
    %v10136 = vmul.u32 %v10132, %v10134
    %v10137 = vmul.u32 %v10132, %v10135
    %v10138 = vmul.u32 %v10133, %v10134
    %v10139 = vmul.u32 %v10133, %v10135
    %v10140 = vshll.u32 %v10137, 16
    %v10141 = vshrl.u32 %v10137, 16
    %v10142 = vshll.u32 %v10138, 16
    %v10143 = vshrl.u32 %v10138, 16
    %vm10144 = vc.u32 %v10136, %v10140
    %v10145 = vsel %vm10144, 1, 0
    %v10146 = vadd.s32 %v10136, %v10140
    %v10147 = vadd.s32 %v10139, %v10145
    %vm10148 = vc.u32 %v10146, %v10142
    %v10149 = vsel %vm10148, 1, 0
    %v10150 = vadd.s32 %v10146, %v10142
    %v10151 = vadd.s32 %v10147, %v10149
    %v10152 = vadd.s32 %v10151, %v10141
    %v10153 = vadd.s32 %v10152, %v10143
    %v10154 = vmul.u32 %v10109, %v10100
    %v10155 = vadd.s32 %v10131, %v10150
    %vm10156 = vc.u32 %v10131, %v10150
    %v10157 = vadd.s32 %v10153, 1
    %v10158 = vsel %vm10156, %v10157, %v10153
    %v10159 = vadd.s32 %v10154, %v10158
    %v10160 = vadd.s32 %v10159, 536870912
    %v10161 = vshrl.u32 %v10160, 30
    %v10162 = vshll.u32 %v10161, 30
    %v10163 = vsub.s32 %v10159, %v10162
    %vm10164 = vcmp.lt.s32.totalorder %v10163, 0
    %v10165 = vsub.s32 0, %v10163
    %v10166 = vsel %vm10164, %v10165, %v10163
    %v10167 = vclz %v10166
    %v10168 = vsub.s32 %v10167, 2
    %vm10169 = vcmp.gt.s32.totalorder 0, %v10168
    %v10170 = vsel %vm10169, 0, %v10168
    %v10171 = vsub.s32 32, %v10170
    %v10172 = vshll.u32 %v10163, %v10170
    %v10173 = vshrl.u32 %v10155, %v10171
    %v10174 = vor.u32 %v10172, %v10173
    %v10175 = vsub.s32 4294967266, %v10170
    %v10176 = vadd.s32 %v10175, 127
    %v10177 = vshll.u32 %v10176, 23
    %v10178 = vor.u32 4788187, %v10177
    %v10179 = vand.u32 2147483647, %v10178
    %v10181 = vcvt.s32.f32 %v10174
    %v10182 = vmul.f32 %v10181, %v10179
    %v10183 = vxor.u32 %v10182, 2147483648
    %v10184 = vsel %vm10063, %v10183, %v10182
    %v10185 = vsub.s32 4, %v10161
    %v10186 = vsel %vm10063, %v10185, %v10161
    %v10187 = vsel %vm10062, %v1065, %v10184
    %v10188 = vsel %vm10062, 0, %v10186
    %v10189 = vmul.f32 %v10187, %v10187
    %v10190 = vmul.f32 %v10189, -0.001358992
    %v10191 = vadd.f32 %v10190, 0.041655596
    %v10192 = vmul.f32 %v10189, %v10191
    %v10193 = vadd.f32 %v10192, -0.4999988
    %v10194 = vmul.f32 %v10189, %v10193
    %v10195 = vadd.f32 1.0, %v10194
    %v10196 = vmul.f32 %v10187, %v10187
    %v10197 = vmul.f32 %v10196, -0.00019511016
    %v10198 = vadd.f32 %v10197, 0.008332121
    %v10199 = vmul.f32 %v10196, %v10198
    %v10200 = vadd.f32 %v10199, -0.16666654
    %v10201 = vmul.f32 %v10196, %v10200
    %v10202 = vadd.f32 %v10201, 1.0
    %v10203 = vmul.f32 %v10202, %v10187
    %vm10204 = vweird.f32 %v1065
    %v10205 = vadd.s32 %v10188, 3
    %v10206 = vand.u32 %v10205, 3
    %vm10207 = vcmp.lt.s32.totalorder %v10206, 2
    %vm10208 = vcmp.eq.s32.totalorder %v10206, 0
    %v10209 = vxor.u32 %v10203, 2147483648
    %v10210 = vsel %vm10208, %v10195, %v10209
    %vm10211 = vcmp.eq.s32.totalorder %v10206, 2
    %v10212 = vxor.u32 %v10195, 2147483648
    %v10213 = vsel %vm10211, %v10212, %v10203
    %v10214 = vsel %vm10207, %v10210, %v10213
    %v10215 = vsel %vm10204, nan, %v10214
    %v10216 = vand.u32 2147483647, %v1066
    %vm10217 = vcmp.le.f32.partialorder %v10216, 0.7853982
    %vm10218 = vcmp.lt.s32.totalorder %v1066, 0
    %v10219 = vand.u32 %v1066, 2139095040
    %v10220 = vshrl.u32 %v10219, 23
    %v10221 = vsub.s32 %v10220, 127
    %v10222 = vand.u32 2147483647, %v1066
    %v10223 = vand.u32 %v10222, 8388607
    %v10224 = vor.u32 %v10223, 8388608
    %v10225 = vsub.s32 0, %v10224
    %v10226 = vadd.s32 %v10221, 1
    %vm10227 = vcmp.gt.s32.totalorder %v10226, 0
    %v10228 = vsel %vm10227, %v10226, 0
    %v10229 = vshrl.u32 %v10228, 5
    %v10230 = vand.u32 %v10228, 31
    %v10231 = vsub.s32 32, %v10230
    %v10232 = vshrl.u32 683565275, %v10231
    %v10233 = vshll.u32 683565275, %v10230
    %v10234 = vshrl.u32 2475754826, %v10231
    %v10235 = vor.u32 %v10233, %v10234
    %v10236 = vshll.u32 2475754826, %v10230
    %v10237 = vshrl.u32 2131351028, %v10231
    %v10238 = vor.u32 %v10236, %v10237
    %v10239 = vshll.u32 2131351028, %v10230
    %v10240 = vshrl.u32 2102212464, %v10231
    %v10241 = vor.u32 %v10239, %v10240
    %v10242 = vshll.u32 2102212464, %v10230
    %v10243 = vshrl.u32 920167782, %v10231
    %v10244 = vor.u32 %v10242, %v10243
    %v10245 = vshll.u32 920167782, %v10230
    %v10246 = vshrl.u32 1326507024, %v10231
    %v10247 = vor.u32 %v10245, %v10246
    %vm10248 = vcmp.lt.s32.totalorder %v10229, 1
    %vm10249 = vcmp.lt.s32.totalorder %v10229, 2
    %vm10250 = vcmp.lt.s32.totalorder %v10229, 3
    %vm10251 = vcmp.lt.s32.totalorder %v10229, 4
    %v10252 = vsel %vm10248, %v10232, %v10235
    %v10253 = vsel %vm10251, %v10241, 2102212464
    %v10254 = vsel %vm10250, %v10238, %v10253
    %v10255 = vsel %vm10249, %v10252, %v10254
    %v10256 = vsel %vm10248, %v10235, %v10238
    %v10257 = vsel %vm10251, %v10244, 920167782
    %v10258 = vsel %vm10250, %v10241, %v10257
    %v10259 = vsel %vm10249, %v10256, %v10258
    %v10260 = vsel %vm10248, %v10238, %v10241
    %v10261 = vsel %vm10251, %v10247, 1326507024
    %v10262 = vsel %vm10250, %v10244, %v10261
    %v10263 = vsel %vm10249, %v10260, %v10262
    %v10264 = vshll.u32 %v10224, 8
    %v10265 = vand.u32 %v10264, 65535
    %v10266 = vshrl.u32 %v10264, 16
    %v10267 = vand.u32 %v10263, 65535
    %v10268 = vshrl.u32 %v10263, 16
    %v10269 = vmul.u32 %v10265, %v10267
    %v10270 = vmul.u32 %v10265, %v10268
    %v10271 = vmul.u32 %v10266, %v10267
    %v10272 = vmul.u32 %v10266, %v10268
    %v10273 = vshll.u32 %v10270, 16
    %v10274 = vshrl.u32 %v10270, 16
    %v10275 = vshll.u32 %v10271, 16
    %v10276 = vshrl.u32 %v10271, 16
    %vm10277 = vc.u32 %v10269, %v10273
    %v10278 = vsel %vm10277, 1, 0
    %v10279 = vadd.s32 %v10269, %v10273
    %v10280 = vadd.s32 %v10272, %v10278
    %vm10281 = vc.u32 %v10279, %v10275
    %v10282 = vsel %vm10281, 1, 0
    %v10283 = vadd.s32 %v10279, %v10275
    %v10284 = vadd.s32 %v10280, %v10282
    %v10285 = vadd.s32 %v10284, %v10274
    %v10286 = vadd.s32 %v10285, %v10276
    %v10287 = vand.u32 %v10264, 65535
    %v10288 = vshrl.u32 %v10264, 16
    %v10289 = vand.u32 %v10259, 65535
    %v10290 = vshrl.u32 %v10259, 16
    %v10291 = vmul.u32 %v10287, %v10289
    %v10292 = vmul.u32 %v10287, %v10290
    %v10293 = vmul.u32 %v10288, %v10289
    %v10294 = vmul.u32 %v10288, %v10290
    %v10295 = vshll.u32 %v10292, 16
    %v10296 = vshrl.u32 %v10292, 16
    %v10297 = vshll.u32 %v10293, 16
    %v10298 = vshrl.u32 %v10293, 16
    %vm10299 = vc.u32 %v10291, %v10295
    %v10300 = vsel %vm10299, 1, 0
    %v10301 = vadd.s32 %v10291, %v10295
    %v10302 = vadd.s32 %v10294, %v10300
    %vm10303 = vc.u32 %v10301, %v10297
    %v10304 = vsel %vm10303, 1, 0
    %v10305 = vadd.s32 %v10301, %v10297
    %v10306 = vadd.s32 %v10302, %v10304
    %v10307 = vadd.s32 %v10306, %v10296
    %v10308 = vadd.s32 %v10307, %v10298
    %v10309 = vmul.u32 %v10264, %v10255
    %v10310 = vadd.s32 %v10286, %v10305
    %vm10311 = vc.u32 %v10286, %v10305
    %v10312 = vadd.s32 %v10308, 1
    %v10313 = vsel %vm10311, %v10312, %v10308
    %v10314 = vadd.s32 %v10309, %v10313
    %v10315 = vadd.s32 %v10314, 536870912
    %v10316 = vshrl.u32 %v10315, 30
    %v10317 = vshll.u32 %v10316, 30
    %v10318 = vsub.s32 %v10314, %v10317
    %vm10319 = vcmp.lt.s32.totalorder %v10318, 0
    %v10320 = vsub.s32 0, %v10318
    %v10321 = vsel %vm10319, %v10320, %v10318
    %v10322 = vclz %v10321
    %v10323 = vsub.s32 %v10322, 2
    %vm10324 = vcmp.gt.s32.totalorder 0, %v10323
    %v10325 = vsel %vm10324, 0, %v10323
    %v10326 = vsub.s32 32, %v10325
    %v10327 = vshll.u32 %v10318, %v10325
    %v10328 = vshrl.u32 %v10310, %v10326
    %v10329 = vor.u32 %v10327, %v10328
    %v10330 = vsub.s32 4294967266, %v10325
    %v10331 = vadd.s32 %v10330, 127
    %v10332 = vshll.u32 %v10331, 23
    %v10333 = vor.u32 4788187, %v10332
    %v10334 = vand.u32 2147483647, %v10333
    %v10336 = vcvt.s32.f32 %v10329
    %v10337 = vmul.f32 %v10336, %v10334
    %v10338 = vxor.u32 %v10337, 2147483648
    %v10339 = vsel %vm10218, %v10338, %v10337
    %v10340 = vsub.s32 4, %v10316
    %v10341 = vsel %vm10218, %v10340, %v10316
    %v10342 = vsel %vm10217, %v1066, %v10339
    %v10343 = vsel %vm10217, 0, %v10341
    %v10344 = vmul.f32 %v10342, %v10342
    %v10345 = vmul.f32 %v10344, -0.001358992
    %v10346 = vadd.f32 %v10345, 0.041655596
    %v10347 = vmul.f32 %v10344, %v10346
    %v10348 = vadd.f32 %v10347, -0.4999988
    %v10349 = vmul.f32 %v10344, %v10348
    %v10350 = vadd.f32 1.0, %v10349
    %v10351 = vmul.f32 %v10342, %v10342
    %v10352 = vmul.f32 %v10351, -0.00019511016
    %v10353 = vadd.f32 %v10352, 0.008332121
    %v10354 = vmul.f32 %v10351, %v10353
    %v10355 = vadd.f32 %v10354, -0.16666654
    %v10356 = vmul.f32 %v10351, %v10355
    %v10357 = vadd.f32 %v10356, 1.0
    %v10358 = vmul.f32 %v10357, %v10342
    %vm10359 = vweird.f32 %v1066
    %v10360 = vadd.s32 %v10343, 3
    %v10361 = vand.u32 %v10360, 3
    %vm10362 = vcmp.lt.s32.totalorder %v10361, 2
    %vm10363 = vcmp.eq.s32.totalorder %v10361, 0
    %v10364 = vxor.u32 %v10358, 2147483648
    %v10365 = vsel %vm10363, %v10350, %v10364
    %vm10366 = vcmp.eq.s32.totalorder %v10361, 2
    %v10367 = vxor.u32 %v10350, 2147483648
    %v10368 = vsel %vm10366, %v10367, %v10358
    %v10369 = vsel %vm10362, %v10365, %v10368
    %v10370 = vsel %vm10359, nan, %v10369
    %v10371 = vand.u32 2147483647, %v1067
    %vm10372 = vcmp.le.f32.partialorder %v10371, 0.7853982
    %vm10373 = vcmp.lt.s32.totalorder %v1067, 0
    %v10374 = vand.u32 %v1067, 2139095040
    %v10375 = vshrl.u32 %v10374, 23
    %v10376 = vsub.s32 %v10375, 127
    %v10377 = vand.u32 2147483647, %v1067
    %v10378 = vand.u32 %v10377, 8388607
    %v10379 = vor.u32 %v10378, 8388608
    %v10380 = vsub.s32 0, %v10379
    %v10381 = vadd.s32 %v10376, 1
    %vm10382 = vcmp.gt.s32.totalorder %v10381, 0
    %v10383 = vsel %vm10382, %v10381, 0
    %v10384 = vshrl.u32 %v10383, 5
    %v10385 = vand.u32 %v10383, 31
    %v10386 = vsub.s32 32, %v10385
    %v10387 = vshrl.u32 683565275, %v10386
    %v10388 = vshll.u32 683565275, %v10385
    %v10389 = vshrl.u32 2475754826, %v10386
    %v10390 = vor.u32 %v10388, %v10389
    %v10391 = vshll.u32 2475754826, %v10385
    %v10392 = vshrl.u32 2131351028, %v10386
    %v10393 = vor.u32 %v10391, %v10392
    %v10394 = vshll.u32 2131351028, %v10385
    %v10395 = vshrl.u32 2102212464, %v10386
    %v10396 = vor.u32 %v10394, %v10395
    %v10397 = vshll.u32 2102212464, %v10385
    %v10398 = vshrl.u32 920167782, %v10386
    %v10399 = vor.u32 %v10397, %v10398
    %v10400 = vshll.u32 920167782, %v10385
    %v10401 = vshrl.u32 1326507024, %v10386
    %v10402 = vor.u32 %v10400, %v10401
    %vm10403 = vcmp.lt.s32.totalorder %v10384, 1
    %vm10404 = vcmp.lt.s32.totalorder %v10384, 2
    %vm10405 = vcmp.lt.s32.totalorder %v10384, 3
    %vm10406 = vcmp.lt.s32.totalorder %v10384, 4
    %v10407 = vsel %vm10403, %v10387, %v10390
    %v10408 = vsel %vm10406, %v10396, 2102212464
    %v10409 = vsel %vm10405, %v10393, %v10408
    %v10410 = vsel %vm10404, %v10407, %v10409
    %v10411 = vsel %vm10403, %v10390, %v10393
    %v10412 = vsel %vm10406, %v10399, 920167782
    %v10413 = vsel %vm10405, %v10396, %v10412
    %v10414 = vsel %vm10404, %v10411, %v10413
    %v10415 = vsel %vm10403, %v10393, %v10396
    %v10416 = vsel %vm10406, %v10402, 1326507024
    %v10417 = vsel %vm10405, %v10399, %v10416
    %v10418 = vsel %vm10404, %v10415, %v10417
    %v10419 = vshll.u32 %v10379, 8
    %v10420 = vand.u32 %v10419, 65535
    %v10421 = vshrl.u32 %v10419, 16
    %v10422 = vand.u32 %v10418, 65535
    %v10423 = vshrl.u32 %v10418, 16
    %v10424 = vmul.u32 %v10420, %v10422
    %v10425 = vmul.u32 %v10420, %v10423
    %v10426 = vmul.u32 %v10421, %v10422
    %v10427 = vmul.u32 %v10421, %v10423
    %v10428 = vshll.u32 %v10425, 16
    %v10429 = vshrl.u32 %v10425, 16
    %v10430 = vshll.u32 %v10426, 16
    %v10431 = vshrl.u32 %v10426, 16
    %vm10432 = vc.u32 %v10424, %v10428
    %v10433 = vsel %vm10432, 1, 0
    %v10434 = vadd.s32 %v10424, %v10428
    %v10435 = vadd.s32 %v10427, %v10433
    %vm10436 = vc.u32 %v10434, %v10430
    %v10437 = vsel %vm10436, 1, 0
    %v10438 = vadd.s32 %v10434, %v10430
    %v10439 = vadd.s32 %v10435, %v10437
    %v10440 = vadd.s32 %v10439, %v10429
    %v10441 = vadd.s32 %v10440, %v10431
    %v10442 = vand.u32 %v10419, 65535
    %v10443 = vshrl.u32 %v10419, 16
    %v10444 = vand.u32 %v10414, 65535
    %v10445 = vshrl.u32 %v10414, 16
    %v10446 = vmul.u32 %v10442, %v10444
    %v10447 = vmul.u32 %v10442, %v10445
    %v10448 = vmul.u32 %v10443, %v10444
    %v10449 = vmul.u32 %v10443, %v10445
    %v10450 = vshll.u32 %v10447, 16
    %v10451 = vshrl.u32 %v10447, 16
    %v10452 = vshll.u32 %v10448, 16
    %v10453 = vshrl.u32 %v10448, 16
    %vm10454 = vc.u32 %v10446, %v10450
    %v10455 = vsel %vm10454, 1, 0
    %v10456 = vadd.s32 %v10446, %v10450
    %v10457 = vadd.s32 %v10449, %v10455
    %vm10458 = vc.u32 %v10456, %v10452
    %v10459 = vsel %vm10458, 1, 0
    %v10460 = vadd.s32 %v10456, %v10452
    %v10461 = vadd.s32 %v10457, %v10459
    %v10462 = vadd.s32 %v10461, %v10451
    %v10463 = vadd.s32 %v10462, %v10453
    %v10464 = vmul.u32 %v10419, %v10410
    %v10465 = vadd.s32 %v10441, %v10460
    %vm10466 = vc.u32 %v10441, %v10460
    %v10467 = vadd.s32 %v10463, 1
    %v10468 = vsel %vm10466, %v10467, %v10463
    %v10469 = vadd.s32 %v10464, %v10468
    %v10470 = vadd.s32 %v10469, 536870912
    %v10471 = vshrl.u32 %v10470, 30
    %v10472 = vshll.u32 %v10471, 30
    %v10473 = vsub.s32 %v10469, %v10472
    %vm10474 = vcmp.lt.s32.totalorder %v10473, 0
    %v10475 = vsub.s32 0, %v10473
    %v10476 = vsel %vm10474, %v10475, %v10473
    %v10477 = vclz %v10476
    %v10478 = vsub.s32 %v10477, 2
    %vm10479 = vcmp.gt.s32.totalorder 0, %v10478
    %v10480 = vsel %vm10479, 0, %v10478
    %v10481 = vsub.s32 32, %v10480
    %v10482 = vshll.u32 %v10473, %v10480
    %v10483 = vshrl.u32 %v10465, %v10481
    %v10484 = vor.u32 %v10482, %v10483
    %v10485 = vsub.s32 4294967266, %v10480
    %v10486 = vadd.s32 %v10485, 127
    %v10487 = vshll.u32 %v10486, 23
    %v10488 = vor.u32 4788187, %v10487
    %v10489 = vand.u32 2147483647, %v10488
    %v10491 = vcvt.s32.f32 %v10484
    %v10492 = vmul.f32 %v10491, %v10489
    %v10493 = vxor.u32 %v10492, 2147483648
    %v10494 = vsel %vm10373, %v10493, %v10492
    %v10495 = vsub.s32 4, %v10471
    %v10496 = vsel %vm10373, %v10495, %v10471
    %v10497 = vsel %vm10372, %v1067, %v10494
    %v10498 = vsel %vm10372, 0, %v10496
    %v10499 = vmul.f32 %v10497, %v10497
    %v10500 = vmul.f32 %v10499, -0.001358992
    %v10501 = vadd.f32 %v10500, 0.041655596
    %v10502 = vmul.f32 %v10499, %v10501
    %v10503 = vadd.f32 %v10502, -0.4999988
    %v10504 = vmul.f32 %v10499, %v10503
    %v10505 = vadd.f32 1.0, %v10504
    %v10506 = vmul.f32 %v10497, %v10497
    %v10507 = vmul.f32 %v10506, -0.00019511016
    %v10508 = vadd.f32 %v10507, 0.008332121
    %v10509 = vmul.f32 %v10506, %v10508
    %v10510 = vadd.f32 %v10509, -0.16666654
    %v10511 = vmul.f32 %v10506, %v10510
    %v10512 = vadd.f32 %v10511, 1.0
    %v10513 = vmul.f32 %v10512, %v10497
    %vm10514 = vweird.f32 %v1067
    %v10515 = vadd.s32 %v10498, 3
    %v10516 = vand.u32 %v10515, 3
    %vm10517 = vcmp.lt.s32.totalorder %v10516, 2
    %vm10518 = vcmp.eq.s32.totalorder %v10516, 0
    %v10519 = vxor.u32 %v10513, 2147483648
    %v10520 = vsel %vm10518, %v10505, %v10519
    %vm10521 = vcmp.eq.s32.totalorder %v10516, 2
    %v10522 = vxor.u32 %v10505, 2147483648
    %v10523 = vsel %vm10521, %v10522, %v10513
    %v10524 = vsel %vm10517, %v10520, %v10523
    %v10525 = vsel %vm10514, nan, %v10524
    %v10526 = vand.u32 2147483647, %v1068
    %vm10527 = vcmp.le.f32.partialorder %v10526, 0.7853982
    %vm10528 = vcmp.lt.s32.totalorder %v1068, 0
    %v10529 = vand.u32 %v1068, 2139095040
    %v10530 = vshrl.u32 %v10529, 23
    %v10531 = vsub.s32 %v10530, 127
    %v10532 = vand.u32 2147483647, %v1068
    %v10533 = vand.u32 %v10532, 8388607
    %v10534 = vor.u32 %v10533, 8388608
    %v10535 = vsub.s32 0, %v10534
    %v10536 = vadd.s32 %v10531, 1
    %vm10537 = vcmp.gt.s32.totalorder %v10536, 0
    %v10538 = vsel %vm10537, %v10536, 0
    %v10539 = vshrl.u32 %v10538, 5
    %v10540 = vand.u32 %v10538, 31
    %v10541 = vsub.s32 32, %v10540
    %v10542 = vshrl.u32 683565275, %v10541
    %v10543 = vshll.u32 683565275, %v10540
    %v10544 = vshrl.u32 2475754826, %v10541
    %v10545 = vor.u32 %v10543, %v10544
    %v10546 = vshll.u32 2475754826, %v10540
    %v10547 = vshrl.u32 2131351028, %v10541
    %v10548 = vor.u32 %v10546, %v10547
    %v10549 = vshll.u32 2131351028, %v10540
    %v10550 = vshrl.u32 2102212464, %v10541
    %v10551 = vor.u32 %v10549, %v10550
    %v10552 = vshll.u32 2102212464, %v10540
    %v10553 = vshrl.u32 920167782, %v10541
    %v10554 = vor.u32 %v10552, %v10553
    %v10555 = vshll.u32 920167782, %v10540
    %v10556 = vshrl.u32 1326507024, %v10541
    %v10557 = vor.u32 %v10555, %v10556
    %vm10558 = vcmp.lt.s32.totalorder %v10539, 1
    %vm10559 = vcmp.lt.s32.totalorder %v10539, 2
    %vm10560 = vcmp.lt.s32.totalorder %v10539, 3
    %vm10561 = vcmp.lt.s32.totalorder %v10539, 4
    %v10562 = vsel %vm10558, %v10542, %v10545
    %v10563 = vsel %vm10561, %v10551, 2102212464
    %v10564 = vsel %vm10560, %v10548, %v10563
    %v10565 = vsel %vm10559, %v10562, %v10564
    %v10566 = vsel %vm10558, %v10545, %v10548
    %v10567 = vsel %vm10561, %v10554, 920167782
    %v10568 = vsel %vm10560, %v10551, %v10567
    %v10569 = vsel %vm10559, %v10566, %v10568
    %v10570 = vsel %vm10558, %v10548, %v10551
    %v10571 = vsel %vm10561, %v10557, 1326507024
    %v10572 = vsel %vm10560, %v10554, %v10571
    %v10573 = vsel %vm10559, %v10570, %v10572
    %v10574 = vshll.u32 %v10534, 8
    %v10575 = vand.u32 %v10574, 65535
    %v10576 = vshrl.u32 %v10574, 16
    %v10577 = vand.u32 %v10573, 65535
    %v10578 = vshrl.u32 %v10573, 16
    %v10579 = vmul.u32 %v10575, %v10577
    %v10580 = vmul.u32 %v10575, %v10578
    %v10581 = vmul.u32 %v10576, %v10577
    %v10582 = vmul.u32 %v10576, %v10578
    %v10583 = vshll.u32 %v10580, 16
    %v10584 = vshrl.u32 %v10580, 16
    %v10585 = vshll.u32 %v10581, 16
    %v10586 = vshrl.u32 %v10581, 16
    %vm10587 = vc.u32 %v10579, %v10583
    %v10588 = vsel %vm10587, 1, 0
    %v10589 = vadd.s32 %v10579, %v10583
    %v10590 = vadd.s32 %v10582, %v10588
    %vm10591 = vc.u32 %v10589, %v10585
    %v10592 = vsel %vm10591, 1, 0
    %v10593 = vadd.s32 %v10589, %v10585
    %v10594 = vadd.s32 %v10590, %v10592
    %v10595 = vadd.s32 %v10594, %v10584
    %v10596 = vadd.s32 %v10595, %v10586
    %v10597 = vand.u32 %v10574, 65535
    %v10598 = vshrl.u32 %v10574, 16
    %v10599 = vand.u32 %v10569, 65535
    %v10600 = vshrl.u32 %v10569, 16
    %v10601 = vmul.u32 %v10597, %v10599
    %v10602 = vmul.u32 %v10597, %v10600
    %v10603 = vmul.u32 %v10598, %v10599
    %v10604 = vmul.u32 %v10598, %v10600
    %v10605 = vshll.u32 %v10602, 16
    %v10606 = vshrl.u32 %v10602, 16
    %v10607 = vshll.u32 %v10603, 16
    %v10608 = vshrl.u32 %v10603, 16
    %vm10609 = vc.u32 %v10601, %v10605
    %v10610 = vsel %vm10609, 1, 0
    %v10611 = vadd.s32 %v10601, %v10605
    %v10612 = vadd.s32 %v10604, %v10610
    %vm10613 = vc.u32 %v10611, %v10607
    %v10614 = vsel %vm10613, 1, 0
    %v10615 = vadd.s32 %v10611, %v10607
    %v10616 = vadd.s32 %v10612, %v10614
    %v10617 = vadd.s32 %v10616, %v10606
    %v10618 = vadd.s32 %v10617, %v10608
    %v10619 = vmul.u32 %v10574, %v10565
    %v10620 = vadd.s32 %v10596, %v10615
    %vm10621 = vc.u32 %v10596, %v10615
    %v10622 = vadd.s32 %v10618, 1
    %v10623 = vsel %vm10621, %v10622, %v10618
    %v10624 = vadd.s32 %v10619, %v10623
    %v10625 = vadd.s32 %v10624, 536870912
    %v10626 = vshrl.u32 %v10625, 30
    %v10627 = vshll.u32 %v10626, 30
    %v10628 = vsub.s32 %v10624, %v10627
    %vm10629 = vcmp.lt.s32.totalorder %v10628, 0
    %v10630 = vsub.s32 0, %v10628
    %v10631 = vsel %vm10629, %v10630, %v10628
    %v10632 = vclz %v10631
    %v10633 = vsub.s32 %v10632, 2
    %vm10634 = vcmp.gt.s32.totalorder 0, %v10633
    %v10635 = vsel %vm10634, 0, %v10633
    %v10636 = vsub.s32 32, %v10635
    %v10637 = vshll.u32 %v10628, %v10635
    %v10638 = vshrl.u32 %v10620, %v10636
    %v10639 = vor.u32 %v10637, %v10638
    %v10640 = vsub.s32 4294967266, %v10635
    %v10641 = vadd.s32 %v10640, 127
    %v10642 = vshll.u32 %v10641, 23
    %v10643 = vor.u32 4788187, %v10642
    %v10644 = vand.u32 2147483647, %v10643
    %v10646 = vcvt.s32.f32 %v10639
    %v10647 = vmul.f32 %v10646, %v10644
    %v10648 = vxor.u32 %v10647, 2147483648
    %v10649 = vsel %vm10528, %v10648, %v10647
    %v10650 = vsub.s32 4, %v10626
    %v10651 = vsel %vm10528, %v10650, %v10626
    %v10652 = vsel %vm10527, %v1068, %v10649
    %v10653 = vsel %vm10527, 0, %v10651
    %v10654 = vmul.f32 %v10652, %v10652
    %v10655 = vmul.f32 %v10654, -0.001358992
    %v10656 = vadd.f32 %v10655, 0.041655596
    %v10657 = vmul.f32 %v10654, %v10656
    %v10658 = vadd.f32 %v10657, -0.4999988
    %v10659 = vmul.f32 %v10654, %v10658
    %v10660 = vadd.f32 1.0, %v10659
    %v10661 = vmul.f32 %v10652, %v10652
    %v10662 = vmul.f32 %v10661, -0.00019511016
    %v10663 = vadd.f32 %v10662, 0.008332121
    %v10664 = vmul.f32 %v10661, %v10663
    %v10665 = vadd.f32 %v10664, -0.16666654
    %v10666 = vmul.f32 %v10661, %v10665
    %v10667 = vadd.f32 %v10666, 1.0
    %v10668 = vmul.f32 %v10667, %v10652
    %vm10669 = vweird.f32 %v1068
    %v10670 = vadd.s32 %v10653, 3
    %v10671 = vand.u32 %v10670, 3
    %vm10672 = vcmp.lt.s32.totalorder %v10671, 2
    %vm10673 = vcmp.eq.s32.totalorder %v10671, 0
    %v10674 = vxor.u32 %v10668, 2147483648
    %v10675 = vsel %vm10673, %v10660, %v10674
    %vm10676 = vcmp.eq.s32.totalorder %v10671, 2
    %v10677 = vxor.u32 %v10660, 2147483648
    %v10678 = vsel %vm10676, %v10677, %v10668
    %v10679 = vsel %vm10672, %v10675, %v10678
    %v10680 = vsel %vm10669, nan, %v10679
    %v10681 = vand.u32 2147483647, %v1069
    %vm10682 = vcmp.le.f32.partialorder %v10681, 0.7853982
    %vm10683 = vcmp.lt.s32.totalorder %v1069, 0
    %v10684 = vand.u32 %v1069, 2139095040
    %v10685 = vshrl.u32 %v10684, 23
    %v10686 = vsub.s32 %v10685, 127
    %v10687 = vand.u32 2147483647, %v1069
    %v10688 = vand.u32 %v10687, 8388607
    %v10689 = vor.u32 %v10688, 8388608
    %v10690 = vsub.s32 0, %v10689
    %v10691 = vadd.s32 %v10686, 1
    %vm10692 = vcmp.gt.s32.totalorder %v10691, 0
    %v10693 = vsel %vm10692, %v10691, 0
    %v10694 = vshrl.u32 %v10693, 5
    %v10695 = vand.u32 %v10693, 31
    %v10696 = vsub.s32 32, %v10695
    %v10697 = vshrl.u32 683565275, %v10696
    %v10698 = vshll.u32 683565275, %v10695
    %v10699 = vshrl.u32 2475754826, %v10696
    %v10700 = vor.u32 %v10698, %v10699
    %v10701 = vshll.u32 2475754826, %v10695
    %v10702 = vshrl.u32 2131351028, %v10696
    %v10703 = vor.u32 %v10701, %v10702
    %v10704 = vshll.u32 2131351028, %v10695
    %v10705 = vshrl.u32 2102212464, %v10696
    %v10706 = vor.u32 %v10704, %v10705
    %v10707 = vshll.u32 2102212464, %v10695
    %v10708 = vshrl.u32 920167782, %v10696
    %v10709 = vor.u32 %v10707, %v10708
    %v10710 = vshll.u32 920167782, %v10695
    %v10711 = vshrl.u32 1326507024, %v10696
    %v10712 = vor.u32 %v10710, %v10711
    %vm10713 = vcmp.lt.s32.totalorder %v10694, 1
    %vm10714 = vcmp.lt.s32.totalorder %v10694, 2
    %vm10715 = vcmp.lt.s32.totalorder %v10694, 3
    %vm10716 = vcmp.lt.s32.totalorder %v10694, 4
    %v10717 = vsel %vm10713, %v10697, %v10700
    %v10718 = vsel %vm10716, %v10706, 2102212464
    %v10719 = vsel %vm10715, %v10703, %v10718
    %v10720 = vsel %vm10714, %v10717, %v10719
    %v10721 = vsel %vm10713, %v10700, %v10703
    %v10722 = vsel %vm10716, %v10709, 920167782
    %v10723 = vsel %vm10715, %v10706, %v10722
    %v10724 = vsel %vm10714, %v10721, %v10723
    %v10725 = vsel %vm10713, %v10703, %v10706
    %v10726 = vsel %vm10716, %v10712, 1326507024
    %v10727 = vsel %vm10715, %v10709, %v10726
    %v10728 = vsel %vm10714, %v10725, %v10727
    %v10729 = vshll.u32 %v10689, 8
    %v10730 = vand.u32 %v10729, 65535
    %v10731 = vshrl.u32 %v10729, 16
    %v10732 = vand.u32 %v10728, 65535
    %v10733 = vshrl.u32 %v10728, 16
    %v10734 = vmul.u32 %v10730, %v10732
    %v10735 = vmul.u32 %v10730, %v10733
    %v10736 = vmul.u32 %v10731, %v10732
    %v10737 = vmul.u32 %v10731, %v10733
    %v10738 = vshll.u32 %v10735, 16
    %v10739 = vshrl.u32 %v10735, 16
    %v10740 = vshll.u32 %v10736, 16
    %v10741 = vshrl.u32 %v10736, 16
    %vm10742 = vc.u32 %v10734, %v10738
    %v10743 = vsel %vm10742, 1, 0
    %v10744 = vadd.s32 %v10734, %v10738
    %v10745 = vadd.s32 %v10737, %v10743
    %vm10746 = vc.u32 %v10744, %v10740
    %v10747 = vsel %vm10746, 1, 0
    %v10748 = vadd.s32 %v10744, %v10740
    %v10749 = vadd.s32 %v10745, %v10747
    %v10750 = vadd.s32 %v10749, %v10739
    %v10751 = vadd.s32 %v10750, %v10741
    %v10752 = vand.u32 %v10729, 65535
    %v10753 = vshrl.u32 %v10729, 16
    %v10754 = vand.u32 %v10724, 65535
    %v10755 = vshrl.u32 %v10724, 16
    %v10756 = vmul.u32 %v10752, %v10754
    %v10757 = vmul.u32 %v10752, %v10755
    %v10758 = vmul.u32 %v10753, %v10754
    %v10759 = vmul.u32 %v10753, %v10755
    %v10760 = vshll.u32 %v10757, 16
    %v10761 = vshrl.u32 %v10757, 16
    %v10762 = vshll.u32 %v10758, 16
    %v10763 = vshrl.u32 %v10758, 16
    %vm10764 = vc.u32 %v10756, %v10760
    %v10765 = vsel %vm10764, 1, 0
    %v10766 = vadd.s32 %v10756, %v10760
    %v10767 = vadd.s32 %v10759, %v10765
    %vm10768 = vc.u32 %v10766, %v10762
    %v10769 = vsel %vm10768, 1, 0
    %v10770 = vadd.s32 %v10766, %v10762
    %v10771 = vadd.s32 %v10767, %v10769
    %v10772 = vadd.s32 %v10771, %v10761
    %v10773 = vadd.s32 %v10772, %v10763
    %v10774 = vmul.u32 %v10729, %v10720
    %v10775 = vadd.s32 %v10751, %v10770
    %vm10776 = vc.u32 %v10751, %v10770
    %v10777 = vadd.s32 %v10773, 1
    %v10778 = vsel %vm10776, %v10777, %v10773
    %v10779 = vadd.s32 %v10774, %v10778
    %v10780 = vadd.s32 %v10779, 536870912
    %v10781 = vshrl.u32 %v10780, 30
    %v10782 = vshll.u32 %v10781, 30
    %v10783 = vsub.s32 %v10779, %v10782
    %vm10784 = vcmp.lt.s32.totalorder %v10783, 0
    %v10785 = vsub.s32 0, %v10783
    %v10786 = vsel %vm10784, %v10785, %v10783
    %v10787 = vclz %v10786
    %v10788 = vsub.s32 %v10787, 2
    %vm10789 = vcmp.gt.s32.totalorder 0, %v10788
    %v10790 = vsel %vm10789, 0, %v10788
    %v10791 = vsub.s32 32, %v10790
    %v10792 = vshll.u32 %v10783, %v10790
    %v10793 = vshrl.u32 %v10775, %v10791
    %v10794 = vor.u32 %v10792, %v10793
    %v10795 = vsub.s32 4294967266, %v10790
    %v10796 = vadd.s32 %v10795, 127
    %v10797 = vshll.u32 %v10796, 23
    %v10798 = vor.u32 4788187, %v10797
    %v10799 = vand.u32 2147483647, %v10798
    %v10801 = vcvt.s32.f32 %v10794
    %v10802 = vmul.f32 %v10801, %v10799
    %v10803 = vxor.u32 %v10802, 2147483648
    %v10804 = vsel %vm10683, %v10803, %v10802
    %v10805 = vsub.s32 4, %v10781
    %v10806 = vsel %vm10683, %v10805, %v10781
    %v10807 = vsel %vm10682, %v1069, %v10804
    %v10808 = vsel %vm10682, 0, %v10806
    %v10809 = vmul.f32 %v10807, %v10807
    %v10810 = vmul.f32 %v10809, -0.001358992
    %v10811 = vadd.f32 %v10810, 0.041655596
    %v10812 = vmul.f32 %v10809, %v10811
    %v10813 = vadd.f32 %v10812, -0.4999988
    %v10814 = vmul.f32 %v10809, %v10813
    %v10815 = vadd.f32 1.0, %v10814
    %v10816 = vmul.f32 %v10807, %v10807
    %v10817 = vmul.f32 %v10816, -0.00019511016
    %v10818 = vadd.f32 %v10817, 0.008332121
    %v10819 = vmul.f32 %v10816, %v10818
    %v10820 = vadd.f32 %v10819, -0.16666654
    %v10821 = vmul.f32 %v10816, %v10820
    %v10822 = vadd.f32 %v10821, 1.0
    %v10823 = vmul.f32 %v10822, %v10807
    %vm10824 = vweird.f32 %v1069
    %v10825 = vadd.s32 %v10808, 3
    %v10826 = vand.u32 %v10825, 3
    %vm10827 = vcmp.lt.s32.totalorder %v10826, 2
    %vm10828 = vcmp.eq.s32.totalorder %v10826, 0
    %v10829 = vxor.u32 %v10823, 2147483648
    %v10830 = vsel %vm10828, %v10815, %v10829
    %vm10831 = vcmp.eq.s32.totalorder %v10826, 2
    %v10832 = vxor.u32 %v10815, 2147483648
    %v10833 = vsel %vm10831, %v10832, %v10823
    %v10834 = vsel %vm10827, %v10830, %v10833
    %v10835 = vsel %vm10824, nan, %v10834
    %v10836 = vand.u32 2147483647, %v1070
    %vm10837 = vcmp.le.f32.partialorder %v10836, 0.7853982
    %vm10838 = vcmp.lt.s32.totalorder %v1070, 0
    %v10839 = vand.u32 %v1070, 2139095040
    %v10840 = vshrl.u32 %v10839, 23
    %v10841 = vsub.s32 %v10840, 127
    %v10842 = vand.u32 2147483647, %v1070
    %v10843 = vand.u32 %v10842, 8388607
    %v10844 = vor.u32 %v10843, 8388608
    %v10845 = vsub.s32 0, %v10844
    %v10846 = vadd.s32 %v10841, 1
    %vm10847 = vcmp.gt.s32.totalorder %v10846, 0
    %v10848 = vsel %vm10847, %v10846, 0
    %v10849 = vshrl.u32 %v10848, 5
    %v10850 = vand.u32 %v10848, 31
    %v10851 = vsub.s32 32, %v10850
    %v10852 = vshrl.u32 683565275, %v10851
    %v10853 = vshll.u32 683565275, %v10850
    %v10854 = vshrl.u32 2475754826, %v10851
    %v10855 = vor.u32 %v10853, %v10854
    %v10856 = vshll.u32 2475754826, %v10850
    %v10857 = vshrl.u32 2131351028, %v10851
    %v10858 = vor.u32 %v10856, %v10857
    %v10859 = vshll.u32 2131351028, %v10850
    %v10860 = vshrl.u32 2102212464, %v10851
    %v10861 = vor.u32 %v10859, %v10860
    %v10862 = vshll.u32 2102212464, %v10850
    %v10863 = vshrl.u32 920167782, %v10851
    %v10864 = vor.u32 %v10862, %v10863
    %v10865 = vshll.u32 920167782, %v10850
    %v10866 = vshrl.u32 1326507024, %v10851
    %v10867 = vor.u32 %v10865, %v10866
    %vm10868 = vcmp.lt.s32.totalorder %v10849, 1
    %vm10869 = vcmp.lt.s32.totalorder %v10849, 2
    %vm10870 = vcmp.lt.s32.totalorder %v10849, 3
    %vm10871 = vcmp.lt.s32.totalorder %v10849, 4
    %v10872 = vsel %vm10868, %v10852, %v10855
    %v10873 = vsel %vm10871, %v10861, 2102212464
    %v10874 = vsel %vm10870, %v10858, %v10873
    %v10875 = vsel %vm10869, %v10872, %v10874
    %v10876 = vsel %vm10868, %v10855, %v10858
    %v10877 = vsel %vm10871, %v10864, 920167782
    %v10878 = vsel %vm10870, %v10861, %v10877
    %v10879 = vsel %vm10869, %v10876, %v10878
    %v10880 = vsel %vm10868, %v10858, %v10861
    %v10881 = vsel %vm10871, %v10867, 1326507024
    %v10882 = vsel %vm10870, %v10864, %v10881
    %v10883 = vsel %vm10869, %v10880, %v10882
    %v10884 = vshll.u32 %v10844, 8
    %v10885 = vand.u32 %v10884, 65535
    %v10886 = vshrl.u32 %v10884, 16
    %v10887 = vand.u32 %v10883, 65535
    %v10888 = vshrl.u32 %v10883, 16
    %v10889 = vmul.u32 %v10885, %v10887
    %v10890 = vmul.u32 %v10885, %v10888
    %v10891 = vmul.u32 %v10886, %v10887
    %v10892 = vmul.u32 %v10886, %v10888
    %v10893 = vshll.u32 %v10890, 16
    %v10894 = vshrl.u32 %v10890, 16
    %v10895 = vshll.u32 %v10891, 16
    %v10896 = vshrl.u32 %v10891, 16
    %vm10897 = vc.u32 %v10889, %v10893
    %v10898 = vsel %vm10897, 1, 0
    %v10899 = vadd.s32 %v10889, %v10893
    %v10900 = vadd.s32 %v10892, %v10898
    %vm10901 = vc.u32 %v10899, %v10895
    %v10902 = vsel %vm10901, 1, 0
    %v10903 = vadd.s32 %v10899, %v10895
    %v10904 = vadd.s32 %v10900, %v10902
    %v10905 = vadd.s32 %v10904, %v10894
    %v10906 = vadd.s32 %v10905, %v10896
    %v10907 = vand.u32 %v10884, 65535
    %v10908 = vshrl.u32 %v10884, 16
    %v10909 = vand.u32 %v10879, 65535
    %v10910 = vshrl.u32 %v10879, 16
    %v10911 = vmul.u32 %v10907, %v10909
    %v10912 = vmul.u32 %v10907, %v10910
    %v10913 = vmul.u32 %v10908, %v10909
    %v10914 = vmul.u32 %v10908, %v10910
    %v10915 = vshll.u32 %v10912, 16
    %v10916 = vshrl.u32 %v10912, 16
    %v10917 = vshll.u32 %v10913, 16
    %v10918 = vshrl.u32 %v10913, 16
    %vm10919 = vc.u32 %v10911, %v10915
    %v10920 = vsel %vm10919, 1, 0
    %v10921 = vadd.s32 %v10911, %v10915
    %v10922 = vadd.s32 %v10914, %v10920
    %vm10923 = vc.u32 %v10921, %v10917
    %v10924 = vsel %vm10923, 1, 0
    %v10925 = vadd.s32 %v10921, %v10917
    %v10926 = vadd.s32 %v10922, %v10924
    %v10927 = vadd.s32 %v10926, %v10916
    %v10928 = vadd.s32 %v10927, %v10918
    %v10929 = vmul.u32 %v10884, %v10875
    %v10930 = vadd.s32 %v10906, %v10925
    %vm10931 = vc.u32 %v10906, %v10925
    %v10932 = vadd.s32 %v10928, 1
    %v10933 = vsel %vm10931, %v10932, %v10928
    %v10934 = vadd.s32 %v10929, %v10933
    %v10935 = vadd.s32 %v10934, 536870912
    %v10936 = vshrl.u32 %v10935, 30
    %v10937 = vshll.u32 %v10936, 30
    %v10938 = vsub.s32 %v10934, %v10937
    %vm10939 = vcmp.lt.s32.totalorder %v10938, 0
    %v10940 = vsub.s32 0, %v10938
    %v10941 = vsel %vm10939, %v10940, %v10938
    %v10942 = vclz %v10941
    %v10943 = vsub.s32 %v10942, 2
    %vm10944 = vcmp.gt.s32.totalorder 0, %v10943
    %v10945 = vsel %vm10944, 0, %v10943
    %v10946 = vsub.s32 32, %v10945
    %v10947 = vshll.u32 %v10938, %v10945
    %v10948 = vshrl.u32 %v10930, %v10946
    %v10949 = vor.u32 %v10947, %v10948
    %v10950 = vsub.s32 4294967266, %v10945
    %v10951 = vadd.s32 %v10950, 127
    %v10952 = vshll.u32 %v10951, 23
    %v10953 = vor.u32 4788187, %v10952
    %v10954 = vand.u32 2147483647, %v10953
    %v10956 = vcvt.s32.f32 %v10949
    %v10957 = vmul.f32 %v10956, %v10954
    %v10958 = vxor.u32 %v10957, 2147483648
    %v10959 = vsel %vm10838, %v10958, %v10957
    %v10960 = vsub.s32 4, %v10936
    %v10961 = vsel %vm10838, %v10960, %v10936
    %v10962 = vsel %vm10837, %v1070, %v10959
    %v10963 = vsel %vm10837, 0, %v10961
    %v10964 = vmul.f32 %v10962, %v10962
    %v10965 = vmul.f32 %v10964, -0.001358992
    %v10966 = vadd.f32 %v10965, 0.041655596
    %v10967 = vmul.f32 %v10964, %v10966
    %v10968 = vadd.f32 %v10967, -0.4999988
    %v10969 = vmul.f32 %v10964, %v10968
    %v10970 = vadd.f32 1.0, %v10969
    %v10971 = vmul.f32 %v10962, %v10962
    %v10972 = vmul.f32 %v10971, -0.00019511016
    %v10973 = vadd.f32 %v10972, 0.008332121
    %v10974 = vmul.f32 %v10971, %v10973
    %v10975 = vadd.f32 %v10974, -0.16666654
    %v10976 = vmul.f32 %v10971, %v10975
    %v10977 = vadd.f32 %v10976, 1.0
    %v10978 = vmul.f32 %v10977, %v10962
    %vm10979 = vweird.f32 %v1070
    %v10980 = vadd.s32 %v10963, 3
    %v10981 = vand.u32 %v10980, 3
    %vm10982 = vcmp.lt.s32.totalorder %v10981, 2
    %vm10983 = vcmp.eq.s32.totalorder %v10981, 0
    %v10984 = vxor.u32 %v10978, 2147483648
    %v10985 = vsel %vm10983, %v10970, %v10984
    %vm10986 = vcmp.eq.s32.totalorder %v10981, 2
    %v10987 = vxor.u32 %v10970, 2147483648
    %v10988 = vsel %vm10986, %v10987, %v10978
    %v10989 = vsel %vm10982, %v10985, %v10988
    %v10990 = vsel %vm10979, nan, %v10989
    %10991 = vadd.xlane.f32.xlu0 %v1225
    %v10992 = vpop.xlane.xlu0 %10991
    %10993 = vadd.xlane.f32.xlu0 %v1380
    %v10994 = vpop.xlane.xlu0 %10993
    %10995 = vadd.xlane.f32.xlu0 %v1535
    %v10996 = vpop.xlane.xlu0 %10995
    %10997 = vadd.xlane.f32.xlu0 %v1690
    %v10998 = vpop.xlane.xlu0 %10997
    %10999 = vadd.xlane.f32.xlu0 %v1845
    %v11000 = vpop.xlane.xlu0 %10999
    %11001 = vadd.xlane.f32.xlu0 %v2000
    %v11002 = vpop.xlane.xlu0 %11001
    %11003 = vadd.xlane.f32.xlu0 %v2155
    %v11004 = vpop.xlane.xlu0 %11003
    %11005 = vadd.xlane.f32.xlu0 %v2310
    %v11006 = vpop.xlane.xlu0 %11005
    %11007 = vadd.xlane.f32.xlu0 %v2465
    %v11008 = vpop.xlane.xlu0 %11007
    %11009 = vadd.xlane.f32.xlu0 %v2620
    %v11010 = vpop.xlane.xlu0 %11009
    %11011 = vadd.xlane.f32.xlu0 %v2775
    %v11012 = vpop.xlane.xlu0 %11011
    %11013 = vadd.xlane.f32.xlu0 %v2930
    %v11014 = vpop.xlane.xlu0 %11013
    %11015 = vadd.xlane.f32.xlu0 %v3085
    %v11016 = vpop.xlane.xlu0 %11015
    %11017 = vadd.xlane.f32.xlu0 %v3240
    %v11018 = vpop.xlane.xlu0 %11017
    %11019 = vadd.xlane.f32.xlu0 %v3395
    %v11020 = vpop.xlane.xlu0 %11019
    %11021 = vadd.xlane.f32.xlu0 %v3550
    %v11022 = vpop.xlane.xlu0 %11021
    %11023 = vadd.xlane.f32.xlu0 %v3705
    %v11024 = vpop.xlane.xlu0 %11023
    %11025 = vadd.xlane.f32.xlu0 %v3860
    %v11026 = vpop.xlane.xlu0 %11025
    %11027 = vadd.xlane.f32.xlu0 %v4015
    %v11028 = vpop.xlane.xlu0 %11027
    %11029 = vadd.xlane.f32.xlu0 %v4170
    %v11030 = vpop.xlane.xlu0 %11029
    %11031 = vadd.xlane.f32.xlu0 %v4325
    %v11032 = vpop.xlane.xlu0 %11031
    %11033 = vadd.xlane.f32.xlu0 %v4480
    %v11034 = vpop.xlane.xlu0 %11033
    %11035 = vadd.xlane.f32.xlu0 %v4635
    %v11036 = vpop.xlane.xlu0 %11035
    %11037 = vadd.xlane.f32.xlu0 %v4790
    %v11038 = vpop.xlane.xlu0 %11037
    %11039 = vadd.xlane.f32.xlu0 %v4945
    %v11040 = vpop.xlane.xlu0 %11039
    %11041 = vadd.xlane.f32.xlu0 %v5100
    %v11042 = vpop.xlane.xlu0 %11041
    %11043 = vadd.xlane.f32.xlu0 %v5255
    %v11044 = vpop.xlane.xlu0 %11043
    %11045 = vadd.xlane.f32.xlu0 %v5410
    %v11046 = vpop.xlane.xlu0 %11045
    %11047 = vadd.xlane.f32.xlu0 %v5565
    %v11048 = vpop.xlane.xlu0 %11047
    %11049 = vadd.xlane.f32.xlu0 %v5720
    %v11050 = vpop.xlane.xlu0 %11049
    %11051 = vadd.xlane.f32.xlu0 %v5875
    %v11052 = vpop.xlane.xlu0 %11051
    %11053 = vadd.xlane.f32.xlu0 %v6030
    %v11054 = vpop.xlane.xlu0 %11053
    %11055 = vadd.xlane.f32.xlu0 %v6185
    %v11056 = vpop.xlane.xlu0 %11055
    %11057 = vadd.xlane.f32.xlu0 %v6340
    %v11058 = vpop.xlane.xlu0 %11057
    %11059 = vadd.xlane.f32.xlu0 %v6495
    %v11060 = vpop.xlane.xlu0 %11059
    %11061 = vadd.xlane.f32.xlu0 %v6650
    %v11062 = vpop.xlane.xlu0 %11061
    %11063 = vadd.xlane.f32.xlu0 %v6805
    %v11064 = vpop.xlane.xlu0 %11063
    %11065 = vadd.xlane.f32.xlu0 %v6960
    %v11066 = vpop.xlane.xlu0 %11065
    %11067 = vadd.xlane.f32.xlu0 %v7115
    %v11068 = vpop.xlane.xlu0 %11067
    %11069 = vadd.xlane.f32.xlu0 %v7270
    %v11070 = vpop.xlane.xlu0 %11069
    %11071 = vadd.xlane.f32.xlu0 %v7425
    %v11072 = vpop.xlane.xlu0 %11071
    %11073 = vadd.xlane.f32.xlu0 %v7580
    %v11074 = vpop.xlane.xlu0 %11073
    %11075 = vadd.xlane.f32.xlu0 %v7735
    %v11076 = vpop.xlane.xlu0 %11075
    %11077 = vadd.xlane.f32.xlu0 %v7890
    %v11078 = vpop.xlane.xlu0 %11077
    %11079 = vadd.xlane.f32.xlu0 %v8045
    %v11080 = vpop.xlane.xlu0 %11079
    %11081 = vadd.xlane.f32.xlu0 %v8200
    %v11082 = vpop.xlane.xlu0 %11081
    %11083 = vadd.xlane.f32.xlu0 %v8355
    %v11084 = vpop.xlane.xlu0 %11083
    %11085 = vadd.xlane.f32.xlu0 %v8510
    %v11086 = vpop.xlane.xlu0 %11085
    %11087 = vadd.xlane.f32.xlu0 %v8665
    %v11088 = vpop.xlane.xlu0 %11087
    %11089 = vadd.xlane.f32.xlu0 %v8820
    %v11090 = vpop.xlane.xlu0 %11089
    %11091 = vadd.xlane.f32.xlu0 %v8975
    %v11092 = vpop.xlane.xlu0 %11091
    %11093 = vadd.xlane.f32.xlu0 %v9130
    %v11094 = vpop.xlane.xlu0 %11093
    %11095 = vadd.xlane.f32.xlu0 %v9285
    %v11096 = vpop.xlane.xlu0 %11095
    %11097 = vadd.xlane.f32.xlu0 %v9440
    %v11098 = vpop.xlane.xlu0 %11097
    %11099 = vadd.xlane.f32.xlu0 %v9595
    %v11100 = vpop.xlane.xlu0 %11099
    %11101 = vadd.xlane.f32.xlu0 %v9750
    %v11102 = vpop.xlane.xlu0 %11101
    %11103 = vadd.xlane.f32.xlu0 %v9905
    %v11104 = vpop.xlane.xlu0 %11103
    %11105 = vadd.xlane.f32.xlu0 %v10060
    %v11106 = vpop.xlane.xlu0 %11105
    %11107 = vadd.xlane.f32.xlu0 %v10215
    %v11108 = vpop.xlane.xlu0 %11107
    %11109 = vadd.xlane.f32.xlu0 %v10370
    %v11110 = vpop.xlane.xlu0 %11109
    %11111 = vadd.xlane.f32.xlu0 %v10525
    %v11112 = vpop.xlane.xlu0 %11111
    %11113 = vadd.xlane.f32.xlu0 %v10680
    %v11114 = vpop.xlane.xlu0 %11113
    %11115 = vadd.xlane.f32.xlu0 %v10835
    %v11116 = vpop.xlane.xlu0 %11115
    %11117 = vadd.xlane.f32.xlu0 %v10990
    %v11118 = vpop.xlane.xlu0 %11117
    %v11119 = vrcp.pop 128.0
    %v11120 = vmul.f32 128.0, %v11119
    %v11121 = vsub.f32 1.0, %v11120
    %v11122 = vmul.f32 %v11119, %v11121
    %v11123 = vadd.f32 %v11119, %v11122
    %vm11124 = vweird.f32 %v11119
    %v11125 = vsel %vm11124, %v11119, %v11123
    %v11126 = vmul.f32 %v10992, %v11125
    %v11127 = vmul.f32 %v10994, %v11125
    %v11128 = vmul.f32 %v10996, %v11125
    %v11129 = vmul.f32 %v10998, %v11125
    %v11130 = vmul.f32 %v11000, %v11125
    %v11131 = vmul.f32 %v11002, %v11125
    %v11132 = vmul.f32 %v11004, %v11125
    %v11133 = vmul.f32 %v11006, %v11125
    %v11134 = vmul.f32 %v11008, %v11125
    %v11135 = vmul.f32 %v11010, %v11125
    %v11136 = vmul.f32 %v11012, %v11125
    %v11137 = vmul.f32 %v11014, %v11125
    %v11138 = vmul.f32 %v11016, %v11125
    %v11139 = vmul.f32 %v11018, %v11125
    %v11140 = vmul.f32 %v11020, %v11125
    %v11141 = vmul.f32 %v11022, %v11125
    %v11142 = vmul.f32 %v11024, %v11125
    %v11143 = vmul.f32 %v11026, %v11125
    %v11144 = vmul.f32 %v11028, %v11125
    %v11145 = vmul.f32 %v11030, %v11125
    %v11146 = vmul.f32 %v11032, %v11125
    %v11147 = vmul.f32 %v11034, %v11125
    %v11148 = vmul.f32 %v11036, %v11125
    %v11149 = vmul.f32 %v11038, %v11125
    %v11150 = vmul.f32 %v11040, %v11125
    %v11151 = vmul.f32 %v11042, %v11125
    %v11152 = vmul.f32 %v11044, %v11125
    %v11153 = vmul.f32 %v11046, %v11125
    %v11154 = vmul.f32 %v11048, %v11125
    %v11155 = vmul.f32 %v11050, %v11125
    %v11156 = vmul.f32 %v11052, %v11125
    %v11157 = vmul.f32 %v11054, %v11125
    %v11158 = vmul.f32 %v11056, %v11125
    %v11159 = vmul.f32 %v11058, %v11125
    %v11160 = vmul.f32 %v11060, %v11125
    %v11161 = vmul.f32 %v11062, %v11125
    %v11162 = vmul.f32 %v11064, %v11125
    %v11163 = vmul.f32 %v11066, %v11125
    %v11164 = vmul.f32 %v11068, %v11125
    %v11165 = vmul.f32 %v11070, %v11125
    %v11166 = vmul.f32 %v11072, %v11125
    %v11167 = vmul.f32 %v11074, %v11125
    %v11168 = vmul.f32 %v11076, %v11125
    %v11169 = vmul.f32 %v11078, %v11125
    %v11170 = vmul.f32 %v11080, %v11125
    %v11171 = vmul.f32 %v11082, %v11125
    %v11172 = vmul.f32 %v11084, %v11125
    %v11173 = vmul.f32 %v11086, %v11125
    %v11174 = vmul.f32 %v11088, %v11125
    %v11175 = vmul.f32 %v11090, %v11125
    %v11176 = vmul.f32 %v11092, %v11125
    %v11177 = vmul.f32 %v11094, %v11125
    %v11178 = vmul.f32 %v11096, %v11125
    %v11179 = vmul.f32 %v11098, %v11125
    %v11180 = vmul.f32 %v11100, %v11125
    %v11181 = vmul.f32 %v11102, %v11125
    %v11182 = vmul.f32 %v11104, %v11125
    %v11183 = vmul.f32 %v11106, %v11125
    %v11184 = vmul.f32 %v11108, %v11125
    %v11185 = vmul.f32 %v11110, %v11125
    %v11186 = vmul.f32 %v11112, %v11125
    %v11187 = vmul.f32 %v11114, %v11125
    %v11188 = vmul.f32 %v11116, %v11125
    %v11189 = vmul.f32 %v11118, %v11125
    %v11190 = vmul.f32 %v1225, %v1225
    %v11191 = vmul.f32 %v1380, %v1380
    %v11192 = vmul.f32 %v1535, %v1535
    %v11193 = vmul.f32 %v1690, %v1690
    %v11194 = vmul.f32 %v1845, %v1845
    %v11195 = vmul.f32 %v2000, %v2000
    %v11196 = vmul.f32 %v2155, %v2155
    %v11197 = vmul.f32 %v2310, %v2310
    %v11198 = vmul.f32 %v2465, %v2465
    %v11199 = vmul.f32 %v2620, %v2620
    %v11200 = vmul.f32 %v2775, %v2775
    %v11201 = vmul.f32 %v2930, %v2930
    %v11202 = vmul.f32 %v3085, %v3085
    %v11203 = vmul.f32 %v3240, %v3240
    %v11204 = vmul.f32 %v3395, %v3395
    %v11205 = vmul.f32 %v3550, %v3550
    %v11206 = vmul.f32 %v3705, %v3705
    %v11207 = vmul.f32 %v3860, %v3860
    %v11208 = vmul.f32 %v4015, %v4015
    %v11209 = vmul.f32 %v4170, %v4170
    %v11210 = vmul.f32 %v4325, %v4325
    %v11211 = vmul.f32 %v4480, %v4480
    %v11212 = vmul.f32 %v4635, %v4635
    %v11213 = vmul.f32 %v4790, %v4790
    %v11214 = vmul.f32 %v4945, %v4945
    %v11215 = vmul.f32 %v5100, %v5100
    %v11216 = vmul.f32 %v5255, %v5255
    %v11217 = vmul.f32 %v5410, %v5410
    %v11218 = vmul.f32 %v5565, %v5565
    %v11219 = vmul.f32 %v5720, %v5720
    %v11220 = vmul.f32 %v5875, %v5875
    %v11221 = vmul.f32 %v6030, %v6030
    %v11222 = vmul.f32 %v6185, %v6185
    %v11223 = vmul.f32 %v6340, %v6340
    %v11224 = vmul.f32 %v6495, %v6495
    %v11225 = vmul.f32 %v6650, %v6650
    %v11226 = vmul.f32 %v6805, %v6805
    %v11227 = vmul.f32 %v6960, %v6960
    %v11228 = vmul.f32 %v7115, %v7115
    %v11229 = vmul.f32 %v7270, %v7270
    %v11230 = vmul.f32 %v7425, %v7425
    %v11231 = vmul.f32 %v7580, %v7580
    %v11232 = vmul.f32 %v7735, %v7735
    %v11233 = vmul.f32 %v7890, %v7890
    %v11234 = vmul.f32 %v8045, %v8045
    %v11235 = vmul.f32 %v8200, %v8200
    %v11236 = vmul.f32 %v8355, %v8355
    %v11237 = vmul.f32 %v8510, %v8510
    %v11238 = vmul.f32 %v8665, %v8665
    %v11239 = vmul.f32 %v8820, %v8820
    %v11240 = vmul.f32 %v8975, %v8975
    %v11241 = vmul.f32 %v9130, %v9130
    %v11242 = vmul.f32 %v9285, %v9285
    %v11243 = vmul.f32 %v9440, %v9440
    %v11244 = vmul.f32 %v9595, %v9595
    %v11245 = vmul.f32 %v9750, %v9750
    %v11246 = vmul.f32 %v9905, %v9905
    %v11247 = vmul.f32 %v10060, %v10060
    %v11248 = vmul.f32 %v10215, %v10215
    %v11249 = vmul.f32 %v10370, %v10370
    %v11250 = vmul.f32 %v10525, %v10525
    %v11251 = vmul.f32 %v10680, %v10680
    %v11252 = vmul.f32 %v10835, %v10835
    %v11253 = vmul.f32 %v10990, %v10990
    %11254 = vadd.xlane.f32.xlu0 %v11190
    %v11255 = vpop.xlane.xlu0 %11254
    %11256 = vadd.xlane.f32.xlu0 %v11191
    %v11257 = vpop.xlane.xlu0 %11256
    %11258 = vadd.xlane.f32.xlu0 %v11192
    %v11259 = vpop.xlane.xlu0 %11258
    %11260 = vadd.xlane.f32.xlu0 %v11193
    %v11261 = vpop.xlane.xlu0 %11260
    %11262 = vadd.xlane.f32.xlu0 %v11194
    %v11263 = vpop.xlane.xlu0 %11262
    %11264 = vadd.xlane.f32.xlu0 %v11195
    %v11265 = vpop.xlane.xlu0 %11264
    %11266 = vadd.xlane.f32.xlu0 %v11196
    %v11267 = vpop.xlane.xlu0 %11266
    %11268 = vadd.xlane.f32.xlu0 %v11197
    %v11269 = vpop.xlane.xlu0 %11268
    %11270 = vadd.xlane.f32.xlu0 %v11198
    %v11271 = vpop.xlane.xlu0 %11270
    %11272 = vadd.xlane.f32.xlu0 %v11199
    %v11273 = vpop.xlane.xlu0 %11272
    %11274 = vadd.xlane.f32.xlu0 %v11200
    %v11275 = vpop.xlane.xlu0 %11274
    %11276 = vadd.xlane.f32.xlu0 %v11201
    %v11277 = vpop.xlane.xlu0 %11276
    %11278 = vadd.xlane.f32.xlu0 %v11202
    %v11279 = vpop.xlane.xlu0 %11278
    %11280 = vadd.xlane.f32.xlu0 %v11203
    %v11281 = vpop.xlane.xlu0 %11280
    %11282 = vadd.xlane.f32.xlu0 %v11204
    %v11283 = vpop.xlane.xlu0 %11282
    %11284 = vadd.xlane.f32.xlu0 %v11205
    %v11285 = vpop.xlane.xlu0 %11284
    %11286 = vadd.xlane.f32.xlu0 %v11206
    %v11287 = vpop.xlane.xlu0 %11286
    %11288 = vadd.xlane.f32.xlu0 %v11207
    %v11289 = vpop.xlane.xlu0 %11288
    %11290 = vadd.xlane.f32.xlu0 %v11208
    %v11291 = vpop.xlane.xlu0 %11290
    %11292 = vadd.xlane.f32.xlu0 %v11209
    %v11293 = vpop.xlane.xlu0 %11292
    %11294 = vadd.xlane.f32.xlu0 %v11210
    %v11295 = vpop.xlane.xlu0 %11294
    %11296 = vadd.xlane.f32.xlu0 %v11211
    %v11297 = vpop.xlane.xlu0 %11296
    %11298 = vadd.xlane.f32.xlu0 %v11212
    %v11299 = vpop.xlane.xlu0 %11298
    %11300 = vadd.xlane.f32.xlu0 %v11213
    %v11301 = vpop.xlane.xlu0 %11300
    %11302 = vadd.xlane.f32.xlu0 %v11214
    %v11303 = vpop.xlane.xlu0 %11302
    %11304 = vadd.xlane.f32.xlu0 %v11215
    %v11305 = vpop.xlane.xlu0 %11304
    %11306 = vadd.xlane.f32.xlu0 %v11216
    %v11307 = vpop.xlane.xlu0 %11306
    %11308 = vadd.xlane.f32.xlu0 %v11217
    %v11309 = vpop.xlane.xlu0 %11308
    %11310 = vadd.xlane.f32.xlu0 %v11218
    %v11311 = vpop.xlane.xlu0 %11310
    %11312 = vadd.xlane.f32.xlu0 %v11219
    %v11313 = vpop.xlane.xlu0 %11312
    %11314 = vadd.xlane.f32.xlu0 %v11220
    %v11315 = vpop.xlane.xlu0 %11314
    %11316 = vadd.xlane.f32.xlu0 %v11221
    %v11317 = vpop.xlane.xlu0 %11316
    %11318 = vadd.xlane.f32.xlu0 %v11222
    %v11319 = vpop.xlane.xlu0 %11318
    %11320 = vadd.xlane.f32.xlu0 %v11223
    %v11321 = vpop.xlane.xlu0 %11320
    %11322 = vadd.xlane.f32.xlu0 %v11224
    %v11323 = vpop.xlane.xlu0 %11322
    %11324 = vadd.xlane.f32.xlu0 %v11225
    %v11325 = vpop.xlane.xlu0 %11324
    %11326 = vadd.xlane.f32.xlu0 %v11226
    %v11327 = vpop.xlane.xlu0 %11326
    %11328 = vadd.xlane.f32.xlu0 %v11227
    %v11329 = vpop.xlane.xlu0 %11328
    %11330 = vadd.xlane.f32.xlu0 %v11228
    %v11331 = vpop.xlane.xlu0 %11330
    %11332 = vadd.xlane.f32.xlu0 %v11229
    %v11333 = vpop.xlane.xlu0 %11332
    %11334 = vadd.xlane.f32.xlu0 %v11230
    %v11335 = vpop.xlane.xlu0 %11334
    %11336 = vadd.xlane.f32.xlu0 %v11231
    %v11337 = vpop.xlane.xlu0 %11336
    %11338 = vadd.xlane.f32.xlu0 %v11232
    %v11339 = vpop.xlane.xlu0 %11338
    %11340 = vadd.xlane.f32.xlu0 %v11233
    %v11341 = vpop.xlane.xlu0 %11340
    %11342 = vadd.xlane.f32.xlu0 %v11234
    %v11343 = vpop.xlane.xlu0 %11342
    %11344 = vadd.xlane.f32.xlu0 %v11235
    %v11345 = vpop.xlane.xlu0 %11344
    %11346 = vadd.xlane.f32.xlu0 %v11236
    %v11347 = vpop.xlane.xlu0 %11346
    %11348 = vadd.xlane.f32.xlu0 %v11237
    %v11349 = vpop.xlane.xlu0 %11348
    %11350 = vadd.xlane.f32.xlu0 %v11238
    %v11351 = vpop.xlane.xlu0 %11350
    %11352 = vadd.xlane.f32.xlu0 %v11239
    %v11353 = vpop.xlane.xlu0 %11352
    %11354 = vadd.xlane.f32.xlu0 %v11240
    %v11355 = vpop.xlane.xlu0 %11354
    %11356 = vadd.xlane.f32.xlu0 %v11241
    %v11357 = vpop.xlane.xlu0 %11356
    %11358 = vadd.xlane.f32.xlu0 %v11242
    %v11359 = vpop.xlane.xlu0 %11358
    %11360 = vadd.xlane.f32.xlu0 %v11243
    %v11361 = vpop.xlane.xlu0 %11360
    %11362 = vadd.xlane.f32.xlu0 %v11244
    %v11363 = vpop.xlane.xlu0 %11362
    %11364 = vadd.xlane.f32.xlu0 %v11245
    %v11365 = vpop.xlane.xlu0 %11364
    %11366 = vadd.xlane.f32.xlu0 %v11246
    %v11367 = vpop.xlane.xlu0 %11366
    %11368 = vadd.xlane.f32.xlu0 %v11247
    %v11369 = vpop.xlane.xlu0 %11368
    %11370 = vadd.xlane.f32.xlu0 %v11248
    %v11371 = vpop.xlane.xlu0 %11370
    %11372 = vadd.xlane.f32.xlu0 %v11249
    %v11373 = vpop.xlane.xlu0 %11372
    %11374 = vadd.xlane.f32.xlu0 %v11250
    %v11375 = vpop.xlane.xlu0 %11374
    %11376 = vadd.xlane.f32.xlu0 %v11251
    %v11377 = vpop.xlane.xlu0 %11376
    %11378 = vadd.xlane.f32.xlu0 %v11252
    %v11379 = vpop.xlane.xlu0 %11378
    %11380 = vadd.xlane.f32.xlu0 %v11253
    %v11381 = vpop.xlane.xlu0 %11380
    %v11382 = vmul.f32 %v11255, %v11125
    %v11383 = vmul.f32 %v11257, %v11125
    %v11384 = vmul.f32 %v11259, %v11125
    %v11385 = vmul.f32 %v11261, %v11125
    %v11386 = vmul.f32 %v11263, %v11125
    %v11387 = vmul.f32 %v11265, %v11125
    %v11388 = vmul.f32 %v11267, %v11125
    %v11389 = vmul.f32 %v11269, %v11125
    %v11390 = vmul.f32 %v11271, %v11125
    %v11391 = vmul.f32 %v11273, %v11125
    %v11392 = vmul.f32 %v11275, %v11125
    %v11393 = vmul.f32 %v11277, %v11125
    %v11394 = vmul.f32 %v11279, %v11125
    %v11395 = vmul.f32 %v11281, %v11125
    %v11396 = vmul.f32 %v11283, %v11125
    %v11397 = vmul.f32 %v11285, %v11125
    %v11398 = vmul.f32 %v11287, %v11125
    %v11399 = vmul.f32 %v11289, %v11125
    %v11400 = vmul.f32 %v11291, %v11125
    %v11401 = vmul.f32 %v11293, %v11125
    %v11402 = vmul.f32 %v11295, %v11125
    %v11403 = vmul.f32 %v11297, %v11125
    %v11404 = vmul.f32 %v11299, %v11125
    %v11405 = vmul.f32 %v11301, %v11125
    %v11406 = vmul.f32 %v11303, %v11125
    %v11407 = vmul.f32 %v11305, %v11125
    %v11408 = vmul.f32 %v11307, %v11125
    %v11409 = vmul.f32 %v11309, %v11125
    %v11410 = vmul.f32 %v11311, %v11125
    %v11411 = vmul.f32 %v11313, %v11125
    %v11412 = vmul.f32 %v11315, %v11125
    %v11413 = vmul.f32 %v11317, %v11125
    %v11414 = vmul.f32 %v11319, %v11125
    %v11415 = vmul.f32 %v11321, %v11125
    %v11416 = vmul.f32 %v11323, %v11125
    %v11417 = vmul.f32 %v11325, %v11125
    %v11418 = vmul.f32 %v11327, %v11125
    %v11419 = vmul.f32 %v11329, %v11125
    %v11420 = vmul.f32 %v11331, %v11125
    %v11421 = vmul.f32 %v11333, %v11125
    %v11422 = vmul.f32 %v11335, %v11125
    %v11423 = vmul.f32 %v11337, %v11125
    %v11424 = vmul.f32 %v11339, %v11125
    %v11425 = vmul.f32 %v11341, %v11125
    %v11426 = vmul.f32 %v11343, %v11125
    %v11427 = vmul.f32 %v11345, %v11125
    %v11428 = vmul.f32 %v11347, %v11125
    %v11429 = vmul.f32 %v11349, %v11125
    %v11430 = vmul.f32 %v11351, %v11125
    %v11431 = vmul.f32 %v11353, %v11125
    %v11432 = vmul.f32 %v11355, %v11125
    %v11433 = vmul.f32 %v11357, %v11125
    %v11434 = vmul.f32 %v11359, %v11125
    %v11435 = vmul.f32 %v11361, %v11125
    %v11436 = vmul.f32 %v11363, %v11125
    %v11437 = vmul.f32 %v11365, %v11125
    %v11438 = vmul.f32 %v11367, %v11125
    %v11439 = vmul.f32 %v11369, %v11125
    %v11440 = vmul.f32 %v11371, %v11125
    %v11441 = vmul.f32 %v11373, %v11125
    %v11442 = vmul.f32 %v11375, %v11125
    %v11443 = vmul.f32 %v11377, %v11125
    %v11444 = vmul.f32 %v11379, %v11125
    %v11445 = vmul.f32 %v11381, %v11125
    %v11446 = vmul.f32 %v11126, %v11126
    %v11447 = vmul.f32 %v11127, %v11127
    %v11448 = vmul.f32 %v11128, %v11128
    %v11449 = vmul.f32 %v11129, %v11129
    %v11450 = vmul.f32 %v11130, %v11130
    %v11451 = vmul.f32 %v11131, %v11131
    %v11452 = vmul.f32 %v11132, %v11132
    %v11453 = vmul.f32 %v11133, %v11133
    %v11454 = vmul.f32 %v11134, %v11134
    %v11455 = vmul.f32 %v11135, %v11135
    %v11456 = vmul.f32 %v11136, %v11136
    %v11457 = vmul.f32 %v11137, %v11137
    %v11458 = vmul.f32 %v11138, %v11138
    %v11459 = vmul.f32 %v11139, %v11139
    %v11460 = vmul.f32 %v11140, %v11140
    %v11461 = vmul.f32 %v11141, %v11141
    %v11462 = vmul.f32 %v11142, %v11142
    %v11463 = vmul.f32 %v11143, %v11143
    %v11464 = vmul.f32 %v11144, %v11144
    %v11465 = vmul.f32 %v11145, %v11145
    %v11466 = vmul.f32 %v11146, %v11146
    %v11467 = vmul.f32 %v11147, %v11147
    %v11468 = vmul.f32 %v11148, %v11148
    %v11469 = vmul.f32 %v11149, %v11149
    %v11470 = vmul.f32 %v11150, %v11150
    %v11471 = vmul.f32 %v11151, %v11151
    %v11472 = vmul.f32 %v11152, %v11152
    %v11473 = vmul.f32 %v11153, %v11153
    %v11474 = vmul.f32 %v11154, %v11154
    %v11475 = vmul.f32 %v11155, %v11155
    %v11476 = vmul.f32 %v11156, %v11156
    %v11477 = vmul.f32 %v11157, %v11157
    %v11478 = vmul.f32 %v11158, %v11158
    %v11479 = vmul.f32 %v11159, %v11159
    %v11480 = vmul.f32 %v11160, %v11160
    %v11481 = vmul.f32 %v11161, %v11161
    %v11482 = vmul.f32 %v11162, %v11162
    %v11483 = vmul.f32 %v11163, %v11163
    %v11484 = vmul.f32 %v11164, %v11164
    %v11485 = vmul.f32 %v11165, %v11165
    %v11486 = vmul.f32 %v11166, %v11166
    %v11487 = vmul.f32 %v11167, %v11167
    %v11488 = vmul.f32 %v11168, %v11168
    %v11489 = vmul.f32 %v11169, %v11169
    %v11490 = vmul.f32 %v11170, %v11170
    %v11491 = vmul.f32 %v11171, %v11171
    %v11492 = vmul.f32 %v11172, %v11172
    %v11493 = vmul.f32 %v11173, %v11173
    %v11494 = vmul.f32 %v11174, %v11174
    %v11495 = vmul.f32 %v11175, %v11175
    %v11496 = vmul.f32 %v11176, %v11176
    %v11497 = vmul.f32 %v11177, %v11177
    %v11498 = vmul.f32 %v11178, %v11178
    %v11499 = vmul.f32 %v11179, %v11179
    %v11500 = vmul.f32 %v11180, %v11180
    %v11501 = vmul.f32 %v11181, %v11181
    %v11502 = vmul.f32 %v11182, %v11182
    %v11503 = vmul.f32 %v11183, %v11183
    %v11504 = vmul.f32 %v11184, %v11184
    %v11505 = vmul.f32 %v11185, %v11185
    %v11506 = vmul.f32 %v11186, %v11186
    %v11507 = vmul.f32 %v11187, %v11187
    %v11508 = vmul.f32 %v11188, %v11188
    %v11509 = vmul.f32 %v11189, %v11189
    %v11510 = vsub.f32 %v11382, %v11446
    %v11511 = vsub.f32 %v11383, %v11447
    %v11512 = vsub.f32 %v11384, %v11448
    %v11513 = vsub.f32 %v11385, %v11449
    %v11514 = vsub.f32 %v11386, %v11450
    %v11515 = vsub.f32 %v11387, %v11451
    %v11516 = vsub.f32 %v11388, %v11452
    %v11517 = vsub.f32 %v11389, %v11453
    %v11518 = vsub.f32 %v11390, %v11454
    %v11519 = vsub.f32 %v11391, %v11455
    %v11520 = vsub.f32 %v11392, %v11456
    %v11521 = vsub.f32 %v11393, %v11457
    %v11522 = vsub.f32 %v11394, %v11458
    %v11523 = vsub.f32 %v11395, %v11459
    %v11524 = vsub.f32 %v11396, %v11460
    %v11525 = vsub.f32 %v11397, %v11461
    %v11526 = vsub.f32 %v11398, %v11462
    %v11527 = vsub.f32 %v11399, %v11463
    %v11528 = vsub.f32 %v11400, %v11464
    %v11529 = vsub.f32 %v11401, %v11465
    %v11530 = vsub.f32 %v11402, %v11466
    %v11531 = vsub.f32 %v11403, %v11467
    %v11532 = vsub.f32 %v11404, %v11468
    %v11533 = vsub.f32 %v11405, %v11469
    %v11534 = vsub.f32 %v11406, %v11470
    %v11535 = vsub.f32 %v11407, %v11471
    %v11536 = vsub.f32 %v11408, %v11472
    %v11537 = vsub.f32 %v11409, %v11473
    %v11538 = vsub.f32 %v11410, %v11474
    %v11539 = vsub.f32 %v11411, %v11475
    %v11540 = vsub.f32 %v11412, %v11476
    %v11541 = vsub.f32 %v11413, %v11477
    %v11542 = vsub.f32 %v11414, %v11478
    %v11543 = vsub.f32 %v11415, %v11479
    %v11544 = vsub.f32 %v11416, %v11480
    %v11545 = vsub.f32 %v11417, %v11481
    %v11546 = vsub.f32 %v11418, %v11482
    %v11547 = vsub.f32 %v11419, %v11483
    %v11548 = vsub.f32 %v11420, %v11484
    %v11549 = vsub.f32 %v11421, %v11485
    %v11550 = vsub.f32 %v11422, %v11486
    %v11551 = vsub.f32 %v11423, %v11487
    %v11552 = vsub.f32 %v11424, %v11488
    %v11553 = vsub.f32 %v11425, %v11489
    %v11554 = vsub.f32 %v11426, %v11490
    %v11555 = vsub.f32 %v11427, %v11491
    %v11556 = vsub.f32 %v11428, %v11492
    %v11557 = vsub.f32 %v11429, %v11493
    %v11558 = vsub.f32 %v11430, %v11494
    %v11559 = vsub.f32 %v11431, %v11495
    %v11560 = vsub.f32 %v11432, %v11496
    %v11561 = vsub.f32 %v11433, %v11497
    %v11562 = vsub.f32 %v11434, %v11498
    %v11563 = vsub.f32 %v11435, %v11499
    %v11564 = vsub.f32 %v11436, %v11500
    %v11565 = vsub.f32 %v11437, %v11501
    %v11566 = vsub.f32 %v11438, %v11502
    %v11567 = vsub.f32 %v11439, %v11503
    %v11568 = vsub.f32 %v11440, %v11504
    %v11569 = vsub.f32 %v11441, %v11505
    %v11570 = vsub.f32 %v11442, %v11506
    %v11571 = vsub.f32 %v11443, %v11507
    %v11572 = vsub.f32 %v11444, %v11508
    %v11573 = vsub.f32 %v11445, %v11509
    %v11574 = vsub.f32 %v1225, %v11126
    %v11575 = vsub.f32 %v1380, %v11127
    %v11576 = vsub.f32 %v1535, %v11128
    %v11577 = vsub.f32 %v1690, %v11129
    %v11578 = vsub.f32 %v1845, %v11130
    %v11579 = vsub.f32 %v2000, %v11131
    %v11580 = vsub.f32 %v2155, %v11132
    %v11581 = vsub.f32 %v2310, %v11133
    %v11582 = vsub.f32 %v2465, %v11134
    %v11583 = vsub.f32 %v2620, %v11135
    %v11584 = vsub.f32 %v2775, %v11136
    %v11585 = vsub.f32 %v2930, %v11137
    %v11586 = vsub.f32 %v3085, %v11138
    %v11587 = vsub.f32 %v3240, %v11139
    %v11588 = vsub.f32 %v3395, %v11140
    %v11589 = vsub.f32 %v3550, %v11141
    %v11590 = vsub.f32 %v3705, %v11142
    %v11591 = vsub.f32 %v3860, %v11143
    %v11592 = vsub.f32 %v4015, %v11144
    %v11593 = vsub.f32 %v4170, %v11145
    %v11594 = vsub.f32 %v4325, %v11146
    %v11595 = vsub.f32 %v4480, %v11147
    %v11596 = vsub.f32 %v4635, %v11148
    %v11597 = vsub.f32 %v4790, %v11149
    %v11598 = vsub.f32 %v4945, %v11150
    %v11599 = vsub.f32 %v5100, %v11151
    %v11600 = vsub.f32 %v5255, %v11152
    %v11601 = vsub.f32 %v5410, %v11153
    %v11602 = vsub.f32 %v5565, %v11154
    %v11603 = vsub.f32 %v5720, %v11155
    %v11604 = vsub.f32 %v5875, %v11156
    %v11605 = vsub.f32 %v6030, %v11157
    %v11606 = vsub.f32 %v6185, %v11158
    %v11607 = vsub.f32 %v6340, %v11159
    %v11608 = vsub.f32 %v6495, %v11160
    %v11609 = vsub.f32 %v6650, %v11161
    %v11610 = vsub.f32 %v6805, %v11162
    %v11611 = vsub.f32 %v6960, %v11163
    %v11612 = vsub.f32 %v7115, %v11164
    %v11613 = vsub.f32 %v7270, %v11165
    %v11614 = vsub.f32 %v7425, %v11166
    %v11615 = vsub.f32 %v7580, %v11167
    %v11616 = vsub.f32 %v7735, %v11168
    %v11617 = vsub.f32 %v7890, %v11169
    %v11618 = vsub.f32 %v8045, %v11170
    %v11619 = vsub.f32 %v8200, %v11171
    %v11620 = vsub.f32 %v8355, %v11172
    %v11621 = vsub.f32 %v8510, %v11173
    %v11622 = vsub.f32 %v8665, %v11174
    %v11623 = vsub.f32 %v8820, %v11175
    %v11624 = vsub.f32 %v8975, %v11176
    %v11625 = vsub.f32 %v9130, %v11177
    %v11626 = vsub.f32 %v9285, %v11178
    %v11627 = vsub.f32 %v9440, %v11179
    %v11628 = vsub.f32 %v9595, %v11180
    %v11629 = vsub.f32 %v9750, %v11181
    %v11630 = vsub.f32 %v9905, %v11182
    %v11631 = vsub.f32 %v10060, %v11183
    %v11632 = vsub.f32 %v10215, %v11184
    %v11633 = vsub.f32 %v10370, %v11185
    %v11634 = vsub.f32 %v10525, %v11186
    %v11635 = vsub.f32 %v10680, %v11187
    %v11636 = vsub.f32 %v10835, %v11188
    %v11637 = vsub.f32 %v10990, %v11189
    %v11638 = vadd.f32 %v11510, 1e-12
    %v11639 = vadd.f32 %v11511, 1e-12
    %v11640 = vadd.f32 %v11512, 1e-12
    %v11641 = vadd.f32 %v11513, 1e-12
    %v11642 = vadd.f32 %v11514, 1e-12
    %v11643 = vadd.f32 %v11515, 1e-12
    %v11644 = vadd.f32 %v11516, 1e-12
    %v11645 = vadd.f32 %v11517, 1e-12
    %v11646 = vadd.f32 %v11518, 1e-12
    %v11647 = vadd.f32 %v11519, 1e-12
    %v11648 = vadd.f32 %v11520, 1e-12
    %v11649 = vadd.f32 %v11521, 1e-12
    %v11650 = vadd.f32 %v11522, 1e-12
    %v11651 = vadd.f32 %v11523, 1e-12
    %v11652 = vadd.f32 %v11524, 1e-12
    %v11653 = vadd.f32 %v11525, 1e-12
    %v11654 = vadd.f32 %v11526, 1e-12
    %v11655 = vadd.f32 %v11527, 1e-12
    %v11656 = vadd.f32 %v11528, 1e-12
    %v11657 = vadd.f32 %v11529, 1e-12
    %v11658 = vadd.f32 %v11530, 1e-12
    %v11659 = vadd.f32 %v11531, 1e-12
    %v11660 = vadd.f32 %v11532, 1e-12
    %v11661 = vadd.f32 %v11533, 1e-12
    %v11662 = vadd.f32 %v11534, 1e-12
    %v11663 = vadd.f32 %v11535, 1e-12
    %v11664 = vadd.f32 %v11536, 1e-12
    %v11665 = vadd.f32 %v11537, 1e-12
    %v11666 = vadd.f32 %v11538, 1e-12
    %v11667 = vadd.f32 %v11539, 1e-12
    %v11668 = vadd.f32 %v11540, 1e-12
    %v11669 = vadd.f32 %v11541, 1e-12
    %v11670 = vadd.f32 %v11542, 1e-12
    %v11671 = vadd.f32 %v11543, 1e-12
    %v11672 = vadd.f32 %v11544, 1e-12
    %v11673 = vadd.f32 %v11545, 1e-12
    %v11674 = vadd.f32 %v11546, 1e-12
    %v11675 = vadd.f32 %v11547, 1e-12
    %v11676 = vadd.f32 %v11548, 1e-12
    %v11677 = vadd.f32 %v11549, 1e-12
    %v11678 = vadd.f32 %v11550, 1e-12
    %v11679 = vadd.f32 %v11551, 1e-12
    %v11680 = vadd.f32 %v11552, 1e-12
    %v11681 = vadd.f32 %v11553, 1e-12
    %v11682 = vadd.f32 %v11554, 1e-12
    %v11683 = vadd.f32 %v11555, 1e-12
    %v11684 = vadd.f32 %v11556, 1e-12
    %v11685 = vadd.f32 %v11557, 1e-12
    %v11686 = vadd.f32 %v11558, 1e-12
    %v11687 = vadd.f32 %v11559, 1e-12
    %v11688 = vadd.f32 %v11560, 1e-12
    %v11689 = vadd.f32 %v11561, 1e-12
    %v11690 = vadd.f32 %v11562, 1e-12
    %v11691 = vadd.f32 %v11563, 1e-12
    %v11692 = vadd.f32 %v11564, 1e-12
    %v11693 = vadd.f32 %v11565, 1e-12
    %v11694 = vadd.f32 %v11566, 1e-12
    %v11695 = vadd.f32 %v11567, 1e-12
    %v11696 = vadd.f32 %v11568, 1e-12
    %v11697 = vadd.f32 %v11569, 1e-12
    %v11698 = vadd.f32 %v11570, 1e-12
    %v11699 = vadd.f32 %v11571, 1e-12
    %v11700 = vadd.f32 %v11572, 1e-12
    %v11701 = vadd.f32 %v11573, 1e-12
    %v11702 = vrsqrt.pop %v11638
    %v11703 = vmul.f32 %v11702, %v11638
    %v11704 = vmul.f32 %v11703, %v11702
    %v11705 = vmul.f32 0.5, %v11704
    %v11706 = vsub.f32 1.5, %v11705
    %v11707 = vmul.f32 %v11702, %v11706
    %vm11708 = vweird.f32 %v11638
    %vm11709 = vweird.f32 %v11702
    %vm11710 = vmor %vm11708, %vm11709
    %v11711 = vsel %vm11710, %v11702, %v11707
    %v11712 = vrsqrt.pop %v11639
    %v11713 = vmul.f32 %v11712, %v11639
    %v11714 = vmul.f32 %v11713, %v11712
    %v11715 = vmul.f32 0.5, %v11714
    %v11716 = vsub.f32 1.5, %v11715
    %v11717 = vmul.f32 %v11712, %v11716
    %vm11718 = vweird.f32 %v11639
    %vm11719 = vweird.f32 %v11712
    %vm11720 = vmor %vm11718, %vm11719
    %v11721 = vsel %vm11720, %v11712, %v11717
    %v11722 = vrsqrt.pop %v11640
    %v11723 = vmul.f32 %v11722, %v11640
    %v11724 = vmul.f32 %v11723, %v11722
    %v11725 = vmul.f32 0.5, %v11724
    %v11726 = vsub.f32 1.5, %v11725
    %v11727 = vmul.f32 %v11722, %v11726
    %vm11728 = vweird.f32 %v11640
    %vm11729 = vweird.f32 %v11722
    %vm11730 = vmor %vm11728, %vm11729
    %v11731 = vsel %vm11730, %v11722, %v11727
    %v11732 = vrsqrt.pop %v11641
    %v11733 = vmul.f32 %v11732, %v11641
    %v11734 = vmul.f32 %v11733, %v11732
    %v11735 = vmul.f32 0.5, %v11734
    %v11736 = vsub.f32 1.5, %v11735
    %v11737 = vmul.f32 %v11732, %v11736
    %vm11738 = vweird.f32 %v11641
    %vm11739 = vweird.f32 %v11732
    %vm11740 = vmor %vm11738, %vm11739
    %v11741 = vsel %vm11740, %v11732, %v11737
    %v11742 = vrsqrt.pop %v11642
    %v11743 = vmul.f32 %v11742, %v11642
    %v11744 = vmul.f32 %v11743, %v11742
    %v11745 = vmul.f32 0.5, %v11744
    %v11746 = vsub.f32 1.5, %v11745
    %v11747 = vmul.f32 %v11742, %v11746
    %vm11748 = vweird.f32 %v11642
    %vm11749 = vweird.f32 %v11742
    %vm11750 = vmor %vm11748, %vm11749
    %v11751 = vsel %vm11750, %v11742, %v11747
    %v11752 = vrsqrt.pop %v11643
    %v11753 = vmul.f32 %v11752, %v11643
    %v11754 = vmul.f32 %v11753, %v11752
    %v11755 = vmul.f32 0.5, %v11754
    %v11756 = vsub.f32 1.5, %v11755
    %v11757 = vmul.f32 %v11752, %v11756
    %vm11758 = vweird.f32 %v11643
    %vm11759 = vweird.f32 %v11752
    %vm11760 = vmor %vm11758, %vm11759
    %v11761 = vsel %vm11760, %v11752, %v11757
    %v11762 = vrsqrt.pop %v11644
    %v11763 = vmul.f32 %v11762, %v11644
    %v11764 = vmul.f32 %v11763, %v11762
    %v11765 = vmul.f32 0.5, %v11764
    %v11766 = vsub.f32 1.5, %v11765
    %v11767 = vmul.f32 %v11762, %v11766
    %vm11768 = vweird.f32 %v11644
    %vm11769 = vweird.f32 %v11762
    %vm11770 = vmor %vm11768, %vm11769
    %v11771 = vsel %vm11770, %v11762, %v11767
    %v11772 = vrsqrt.pop %v11645
    %v11773 = vmul.f32 %v11772, %v11645
    %v11774 = vmul.f32 %v11773, %v11772
    %v11775 = vmul.f32 0.5, %v11774
    %v11776 = vsub.f32 1.5, %v11775
    %v11777 = vmul.f32 %v11772, %v11776
    %vm11778 = vweird.f32 %v11645
    %vm11779 = vweird.f32 %v11772
    %vm11780 = vmor %vm11778, %vm11779
    %v11781 = vsel %vm11780, %v11772, %v11777
    %v11782 = vrsqrt.pop %v11646
    %v11783 = vmul.f32 %v11782, %v11646
    %v11784 = vmul.f32 %v11783, %v11782
    %v11785 = vmul.f32 0.5, %v11784
    %v11786 = vsub.f32 1.5, %v11785
    %v11787 = vmul.f32 %v11782, %v11786
    %vm11788 = vweird.f32 %v11646
    %vm11789 = vweird.f32 %v11782
    %vm11790 = vmor %vm11788, %vm11789
    %v11791 = vsel %vm11790, %v11782, %v11787
    %v11792 = vrsqrt.pop %v11647
    %v11793 = vmul.f32 %v11792, %v11647
    %v11794 = vmul.f32 %v11793, %v11792
    %v11795 = vmul.f32 0.5, %v11794
    %v11796 = vsub.f32 1.5, %v11795
    %v11797 = vmul.f32 %v11792, %v11796
    %vm11798 = vweird.f32 %v11647
    %vm11799 = vweird.f32 %v11792
    %vm11800 = vmor %vm11798, %vm11799
    %v11801 = vsel %vm11800, %v11792, %v11797
    %v11802 = vrsqrt.pop %v11648
    %v11803 = vmul.f32 %v11802, %v11648
    %v11804 = vmul.f32 %v11803, %v11802
    %v11805 = vmul.f32 0.5, %v11804
    %v11806 = vsub.f32 1.5, %v11805
    %v11807 = vmul.f32 %v11802, %v11806
    %vm11808 = vweird.f32 %v11648
    %vm11809 = vweird.f32 %v11802
    %vm11810 = vmor %vm11808, %vm11809
    %v11811 = vsel %vm11810, %v11802, %v11807
    %v11812 = vrsqrt.pop %v11649
    %v11813 = vmul.f32 %v11812, %v11649
    %v11814 = vmul.f32 %v11813, %v11812
    %v11815 = vmul.f32 0.5, %v11814
    %v11816 = vsub.f32 1.5, %v11815
    %v11817 = vmul.f32 %v11812, %v11816
    %vm11818 = vweird.f32 %v11649
    %vm11819 = vweird.f32 %v11812
    %vm11820 = vmor %vm11818, %vm11819
    %v11821 = vsel %vm11820, %v11812, %v11817
    %v11822 = vrsqrt.pop %v11650
    %v11823 = vmul.f32 %v11822, %v11650
    %v11824 = vmul.f32 %v11823, %v11822
    %v11825 = vmul.f32 0.5, %v11824
    %v11826 = vsub.f32 1.5, %v11825
    %v11827 = vmul.f32 %v11822, %v11826
    %vm11828 = vweird.f32 %v11650
    %vm11829 = vweird.f32 %v11822
    %vm11830 = vmor %vm11828, %vm11829
    %v11831 = vsel %vm11830, %v11822, %v11827
    %v11832 = vrsqrt.pop %v11651
    %v11833 = vmul.f32 %v11832, %v11651
    %v11834 = vmul.f32 %v11833, %v11832
    %v11835 = vmul.f32 0.5, %v11834
    %v11836 = vsub.f32 1.5, %v11835
    %v11837 = vmul.f32 %v11832, %v11836
    %vm11838 = vweird.f32 %v11651
    %vm11839 = vweird.f32 %v11832
    %vm11840 = vmor %vm11838, %vm11839
    %v11841 = vsel %vm11840, %v11832, %v11837
    %v11842 = vrsqrt.pop %v11652
    %v11843 = vmul.f32 %v11842, %v11652
    %v11844 = vmul.f32 %v11843, %v11842
    %v11845 = vmul.f32 0.5, %v11844
    %v11846 = vsub.f32 1.5, %v11845
    %v11847 = vmul.f32 %v11842, %v11846
    %vm11848 = vweird.f32 %v11652
    %vm11849 = vweird.f32 %v11842
    %vm11850 = vmor %vm11848, %vm11849
    %v11851 = vsel %vm11850, %v11842, %v11847
    %v11852 = vrsqrt.pop %v11653
    %v11853 = vmul.f32 %v11852, %v11653
    %v11854 = vmul.f32 %v11853, %v11852
    %v11855 = vmul.f32 0.5, %v11854
    %v11856 = vsub.f32 1.5, %v11855
    %v11857 = vmul.f32 %v11852, %v11856
    %vm11858 = vweird.f32 %v11653
    %vm11859 = vweird.f32 %v11852
    %vm11860 = vmor %vm11858, %vm11859
    %v11861 = vsel %vm11860, %v11852, %v11857
    %v11862 = vrsqrt.pop %v11654
    %v11863 = vmul.f32 %v11862, %v11654
    %v11864 = vmul.f32 %v11863, %v11862
    %v11865 = vmul.f32 0.5, %v11864
    %v11866 = vsub.f32 1.5, %v11865
    %v11867 = vmul.f32 %v11862, %v11866
    %vm11868 = vweird.f32 %v11654
    %vm11869 = vweird.f32 %v11862
    %vm11870 = vmor %vm11868, %vm11869
    %v11871 = vsel %vm11870, %v11862, %v11867
    %v11872 = vrsqrt.pop %v11655
    %v11873 = vmul.f32 %v11872, %v11655
    %v11874 = vmul.f32 %v11873, %v11872
    %v11875 = vmul.f32 0.5, %v11874
    %v11876 = vsub.f32 1.5, %v11875
    %v11877 = vmul.f32 %v11872, %v11876
    %vm11878 = vweird.f32 %v11655
    %vm11879 = vweird.f32 %v11872
    %vm11880 = vmor %vm11878, %vm11879
    %v11881 = vsel %vm11880, %v11872, %v11877
    %v11882 = vrsqrt.pop %v11656
    %v11883 = vmul.f32 %v11882, %v11656
    %v11884 = vmul.f32 %v11883, %v11882
    %v11885 = vmul.f32 0.5, %v11884
    %v11886 = vsub.f32 1.5, %v11885
    %v11887 = vmul.f32 %v11882, %v11886
    %vm11888 = vweird.f32 %v11656
    %vm11889 = vweird.f32 %v11882
    %vm11890 = vmor %vm11888, %vm11889
    %v11891 = vsel %vm11890, %v11882, %v11887
    %v11892 = vrsqrt.pop %v11657
    %v11893 = vmul.f32 %v11892, %v11657
    %v11894 = vmul.f32 %v11893, %v11892
    %v11895 = vmul.f32 0.5, %v11894
    %v11896 = vsub.f32 1.5, %v11895
    %v11897 = vmul.f32 %v11892, %v11896
    %vm11898 = vweird.f32 %v11657
    %vm11899 = vweird.f32 %v11892
    %vm11900 = vmor %vm11898, %vm11899
    %v11901 = vsel %vm11900, %v11892, %v11897
    %v11902 = vrsqrt.pop %v11658
    %v11903 = vmul.f32 %v11902, %v11658
    %v11904 = vmul.f32 %v11903, %v11902
    %v11905 = vmul.f32 0.5, %v11904
    %v11906 = vsub.f32 1.5, %v11905
    %v11907 = vmul.f32 %v11902, %v11906
    %vm11908 = vweird.f32 %v11658
    %vm11909 = vweird.f32 %v11902
    %vm11910 = vmor %vm11908, %vm11909
    %v11911 = vsel %vm11910, %v11902, %v11907
    %v11912 = vrsqrt.pop %v11659
    %v11913 = vmul.f32 %v11912, %v11659
    %v11914 = vmul.f32 %v11913, %v11912
    %v11915 = vmul.f32 0.5, %v11914
    %v11916 = vsub.f32 1.5, %v11915
    %v11917 = vmul.f32 %v11912, %v11916
    %vm11918 = vweird.f32 %v11659
    %vm11919 = vweird.f32 %v11912
    %vm11920 = vmor %vm11918, %vm11919
    %v11921 = vsel %vm11920, %v11912, %v11917
    %v11922 = vrsqrt.pop %v11660
    %v11923 = vmul.f32 %v11922, %v11660
    %v11924 = vmul.f32 %v11923, %v11922
    %v11925 = vmul.f32 0.5, %v11924
    %v11926 = vsub.f32 1.5, %v11925
    %v11927 = vmul.f32 %v11922, %v11926
    %vm11928 = vweird.f32 %v11660
    %vm11929 = vweird.f32 %v11922
    %vm11930 = vmor %vm11928, %vm11929
    %v11931 = vsel %vm11930, %v11922, %v11927
    %v11932 = vrsqrt.pop %v11661
    %v11933 = vmul.f32 %v11932, %v11661
    %v11934 = vmul.f32 %v11933, %v11932
    %v11935 = vmul.f32 0.5, %v11934
    %v11936 = vsub.f32 1.5, %v11935
    %v11937 = vmul.f32 %v11932, %v11936
    %vm11938 = vweird.f32 %v11661
    %vm11939 = vweird.f32 %v11932
    %vm11940 = vmor %vm11938, %vm11939
    %v11941 = vsel %vm11940, %v11932, %v11937
    %v11942 = vrsqrt.pop %v11662
    %v11943 = vmul.f32 %v11942, %v11662
    %v11944 = vmul.f32 %v11943, %v11942
    %v11945 = vmul.f32 0.5, %v11944
    %v11946 = vsub.f32 1.5, %v11945
    %v11947 = vmul.f32 %v11942, %v11946
    %vm11948 = vweird.f32 %v11662
    %vm11949 = vweird.f32 %v11942
    %vm11950 = vmor %vm11948, %vm11949
    %v11951 = vsel %vm11950, %v11942, %v11947
    %v11952 = vrsqrt.pop %v11663
    %v11953 = vmul.f32 %v11952, %v11663
    %v11954 = vmul.f32 %v11953, %v11952
    %v11955 = vmul.f32 0.5, %v11954
    %v11956 = vsub.f32 1.5, %v11955
    %v11957 = vmul.f32 %v11952, %v11956
    %vm11958 = vweird.f32 %v11663
    %vm11959 = vweird.f32 %v11952
    %vm11960 = vmor %vm11958, %vm11959
    %v11961 = vsel %vm11960, %v11952, %v11957
    %v11962 = vrsqrt.pop %v11664
    %v11963 = vmul.f32 %v11962, %v11664
    %v11964 = vmul.f32 %v11963, %v11962
    %v11965 = vmul.f32 0.5, %v11964
    %v11966 = vsub.f32 1.5, %v11965
    %v11967 = vmul.f32 %v11962, %v11966
    %vm11968 = vweird.f32 %v11664
    %vm11969 = vweird.f32 %v11962
    %vm11970 = vmor %vm11968, %vm11969
    %v11971 = vsel %vm11970, %v11962, %v11967
    %v11972 = vrsqrt.pop %v11665
    %v11973 = vmul.f32 %v11972, %v11665
    %v11974 = vmul.f32 %v11973, %v11972
    %v11975 = vmul.f32 0.5, %v11974
    %v11976 = vsub.f32 1.5, %v11975
    %v11977 = vmul.f32 %v11972, %v11976
    %vm11978 = vweird.f32 %v11665
    %vm11979 = vweird.f32 %v11972
    %vm11980 = vmor %vm11978, %vm11979
    %v11981 = vsel %vm11980, %v11972, %v11977
    %v11982 = vrsqrt.pop %v11666
    %v11983 = vmul.f32 %v11982, %v11666
    %v11984 = vmul.f32 %v11983, %v11982
    %v11985 = vmul.f32 0.5, %v11984
    %v11986 = vsub.f32 1.5, %v11985
    %v11987 = vmul.f32 %v11982, %v11986
    %vm11988 = vweird.f32 %v11666
    %vm11989 = vweird.f32 %v11982
    %vm11990 = vmor %vm11988, %vm11989
    %v11991 = vsel %vm11990, %v11982, %v11987
    %v11992 = vrsqrt.pop %v11667
    %v11993 = vmul.f32 %v11992, %v11667
    %v11994 = vmul.f32 %v11993, %v11992
    %v11995 = vmul.f32 0.5, %v11994
    %v11996 = vsub.f32 1.5, %v11995
    %v11997 = vmul.f32 %v11992, %v11996
    %vm11998 = vweird.f32 %v11667
    %vm11999 = vweird.f32 %v11992
    %vm12000 = vmor %vm11998, %vm11999
    %v12001 = vsel %vm12000, %v11992, %v11997
    %v12002 = vrsqrt.pop %v11668
    %v12003 = vmul.f32 %v12002, %v11668
    %v12004 = vmul.f32 %v12003, %v12002
    %v12005 = vmul.f32 0.5, %v12004
    %v12006 = vsub.f32 1.5, %v12005
    %v12007 = vmul.f32 %v12002, %v12006
    %vm12008 = vweird.f32 %v11668
    %vm12009 = vweird.f32 %v12002
    %vm12010 = vmor %vm12008, %vm12009
    %v12011 = vsel %vm12010, %v12002, %v12007
    %v12012 = vrsqrt.pop %v11669
    %v12013 = vmul.f32 %v12012, %v11669
    %v12014 = vmul.f32 %v12013, %v12012
    %v12015 = vmul.f32 0.5, %v12014
    %v12016 = vsub.f32 1.5, %v12015
    %v12017 = vmul.f32 %v12012, %v12016
    %vm12018 = vweird.f32 %v11669
    %vm12019 = vweird.f32 %v12012
    %vm12020 = vmor %vm12018, %vm12019
    %v12021 = vsel %vm12020, %v12012, %v12017
    %v12022 = vrsqrt.pop %v11670
    %v12023 = vmul.f32 %v12022, %v11670
    %v12024 = vmul.f32 %v12023, %v12022
    %v12025 = vmul.f32 0.5, %v12024
    %v12026 = vsub.f32 1.5, %v12025
    %v12027 = vmul.f32 %v12022, %v12026
    %vm12028 = vweird.f32 %v11670
    %vm12029 = vweird.f32 %v12022
    %vm12030 = vmor %vm12028, %vm12029
    %v12031 = vsel %vm12030, %v12022, %v12027
    %v12032 = vrsqrt.pop %v11671
    %v12033 = vmul.f32 %v12032, %v11671
    %v12034 = vmul.f32 %v12033, %v12032
    %v12035 = vmul.f32 0.5, %v12034
    %v12036 = vsub.f32 1.5, %v12035
    %v12037 = vmul.f32 %v12032, %v12036
    %vm12038 = vweird.f32 %v11671
    %vm12039 = vweird.f32 %v12032
    %vm12040 = vmor %vm12038, %vm12039
    %v12041 = vsel %vm12040, %v12032, %v12037
    %v12042 = vrsqrt.pop %v11672
    %v12043 = vmul.f32 %v12042, %v11672
    %v12044 = vmul.f32 %v12043, %v12042
    %v12045 = vmul.f32 0.5, %v12044
    %v12046 = vsub.f32 1.5, %v12045
    %v12047 = vmul.f32 %v12042, %v12046
    %vm12048 = vweird.f32 %v11672
    %vm12049 = vweird.f32 %v12042
    %vm12050 = vmor %vm12048, %vm12049
    %v12051 = vsel %vm12050, %v12042, %v12047
    %v12052 = vrsqrt.pop %v11673
    %v12053 = vmul.f32 %v12052, %v11673
    %v12054 = vmul.f32 %v12053, %v12052
    %v12055 = vmul.f32 0.5, %v12054
    %v12056 = vsub.f32 1.5, %v12055
    %v12057 = vmul.f32 %v12052, %v12056
    %vm12058 = vweird.f32 %v11673
    %vm12059 = vweird.f32 %v12052
    %vm12060 = vmor %vm12058, %vm12059
    %v12061 = vsel %vm12060, %v12052, %v12057
    %v12062 = vrsqrt.pop %v11674
    %v12063 = vmul.f32 %v12062, %v11674
    %v12064 = vmul.f32 %v12063, %v12062
    %v12065 = vmul.f32 0.5, %v12064
    %v12066 = vsub.f32 1.5, %v12065
    %v12067 = vmul.f32 %v12062, %v12066
    %vm12068 = vweird.f32 %v11674
    %vm12069 = vweird.f32 %v12062
    %vm12070 = vmor %vm12068, %vm12069
    %v12071 = vsel %vm12070, %v12062, %v12067
    %v12072 = vrsqrt.pop %v11675
    %v12073 = vmul.f32 %v12072, %v11675
    %v12074 = vmul.f32 %v12073, %v12072
    %v12075 = vmul.f32 0.5, %v12074
    %v12076 = vsub.f32 1.5, %v12075
    %v12077 = vmul.f32 %v12072, %v12076
    %vm12078 = vweird.f32 %v11675
    %vm12079 = vweird.f32 %v12072
    %vm12080 = vmor %vm12078, %vm12079
    %v12081 = vsel %vm12080, %v12072, %v12077
    %v12082 = vrsqrt.pop %v11676
    %v12083 = vmul.f32 %v12082, %v11676
    %v12084 = vmul.f32 %v12083, %v12082
    %v12085 = vmul.f32 0.5, %v12084
    %v12086 = vsub.f32 1.5, %v12085
    %v12087 = vmul.f32 %v12082, %v12086
    %vm12088 = vweird.f32 %v11676
    %vm12089 = vweird.f32 %v12082
    %vm12090 = vmor %vm12088, %vm12089
    %v12091 = vsel %vm12090, %v12082, %v12087
    %v12092 = vrsqrt.pop %v11677
    %v12093 = vmul.f32 %v12092, %v11677
    %v12094 = vmul.f32 %v12093, %v12092
    %v12095 = vmul.f32 0.5, %v12094
    %v12096 = vsub.f32 1.5, %v12095
    %v12097 = vmul.f32 %v12092, %v12096
    %vm12098 = vweird.f32 %v11677
    %vm12099 = vweird.f32 %v12092
    %vm12100 = vmor %vm12098, %vm12099
    %v12101 = vsel %vm12100, %v12092, %v12097
    %v12102 = vrsqrt.pop %v11678
    %v12103 = vmul.f32 %v12102, %v11678
    %v12104 = vmul.f32 %v12103, %v12102
    %v12105 = vmul.f32 0.5, %v12104
    %v12106 = vsub.f32 1.5, %v12105
    %v12107 = vmul.f32 %v12102, %v12106
    %vm12108 = vweird.f32 %v11678
    %vm12109 = vweird.f32 %v12102
    %vm12110 = vmor %vm12108, %vm12109
    %v12111 = vsel %vm12110, %v12102, %v12107
    %v12112 = vrsqrt.pop %v11679
    %v12113 = vmul.f32 %v12112, %v11679
    %v12114 = vmul.f32 %v12113, %v12112
    %v12115 = vmul.f32 0.5, %v12114
    %v12116 = vsub.f32 1.5, %v12115
    %v12117 = vmul.f32 %v12112, %v12116
    %vm12118 = vweird.f32 %v11679
    %vm12119 = vweird.f32 %v12112
    %vm12120 = vmor %vm12118, %vm12119
    %v12121 = vsel %vm12120, %v12112, %v12117
    %v12122 = vrsqrt.pop %v11680
    %v12123 = vmul.f32 %v12122, %v11680
    %v12124 = vmul.f32 %v12123, %v12122
    %v12125 = vmul.f32 0.5, %v12124
    %v12126 = vsub.f32 1.5, %v12125
    %v12127 = vmul.f32 %v12122, %v12126
    %vm12128 = vweird.f32 %v11680
    %vm12129 = vweird.f32 %v12122
    %vm12130 = vmor %vm12128, %vm12129
    %v12131 = vsel %vm12130, %v12122, %v12127
    %v12132 = vrsqrt.pop %v11681
    %v12133 = vmul.f32 %v12132, %v11681
    %v12134 = vmul.f32 %v12133, %v12132
    %v12135 = vmul.f32 0.5, %v12134
    %v12136 = vsub.f32 1.5, %v12135
    %v12137 = vmul.f32 %v12132, %v12136
    %vm12138 = vweird.f32 %v11681
    %vm12139 = vweird.f32 %v12132
    %vm12140 = vmor %vm12138, %vm12139
    %v12141 = vsel %vm12140, %v12132, %v12137
    %v12142 = vrsqrt.pop %v11682
    %v12143 = vmul.f32 %v12142, %v11682
    %v12144 = vmul.f32 %v12143, %v12142
    %v12145 = vmul.f32 0.5, %v12144
    %v12146 = vsub.f32 1.5, %v12145
    %v12147 = vmul.f32 %v12142, %v12146
    %vm12148 = vweird.f32 %v11682
    %vm12149 = vweird.f32 %v12142
    %vm12150 = vmor %vm12148, %vm12149
    %v12151 = vsel %vm12150, %v12142, %v12147
    %v12152 = vrsqrt.pop %v11683
    %v12153 = vmul.f32 %v12152, %v11683
    %v12154 = vmul.f32 %v12153, %v12152
    %v12155 = vmul.f32 0.5, %v12154
    %v12156 = vsub.f32 1.5, %v12155
    %v12157 = vmul.f32 %v12152, %v12156
    %vm12158 = vweird.f32 %v11683
    %vm12159 = vweird.f32 %v12152
    %vm12160 = vmor %vm12158, %vm12159
    %v12161 = vsel %vm12160, %v12152, %v12157
    %v12162 = vrsqrt.pop %v11684
    %v12163 = vmul.f32 %v12162, %v11684
    %v12164 = vmul.f32 %v12163, %v12162
    %v12165 = vmul.f32 0.5, %v12164
    %v12166 = vsub.f32 1.5, %v12165
    %v12167 = vmul.f32 %v12162, %v12166
    %vm12168 = vweird.f32 %v11684
    %vm12169 = vweird.f32 %v12162
    %vm12170 = vmor %vm12168, %vm12169
    %v12171 = vsel %vm12170, %v12162, %v12167
    %v12172 = vrsqrt.pop %v11685
    %v12173 = vmul.f32 %v12172, %v11685
    %v12174 = vmul.f32 %v12173, %v12172
    %v12175 = vmul.f32 0.5, %v12174
    %v12176 = vsub.f32 1.5, %v12175
    %v12177 = vmul.f32 %v12172, %v12176
    %vm12178 = vweird.f32 %v11685
    %vm12179 = vweird.f32 %v12172
    %vm12180 = vmor %vm12178, %vm12179
    %v12181 = vsel %vm12180, %v12172, %v12177
    %v12182 = vrsqrt.pop %v11686
    %v12183 = vmul.f32 %v12182, %v11686
    %v12184 = vmul.f32 %v12183, %v12182
    %v12185 = vmul.f32 0.5, %v12184
    %v12186 = vsub.f32 1.5, %v12185
    %v12187 = vmul.f32 %v12182, %v12186
    %vm12188 = vweird.f32 %v11686
    %vm12189 = vweird.f32 %v12182
    %vm12190 = vmor %vm12188, %vm12189
    %v12191 = vsel %vm12190, %v12182, %v12187
    %v12192 = vrsqrt.pop %v11687
    %v12193 = vmul.f32 %v12192, %v11687
    %v12194 = vmul.f32 %v12193, %v12192
    %v12195 = vmul.f32 0.5, %v12194
    %v12196 = vsub.f32 1.5, %v12195
    %v12197 = vmul.f32 %v12192, %v12196
    %vm12198 = vweird.f32 %v11687
    %vm12199 = vweird.f32 %v12192
    %vm12200 = vmor %vm12198, %vm12199
    %v12201 = vsel %vm12200, %v12192, %v12197
    %v12202 = vrsqrt.pop %v11688
    %v12203 = vmul.f32 %v12202, %v11688
    %v12204 = vmul.f32 %v12203, %v12202
    %v12205 = vmul.f32 0.5, %v12204
    %v12206 = vsub.f32 1.5, %v12205
    %v12207 = vmul.f32 %v12202, %v12206
    %vm12208 = vweird.f32 %v11688
    %vm12209 = vweird.f32 %v12202
    %vm12210 = vmor %vm12208, %vm12209
    %v12211 = vsel %vm12210, %v12202, %v12207
    %v12212 = vrsqrt.pop %v11689
    %v12213 = vmul.f32 %v12212, %v11689
    %v12214 = vmul.f32 %v12213, %v12212
    %v12215 = vmul.f32 0.5, %v12214
    %v12216 = vsub.f32 1.5, %v12215
    %v12217 = vmul.f32 %v12212, %v12216
    %vm12218 = vweird.f32 %v11689
    %vm12219 = vweird.f32 %v12212
    %vm12220 = vmor %vm12218, %vm12219
    %v12221 = vsel %vm12220, %v12212, %v12217
    %v12222 = vrsqrt.pop %v11690
    %v12223 = vmul.f32 %v12222, %v11690
    %v12224 = vmul.f32 %v12223, %v12222
    %v12225 = vmul.f32 0.5, %v12224
    %v12226 = vsub.f32 1.5, %v12225
    %v12227 = vmul.f32 %v12222, %v12226
    %vm12228 = vweird.f32 %v11690
    %vm12229 = vweird.f32 %v12222
    %vm12230 = vmor %vm12228, %vm12229
    %v12231 = vsel %vm12230, %v12222, %v12227
    %v12232 = vrsqrt.pop %v11691
    %v12233 = vmul.f32 %v12232, %v11691
    %v12234 = vmul.f32 %v12233, %v12232
    %v12235 = vmul.f32 0.5, %v12234
    %v12236 = vsub.f32 1.5, %v12235
    %v12237 = vmul.f32 %v12232, %v12236
    %vm12238 = vweird.f32 %v11691
    %vm12239 = vweird.f32 %v12232
    %vm12240 = vmor %vm12238, %vm12239
    %v12241 = vsel %vm12240, %v12232, %v12237
    %v12242 = vrsqrt.pop %v11692
    %v12243 = vmul.f32 %v12242, %v11692
    %v12244 = vmul.f32 %v12243, %v12242
    %v12245 = vmul.f32 0.5, %v12244
    %v12246 = vsub.f32 1.5, %v12245
    %v12247 = vmul.f32 %v12242, %v12246
    %vm12248 = vweird.f32 %v11692
    %vm12249 = vweird.f32 %v12242
    %vm12250 = vmor %vm12248, %vm12249
    %v12251 = vsel %vm12250, %v12242, %v12247
    %v12252 = vrsqrt.pop %v11693
    %v12253 = vmul.f32 %v12252, %v11693
    %v12254 = vmul.f32 %v12253, %v12252
    %v12255 = vmul.f32 0.5, %v12254
    %v12256 = vsub.f32 1.5, %v12255
    %v12257 = vmul.f32 %v12252, %v12256
    %vm12258 = vweird.f32 %v11693
    %vm12259 = vweird.f32 %v12252
    %vm12260 = vmor %vm12258, %vm12259
    %v12261 = vsel %vm12260, %v12252, %v12257
    %v12262 = vrsqrt.pop %v11694
    %v12263 = vmul.f32 %v12262, %v11694
    %v12264 = vmul.f32 %v12263, %v12262
    %v12265 = vmul.f32 0.5, %v12264
    %v12266 = vsub.f32 1.5, %v12265
    %v12267 = vmul.f32 %v12262, %v12266
    %vm12268 = vweird.f32 %v11694
    %vm12269 = vweird.f32 %v12262
    %vm12270 = vmor %vm12268, %vm12269
    %v12271 = vsel %vm12270, %v12262, %v12267
    %v12272 = vrsqrt.pop %v11695
    %v12273 = vmul.f32 %v12272, %v11695
    %v12274 = vmul.f32 %v12273, %v12272
    %v12275 = vmul.f32 0.5, %v12274
    %v12276 = vsub.f32 1.5, %v12275
    %v12277 = vmul.f32 %v12272, %v12276
    %vm12278 = vweird.f32 %v11695
    %vm12279 = vweird.f32 %v12272
    %vm12280 = vmor %vm12278, %vm12279
    %v12281 = vsel %vm12280, %v12272, %v12277
    %v12282 = vrsqrt.pop %v11696
    %v12283 = vmul.f32 %v12282, %v11696
    %v12284 = vmul.f32 %v12283, %v12282
    %v12285 = vmul.f32 0.5, %v12284
    %v12286 = vsub.f32 1.5, %v12285
    %v12287 = vmul.f32 %v12282, %v12286
    %vm12288 = vweird.f32 %v11696
    %vm12289 = vweird.f32 %v12282
    %vm12290 = vmor %vm12288, %vm12289
    %v12291 = vsel %vm12290, %v12282, %v12287
    %v12292 = vrsqrt.pop %v11697
    %v12293 = vmul.f32 %v12292, %v11697
    %v12294 = vmul.f32 %v12293, %v12292
    %v12295 = vmul.f32 0.5, %v12294
    %v12296 = vsub.f32 1.5, %v12295
    %v12297 = vmul.f32 %v12292, %v12296
    %vm12298 = vweird.f32 %v11697
    %vm12299 = vweird.f32 %v12292
    %vm12300 = vmor %vm12298, %vm12299
    %v12301 = vsel %vm12300, %v12292, %v12297
    %v12302 = vrsqrt.pop %v11698
    %v12303 = vmul.f32 %v12302, %v11698
    %v12304 = vmul.f32 %v12303, %v12302
    %v12305 = vmul.f32 0.5, %v12304
    %v12306 = vsub.f32 1.5, %v12305
    %v12307 = vmul.f32 %v12302, %v12306
    %vm12308 = vweird.f32 %v11698
    %vm12309 = vweird.f32 %v12302
    %vm12310 = vmor %vm12308, %vm12309
    %v12311 = vsel %vm12310, %v12302, %v12307
    %v12312 = vrsqrt.pop %v11699
    %v12313 = vmul.f32 %v12312, %v11699
    %v12314 = vmul.f32 %v12313, %v12312
    %v12315 = vmul.f32 0.5, %v12314
    %v12316 = vsub.f32 1.5, %v12315
    %v12317 = vmul.f32 %v12312, %v12316
    %vm12318 = vweird.f32 %v11699
    %vm12319 = vweird.f32 %v12312
    %vm12320 = vmor %vm12318, %vm12319
    %v12321 = vsel %vm12320, %v12312, %v12317
    %v12322 = vrsqrt.pop %v11700
    %v12323 = vmul.f32 %v12322, %v11700
    %v12324 = vmul.f32 %v12323, %v12322
    %v12325 = vmul.f32 0.5, %v12324
    %v12326 = vsub.f32 1.5, %v12325
    %v12327 = vmul.f32 %v12322, %v12326
    %vm12328 = vweird.f32 %v11700
    %vm12329 = vweird.f32 %v12322
    %vm12330 = vmor %vm12328, %vm12329
    %v12331 = vsel %vm12330, %v12322, %v12327
    %v12332 = vrsqrt.pop %v11701
    %v12333 = vmul.f32 %v12332, %v11701
    %v12334 = vmul.f32 %v12333, %v12332
    %v12335 = vmul.f32 0.5, %v12334
    %v12336 = vsub.f32 1.5, %v12335
    %v12337 = vmul.f32 %v12332, %v12336
    %vm12338 = vweird.f32 %v11701
    %vm12339 = vweird.f32 %v12332
    %vm12340 = vmor %vm12338, %vm12339
    %v12341 = vsel %vm12340, %v12332, %v12337
    %v12342 = vmul.f32 %v11574, %v11711
    %v12343 = vmul.f32 %v11575, %v11721
    %v12344 = vmul.f32 %v11576, %v11731
    %v12345 = vmul.f32 %v11577, %v11741
    %v12346 = vmul.f32 %v11578, %v11751
    %v12347 = vmul.f32 %v11579, %v11761
    %v12348 = vmul.f32 %v11580, %v11771
    %v12349 = vmul.f32 %v11581, %v11781
    %v12350 = vmul.f32 %v11582, %v11791
    %v12351 = vmul.f32 %v11583, %v11801
    %v12352 = vmul.f32 %v11584, %v11811
    %v12353 = vmul.f32 %v11585, %v11821
    %v12354 = vmul.f32 %v11586, %v11831
    %v12355 = vmul.f32 %v11587, %v11841
    %v12356 = vmul.f32 %v11588, %v11851
    %v12357 = vmul.f32 %v11589, %v11861
    %v12358 = vmul.f32 %v11590, %v11871
    %v12359 = vmul.f32 %v11591, %v11881
    %v12360 = vmul.f32 %v11592, %v11891
    %v12361 = vmul.f32 %v11593, %v11901
    %v12362 = vmul.f32 %v11594, %v11911
    %v12363 = vmul.f32 %v11595, %v11921
    %v12364 = vmul.f32 %v11596, %v11931
    %v12365 = vmul.f32 %v11597, %v11941
    %v12366 = vmul.f32 %v11598, %v11951
    %v12367 = vmul.f32 %v11599, %v11961
    %v12368 = vmul.f32 %v11600, %v11971
    %v12369 = vmul.f32 %v11601, %v11981
    %v12370 = vmul.f32 %v11602, %v11991
    %v12371 = vmul.f32 %v11603, %v12001
    %v12372 = vmul.f32 %v11604, %v12011
    %v12373 = vmul.f32 %v11605, %v12021
    %v12374 = vmul.f32 %v11606, %v12031
    %v12375 = vmul.f32 %v11607, %v12041
    %v12376 = vmul.f32 %v11608, %v12051
    %v12377 = vmul.f32 %v11609, %v12061
    %v12378 = vmul.f32 %v11610, %v12071
    %v12379 = vmul.f32 %v11611, %v12081
    %v12380 = vmul.f32 %v11612, %v12091
    %v12381 = vmul.f32 %v11613, %v12101
    %v12382 = vmul.f32 %v11614, %v12111
    %v12383 = vmul.f32 %v11615, %v12121
    %v12384 = vmul.f32 %v11616, %v12131
    %v12385 = vmul.f32 %v11617, %v12141
    %v12386 = vmul.f32 %v11618, %v12151
    %v12387 = vmul.f32 %v11619, %v12161
    %v12388 = vmul.f32 %v11620, %v12171
    %v12389 = vmul.f32 %v11621, %v12181
    %v12390 = vmul.f32 %v11622, %v12191
    %v12391 = vmul.f32 %v11623, %v12201
    %v12392 = vmul.f32 %v11624, %v12211
    %v12393 = vmul.f32 %v11625, %v12221
    %v12394 = vmul.f32 %v11626, %v12231
    %v12395 = vmul.f32 %v11627, %v12241
    %v12396 = vmul.f32 %v11628, %v12251
    %v12397 = vmul.f32 %v11629, %v12261
    %v12398 = vmul.f32 %v11630, %v12271
    %v12399 = vmul.f32 %v11631, %v12281
    %v12400 = vmul.f32 %v11632, %v12291
    %v12401 = vmul.f32 %v11633, %v12301
    %v12402 = vmul.f32 %v11634, %v12311
    %v12403 = vmul.f32 %v11635, %v12321
    %v12404 = vmul.f32 %v11636, %v12331
    %v12405 = vmul.f32 %v11637, %v12341
    %12406 = vst [vmem:[#allocation2] sm:$0xff] %v12342
    %12407 = vst [vmem:[#allocation2 + $0x8] sm:$0xff] %v12343
    %12408 = vst [vmem:[#allocation2 + $0x10] sm:$0xff] %v12344
    %12409 = vst [vmem:[#allocation2 + $0x18] sm:$0xff] %v12345
    %12410 = vst [vmem:[#allocation2 + $0x20] sm:$0xff] %v12346
    %12411 = vst [vmem:[#allocation2 + $0x28] sm:$0xff] %v12347
    %12412 = vst [vmem:[#allocation2 + $0x30] sm:$0xff] %v12348
    %12413 = vst [vmem:[#allocation2 + $0x38] sm:$0xff] %v12349
    %12414 = vst [vmem:[#allocation2 + $0x40] sm:$0xff] %v12350
    %12415 = vst [vmem:[#allocation2 + $0x48] sm:$0xff] %v12351
    %12416 = vst [vmem:[#allocation2 + $0x50] sm:$0xff] %v12352
    %12417 = vst [vmem:[#allocation2 + $0x58] sm:$0xff] %v12353
    %12418 = vst [vmem:[#allocation2 + $0x60] sm:$0xff] %v12354
    %12419 = vst [vmem:[#allocation2 + $0x68] sm:$0xff] %v12355
    %12420 = vst [vmem:[#allocation2 + $0x70] sm:$0xff] %v12356
    %12421 = vst [vmem:[#allocation2 + $0x78] sm:$0xff] %v12357
    %12422 = vst [vmem:[#allocation2 + $0x80] sm:$0xff] %v12358
    %12423 = vst [vmem:[#allocation2 + $0x88] sm:$0xff] %v12359
    %12424 = vst [vmem:[#allocation2 + $0x90] sm:$0xff] %v12360
    %12425 = vst [vmem:[#allocation2 + $0x98] sm:$0xff] %v12361
    %12426 = vst [vmem:[#allocation2 + $0xa0] sm:$0xff] %v12362
    %12427 = vst [vmem:[#allocation2 + $0xa8] sm:$0xff] %v12363
    %12428 = vst [vmem:[#allocation2 + $0xb0] sm:$0xff] %v12364
    %12429 = vst [vmem:[#allocation2 + $0xb8] sm:$0xff] %v12365
    %12430 = vst [vmem:[#allocation2 + $0xc0] sm:$0xff] %v12366
    %12431 = vst [vmem:[#allocation2 + $0xc8] sm:$0xff] %v12367
    %12432 = vst [vmem:[#allocation2 + $0xd0] sm:$0xff] %v12368
    %12433 = vst [vmem:[#allocation2 + $0xd8] sm:$0xff] %v12369
    %12434 = vst [vmem:[#allocation2 + $0xe0] sm:$0xff] %v12370
    %12435 = vst [vmem:[#allocation2 + $0xe8] sm:$0xff] %v12371
    %12436 = vst [vmem:[#allocation2 + $0xf0] sm:$0xff] %v12372
    %12437 = vst [vmem:[#allocation2 + $0xf8] sm:$0xff] %v12373
    %12438 = vst [vmem:[#allocation2 + $0x100] sm:$0xff] %v12374
    %12439 = vst [vmem:[#allocation2 + $0x108] sm:$0xff] %v12375
    %12440 = vst [vmem:[#allocation2 + $0x110] sm:$0xff] %v12376
    %12441 = vst [vmem:[#allocation2 + $0x118] sm:$0xff] %v12377
    %12442 = vst [vmem:[#allocation2 + $0x120] sm:$0xff] %v12378
    %12443 = vst [vmem:[#allocation2 + $0x128] sm:$0xff] %v12379
    %12444 = vst [vmem:[#allocation2 + $0x130] sm:$0xff] %v12380
    %12445 = vst [vmem:[#allocation2 + $0x138] sm:$0xff] %v12381
    %12446 = vst [vmem:[#allocation2 + $0x140] sm:$0xff] %v12382
    %12447 = vst [vmem:[#allocation2 + $0x148] sm:$0xff] %v12383
    %12448 = vst [vmem:[#allocation2 + $0x150] sm:$0xff] %v12384
    %12449 = vst [vmem:[#allocation2 + $0x158] sm:$0xff] %v12385
    %12450 = vst [vmem:[#allocation2 + $0x160] sm:$0xff] %v12386
    %12451 = vst [vmem:[#allocation2 + $0x168] sm:$0xff] %v12387
    %12452 = vst [vmem:[#allocation2 + $0x170] sm:$0xff] %v12388
    %12453 = vst [vmem:[#allocation2 + $0x178] sm:$0xff] %v12389
    %12454 = vst [vmem:[#allocation2 + $0x180] sm:$0xff] %v12390
    %12455 = vst [vmem:[#allocation2 + $0x188] sm:$0xff] %v12391
    %12456 = vst [vmem:[#allocation2 + $0x190] sm:$0xff] %v12392
    %12457 = vst [vmem:[#allocation2 + $0x198] sm:$0xff] %v12393
    %12458 = vst [vmem:[#allocation2 + $0x1a0] sm:$0xff] %v12394
    %12459 = vst [vmem:[#allocation2 + $0x1a8] sm:$0xff] %v12395
    %12460 = vst [vmem:[#allocation2 + $0x1b0] sm:$0xff] %v12396
    %12461 = vst [vmem:[#allocation2 + $0x1b8] sm:$0xff] %v12397
    %12462 = vst [vmem:[#allocation2 + $0x1c0] sm:$0xff] %v12398
    %12463 = vst [vmem:[#allocation2 + $0x1c8] sm:$0xff] %v12399
    %12464 = vst [vmem:[#allocation2 + $0x1d0] sm:$0xff] %v12400
    %12465 = vst [vmem:[#allocation2 + $0x1d8] sm:$0xff] %v12401
    %12466 = vst [vmem:[#allocation2 + $0x1e0] sm:$0xff] %v12402
    %12467 = vst [vmem:[#allocation2 + $0x1e8] sm:$0xff] %v12403
    %12468 = vst [vmem:[#allocation2 + $0x1f0] sm:$0xff] %v12404
    %12469 = vst [vmem:[#allocation2 + $0x1f8] sm:$0xff] %v12405
    // Predicated region
    $region14: #{segtran_input_feat_encoder.1} parent=1 // pred_check
      _
    $region15: #{segtran_input_feat_encoder.1} parent=1 // pred_check_branch
      %12471 = sbr.rel (0) target = $region17
    $region16: #{segtran_input_feat_encoder.1} parent=1 // pred_region
      %12473 = vsyncadd [#allocation3], 0
      %s12474 = sshll.u32 [#allocation2], 4
      %s12475 = int_to_ptr.vmem [resolvable:$true] %s12474
      %s12476 = sshll.u32 %s3, 4
      %s12477 = int_to_ptr.hbm [resolvable:$true] %s12476
      %12482 = dma.vmem_to_hbm [thread:$0]  %s12475, 8192, %s12477, [#allocation3], 128, 128, 8
    $region17: #{segtran_input_feat_encoder.1} parent=1 // pred_fallthru
      _
    // Predicated region
    $region18: #{segtran_input_feat_encoder.1} parent=1 // pred_check
      _
    $region19: #{segtran_input_feat_encoder.1} parent=1 // pred_check_branch
      %12484 = sbr.rel (0) target = $region21
    $region20: #{segtran_input_feat_encoder.1} parent=1 // pred_region
      %12486 = dma.done [#allocation3], 8192
    $region21: #{segtran_input_feat_encoder.1} parent=1 // pred_fallthru
      _
    %12487 = vsyncpa [#allocation3], 1

</llo_original>
